<compile_context>
chip_gen: v7x
topology: tpu7x:2x2x1
jax: 0.10.0
libtpu: 0.0.40
codegen_flags: <defaults>
</compile_context>

<pallas_src>
import functools

import jax
import jax.numpy as jnp
from jax.experimental import pallas as pl
from jax.experimental.pallas import tpu as pltpu

BN_EPS = 1e-5   # nn.BatchNorm2d default
LANE = 128


# ----------------------------- kernel helpers --------------------------------

def _silu(x):
    # x * sigmoid(x); exp and approx reciprocal both run on the EUP slot.
    return x * pl.reciprocal(1.0 + jnp.exp(-x), approx=True)


def _round_up(n, m=LANE):
    return ((n + m - 1) // m) * m


# ------------------------------- Pallas kernel --------------------------------

def _csp_fused_kernel(x_ref, wc1_ref, sc1_ref, bc1_ref,
                      mw1_ref, ms1_ref, mb1_ref,
                      mw2_ref, ms2_ref, mb2_ref,
                      w3_ref, w2_ref,
                      sbn1_ref, bbn1_ref, sbn2_ref, bbn2_ref,
                      w4a_ref, w4b_ref, s4_ref, b4_ref,
                      o_ref, h_acc, pad_ref, *, H, W):
    """Grid = (batch, block).  `h` stays resident in VMEM across block steps."""
    HW = H * W
    cp = h_acc.shape[-1]                 # padded c_
    j = pl.program_id(1)
    last = pl.num_programs(1) - 1

    @pl.when(j == 0)
    def _init():
        # Zero the padded buffer once per image; the 1-pixel border rows stay
        # zero across all blocks (interior rows are fully rewritten each block).
        pad_ref[...] = jnp.zeros_like(pad_ref)
        # CSP.cv1: 1x1 conv (matmul) + folded BN + SiLU.
        y = jnp.dot(x_ref[...], wc1_ref[...],
                    preferred_element_type=jnp.float32)
        h_acc[...] = _silu(y * sc1_ref[...] + bc1_ref[...])       # (HW, cp) f32

    # ------------------------- Bottleneck block j ----------------------------
    h = h_acc[...]                                                 # f32 resident

    # Bottleneck cv1: 1x1 conv + BN + SiLU.
    u = jnp.dot(h.astype(jnp.bfloat16), mw1_ref[...],
                preferred_element_type=jnp.float32)
    u = _silu(u * ms1_ref[...] + mb1_ref[...])                     # (HW, cp) f32

    # Write zero-padded rows (full width, sublane offset 0) as bf16, once.
    zcol = jnp.zeros((H, 1, cp), jnp.bfloat16)
    pad_ref[1:H + 1, :, :] = jnp.concatenate(
        [zcol, u.astype(jnp.bfloat16).reshape(H, W, cp), zcol], axis=1)

    # 3x3 / stride 1 / pad 1 conv regrouped: stack the 3 dh-shifted row slices
    # along channels once, then 3 dw-shifted matmuls with K = 3*cp.
    stacked = jnp.concatenate(
        [pad_ref[0:H, :, :], pad_ref[1:H + 1, :, :], pad_ref[2:H + 2, :, :]],
        axis=-1)                                       # (H, W+2, 3*cp) bf16

    acc = jnp.dot(stacked[:, 0:W, :].reshape(HW, 3 * cp), mw2_ref[0],
                  preferred_element_type=jnp.float32)
    acc = acc + jnp.dot(stacked[:, 1:W + 1, :].reshape(HW, 3 * cp), mw2_ref[1],
                        preferred_element_type=jnp.float32)
    acc = acc + jnp.dot(stacked[:, 2:W + 2, :].reshape(HW, 3 * cp), mw2_ref[2],
                        preferred_element_type=jnp.float32)

    h = _silu(acc * ms2_ref[...] + mb2_ref[...]) + h               # residual f32
    h_acc[...] = h

    # ------------- tail fused into the epilogue of the last block ------------
    @pl.when(j == last)
    def _tail():
        y1 = jnp.dot(h.astype(jnp.bfloat16), w3_ref[...],
                     preferred_element_type=jnp.float32)
        y2 = jnp.dot(x_ref[...], w2_ref[...],
                     preferred_element_type=jnp.float32)
        # BN over the (virtual) concat, applied per half; no concat copy.
        a1 = _silu(y1 * sbn1_ref[...] + bbn1_ref[...]).astype(jnp.bfloat16)
        a2 = _silu(y2 * sbn2_ref[...] + bbn2_ref[...]).astype(jnp.bfloat16)
        z = (jnp.dot(a1, w4a_ref[...], preferred_element_type=jnp.float32) +
             jnp.dot(a2, w4b_ref[...], preferred_element_type=jnp.float32))
        o_ref[...] = _silu(z * s4_ref[...] + b4_ref[...]).astype(o_ref.dtype)


# ----------------------------- pallas_call wrapper -----------------------------

def _vmem_limit_bytes():
    """Generation-aware VMEM cap: ~96 MiB on v5e/v6e, ~48 MiB on v7x."""
    cap = 64 * 1024 * 1024
    try:
        cap = int(getattr(pltpu.get_tpu_info(), "vmem_capacity_bytes", cap))
    except Exception:
        pass
    return max(32 * 1024 * 1024, min(100 * 1024 * 1024, (cap * 3) // 4))


def csp_forward(x_nhwc, prep, H, W):
    N, HW, c1 = x_nhwc.shape
    cp = prep['w_cv1'].shape[1]          # padded c_
    c2p = prep['w_cv4a'].shape[1]        # padded c2
    n_blocks = prep['mw1'].shape[0]

    const2 = lambda b, j: (0, 0)
    per_blk3 = lambda b, j: (j, 0, 0)
    per_blk4 = lambda b, j: (j, 0, 0, 0)
    batch3 = lambda b, j: (b, 0, 0)

    return pl.pallas_call(
        functools.partial(_csp_fused_kernel, H=H, W=W),
        out_shape=jax.ShapeDtypeStruct((N, HW, c2p), jnp.bfloat16),
        grid=(N, n_blocks),
        in_specs=[
            pl.BlockSpec((None, HW, c1), batch3),            # x (resident per b)
            pl.BlockSpec((c1, cp), const2),                  # cv1 weight
            pl.BlockSpec((1, cp), const2),                   # cv1 BN scale
            pl.BlockSpec((1, cp), const2),                   # cv1 BN bias
            pl.BlockSpec((None, cp, cp), per_blk3),          # m[j].cv1 weight
            pl.BlockSpec((None, 1, cp), per_blk3),           # m[j].cv1 BN scale
            pl.BlockSpec((None, 1, cp), per_blk3),           # m[j].cv1 BN bias
            pl.BlockSpec((None, 3, 3 * cp, cp), per_blk4),   # m[j].cv2 (grouped)
            pl.BlockSpec((None, 1, cp), per_blk3),           # m[j].cv2 BN scale
            pl.BlockSpec((None, 1, cp), per_blk3),           # m[j].cv2 BN bias
            pl.BlockSpec((cp, cp), const2),                  # cv3 weight
            pl.BlockSpec((c1, cp), const2),                  # cv2 (CSP) weight
            pl.BlockSpec((1, cp), const2),                   # concat BN scale (y1)
            pl.BlockSpec((1, cp), const2),                   # concat BN bias  (y1)
            pl.BlockSpec((1, cp), const2),                   # concat BN scale (y2)
            pl.BlockSpec((1, cp), const2),                   # concat BN bias  (y2)
            pl.BlockSpec((cp, c2p), const2),                 # cv4 weight (y1 half)
            pl.BlockSpec((cp, c2p), const2),                 # cv4 weight (y2 half)
            pl.BlockSpec((1, c2p), const2),                  # cv4 BN scale
            pl.BlockSpec((1, c2p), const2),                  # cv4 BN bias
        ],
        out_specs=pl.BlockSpec((None, HW, c2p), batch3),
        scratch_shapes=[
            pltpu.VMEM((HW, cp), jnp.float32),               # resident h
            pltpu.VMEM((H + 2, W + 2, cp), jnp.bfloat16),    # zero-padded u
        ],
        compiler_params=pltpu.CompilerParams(
            dimension_semantics=("parallel", "arbitrary"),
            vmem_limit_bytes=_vmem_limit_bytes()),
    )(x_nhwc, prep['w_cv1'], prep['s_cv1'], prep['b_cv1'],
      prep['mw1'], prep['ms1'], prep['mb1'],
      prep['mw2'], prep['ms2'], prep['mb2'],
      prep['w_cv3'], prep['w_cv2'],
      prep['s_bn1'], prep['b_bn1'], prep['s_bn2'], prep['b_bn2'],
      prep['w_cv4a'], prep['w_cv4b'], prep['s_cv4'], prep['b_cv4'])


# ----------------------------- parameter handling -----------------------------

def init_params(key, c1, c2, n, e=0.5):
    c_ = int(c2 * e)
    keys = iter(jax.random.split(key, 16 + 10 * n))

    def conv_w(cout, cin, k):
        scale = 1.0 / float(cin * k * k) ** 0.5
        return jax.random.normal(next(keys), (cout, cin, k, k), jnp.float32) * scale

    def bn_p(c):
        gamma = jax.random.uniform(next(keys), (c,), jnp.float32, 0.5, 1.5)
        beta = jax.random.normal(next(keys), (c,), jnp.float32) * 0.1
        rmean = jax.random.normal(next(keys), (c,), jnp.float32) * 0.1
        rvar = jax.random.uniform(next(keys), (c,), jnp.float32, 0.5, 1.5)
        return (gamma, beta, rmean, rvar)

    p = {
        'cv1_w': conv_w(c_, c1, 1), 'cv1_bn': bn_p(c_),
        'cv2_w': conv_w(c_, c1, 1),
        'cv3_w': conv_w(c_, c_, 1),
        'cv4_w': conv_w(c2, 2 * c_, 1), 'cv4_bn': bn_p(c2),
        'bn_bn': bn_p(2 * c_),
        'm': [{'cv1_w': conv_w(c_, c_, 1), 'cv1_bn': bn_p(c_),
               'cv2_w': conv_w(c_, c_, 3), 'cv2_bn': bn_p(c_)}
              for _ in range(n)],
    }
    return p, c_


def fold_bn(bn):
    gamma, beta, rmean, rvar = bn
    s = gamma / jnp.sqrt(rvar + BN_EPS)
    return s, beta - rmean * s


def w1x1(w4):  # (Cout, Cin, 1, 1) -> (Cin, Cout)
    return jnp.transpose(w4[:, :, 0, 0], (1, 0))


def _pad2d(a, rows=None, cols=None):
    r = a.shape[0] if rows is None else rows
    c = a.shape[1] if cols is None else cols
    return jnp.pad(a, ((0, r - a.shape[0]), (0, c - a.shape[1])))


def _pad_vec(v, c):
    return jnp.pad(v, (0, c - v.shape[0]))


def w3x3_grouped(w4, cin_p, cout_p):
    """(Cout, Cin, 3, 3) -> (3[kw], 3*cin_p, cout_p), rows ordered (kh, cin)."""
    cout, cin = w4.shape[0], w4.shape[1]
    w = jnp.pad(w4, ((0, cout_p - cout), (0, cin_p - cin), (0, 0), (0, 0)))
    return jnp.transpose(w, (3, 2, 1, 0)).reshape(3, 3 * cin_p, cout_p)


def prepare_params(p, c_, c2):
    """Fold BN, lane-pad channels to 128, regroup 3x3 taps, cast weights bf16."""
    bf = jnp.bfloat16
    cp, c2p = _round_up(c_), _round_up(c2)

    def bn_row(bn, cpad):
        s, b = fold_bn(bn)
        return (_pad_vec(s, cpad).reshape(1, cpad),
                _pad_vec(b, cpad).reshape(1, cpad))

    s_cv1, b_cv1 = bn_row(p['cv1_bn'], cp)
    s_cv4, b_cv4 = bn_row(p['cv4_bn'], c2p)
    s_bn, b_bn = fold_bn(p['bn_bn'])
    w4 = w1x1(p['cv4_w'])                                    # (2c_, c2)

    mw1 = jnp.stack([_pad2d(w1x1(m['cv1_w']), cp, cp) for m in p['m']]).astype(bf)
    mw2 = jnp.stack([w3x3_grouped(m['cv2_w'], cp, cp) for m in p['m']]).astype(bf)
    ms1 = jnp.stack([bn_row(m['cv1_bn'], cp)[0] for m in p['m']])
    mb1 = jnp.stack([bn_row(m['cv1_bn'], cp)[1] for m in p['m']])
    ms2 = jnp.stack([bn_row(m['cv2_bn'], cp)[0] for m in p['m']])
    mb2 = jnp.stack([bn_row(m['cv2_bn'], cp)[1] for m in p['m']])

    return {
        'w_cv1': _pad2d(w1x1(p['cv1_w']), cols=cp).astype(bf),
        's_cv1': s_cv1, 'b_cv1': b_cv1,
        'mw1': mw1, 'ms1': ms1, 'mb1': mb1,
        'mw2': mw2, 'ms2': ms2, 'mb2': mb2,
        'w_cv3': _pad2d(w1x1(p['cv3_w']), cp, cp).astype(bf),
        'w_cv2': _pad2d(w1x1(p['cv2_w']), cols=cp).astype(bf),
        's_bn1': _pad_vec(s_bn[:c_], cp).reshape(1, cp),
        'b_bn1': _pad_vec(b_bn[:c_], cp).reshape(1, cp),
        's_bn2': _pad_vec(s_bn[c_:], cp).reshape(1, cp),
        'b_bn2': _pad_vec(b_bn[c_:], cp).reshape(1, cp),
        'w_cv4a': _pad2d(w4[:c_], cp, c2p).astype(bf),
        'w_cv4b': _pad2d(w4[c_:], cp, c2p).astype(bf),
        's_cv4': s_cv4, 'b_cv4': b_cv4,
    }


# ----------------------------- full forward -----------------------------------

def bottleneck_csp_pallas(x_nchw, prep, c2):
    N, c1, H, W = x_nchw.shape
    x_nhwc = jnp.transpose(x_nchw, (0, 2, 3, 1)).reshape(N, H * W, c1)
    x_nhwc = x_nhwc.astype(jnp.bfloat16)                     # NHWC bf16
    out = csp_forward(x_nhwc, prep, H, W)                    # (N, HW, c2p) bf16
    out = out[:, :, :c2].astype(jnp.float32).reshape(N, H, W, c2)
    return jnp.transpose(out, (0, 3, 1, 2))                  # NCHW f32


# ----------------------------- pure-JAX reference ------------------------------

def bottleneck_csp_reference(x, p):
    def conv(x, w, pad=0):
        return jax.lax.conv_general_dilated(
            x, w, (1, 1), [(pad, pad), (pad, pad)],
            dimension_numbers=('NCHW', 'OIHW', 'NCHW'))

    def bn(x, bnp):
        g, bta, m, v = bnp
        s = g / jnp.sqrt(v + BN_EPS)
        return x * s[None, :, None, None] + (bta - m * s)[None, :, None, None]

    def silu(x):
        return x * jax.nn.sigmoid(x)

    t = silu(bn(conv(x, p['cv1_w']), p['cv1_bn']))
    h = t
    for mp in p['m']:
        u = silu(bn(conv(h, mp['cv1_w']), mp['cv1_bn']))
        u = silu(bn(conv(u, mp['cv2_w'], pad=1), mp['cv2_bn']))
        h = h + u
    y1 = conv(h, p['cv3_w'])
    y2 = conv(x, p['cv2_w'])
    y = silu(bn(jnp.concatenate([y1, y2], axis=1), p['bn_bn']))
    return silu(bn(conv(y, p['cv4_w']), p['cv4_bn']))


# ----------------------------- main --------------------------------------------

if __name__ == "__main__":
    key = jax.random.PRNGKey(0)
    c1, c2, n = 8, 8, 2
    N, H, W = 2, 16, 16

    kx, kp = jax.random.split(key)
    x = jax.random.normal(kx, (N, c1, H, W), jnp.float32)
    params, c_ = init_params(kp, c1, c2, n)
    prep = prepare_params(params, c_, c2)

    fwd = jax.jit(functools.partial(bottleneck_csp_pallas, c2=c2))
    out = jax.block_until_ready(fwd(x, prep))

    ref = bottleneck_csp_reference(x, params)
    assert out.shape == ref.shape == (N, c2, H, W), (out.shape, ref.shape)

    # bf16 matmuls + bf16 output -> compare against the output dynamic range.
    err = float(jnp.max(jnp.abs(out - ref)))
    scale = float(jnp.max(jnp.abs(ref))) + 1e-6
    if err > 0.05 * scale:
        raise AssertionError(
            f"Pallas/reference mismatch: max abs err={err:.4f}, ref scale={scale:.4f}")

    print("KERNEL_OK")
</pallas_src>

<mosaic_0001>
module attributes {stable_mosaic.version = 11 : i64} {
  func.func @_csp_fused_kernel(%arg0: i32, %arg1: i32, %arg2: memref<1x256x8xbf16, #tpu.memory_space<vmem>>, %arg3: memref<8x128xbf16, #tpu.memory_space<vmem>>, %arg4: memref<1x128xf32, #tpu.memory_space<vmem>>, %arg5: memref<1x128xf32, #tpu.memory_space<vmem>>, %arg6: memref<1x128x128xbf16, #tpu.memory_space<vmem>>, %arg7: memref<1x1x128xf32, #tpu.memory_space<vmem>>, %arg8: memref<1x1x128xf32, #tpu.memory_space<vmem>>, %arg9: memref<1x3x384x128xbf16, #tpu.memory_space<vmem>>, %arg10: memref<1x1x128xf32, #tpu.memory_space<vmem>>, %arg11: memref<1x1x128xf32, #tpu.memory_space<vmem>>, %arg12: memref<128x128xbf16, #tpu.memory_space<vmem>>, %arg13: memref<8x128xbf16, #tpu.memory_space<vmem>>, %arg14: memref<1x128xf32, #tpu.memory_space<vmem>>, %arg15: memref<1x128xf32, #tpu.memory_space<vmem>>, %arg16: memref<1x128xf32, #tpu.memory_space<vmem>>, %arg17: memref<1x128xf32, #tpu.memory_space<vmem>>, %arg18: memref<128x128xbf16, #tpu.memory_space<vmem>>, %arg19: memref<128x128xbf16, #tpu.memory_space<vmem>>, %arg20: memref<1x128xf32, #tpu.memory_space<vmem>>, %arg21: memref<1x128xf32, #tpu.memory_space<vmem>>, %arg22: memref<1x256x128xbf16, #tpu.memory_space<vmem>>, %arg23: memref<256x128xf32, #tpu.memory_space<vmem>>, %arg24: memref<18x18x128xbf16, #tpu.memory_space<vmem>>) attributes {dimension_semantics = [#tpu.dimension_semantics<parallel>, #tpu.dimension_semantics<arbitrary>], iteration_bounds = array<i64: 2, 2>, scalar_prefetch = 0 : i64, scratch_operands = 2 : i64, tpu.core_type = #tpu.core_type<tc>, window_params = [{transform_indices = @transform_0, window_bounds = array<i64: 1, 256, 8>}, {pipeline_mode = #tpu.pipeline_mode<synchronous>, transform_indices = @transform_1, window_bounds = array<i64: 8, 128>}, {pipeline_mode = #tpu.pipeline_mode<synchronous>, transform_indices = @transform_2, window_bounds = array<i64: 1, 128>}, {pipeline_mode = #tpu.pipeline_mode<synchronous>, transform_indices = @transform_3, window_bounds = array<i64: 1, 128>}, {transform_indices = @transform_4, window_bounds = array<i64: 1, 128, 128>}, {transform_indices = @transform_5, window_bounds = array<i64: 1, 1, 128>}, {transform_indices = @transform_6, window_bounds = array<i64: 1, 1, 128>}, {transform_indices = @transform_7, window_bounds = array<i64: 1, 3, 384, 128>}, {transform_indices = @transform_8, window_bounds = array<i64: 1, 1, 128>}, {transform_indices = @transform_9, window_bounds = array<i64: 1, 1, 128>}, {pipeline_mode = #tpu.pipeline_mode<synchronous>, transform_indices = @transform_10, window_bounds = array<i64: 128, 128>}, {pipeline_mode = #tpu.pipeline_mode<synchronous>, transform_indices = @transform_11, window_bounds = array<i64: 8, 128>}, {pipeline_mode = #tpu.pipeline_mode<synchronous>, transform_indices = @transform_12, window_bounds = array<i64: 1, 128>}, {pipeline_mode = #tpu.pipeline_mode<synchronous>, transform_indices = @transform_13, window_bounds = array<i64: 1, 128>}, {pipeline_mode = #tpu.pipeline_mode<synchronous>, transform_indices = @transform_14, window_bounds = array<i64: 1, 128>}, {pipeline_mode = #tpu.pipeline_mode<synchronous>, transform_indices = @transform_15, window_bounds = array<i64: 1, 128>}, {pipeline_mode = #tpu.pipeline_mode<synchronous>, transform_indices = @transform_16, window_bounds = array<i64: 128, 128>}, {pipeline_mode = #tpu.pipeline_mode<synchronous>, transform_indices = @transform_17, window_bounds = array<i64: 128, 128>}, {pipeline_mode = #tpu.pipeline_mode<synchronous>, transform_indices = @transform_18, window_bounds = array<i64: 1, 128>}, {pipeline_mode = #tpu.pipeline_mode<synchronous>, transform_indices = @transform_19, window_bounds = array<i64: 1, 128>}, {transform_indices = @transform_20, window_bounds = array<i64: 1, 256, 128>}]} {
    %c0_i32 = arith.constant 0 : i32
    %0 = arith.cmpi eq, %arg1, %c0_i32 : i32
    %1 = arith.extui %0 : i1 to i32
    %c0_i32_0 = arith.constant 0 : i32
    %2 = arith.cmpi ne, %1, %c0_i32_0 : i32
    scf.if %2 {
      %cst_50 = arith.constant 0.000000e+00 : bf16
      %69 = vector.broadcast %cst_50 : bf16 to vector<18x18x128xbf16>
      %c0_51 = arith.constant 0 : index
      %c0_52 = arith.constant 0 : index
      %c0_53 = arith.constant 0 : index
      %70 = vector.load %arg24[%c0_51, %c0_52, %c0_53] : memref<18x18x128xbf16, #tpu.memory_space<vmem>>, vector<18x18x128xbf16>
      tpu.vector_store %arg24[%c0_51, %c0_52, %c0_53], %69 {strides = array<i32>} : memref<18x18x128xbf16, #tpu.memory_space<vmem>>, vector<18x18x128xbf16>,
      %c0_54 = arith.constant 0 : index
      %c0_55 = arith.constant 0 : index
      %c0_56 = arith.constant 0 : index
      %71 = vector.load %arg2[%c0_54, %c0_55, %c0_56] : memref<1x256x8xbf16, #tpu.memory_space<vmem>>, vector<1x256x8xbf16>
      %72 = vector.shape_cast %71 : vector<1x256x8xbf16> to vector<256x8xbf16>
      %c0_57 = arith.constant 0 : index
      %c0_58 = arith.constant 0 : index
      %73 = vector.load %arg3[%c0_57, %c0_58] : memref<8x128xbf16, #tpu.memory_space<vmem>>, vector<8x128xbf16>
      %cst_59 = arith.constant dense<0.000000e+00> : vector<256x128xf32>
      %74 = tpu.matmul %72, %73, %cst_59 {dimension_numbers = #tpu.dot_dimension_numbers<[1], [0], [0], [1], [0, 0, 1, 1], [], []>} : vector<256x8xbf16>, vector<8x128xbf16>, vector<256x128xf32> -> vector<256x128xf32>
      %c0_60 = arith.constant 0 : index
      %c0_61 = arith.constant 0 : index
      %75 = vector.load %arg4[%c0_60, %c0_61] : memref<1x128xf32, #tpu.memory_space<vmem>>, vector<1x128xf32>
      %76 = vector.broadcast %75 : vector<1x128xf32> to vector<256x128xf32>
      %77 = arith.mulf %74, %76 : vector<256x128xf32>
      %c0_62 = arith.constant 0 : index
      %c0_63 = arith.constant 0 : index
      %78 = vector.load %arg5[%c0_62, %c0_63] : memref<1x128xf32, #tpu.memory_space<vmem>>, vector<1x128xf32>
      %79 = vector.broadcast %78 : vector<1x128xf32> to vector<256x128xf32>
      %80 = arith.addf %77, %79 : vector<256x128xf32>
      %cst_64 = arith.constant 0.000000e+00 : f32
      %81 = vector.broadcast %cst_64 : f32 to vector<256x128xf32>
      %82 = arith.subf %81, %80 : vector<256x128xf32>
      %83 = math.exp %82 : vector<256x128xf32>
      %cst_65 = arith.constant 1.000000e+00 : f32
      %84 = vector.broadcast %cst_65 : f32 to vector<256x128xf32>
      %85 = arith.addf %84, %83 : vector<256x128xf32>
      %86 = tpu.reciprocal %85 {approx = true} : vector<256x128xf32> -> vector<256x128xf32>
      %87 = arith.mulf %80, %86 : vector<256x128xf32>
      %c0_66 = arith.constant 0 : index
      %c0_67 = arith.constant 0 : index
      %88 = vector.load %arg23[%c0_66, %c0_67] : memref<256x128xf32, #tpu.memory_space<vmem>>, vector<256x128xf32>
      tpu.vector_store %arg23[%c0_66, %c0_67], %87 {strides = array<i32>} : memref<256x128xf32, #tpu.memory_space<vmem>>, vector<256x128xf32>,
    } else {
    }
    %c0 = arith.constant 0 : index
    %c0_1 = arith.constant 0 : index
    %3 = vector.load %arg23[%c0, %c0_1] : memref<256x128xf32, #tpu.memory_space<vmem>>, vector<256x128xf32>
    %4 = arith.truncf %3 : vector<256x128xf32> to vector<256x128xbf16>
    %c0_2 = arith.constant 0 : index
    %c0_3 = arith.constant 0 : index
    %c0_4 = arith.constant 0 : index
    %5 = vector.load %arg6[%c0_2, %c0_3, %c0_4] : memref<1x128x128xbf16, #tpu.memory_space<vmem>>, vector<1x128x128xbf16>
    %6 = vector.shape_cast %5 : vector<1x128x128xbf16> to vector<128x128xbf16>
    %cst = arith.constant dense<0.000000e+00> : vector<256x128xf32>
    %7 = tpu.matmul %4, %6, %cst {dimension_numbers = #tpu.dot_dimension_numbers<[1], [0], [0], [1], [0, 0, 1, 1], [], []>} : vector<256x128xbf16>, vector<128x128xbf16>, vector<256x128xf32> -> vector<256x128xf32>
    %c0_5 = arith.constant 0 : index
    %c0_6 = arith.constant 0 : index
    %c0_7 = arith.constant 0 : index
    %8 = vector.load %arg7[%c0_5, %c0_6, %c0_7] : memref<1x1x128xf32, #tpu.memory_space<vmem>>, vector<1x1x128xf32>
    %9 = vector.shape_cast %8 : vector<1x1x128xf32> to vector<1x128xf32>
    %10 = vector.broadcast %9 : vector<1x128xf32> to vector<256x128xf32>
    %11 = arith.mulf %7, %10 : vector<256x128xf32>
    %c0_8 = arith.constant 0 : index
    %c0_9 = arith.constant 0 : index
    %c0_10 = arith.constant 0 : index
    %12 = vector.load %arg8[%c0_8, %c0_9, %c0_10] : memref<1x1x128xf32, #tpu.memory_space<vmem>>, vector<1x1x128xf32>
    %13 = vector.shape_cast %12 : vector<1x1x128xf32> to vector<1x128xf32>
    %14 = vector.broadcast %13 : vector<1x128xf32> to vector<256x128xf32>
    %15 = arith.addf %11, %14 : vector<256x128xf32>
    %cst_11 = arith.constant 0.000000e+00 : f32
    %16 = vector.broadcast %cst_11 : f32 to vector<256x128xf32>
    %17 = arith.subf %16, %15 : vector<256x128xf32>
    %18 = math.exp %17 : vector<256x128xf32>
    %cst_12 = arith.constant 1.000000e+00 : f32
    %19 = vector.broadcast %cst_12 : f32 to vector<256x128xf32>
    %20 = arith.addf %19, %18 : vector<256x128xf32>
    %21 = tpu.reciprocal %20 {approx = true} : vector<256x128xf32> -> vector<256x128xf32>
    %22 = arith.mulf %15, %21 : vector<256x128xf32>
    %cst_13 = arith.constant 0.000000e+00 : bf16
    %23 = vector.broadcast %cst_13 : bf16 to vector<16x1x128xbf16>
    %24 = arith.truncf %22 : vector<256x128xf32> to vector<256x128xbf16>
    %25 = vector.shape_cast %24 : vector<256x128xbf16> to vector<16x16x128xbf16>
    %26 = tpu.concatenate %23, %25, %23 in 1 : vector<16x1x128xbf16>, vector<16x16x128xbf16>, vector<16x1x128xbf16> -> vector<16x18x128xbf16>
    %c1 = arith.constant 1 : index
    %c0_14 = arith.constant 0 : index
    %c0_15 = arith.constant 0 : index
    %27 = vector.load %arg24[%c1, %c0_14, %c0_15] : memref<18x18x128xbf16, #tpu.memory_space<vmem>>, vector<16x18x128xbf16>
    tpu.vector_store %arg24[%c1, %c0_14, %c0_15], %26 {strides = array<i32>} : memref<18x18x128xbf16, #tpu.memory_space<vmem>>, vector<16x18x128xbf16>,
    %c0_16 = arith.constant 0 : index
    %c0_17 = arith.constant 0 : index
    %c0_18 = arith.constant 0 : index
    %28 = vector.load %arg24[%c0_16, %c0_17, %c0_18] : memref<18x18x128xbf16, #tpu.memory_space<vmem>>, vector<16x18x128xbf16>
    %c1_19 = arith.constant 1 : index
    %c0_20 = arith.constant 0 : index
    %c0_21 = arith.constant 0 : index
    %29 = vector.load %arg24[%c1_19, %c0_20, %c0_21] : memref<18x18x128xbf16, #tpu.memory_space<vmem>>, vector<16x18x128xbf16>
    %c2 = arith.constant 2 : index
    %c0_22 = arith.constant 0 : index
    %c0_23 = arith.constant 0 : index
    %30 = vector.load %arg24[%c2, %c0_22, %c0_23] : memref<18x18x128xbf16, #tpu.memory_space<vmem>>, vector<16x18x128xbf16>
    %31 = tpu.concatenate %28, %29, %30 in 2 : vector<16x18x128xbf16>, vector<16x18x128xbf16>, vector<16x18x128xbf16> -> vector<16x18x384xbf16>
    %32 = vector.extract_strided_slice %31 {offsets = [0, 0, 0], sizes = [16, 16, 384], strides = [1, 1, 1]} : vector<16x18x384xbf16> to vector<16x16x384xbf16>
    %33 = vector.shape_cast %32 : vector<16x16x384xbf16> to vector<256x384xbf16>
    %c0_24 = arith.constant 0 : index
    %c0_25 = arith.constant 0 : index
    %c0_26 = arith.constant 0 : index
    %c0_27 = arith.constant 0 : index
    %34 = vector.load %arg9[%c0_24, %c0_25, %c0_26, %c0_27] : memref<1x3x384x128xbf16, #tpu.memory_space<vmem>>, vector<1x1x384x128xbf16>
    %35 = vector.shape_cast %34 : vector<1x1x384x128xbf16> to vector<384x128xbf16>
    %cst_28 = arith.constant dense<0.000000e+00> : vector<256x128xf32>
    %36 = tpu.matmul %33, %35, %cst_28 {dimension_numbers = #tpu.dot_dimension_numbers<[1], [0], [0], [1], [0, 0, 1, 1], [], []>} : vector<256x384xbf16>, vector<384x128xbf16>, vector<256x128xf32> -> vector<256x128xf32>
    %37 = vector.extract_strided_slice %31 {offsets = [0, 1, 0], sizes = [16, 16, 384], strides = [1, 1, 1]} : vector<16x18x384xbf16> to vector<16x16x384xbf16>
    %38 = vector.shape_cast %37 : vector<16x16x384xbf16> to vector<256x384xbf16>
    %c0_29 = arith.constant 0 : index
    %c1_30 = arith.constant 1 : index
    %c0_31 = arith.constant 0 : index
    %c0_32 = arith.constant 0 : index
    %39 = vector.load %arg9[%c0_29, %c1_30, %c0_31, %c0_32] : memref<1x3x384x128xbf16, #tpu.memory_space<vmem>>, vector<1x1x384x128xbf16>
    %40 = vector.shape_cast %39 : vector<1x1x384x128xbf16> to vector<384x128xbf16>
    %cst_33 = arith.constant dense<0.000000e+00> : vector<256x128xf32>
    %41 = tpu.matmul %38, %40, %cst_33 {dimension_numbers = #tpu.dot_dimension_numbers<[1], [0], [0], [1], [0, 0, 1, 1], [], []>} : vector<256x384xbf16>, vector<384x128xbf16>, vector<256x128xf32> -> vector<256x128xf32>
    %42 = arith.addf %36, %41 : vector<256x128xf32>
    %43 = vector.extract_strided_slice %31 {offsets = [0, 2, 0], sizes = [16, 16, 384], strides = [1, 1, 1]} : vector<16x18x384xbf16> to vector<16x16x384xbf16>
    %44 = vector.shape_cast %43 : vector<16x16x384xbf16> to vector<256x384xbf16>
    %c0_34 = arith.constant 0 : index
    %c2_35 = arith.constant 2 : index
    %c0_36 = arith.constant 0 : index
    %c0_37 = arith.constant 0 : index
    %45 = vector.load %arg9[%c0_34, %c2_35, %c0_36, %c0_37] : memref<1x3x384x128xbf16, #tpu.memory_space<vmem>>, vector<1x1x384x128xbf16>
    %46 = vector.shape_cast %45 : vector<1x1x384x128xbf16> to vector<384x128xbf16>
    %cst_38 = arith.constant dense<0.000000e+00> : vector<256x128xf32>
    %47 = tpu.matmul %44, %46, %cst_38 {dimension_numbers = #tpu.dot_dimension_numbers<[1], [0], [0], [1], [0, 0, 1, 1], [], []>} : vector<256x384xbf16>, vector<384x128xbf16>, vector<256x128xf32> -> vector<256x128xf32>
    %48 = arith.addf %42, %47 : vector<256x128xf32>
    %c0_39 = arith.constant 0 : index
    %c0_40 = arith.constant 0 : index
    %c0_41 = arith.constant 0 : index
    %49 = vector.load %arg10[%c0_39, %c0_40, %c0_41] : memref<1x1x128xf32, #tpu.memory_space<vmem>>, vector<1x1x128xf32>
    %50 = vector.shape_cast %49 : vector<1x1x128xf32> to vector<1x128xf32>
    %51 = vector.broadcast %50 : vector<1x128xf32> to vector<256x128xf32>
    %52 = arith.mulf %48, %51 : vector<256x128xf32>
    %c0_42 = arith.constant 0 : index
    %c0_43 = arith.constant 0 : index
    %c0_44 = arith.constant 0 : index
    %53 = vector.load %arg11[%c0_42, %c0_43, %c0_44] : memref<1x1x128xf32, #tpu.memory_space<vmem>>, vector<1x1x128xf32>
    %54 = vector.shape_cast %53 : vector<1x1x128xf32> to vector<1x128xf32>
    %55 = vector.broadcast %54 : vector<1x128xf32> to vector<256x128xf32>
    %56 = arith.addf %52, %55 : vector<256x128xf32>
    %cst_45 = arith.constant 0.000000e+00 : f32
    %57 = vector.broadcast %cst_45 : f32 to vector<256x128xf32>
    %58 = arith.subf %57, %56 : vector<256x128xf32>
    %59 = math.exp %58 : vector<256x128xf32>
    %cst_46 = arith.constant 1.000000e+00 : f32
    %60 = vector.broadcast %cst_46 : f32 to vector<256x128xf32>
    %61 = arith.addf %60, %59 : vector<256x128xf32>
    %62 = tpu.reciprocal %61 {approx = true} : vector<256x128xf32> -> vector<256x128xf32>
    %63 = arith.mulf %56, %62 : vector<256x128xf32>
    %64 = arith.addf %63, %3 : vector<256x128xf32>
    %c0_47 = arith.constant 0 : index
    %c0_48 = arith.constant 0 : index
    %65 = vector.load %arg23[%c0_47, %c0_48] : memref<256x128xf32, #tpu.memory_space<vmem>>, vector<256x128xf32>
    tpu.vector_store %arg23[%c0_47, %c0_48], %64 {strides = array<i32>} : memref<256x128xf32, #tpu.memory_space<vmem>>, vector<256x128xf32>,
    %c1_i32 = arith.constant 1 : i32
    %66 = arith.cmpi eq, %arg1, %c1_i32 : i32
    %67 = arith.extui %66 : i1 to i32
    %c0_i32_49 = arith.constant 0 : i32
    %68 = arith.cmpi ne, %67, %c0_i32_49 : i32
    scf.if %68 {
      %69 = arith.truncf %64 : vector<256x128xf32> to vector<256x128xbf16>
      %c0_50 = arith.constant 0 : index
      %c0_51 = arith.constant 0 : index
      %70 = vector.load %arg12[%c0_50, %c0_51] : memref<128x128xbf16, #tpu.memory_space<vmem>>, vector<128x128xbf16>
      %cst_52 = arith.constant dense<0.000000e+00> : vector<256x128xf32>
      %71 = tpu.matmul %69, %70, %cst_52 {dimension_numbers = #tpu.dot_dimension_numbers<[1], [0], [0], [1], [0, 0, 1, 1], [], []>} : vector<256x128xbf16>, vector<128x128xbf16>, vector<256x128xf32> -> vector<256x128xf32>
      %c0_53 = arith.constant 0 : index
      %c0_54 = arith.constant 0 : index
      %c0_55 = arith.constant 0 : index
      %72 = vector.load %arg2[%c0_53, %c0_54, %c0_55] : memref<1x256x8xbf16, #tpu.memory_space<vmem>>, vector<1x256x8xbf16>
      %73 = vector.shape_cast %72 : vector<1x256x8xbf16> to vector<256x8xbf16>
      %c0_56 = arith.constant 0 : index
      %c0_57 = arith.constant 0 : index
      %74 = vector.load %arg13[%c0_56, %c0_57] : memref<8x128xbf16, #tpu.memory_space<vmem>>, vector<8x128xbf16>
      %cst_58 = arith.constant dense<0.000000e+00> : vector<256x128xf32>
      %75 = tpu.matmul %73, %74, %cst_58 {dimension_numbers = #tpu.dot_dimension_numbers<[1], [0], [0], [1], [0, 0, 1, 1], [], []>} : vector<256x8xbf16>, vector<8x128xbf16>, vector<256x128xf32> -> vector<256x128xf32>
      %c0_59 = arith.constant 0 : index
      %c0_60 = arith.constant 0 : index
      %76 = vector.load %arg14[%c0_59, %c0_60] : memref<1x128xf32, #tpu.memory_space<vmem>>, vector<1x128xf32>
      %77 = vector.broadcast %76 : vector<1x128xf32> to vector<256x128xf32>
      %78 = arith.mulf %71, %77 : vector<256x128xf32>
      %c0_61 = arith.constant 0 : index
      %c0_62 = arith.constant 0 : index
      %79 = vector.load %arg15[%c0_61, %c0_62] : memref<1x128xf32, #tpu.memory_space<vmem>>, vector<1x128xf32>
      %80 = vector.broadcast %79 : vector<1x128xf32> to vector<256x128xf32>
      %81 = arith.addf %78, %80 : vector<256x128xf32>
      %cst_63 = arith.constant 0.000000e+00 : f32
      %82 = vector.broadcast %cst_63 : f32 to vector<256x128xf32>
      %83 = arith.subf %82, %81 : vector<256x128xf32>
      %84 = math.exp %83 : vector<256x128xf32>
      %cst_64 = arith.constant 1.000000e+00 : f32
      %85 = vector.broadcast %cst_64 : f32 to vector<256x128xf32>
      %86 = arith.addf %85, %84 : vector<256x128xf32>
      %87 = tpu.reciprocal %86 {approx = true} : vector<256x128xf32> -> vector<256x128xf32>
      %88 = arith.mulf %81, %87 : vector<256x128xf32>
      %89 = arith.truncf %88 : vector<256x128xf32> to vector<256x128xbf16>
      %c0_65 = arith.constant 0 : index
      %c0_66 = arith.constant 0 : index
      %90 = vector.load %arg16[%c0_65, %c0_66] : memref<1x128xf32, #tpu.memory_space<vmem>>, vector<1x128xf32>
      %91 = vector.broadcast %90 : vector<1x128xf32> to vector<256x128xf32>
      %92 = arith.mulf %75, %91 : vector<256x128xf32>
      %c0_67 = arith.constant 0 : index
      %c0_68 = arith.constant 0 : index
      %93 = vector.load %arg17[%c0_67, %c0_68] : memref<1x128xf32, #tpu.memory_space<vmem>>, vector<1x128xf32>
      %94 = vector.broadcast %93 : vector<1x128xf32> to vector<256x128xf32>
      %95 = arith.addf %92, %94 : vector<256x128xf32>
      %cst_69 = arith.constant 0.000000e+00 : f32
      %96 = vector.broadcast %cst_69 : f32 to vector<256x128xf32>
      %97 = arith.subf %96, %95 : vector<256x128xf32>
      %98 = math.exp %97 : vector<256x128xf32>
      %cst_70 = arith.constant 1.000000e+00 : f32
      %99 = vector.broadcast %cst_70 : f32 to vector<256x128xf32>
      %100 = arith.addf %99, %98 : vector<256x128xf32>
      %101 = tpu.reciprocal %100 {approx = true} : vector<256x128xf32> -> vector<256x128xf32>
      %102 = arith.mulf %95, %101 : vector<256x128xf32>
      %103 = arith.truncf %102 : vector<256x128xf32> to vector<256x128xbf16>
      %c0_71 = arith.constant 0 : index
      %c0_72 = arith.constant 0 : index
      %104 = vector.load %arg18[%c0_71, %c0_72] : memref<128x128xbf16, #tpu.memory_space<vmem>>, vector<128x128xbf16>
      %cst_73 = arith.constant dense<0.000000e+00> : vector<256x128xf32>
      %105 = tpu.matmul %89, %104, %cst_73 {dimension_numbers = #tpu.dot_dimension_numbers<[1], [0], [0], [1], [0, 0, 1, 1], [], []>} : vector<256x128xbf16>, vector<128x128xbf16>, vector<256x128xf32> -> vector<256x128xf32>
      %c0_74 = arith.constant 0 : index
      %c0_75 = arith.constant 0 : index
      %106 = vector.load %arg19[%c0_74, %c0_75] : memref<128x128xbf16, #tpu.memory_space<vmem>>, vector<128x128xbf16>
      %cst_76 = arith.constant dense<0.000000e+00> : vector<256x128xf32>
      %107 = tpu.matmul %103, %106, %cst_76 {dimension_numbers = #tpu.dot_dimension_numbers<[1], [0], [0], [1], [0, 0, 1, 1], [], []>} : vector<256x128xbf16>, vector<128x128xbf16>, vector<256x128xf32> -> vector<256x128xf32>
      %108 = arith.addf %105, %107 : vector<256x128xf32>
      %c0_77 = arith.constant 0 : index
      %c0_78 = arith.constant 0 : index
      %109 = vector.load %arg20[%c0_77, %c0_78] : memref<1x128xf32, #tpu.memory_space<vmem>>, vector<1x128xf32>
      %110 = vector.broadcast %109 : vector<1x128xf32> to vector<256x128xf32>
      %111 = arith.mulf %108, %110 : vector<256x128xf32>
      %c0_79 = arith.constant 0 : index
      %c0_80 = arith.constant 0 : index
      %112 = vector.load %arg21[%c0_79, %c0_80] : memref<1x128xf32, #tpu.memory_space<vmem>>, vector<1x128xf32>
      %113 = vector.broadcast %112 : vector<1x128xf32> to vector<256x128xf32>
      %114 = arith.addf %111, %113 : vector<256x128xf32>
      %cst_81 = arith.constant 0.000000e+00 : f32
      %115 = vector.broadcast %cst_81 : f32 to vector<256x128xf32>
      %116 = arith.subf %115, %114 : vector<256x128xf32>
      %117 = math.exp %116 : vector<256x128xf32>
      %cst_82 = arith.constant 1.000000e+00 : f32
      %118 = vector.broadcast %cst_82 : f32 to vector<256x128xf32>
      %119 = arith.addf %118, %117 : vector<256x128xf32>
      %120 = tpu.reciprocal %119 {approx = true} : vector<256x128xf32> -> vector<256x128xf32>
      %121 = arith.mulf %114, %120 : vector<256x128xf32>
      %122 = arith.truncf %121 : vector<256x128xf32> to vector<256x128xbf16>
      %c0_83 = arith.constant 0 : index
      %c0_84 = arith.constant 0 : index
      %c0_85 = arith.constant 0 : index
      %123 = vector.load %arg22[%c0_83, %c0_84, %c0_85] : memref<1x256x128xbf16, #tpu.memory_space<vmem>>, vector<1x256x128xbf16>
      %124 = vector.shape_cast %123 : vector<1x256x128xbf16> to vector<256x128xbf16>
      %125 = vector.shape_cast %122 : vector<256x128xbf16> to vector<1x256x128xbf16>
      tpu.vector_store %arg22[%c0_83, %c0_84, %c0_85], %125 {strides = array<i32>} : memref<1x256x128xbf16, #tpu.memory_space<vmem>>, vector<1x256x128xbf16>,
    } else {
    }
    return
  }
  func.func @transform_0(%arg0: i32, %arg1: i32) -> (i32, i32, i32) {
    %c0_i32 = arith.constant 0 : i32
    %c0_i32_0 = arith.constant 0 : i32
    %c0_i32_1 = arith.constant 0 : i32
    return %arg0, %c0_i32, %c0_i32_0 : i32, i32, i32
  }
  func.func @transform_1(%arg0: i32, %arg1: i32) -> (i32, i32) {
    %c0_i32 = arith.constant 0 : i32
    %c0_i32_0 = arith.constant 0 : i32
    %c0_i32_1 = arith.constant 0 : i32
    return %c0_i32, %c0_i32_0 : i32, i32
  }
  func.func @transform_2(%arg0: i32, %arg1: i32) -> (i32, i32) {
    %c0_i32 = arith.constant 0 : i32
    %c0_i32_0 = arith.constant 0 : i32
    %c0_i32_1 = arith.constant 0 : i32
    return %c0_i32, %c0_i32_0 : i32, i32
  }
  func.func @transform_3(%arg0: i32, %arg1: i32) -> (i32, i32) {
    %c0_i32 = arith.constant 0 : i32
    %c0_i32_0 = arith.constant 0 : i32
    %c0_i32_1 = arith.constant 0 : i32
    return %c0_i32, %c0_i32_0 : i32, i32
  }
  func.func @transform_4(%arg0: i32, %arg1: i32) -> (i32, i32, i32) {
    %c0_i32 = arith.constant 0 : i32
    %c0_i32_0 = arith.constant 0 : i32
    %c0_i32_1 = arith.constant 0 : i32
    return %arg1, %c0_i32, %c0_i32_0 : i32, i32, i32
  }
  func.func @transform_5(%arg0: i32, %arg1: i32) -> (i32, i32, i32) {
    %c0_i32 = arith.constant 0 : i32
    %c0_i32_0 = arith.constant 0 : i32
    %c0_i32_1 = arith.constant 0 : i32
    return %arg1, %c0_i32, %c0_i32_0 : i32, i32, i32
  }
  func.func @transform_6(%arg0: i32, %arg1: i32) -> (i32, i32, i32) {
    %c0_i32 = arith.constant 0 : i32
    %c0_i32_0 = arith.constant 0 : i32
    %c0_i32_1 = arith.constant 0 : i32
    return %arg1, %c0_i32, %c0_i32_0 : i32, i32, i32
  }
  func.func @transform_7(%arg0: i32, %arg1: i32) -> (i32, i32, i32, i32) {
    %c0_i32 = arith.constant 0 : i32
    %c0_i32_0 = arith.constant 0 : i32
    %c0_i32_1 = arith.constant 0 : i32
    %c0_i32_2 = arith.constant 0 : i32
    return %arg1, %c0_i32, %c0_i32_0, %c0_i32_1 : i32, i32, i32, i32
  }
  func.func @transform_8(%arg0: i32, %arg1: i32) -> (i32, i32, i32) {
    %c0_i32 = arith.constant 0 : i32
    %c0_i32_0 = arith.constant 0 : i32
    %c0_i32_1 = arith.constant 0 : i32
    return %arg1, %c0_i32, %c0_i32_0 : i32, i32, i32
  }
  func.func @transform_9(%arg0: i32, %arg1: i32) -> (i32, i32, i32) {
    %c0_i32 = arith.constant 0 : i32
    %c0_i32_0 = arith.constant 0 : i32
    %c0_i32_1 = arith.constant 0 : i32
    return %arg1, %c0_i32, %c0_i32_0 : i32, i32, i32
  }
  func.func @transform_10(%arg0: i32, %arg1: i32) -> (i32, i32) {
    %c0_i32 = arith.constant 0 : i32
    %c0_i32_0 = arith.constant 0 : i32
    %c0_i32_1 = arith.constant 0 : i32
    return %c0_i32, %c0_i32_0 : i32, i32
  }
  func.func @transform_11(%arg0: i32, %arg1: i32) -> (i32, i32) {
    %c0_i32 = arith.constant 0 : i32
    %c0_i32_0 = arith.constant 0 : i32
    %c0_i32_1 = arith.constant 0 : i32
    return %c0_i32, %c0_i32_0 : i32, i32
  }
  func.func @transform_12(%arg0: i32, %arg1: i32) -> (i32, i32) {
    %c0_i32 = arith.constant 0 : i32
    %c0_i32_0 = arith.constant 0 : i32
    %c0_i32_1 = arith.constant 0 : i32
    return %c0_i32, %c0_i32_0 : i32, i32
  }
  func.func @transform_13(%arg0: i32, %arg1: i32) -> (i32, i32) {
    %c0_i32 = arith.constant 0 : i32
    %c0_i32_0 = arith.constant 0 : i32
    %c0_i32_1 = arith.constant 0 : i32
    return %c0_i32, %c0_i32_0 : i32, i32
  }
  func.func @transform_14(%arg0: i32, %arg1: i32) -> (i32, i32) {
    %c0_i32 = arith.constant 0 : i32
    %c0_i32_0 = arith.constant 0 : i32
    %c0_i32_1 = arith.constant 0 : i32
    return %c0_i32, %c0_i32_0 : i32, i32
  }
  func.func @transform_15(%arg0: i32, %arg1: i32) -> (i32, i32) {
    %c0_i32 = arith.constant 0 : i32
    %c0_i32_0 = arith.constant 0 : i32
    %c0_i32_1 = arith.constant 0 : i32
    return %c0_i32, %c0_i32_0 : i32, i32
  }
  func.func @transform_16(%arg0: i32, %arg1: i32) -> (i32, i32) {
    %c0_i32 = arith.constant 0 : i32
    %c0_i32_0 = arith.constant 0 : i32
    %c0_i32_1 = arith.constant 0 : i32
    return %c0_i32, %c0_i32_0 : i32, i32
  }
  func.func @transform_17(%arg0: i32, %arg1: i32) -> (i32, i32) {
    %c0_i32 = arith.constant 0 : i32
    %c0_i32_0 = arith.constant 0 : i32
    %c0_i32_1 = arith.constant 0 : i32
    return %c0_i32, %c0_i32_0 : i32, i32
  }
  func.func @transform_18(%arg0: i32, %arg1: i32) -> (i32, i32) {
    %c0_i32 = arith.constant 0 : i32
    %c0_i32_0 = arith.constant 0 : i32
    %c0_i32_1 = arith.constant 0 : i32
    return %c0_i32, %c0_i32_0 : i32, i32
  }
  func.func @transform_19(%arg0: i32, %arg1: i32) -> (i32, i32) {
    %c0_i32 = arith.constant 0 : i32
    %c0_i32_0 = arith.constant 0 : i32
    %c0_i32_1 = arith.constant 0 : i32
    return %c0_i32, %c0_i32_0 : i32, i32
  }
  func.func @transform_20(%arg0: i32, %arg1: i32) -> (i32, i32, i32) {
    %c0_i32 = arith.constant 0 : i32
    %c0_i32_0 = arith.constant 0 : i32
    %c0_i32_1 = arith.constant 0 : i32
    return %arg0, %c0_i32, %c0_i32_0 : i32, i32, i32
  }
}

</mosaic_0001>

<llo_original>
// kernel: bottleneck_csp_pallas.1
$region0: #{bottleneck_csp_pallas.1}
  #allocation0 [shape = 'u32[]', space=smem, size = 0x4, offset = 0x4, fixed_abs, tag = 'smem constant byte address 0x4 - core index']
  #allocation1 [shape = 'u32[144,128]{1,0:T(1,128)}', space=vmem, size = 0x12000, scoped, tag = 'internal scratch']
  #allocation2 [shape = 'f32[256,128]{1,0:T(8,128)}', space=vmem, size = 0x20000, scoped, tag = 'scratch operand']
  #allocation3 [shape = 'bf16[18,18,128]{2,1,0:T(8,128)(2,1)}', space=vmem, size = 0x1b000, scoped, tag = 'scratch operand']
  %s0 = inlined_call_operand.vmem [shape: bf16[2,256,8], index: 0, kind: input, shape index: {}]
  %s1 = inlined_call_operand.vmem [shape: bf16[8,128], index: 1, kind: input, shape index: {}]
  %s2 = inlined_call_operand.vmem [shape: f32[1,128], index: 2, kind: input, shape index: {}]
  %s3 = inlined_call_operand.vmem [shape: f32[1,128], index: 3, kind: input, shape index: {}]
  %s4 = inlined_call_operand.vmem [shape: bf16[2,128,128], index: 4, kind: input, shape index: {}]
  %s5 = inlined_call_operand.vmem [shape: f32[2,1,128], index: 5, kind: input, shape index: {}]
  %s6 = inlined_call_operand.vmem [shape: f32[2,1,128], index: 6, kind: input, shape index: {}]
  %s7 = inlined_call_operand.hbm [shape: bf16[2,3,384,128], index: 7, kind: input, shape index: {}]
  %s8 = inlined_call_operand.vmem [shape: f32[2,1,128], index: 8, kind: input, shape index: {}]
  %s9 = inlined_call_operand.vmem [shape: f32[2,1,128], index: 9, kind: input, shape index: {}]
  %s10 = inlined_call_operand.vmem [shape: bf16[128,128], index: 10, kind: input, shape index: {}]
  %s11 = inlined_call_operand.vmem [shape: bf16[8,128], index: 11, kind: input, shape index: {}]
  %s12 = inlined_call_operand.vmem [shape: f32[1,128], index: 12, kind: input, shape index: {}]
  %s13 = inlined_call_operand.vmem [shape: f32[1,128], index: 13, kind: input, shape index: {}]
  %s14 = inlined_call_operand.vmem [shape: f32[1,128], index: 14, kind: input, shape index: {}]
  %s15 = inlined_call_operand.vmem [shape: f32[1,128], index: 15, kind: input, shape index: {}]
  %s16 = inlined_call_operand.vmem [shape: bf16[128,128], index: 16, kind: input, shape index: {}]
  %s17 = inlined_call_operand.vmem [shape: bf16[128,128], index: 17, kind: input, shape index: {}]
  %s18 = inlined_call_operand.vmem [shape: f32[1,128], index: 18, kind: input, shape index: {}]
  %s19 = inlined_call_operand.vmem [shape: f32[1,128], index: 19, kind: input, shape index: {}]
  %s20 = inlined_call_operand.vmem [shape: bf16[2,256,128], index: 20, kind: output, shape index: {}]
  %s21 = sld [smem:[#allocation0]]
  $region125: #{bottleneck_csp_pallas.1} parent=0
    _
  %s23 = ssub.s32 1, %s21
  %s24 = scalar_select 0, %s23, %s21
  $region1: #{bottleneck_csp_pallas.1} parent=0
    #allocation4 [shape = 'u8[589824]{0}', space=vmem, size = 0x90000, scoped, tag = 'input window, operand 7']
    #allocation5 [shape = 's32[2]{0}', space=sflag, size = 0x8, scoped, tag = 'scoped memory for bottleneck_csp_pallas.1']
    %25 = vsyncpa [#allocation5], 0
    %s26 = scalar_lea.sflag [#allocation5], 1
    %27 = vsyncpa %s26, 0
    loop: start=0, step=1, limit=6
    $region2: #{bottleneck_csp_pallas.1} parent=1 // loop_pre_header
      _
    $region3: #{bottleneck_csp_pallas.1} parent=1 // loop_header
      %s29 = sphi 0, %s33
      %p30 = scmp.ge.s32.totalorder %s29, 6
      %s36 = sphi 0, %s48
      %s37 = sphi 0, %s44
      %s38 = sphi 0, %s36
      %s39 = sphi 0, %s37
      %s40 = sphi 0, %s38
      %s41 = sphi 0, %s39
      %s51 = sphi 0, %s53
      %s54 = sphi 0, %s51
      %s55 = sphi 0, %s54
      %s71 = sphi 0, %s55
      %s75 = sphi 0, %s75
      %s77 = sphi 0, %s75
      %s78 = sphi 0, %s77
      %s92 = sphi 0, %s78
      %s96 = sphi 0, %s96
      %s98 = sphi 0, %s96
      %s99 = sphi 0, %s98
      %s113 = sphi 0, %s99
      %s117 = sphi 0, %s117
      %s119 = sphi 0, %s117
      %s120 = sphi 0, %s119
      %s134 = sphi 0, %s120
      %s140 = sphi 0, %s142
      %s143 = sphi 0, %s140
      %s144 = sphi 0, %s143
      %s160 = sphi 0, %s144
      %s166 = sphi 0, %s168
      %s169 = sphi 0, %s166
      %s170 = sphi 0, %s169
      %s186 = sphi 0, %s170
      %s192 = sphi 0, %s194
      %s195 = sphi 0, %s192
      %s196 = sphi 0, %s195
      %s212 = sphi 0, %s196
      %s218 = sphi 0, %s220
      %s221 = sphi 0, %s218
      %s222 = sphi 0, %s221
      %s238 = sphi 0, %s222
      %s244 = sphi 0, %s246
      %s247 = sphi 0, %s244
      %s248 = sphi 0, %s247
      %s264 = sphi 0, %s248
      %s270 = sphi 0, %s272
      %s273 = sphi 0, %s270
      %s274 = sphi 0, %s273
      %s290 = sphi 0, %s274
      %s294 = sphi 0, %s294
      %s296 = sphi 0, %s294
      %s297 = sphi 0, %s296
      %s311 = sphi 0, %s297
      %s315 = sphi 0, %s315
      %s317 = sphi 0, %s315
      %s318 = sphi 0, %s317
      %s332 = sphi 0, %s318
      %s336 = sphi 0, %s336
      %s338 = sphi 0, %s336
      %s339 = sphi 0, %s338
      %s353 = sphi 0, %s339
      %s357 = sphi 0, %s357
      %s359 = sphi 0, %s357
      %s360 = sphi 0, %s359
      %s374 = sphi 0, %s360
      %s378 = sphi 0, %s378
      %s380 = sphi 0, %s378
      %s381 = sphi 0, %s380
      %s395 = sphi 0, %s381
      %s399 = sphi 0, %s399
      %s401 = sphi 0, %s399
      %s402 = sphi 0, %s401
      %s416 = sphi 0, %s402
      %s420 = sphi 0, %s420
      %s422 = sphi 0, %s420
      %s423 = sphi 0, %s422
      %s437 = sphi 0, %s423
      %s441 = sphi 0, %s441
      %s443 = sphi 0, %s441
      %s444 = sphi 0, %s443
      %s458 = sphi 0, %s444
      %s462 = sphi 0, %s462
      %s464 = sphi 0, %s462
      %s465 = sphi 0, %s464
      %s479 = sphi 0, %s465
      %s483 = sphi 0, %s483
      %s485 = sphi 0, %s483
      %s486 = sphi 0, %s485
      %s500 = sphi 0, %s486
      %s506 = sphi 0, %s508
      %s509 = sphi 0, %s506
      %s510 = sphi 0, %s509
      %s526 = sphi 0, %s510
    $region4: #{bottleneck_csp_pallas.1} parent=1 // loop_header_branch
      %32 = sbr.rel (%p30) target = $region8
    $region5: #{bottleneck_csp_pallas.1} parent=1 // loop_body
      %s34 = ssub.s32 %s29, 1
      %s35 = ssub.s32 %s29, 2
      %s42 = sadd.s32 1, %s37
      %p43 = scmp.ge.s32.totalorder %s42, 2
      %s44 = scalar_select %p43, 0, %s42
      %s45 = sadd.s32 1, %s36
      %s46 = scalar_select %p43, %s45, %s36
      %p47 = scmp.ge.s32.totalorder %s46, 2
      %s48 = scalar_select %p47, 0, %s46
      %s49 = ssub.s32 %s36, %s48
      %p50 = scmp.eq.s32.totalorder %s49, 0
      %s52 = sadd.s32 %s51, 1
      %s53 = scalar_select %p50, %s51, %s52
      %p56 = pneg %p50
      %p57 = scmp.eq.s32.totalorder %s29, 3
      %p58 = por %p56, %p57
      %p59 = scmp.ne.s32.totalorder %s51, %s54
      %p60 = scmp.eq.s32.totalorder %s29, 0
      %p61 = por %p59, %p60
      %p62 = scmp.ne.s32.totalorder %s51, %s54
      %p63 = scmp.eq.s32.totalorder %s34, 3
      %p64 = por %p62, %p63
      %p65 = scmp.ne.s32.totalorder %s54, %s55
      %p66 = scmp.eq.s32.totalorder %s34, 0
      %p67 = por %p65, %p66
      %p68 = scmp.ne.s32.totalorder %s54, %s55
      %p69 = scmp.eq.s32.totalorder %s35, 3
      %p70 = por %p68, %p69
      %p72 = scmp.ne.s32.totalorder %s55, %s71
      %p73 = scmp.eq.s32.totalorder %s35, 0
      %p74 = por %p72, %p73
      %s76 = sadd.s32 %s75, 1
      %p79 = scmp.eq.s32.totalorder %s29, 3
      %p80 = scmp.ne.s32.totalorder %s75, %s77
      %p81 = scmp.eq.s32.totalorder %s29, 0
      %p82 = por %p80, %p81
      %p83 = scmp.ne.s32.totalorder %s75, %s77
      %p84 = scmp.eq.s32.totalorder %s34, 3
      %p85 = por %p83, %p84
      %p86 = scmp.ne.s32.totalorder %s77, %s78
      %p87 = scmp.eq.s32.totalorder %s34, 0
      %p88 = por %p86, %p87
      %p89 = scmp.ne.s32.totalorder %s77, %s78
      %p90 = scmp.eq.s32.totalorder %s35, 3
      %p91 = por %p89, %p90
      %p93 = scmp.ne.s32.totalorder %s78, %s92
      %p94 = scmp.eq.s32.totalorder %s35, 0
      %p95 = por %p93, %p94
      %s97 = sadd.s32 %s96, 1
      %p100 = scmp.eq.s32.totalorder %s29, 3
      %p101 = scmp.ne.s32.totalorder %s96, %s98
      %p102 = scmp.eq.s32.totalorder %s29, 0
      %p103 = por %p101, %p102
      %p104 = scmp.ne.s32.totalorder %s96, %s98
      %p105 = scmp.eq.s32.totalorder %s34, 3
      %p106 = por %p104, %p105
      %p107 = scmp.ne.s32.totalorder %s98, %s99
      %p108 = scmp.eq.s32.totalorder %s34, 0
      %p109 = por %p107, %p108
      %p110 = scmp.ne.s32.totalorder %s98, %s99
      %p111 = scmp.eq.s32.totalorder %s35, 3
      %p112 = por %p110, %p111
      %p114 = scmp.ne.s32.totalorder %s99, %s113
      %p115 = scmp.eq.s32.totalorder %s35, 0
      %p116 = por %p114, %p115
      %s118 = sadd.s32 %s117, 1
      %p121 = scmp.eq.s32.totalorder %s29, 3
      %p122 = scmp.ne.s32.totalorder %s117, %s119
      %p123 = scmp.eq.s32.totalorder %s29, 0
      %p124 = por %p122, %p123
      %p125 = scmp.ne.s32.totalorder %s117, %s119
      %p126 = scmp.eq.s32.totalorder %s34, 3
      %p127 = por %p125, %p126
      %p128 = scmp.ne.s32.totalorder %s119, %s120
      %p129 = scmp.eq.s32.totalorder %s34, 0
      %p130 = por %p128, %p129
      %p131 = scmp.ne.s32.totalorder %s119, %s120
      %p132 = scmp.eq.s32.totalorder %s35, 3
      %p133 = por %p131, %p132
      %p135 = scmp.ne.s32.totalorder %s120, %s134
      %p136 = scmp.eq.s32.totalorder %s35, 0
      %p137 = por %p135, %p136
      %s138 = ssub.s32 %s37, %s44
      %p139 = scmp.eq.s32.totalorder %s138, 0
      %s141 = sadd.s32 %s140, 1
      %s142 = scalar_select %p139, %s140, %s141
      %p145 = pneg %p139
      %p146 = scmp.eq.s32.totalorder %s29, 3
      %p147 = por %p145, %p146
      %p148 = scmp.ne.s32.totalorder %s140, %s143
      %p149 = scmp.eq.s32.totalorder %s29, 0
      %p150 = por %p148, %p149
      %p151 = scmp.ne.s32.totalorder %s140, %s143
      %p152 = scmp.eq.s32.totalorder %s34, 3
      %p153 = por %p151, %p152
      %p154 = scmp.ne.s32.totalorder %s143, %s144
      %p155 = scmp.eq.s32.totalorder %s34, 0
      %p156 = por %p154, %p155
      %p157 = scmp.ne.s32.totalorder %s143, %s144
      %p158 = scmp.eq.s32.totalorder %s35, 3
      %p159 = por %p157, %p158
      %p161 = scmp.ne.s32.totalorder %s144, %s160
      %p162 = scmp.eq.s32.totalorder %s35, 0
      %p163 = por %p161, %p162
      %s164 = ssub.s32 %s37, %s44
      %p165 = scmp.eq.s32.totalorder %s164, 0
      %s167 = sadd.s32 %s166, 1
      %s168 = scalar_select %p165, %s166, %s167
      %p171 = pneg %p165
      %p172 = scmp.eq.s32.totalorder %s29, 3
      %p173 = por %p171, %p172
      %p174 = scmp.ne.s32.totalorder %s166, %s169
      %p175 = scmp.eq.s32.totalorder %s29, 0
      %p176 = por %p174, %p175
      %p177 = scmp.ne.s32.totalorder %s166, %s169
      %p178 = scmp.eq.s32.totalorder %s34, 3
      %p179 = por %p177, %p178
      %p180 = scmp.ne.s32.totalorder %s169, %s170
      %p181 = scmp.eq.s32.totalorder %s34, 0
      %p182 = por %p180, %p181
      %p183 = scmp.ne.s32.totalorder %s169, %s170
      %p184 = scmp.eq.s32.totalorder %s35, 3
      %p185 = por %p183, %p184
      %p187 = scmp.ne.s32.totalorder %s170, %s186
      %p188 = scmp.eq.s32.totalorder %s35, 0
      %p189 = por %p187, %p188
      %s190 = ssub.s32 %s37, %s44
      %p191 = scmp.eq.s32.totalorder %s190, 0
      %s193 = sadd.s32 %s192, 1
      %s194 = scalar_select %p191, %s192, %s193
      %p197 = pneg %p191
      %p198 = scmp.eq.s32.totalorder %s29, 3
      %p199 = por %p197, %p198
      %p200 = scmp.ne.s32.totalorder %s192, %s195
      %p201 = scmp.eq.s32.totalorder %s29, 0
      %p202 = por %p200, %p201
      %p203 = scmp.ne.s32.totalorder %s192, %s195
      %p204 = scmp.eq.s32.totalorder %s34, 3
      %p205 = por %p203, %p204
      %p206 = scmp.ne.s32.totalorder %s195, %s196
      %p207 = scmp.eq.s32.totalorder %s34, 0
      %p208 = por %p206, %p207
      %p209 = scmp.ne.s32.totalorder %s195, %s196
      %p210 = scmp.eq.s32.totalorder %s35, 3
      %p211 = por %p209, %p210
      %p213 = scmp.ne.s32.totalorder %s196, %s212
      %p214 = scmp.eq.s32.totalorder %s35, 0
      %p215 = por %p213, %p214
      %s216 = ssub.s32 %s37, %s44
      %p217 = scmp.eq.s32.totalorder %s216, 0
      %s219 = sadd.s32 %s218, 1
      %s220 = scalar_select %p217, %s218, %s219
      %p223 = pneg %p217
      %p224 = scmp.eq.s32.totalorder %s29, 3
      %p225 = por %p223, %p224
      %p226 = scmp.ne.s32.totalorder %s218, %s221
      %p227 = scmp.eq.s32.totalorder %s29, 0
      %p228 = por %p226, %p227
      %p229 = scmp.ne.s32.totalorder %s218, %s221
      %p230 = scmp.eq.s32.totalorder %s34, 3
      %p231 = por %p229, %p230
      %p232 = scmp.ne.s32.totalorder %s221, %s222
      %p233 = scmp.eq.s32.totalorder %s34, 0
      %p234 = por %p232, %p233
      %p235 = scmp.ne.s32.totalorder %s221, %s222
      %p236 = scmp.eq.s32.totalorder %s35, 3
      %p237 = por %p235, %p236
      %p239 = scmp.ne.s32.totalorder %s222, %s238
      %p240 = scmp.eq.s32.totalorder %s35, 0
      %p241 = por %p239, %p240
      %s242 = ssub.s32 %s37, %s44
      %p243 = scmp.eq.s32.totalorder %s242, 0
      %s245 = sadd.s32 %s244, 1
      %s246 = scalar_select %p243, %s244, %s245
      %p249 = pneg %p243
      %p250 = scmp.eq.s32.totalorder %s29, 3
      %p251 = por %p249, %p250
      %p252 = scmp.ne.s32.totalorder %s244, %s247
      %p253 = scmp.eq.s32.totalorder %s29, 0
      %p254 = por %p252, %p253
      %p255 = scmp.ne.s32.totalorder %s244, %s247
      %p256 = scmp.eq.s32.totalorder %s34, 3
      %p257 = por %p255, %p256
      %p258 = scmp.ne.s32.totalorder %s247, %s248
      %p259 = scmp.eq.s32.totalorder %s34, 0
      %p260 = por %p258, %p259
      %p261 = scmp.ne.s32.totalorder %s247, %s248
      %p262 = scmp.eq.s32.totalorder %s35, 3
      %p263 = por %p261, %p262
      %p265 = scmp.ne.s32.totalorder %s248, %s264
      %p266 = scmp.eq.s32.totalorder %s35, 0
      %p267 = por %p265, %p266
      %s268 = ssub.s32 %s37, %s44
      %p269 = scmp.eq.s32.totalorder %s268, 0
      %s271 = sadd.s32 %s270, 1
      %s272 = scalar_select %p269, %s270, %s271
      %p275 = pneg %p269
      %p276 = scmp.eq.s32.totalorder %s29, 3
      %p277 = por %p275, %p276
      %p278 = scmp.ne.s32.totalorder %s270, %s273
      %p279 = scmp.eq.s32.totalorder %s29, 0
      %p280 = por %p278, %p279
      %p281 = scmp.ne.s32.totalorder %s270, %s273
      %p282 = scmp.eq.s32.totalorder %s34, 3
      %p283 = por %p281, %p282
      %p284 = scmp.ne.s32.totalorder %s273, %s274
      %p285 = scmp.eq.s32.totalorder %s34, 0
      %p286 = por %p284, %p285
      %p287 = scmp.ne.s32.totalorder %s273, %s274
      %p288 = scmp.eq.s32.totalorder %s35, 3
      %p289 = por %p287, %p288
      %p291 = scmp.ne.s32.totalorder %s274, %s290
      %p292 = scmp.eq.s32.totalorder %s35, 0
      %p293 = por %p291, %p292
      %s295 = sadd.s32 %s294, 1
      %p298 = scmp.eq.s32.totalorder %s29, 3
      %p299 = scmp.ne.s32.totalorder %s294, %s296
      %p300 = scmp.eq.s32.totalorder %s29, 0
      %p301 = por %p299, %p300
      %p302 = scmp.ne.s32.totalorder %s294, %s296
      %p303 = scmp.eq.s32.totalorder %s34, 3
      %p304 = por %p302, %p303
      %p305 = scmp.ne.s32.totalorder %s296, %s297
      %p306 = scmp.eq.s32.totalorder %s34, 0
      %p307 = por %p305, %p306
      %p308 = scmp.ne.s32.totalorder %s296, %s297
      %p309 = scmp.eq.s32.totalorder %s35, 3
      %p310 = por %p308, %p309
      %p312 = scmp.ne.s32.totalorder %s297, %s311
      %p313 = scmp.eq.s32.totalorder %s35, 0
      %p314 = por %p312, %p313
      %s316 = sadd.s32 %s315, 1
      %p319 = scmp.eq.s32.totalorder %s29, 3
      %p320 = scmp.ne.s32.totalorder %s315, %s317
      %p321 = scmp.eq.s32.totalorder %s29, 0
      %p322 = por %p320, %p321
      %p323 = scmp.ne.s32.totalorder %s315, %s317
      %p324 = scmp.eq.s32.totalorder %s34, 3
      %p325 = por %p323, %p324
      %p326 = scmp.ne.s32.totalorder %s317, %s318
      %p327 = scmp.eq.s32.totalorder %s34, 0
      %p328 = por %p326, %p327
      %p329 = scmp.ne.s32.totalorder %s317, %s318
      %p330 = scmp.eq.s32.totalorder %s35, 3
      %p331 = por %p329, %p330
      %p333 = scmp.ne.s32.totalorder %s318, %s332
      %p334 = scmp.eq.s32.totalorder %s35, 0
      %p335 = por %p333, %p334
      %s337 = sadd.s32 %s336, 1
      %p340 = scmp.eq.s32.totalorder %s29, 3
      %p341 = scmp.ne.s32.totalorder %s336, %s338
      %p342 = scmp.eq.s32.totalorder %s29, 0
      %p343 = por %p341, %p342
      %p344 = scmp.ne.s32.totalorder %s336, %s338
      %p345 = scmp.eq.s32.totalorder %s34, 3
      %p346 = por %p344, %p345
      %p347 = scmp.ne.s32.totalorder %s338, %s339
      %p348 = scmp.eq.s32.totalorder %s34, 0
      %p349 = por %p347, %p348
      %p350 = scmp.ne.s32.totalorder %s338, %s339
      %p351 = scmp.eq.s32.totalorder %s35, 3
      %p352 = por %p350, %p351
      %p354 = scmp.ne.s32.totalorder %s339, %s353
      %p355 = scmp.eq.s32.totalorder %s35, 0
      %p356 = por %p354, %p355
      %s358 = sadd.s32 %s357, 1
      %p361 = scmp.eq.s32.totalorder %s29, 3
      %p362 = scmp.ne.s32.totalorder %s357, %s359
      %p363 = scmp.eq.s32.totalorder %s29, 0
      %p364 = por %p362, %p363
      %p365 = scmp.ne.s32.totalorder %s357, %s359
      %p366 = scmp.eq.s32.totalorder %s34, 3
      %p367 = por %p365, %p366
      %p368 = scmp.ne.s32.totalorder %s359, %s360
      %p369 = scmp.eq.s32.totalorder %s34, 0
      %p370 = por %p368, %p369
      %p371 = scmp.ne.s32.totalorder %s359, %s360
      %p372 = scmp.eq.s32.totalorder %s35, 3
      %p373 = por %p371, %p372
      %p375 = scmp.ne.s32.totalorder %s360, %s374
      %p376 = scmp.eq.s32.totalorder %s35, 0
      %p377 = por %p375, %p376
      %s379 = sadd.s32 %s378, 1
      %p382 = scmp.eq.s32.totalorder %s29, 3
      %p383 = scmp.ne.s32.totalorder %s378, %s380
      %p384 = scmp.eq.s32.totalorder %s29, 0
      %p385 = por %p383, %p384
      %p386 = scmp.ne.s32.totalorder %s378, %s380
      %p387 = scmp.eq.s32.totalorder %s34, 3
      %p388 = por %p386, %p387
      %p389 = scmp.ne.s32.totalorder %s380, %s381
      %p390 = scmp.eq.s32.totalorder %s34, 0
      %p391 = por %p389, %p390
      %p392 = scmp.ne.s32.totalorder %s380, %s381
      %p393 = scmp.eq.s32.totalorder %s35, 3
      %p394 = por %p392, %p393
      %p396 = scmp.ne.s32.totalorder %s381, %s395
      %p397 = scmp.eq.s32.totalorder %s35, 0
      %p398 = por %p396, %p397
      %s400 = sadd.s32 %s399, 1
      %p403 = scmp.eq.s32.totalorder %s29, 3
      %p404 = scmp.ne.s32.totalorder %s399, %s401
      %p405 = scmp.eq.s32.totalorder %s29, 0
      %p406 = por %p404, %p405
      %p407 = scmp.ne.s32.totalorder %s399, %s401
      %p408 = scmp.eq.s32.totalorder %s34, 3
      %p409 = por %p407, %p408
      %p410 = scmp.ne.s32.totalorder %s401, %s402
      %p411 = scmp.eq.s32.totalorder %s34, 0
      %p412 = por %p410, %p411
      %p413 = scmp.ne.s32.totalorder %s401, %s402
      %p414 = scmp.eq.s32.totalorder %s35, 3
      %p415 = por %p413, %p414
      %p417 = scmp.ne.s32.totalorder %s402, %s416
      %p418 = scmp.eq.s32.totalorder %s35, 0
      %p419 = por %p417, %p418
      %s421 = sadd.s32 %s420, 1
      %p424 = scmp.eq.s32.totalorder %s29, 3
      %p425 = scmp.ne.s32.totalorder %s420, %s422
      %p426 = scmp.eq.s32.totalorder %s29, 0
      %p427 = por %p425, %p426
      %p428 = scmp.ne.s32.totalorder %s420, %s422
      %p429 = scmp.eq.s32.totalorder %s34, 3
      %p430 = por %p428, %p429
      %p431 = scmp.ne.s32.totalorder %s422, %s423
      %p432 = scmp.eq.s32.totalorder %s34, 0
      %p433 = por %p431, %p432
      %p434 = scmp.ne.s32.totalorder %s422, %s423
      %p435 = scmp.eq.s32.totalorder %s35, 3
      %p436 = por %p434, %p435
      %p438 = scmp.ne.s32.totalorder %s423, %s437
      %p439 = scmp.eq.s32.totalorder %s35, 0
      %p440 = por %p438, %p439
      %s442 = sadd.s32 %s441, 1
      %p445 = scmp.eq.s32.totalorder %s29, 3
      %p446 = scmp.ne.s32.totalorder %s441, %s443
      %p447 = scmp.eq.s32.totalorder %s29, 0
      %p448 = por %p446, %p447
      %p449 = scmp.ne.s32.totalorder %s441, %s443
      %p450 = scmp.eq.s32.totalorder %s34, 3
      %p451 = por %p449, %p450
      %p452 = scmp.ne.s32.totalorder %s443, %s444
      %p453 = scmp.eq.s32.totalorder %s34, 0
      %p454 = por %p452, %p453
      %p455 = scmp.ne.s32.totalorder %s443, %s444
      %p456 = scmp.eq.s32.totalorder %s35, 3
      %p457 = por %p455, %p456
      %p459 = scmp.ne.s32.totalorder %s444, %s458
      %p460 = scmp.eq.s32.totalorder %s35, 0
      %p461 = por %p459, %p460
      %s463 = sadd.s32 %s462, 1
      %p466 = scmp.eq.s32.totalorder %s29, 3
      %p467 = scmp.ne.s32.totalorder %s462, %s464
      %p468 = scmp.eq.s32.totalorder %s29, 0
      %p469 = por %p467, %p468
      %p470 = scmp.ne.s32.totalorder %s462, %s464
      %p471 = scmp.eq.s32.totalorder %s34, 3
      %p472 = por %p470, %p471
      %p473 = scmp.ne.s32.totalorder %s464, %s465
      %p474 = scmp.eq.s32.totalorder %s34, 0
      %p475 = por %p473, %p474
      %p476 = scmp.ne.s32.totalorder %s464, %s465
      %p477 = scmp.eq.s32.totalorder %s35, 3
      %p478 = por %p476, %p477
      %p480 = scmp.ne.s32.totalorder %s465, %s479
      %p481 = scmp.eq.s32.totalorder %s35, 0
      %p482 = por %p480, %p481
      %s484 = sadd.s32 %s483, 1
      %p487 = scmp.eq.s32.totalorder %s29, 3
      %p488 = scmp.ne.s32.totalorder %s483, %s485
      %p489 = scmp.eq.s32.totalorder %s29, 0
      %p490 = por %p488, %p489
      %p491 = scmp.ne.s32.totalorder %s483, %s485
      %p492 = scmp.eq.s32.totalorder %s34, 3
      %p493 = por %p491, %p492
      %p494 = scmp.ne.s32.totalorder %s485, %s486
      %p495 = scmp.eq.s32.totalorder %s34, 0
      %p496 = por %p494, %p495
      %p497 = scmp.ne.s32.totalorder %s485, %s486
      %p498 = scmp.eq.s32.totalorder %s35, 3
      %p499 = por %p497, %p498
      %p501 = scmp.ne.s32.totalorder %s486, %s500
      %p502 = scmp.eq.s32.totalorder %s35, 0
      %p503 = por %p501, %p502
      %s504 = ssub.s32 %s36, %s48
      %p505 = scmp.eq.s32.totalorder %s504, 0
      %s507 = sadd.s32 %s506, 1
      %s508 = scalar_select %p505, %s506, %s507
      %p511 = pneg %p505
      %p512 = scmp.eq.s32.totalorder %s29, 3
      %p513 = por %p511, %p512
      %p514 = scmp.ne.s32.totalorder %s506, %s509
      %p515 = scmp.eq.s32.totalorder %s29, 0
      %p516 = por %p514, %p515
      %p517 = scmp.ne.s32.totalorder %s506, %s509
      %p518 = scmp.eq.s32.totalorder %s34, 3
      %p519 = por %p517, %p518
      %p520 = scmp.ne.s32.totalorder %s509, %s510
      %p521 = scmp.eq.s32.totalorder %s34, 0
      %p522 = por %p520, %p521
      %p523 = scmp.ne.s32.totalorder %s509, %s510
      %p524 = scmp.eq.s32.totalorder %s35, 3
      %p525 = por %p523, %p524
      %p527 = scmp.ne.s32.totalorder %s510, %s526
      %p528 = scmp.eq.s32.totalorder %s35, 0
      %p529 = por %p527, %p528
      %p530 = scmp.le.s32.totalorder 1, %s29
      %p531 = scmp.lt.s32.totalorder %s29, 5
      %p532 = pnand %p530, %p531
      %p533 = pneg %p532
      // Predicated region
      $region9: #{bottleneck_csp_pallas.1} parent=5 // pred_check
        _
      $region10: #{bottleneck_csp_pallas.1} parent=5 // pred_check_branch
        %535 = sbr.rel (%p532) target = $region12
      $region11: #{bottleneck_csp_pallas.1} parent=5 // pred_region
        %s536 = ssub.s32 %s29, 1
        // Predicated region
        $region13: #{bottleneck_csp_pallas.1} parent=11 // pred_check
          %p537 = pneg %p88
        $region14: #{bottleneck_csp_pallas.1} parent=11 // pred_check_branch
          %539 = sbr.rel (%p537) target = $region16
        $region15: #{bottleneck_csp_pallas.1} parent=11 // pred_region
          _
        $region16: #{bottleneck_csp_pallas.1} parent=11 // pred_fallthru
          _
        // Predicated region
        $region17: #{bottleneck_csp_pallas.1} parent=11 // pred_check
          %p540 = pneg %p109
        $region18: #{bottleneck_csp_pallas.1} parent=11 // pred_check_branch
          %542 = sbr.rel (%p540) target = $region20
        $region19: #{bottleneck_csp_pallas.1} parent=11 // pred_region
          _
        $region20: #{bottleneck_csp_pallas.1} parent=11 // pred_fallthru
          _
        // Predicated region
        $region21: #{bottleneck_csp_pallas.1} parent=11 // pred_check
          %p543 = pneg %p130
        $region22: #{bottleneck_csp_pallas.1} parent=11 // pred_check_branch
          %545 = sbr.rel (%p543) target = $region24
        $region23: #{bottleneck_csp_pallas.1} parent=11 // pred_region
          _
        $region24: #{bottleneck_csp_pallas.1} parent=11 // pred_fallthru
          _
        // Predicated region
        $region25: #{bottleneck_csp_pallas.1} parent=11 // pred_check
          %p546 = pneg %p307
        $region26: #{bottleneck_csp_pallas.1} parent=11 // pred_check_branch
          %548 = sbr.rel (%p546) target = $region28
        $region27: #{bottleneck_csp_pallas.1} parent=11 // pred_region
          _
        $region28: #{bottleneck_csp_pallas.1} parent=11 // pred_fallthru
          _
        // Predicated region
        $region29: #{bottleneck_csp_pallas.1} parent=11 // pred_check
          %p549 = pneg %p328
        $region30: #{bottleneck_csp_pallas.1} parent=11 // pred_check_branch
          %551 = sbr.rel (%p549) target = $region32
        $region31: #{bottleneck_csp_pallas.1} parent=11 // pred_region
          _
        $region32: #{bottleneck_csp_pallas.1} parent=11 // pred_fallthru
          _
        // Predicated region
        $region33: #{bottleneck_csp_pallas.1} parent=11 // pred_check
          %p552 = pneg %p349
        $region34: #{bottleneck_csp_pallas.1} parent=11 // pred_check_branch
          %554 = sbr.rel (%p552) target = $region36
        $region35: #{bottleneck_csp_pallas.1} parent=11 // pred_region
          _
        $region36: #{bottleneck_csp_pallas.1} parent=11 // pred_fallthru
          _
        // Predicated region
        $region37: #{bottleneck_csp_pallas.1} parent=11 // pred_check
          %p555 = pneg %p370
        $region38: #{bottleneck_csp_pallas.1} parent=11 // pred_check_branch
          %557 = sbr.rel (%p555) target = $region40
        $region39: #{bottleneck_csp_pallas.1} parent=11 // pred_region
          _
        $region40: #{bottleneck_csp_pallas.1} parent=11 // pred_fallthru
          _
        // Predicated region
        $region41: #{bottleneck_csp_pallas.1} parent=11 // pred_check
          %p558 = pneg %p391
        $region42: #{bottleneck_csp_pallas.1} parent=11 // pred_check_branch
          %560 = sbr.rel (%p558) target = $region44
        $region43: #{bottleneck_csp_pallas.1} parent=11 // pred_region
          _
        $region44: #{bottleneck_csp_pallas.1} parent=11 // pred_fallthru
          _
        // Predicated region
        $region45: #{bottleneck_csp_pallas.1} parent=11 // pred_check
          %p561 = pneg %p412
        $region46: #{bottleneck_csp_pallas.1} parent=11 // pred_check_branch
          %563 = sbr.rel (%p561) target = $region48
        $region47: #{bottleneck_csp_pallas.1} parent=11 // pred_region
          _
        $region48: #{bottleneck_csp_pallas.1} parent=11 // pred_fallthru
          _
        // Predicated region
        $region49: #{bottleneck_csp_pallas.1} parent=11 // pred_check
          %p564 = pneg %p433
        $region50: #{bottleneck_csp_pallas.1} parent=11 // pred_check_branch
          %566 = sbr.rel (%p564) target = $region52
        $region51: #{bottleneck_csp_pallas.1} parent=11 // pred_region
          _
        $region52: #{bottleneck_csp_pallas.1} parent=11 // pred_fallthru
          _
        // Predicated region
        $region53: #{bottleneck_csp_pallas.1} parent=11 // pred_check
          %p567 = pneg %p454
        $region54: #{bottleneck_csp_pallas.1} parent=11 // pred_check_branch
          %569 = sbr.rel (%p567) target = $region56
        $region55: #{bottleneck_csp_pallas.1} parent=11 // pred_region
          _
        $region56: #{bottleneck_csp_pallas.1} parent=11 // pred_fallthru
          _
        // Predicated region
        $region57: #{bottleneck_csp_pallas.1} parent=11 // pred_check
          %p570 = pneg %p475
        $region58: #{bottleneck_csp_pallas.1} parent=11 // pred_check_branch
          %572 = sbr.rel (%p570) target = $region60
        $region59: #{bottleneck_csp_pallas.1} parent=11 // pred_region
          _
        $region60: #{bottleneck_csp_pallas.1} parent=11 // pred_fallthru
          _
        // Predicated region
        $region61: #{bottleneck_csp_pallas.1} parent=11 // pred_check
          %p573 = pneg %p496
        $region62: #{bottleneck_csp_pallas.1} parent=11 // pred_check_branch
          %575 = sbr.rel (%p573) target = $region64
        $region63: #{bottleneck_csp_pallas.1} parent=11 // pred_region
          _
        $region64: #{bottleneck_csp_pallas.1} parent=11 // pred_fallthru
          _
      $region12: #{bottleneck_csp_pallas.1} parent=5 // pred_fallthru
        _
      %p576 = scmp.lt.s32.totalorder %s29, 4
      // Predicated region
      $region65: #{bottleneck_csp_pallas.1} parent=5 // pred_check
        %p577 = pneg %p576
      $region66: #{bottleneck_csp_pallas.1} parent=5 // pred_check_branch
        %579 = sbr.rel (%p577) target = $region68
      $region67: #{bottleneck_csp_pallas.1} parent=5 // pred_region
        // Predicated region
        $region69: #{bottleneck_csp_pallas.1} parent=67 // pred_check
          %p580 = pneg %p61
        $region70: #{bottleneck_csp_pallas.1} parent=67 // pred_check_branch
          %582 = sbr.rel (%p580) target = $region72
        $region71: #{bottleneck_csp_pallas.1} parent=67 // pred_region
          %p583 = scmp.lt.s32.totalorder %s36, 1
          %s584 = scalar_select %p583, %s36, 1
          %s585 = smul.addr %s584, 32
          %s586 = smul.addr %s585, 4
          %s587 = scalar_lea.vmem %s0, %s586
        $region72: #{bottleneck_csp_pallas.1} parent=67 // pred_fallthru
          _
        // Predicated region
        $region73: #{bottleneck_csp_pallas.1} parent=67 // pred_check
          %p588 = pneg %p150
        $region74: #{bottleneck_csp_pallas.1} parent=67 // pred_check_branch
          %590 = sbr.rel (%p588) target = $region76
        $region75: #{bottleneck_csp_pallas.1} parent=67 // pred_region
          %p591 = scmp.lt.s32.totalorder %s37, 1
          %s592 = scalar_select %p591, %s37, 1
          %s593 = smul.addr %s592, 16
          %s594 = smul.addr %s593, 4
          %s595 = scalar_lea.vmem %s4, %s594
        $region76: #{bottleneck_csp_pallas.1} parent=67 // pred_fallthru
          _
        // Predicated region
        $region77: #{bottleneck_csp_pallas.1} parent=67 // pred_check
          %p596 = pneg %p176
        $region78: #{bottleneck_csp_pallas.1} parent=67 // pred_check_branch
          %598 = sbr.rel (%p596) target = $region80
        $region79: #{bottleneck_csp_pallas.1} parent=67 // pred_region
          %p599 = scmp.lt.s32.totalorder %s37, 1
          %s600 = scalar_select %p599, %s37, 1
          %s601 = scalar_lea.vmem %s5, %s600
        $region80: #{bottleneck_csp_pallas.1} parent=67 // pred_fallthru
          _
        // Predicated region
        $region81: #{bottleneck_csp_pallas.1} parent=67 // pred_check
          %p602 = pneg %p202
        $region82: #{bottleneck_csp_pallas.1} parent=67 // pred_check_branch
          %604 = sbr.rel (%p602) target = $region84
        $region83: #{bottleneck_csp_pallas.1} parent=67 // pred_region
          %p605 = scmp.lt.s32.totalorder %s37, 1
          %s606 = scalar_select %p605, %s37, 1
          %s607 = scalar_lea.vmem %s6, %s606
        $region84: #{bottleneck_csp_pallas.1} parent=67 // pred_fallthru
          _
        // Predicated region
        $region85: #{bottleneck_csp_pallas.1} parent=67 // pred_check
          %p608 = pneg %p228
        $region86: #{bottleneck_csp_pallas.1} parent=67 // pred_check_branch
          %610 = sbr.rel (%p608) target = $region88
        $region87: #{bottleneck_csp_pallas.1} parent=67 // pred_region
          %s611 = sand.u32 %s218, 1
          %s612 = scalar_lea.sflag [#allocation5], %s611
          %s613 = sand.u32 %s218, 1
          %s614 = smul.addr %s613, 576
          %s615 = scalar_lea.vmem [#allocation4], %s614
          %s617 = ssub.s32 9216, 9216
          %618 = vsyncadd %s612, %s617
          %s619 = smul.addr %s37, 144
          %s620 = smul.addr %s619, 64
          %s621 = scalar_lea.hbm %s7, %s620
          %s622 = sshll.u32 %s615, 4
          %s623 = int_to_ptr.vmem [resolvable:$true] %s622
          %628 = dma.hbm_to_vmem [thread:$0]  %s621, 9216, %s623, %s612, 64, 64, 4
        $region88: #{bottleneck_csp_pallas.1} parent=67 // pred_fallthru
          _
        // Predicated region
        $region89: #{bottleneck_csp_pallas.1} parent=67 // pred_check
          %p629 = pneg %p254
        $region90: #{bottleneck_csp_pallas.1} parent=67 // pred_check_branch
          %631 = sbr.rel (%p629) target = $region92
        $region91: #{bottleneck_csp_pallas.1} parent=67 // pred_region
          %p632 = scmp.lt.s32.totalorder %s37, 1
          %s633 = scalar_select %p632, %s37, 1
          %s634 = scalar_lea.vmem %s8, %s633
        $region92: #{bottleneck_csp_pallas.1} parent=67 // pred_fallthru
          _
        // Predicated region
        $region93: #{bottleneck_csp_pallas.1} parent=67 // pred_check
          %p635 = pneg %p280
        $region94: #{bottleneck_csp_pallas.1} parent=67 // pred_check_branch
          %637 = sbr.rel (%p635) target = $region96
        $region95: #{bottleneck_csp_pallas.1} parent=67 // pred_region
          %p638 = scmp.lt.s32.totalorder %s37, 1
          %s639 = scalar_select %p638, %s37, 1
          %s640 = scalar_lea.vmem %s9, %s639
        $region96: #{bottleneck_csp_pallas.1} parent=67 // pred_fallthru
          _
      $region68: #{bottleneck_csp_pallas.1} parent=5 // pred_fallthru
        _
      %p641 = scmp.le.s32.totalorder 1, %s29
      %p642 = scmp.lt.s32.totalorder %s29, 5
      %p643 = pnand %p641, %p642
      %p644 = pneg %p643
      // Predicated region
      $region97: #{bottleneck_csp_pallas.1} parent=5 // pred_check
        _
      $region98: #{bottleneck_csp_pallas.1} parent=5 // pred_check_branch
        %646 = sbr.rel (%p643) target = $region100
      $region99: #{bottleneck_csp_pallas.1} parent=5 // pred_region
        %s647 = ssub.s32 %s29, 1
        %s648 = sand.u32 %s221, 1
        %s649 = scalar_lea.sflag [#allocation5], %s648
        %s650 = sand.u32 %s221, 1
        %s651 = smul.addr %s650, 576
        %s652 = scalar_lea.vmem [#allocation4], %s651
        // Predicated region
        $region101: #{bottleneck_csp_pallas.1} parent=99 // pred_check
          %p653 = pneg %p234
        $region102: #{bottleneck_csp_pallas.1} parent=99 // pred_check_branch
          %655 = sbr.rel (%p653) target = $region104
        $region103: #{bottleneck_csp_pallas.1} parent=99 // pred_region
          %656 = dma.done %s649, 9216
        $region104: #{bottleneck_csp_pallas.1} parent=99 // pred_fallthru
          _
        %p657 = scmp.lt.s32.totalorder %s38, 1
        %s658 = scalar_select %p657, %s38, 1
        %s659 = smul.addr %s658, 32
        %s660 = smul.addr %s659, 4
        %s661 = scalar_lea.vmem %s0, %s660
        %p662 = pneg %p67
        %p663 = pneg %p64
        %p664 = pneg %p88
        %p665 = pneg %p85
        %p666 = pneg %p109
        %p667 = pneg %p106
        %p668 = pneg %p130
        %p669 = pneg %p127
        %p670 = scmp.lt.s32.totalorder %s39, 1
        %s671 = scalar_select %p670, %s39, 1
        %s672 = smul.addr %s671, 16
        %s673 = smul.addr %s672, 4
        %s674 = scalar_lea.vmem %s4, %s673
        %p675 = pneg %p156
        %p676 = pneg %p153
        %p677 = scmp.lt.s32.totalorder %s39, 1
        %s678 = scalar_select %p677, %s39, 1
        %s679 = scalar_lea.vmem %s5, %s678
        %p680 = pneg %p182
        %p681 = pneg %p179
        %p682 = scmp.lt.s32.totalorder %s39, 1
        %s683 = scalar_select %p682, %s39, 1
        %s684 = scalar_lea.vmem %s6, %s683
        %p685 = pneg %p208
        %p686 = pneg %p205
        %s687 = sand.u32 %s221, 1
        %s688 = scalar_lea.sflag [#allocation5], %s687
        %s689 = sand.u32 %s221, 1
        %s690 = smul.addr %s689, 576
        %s691 = scalar_lea.vmem [#allocation4], %s690
        %p692 = pneg %p234
        %p693 = pneg %p231
        %p694 = scmp.lt.s32.totalorder %s39, 1
        %s695 = scalar_select %p694, %s39, 1
        %s696 = scalar_lea.vmem %s8, %s695
        %p697 = pneg %p260
        %p698 = pneg %p257
        %p699 = scmp.lt.s32.totalorder %s39, 1
        %s700 = scalar_select %p699, %s39, 1
        %s701 = scalar_lea.vmem %s9, %s700
        %p702 = pneg %p286
        %p703 = pneg %p283
        %p704 = pneg %p307
        %p705 = pneg %p304
        %p706 = pneg %p328
        %p707 = pneg %p325
        %p708 = pneg %p349
        %p709 = pneg %p346
        %p710 = pneg %p370
        %p711 = pneg %p367
        %p712 = pneg %p391
        %p713 = pneg %p388
        %p714 = pneg %p412
        %p715 = pneg %p409
        %p716 = pneg %p433
        %p717 = pneg %p430
        %p718 = pneg %p454
        %p719 = pneg %p451
        %p720 = pneg %p475
        %p721 = pneg %p472
        %p722 = pneg %p496
        %p723 = pneg %p493
        %p724 = pneg %p522
        %p725 = pneg %p519
        %p726 = scmp.lt.s32.totalorder %s38, 1
        %s727 = scalar_select %p726, %s38, 1
        %s728 = smul.addr %s727, 32
        %s729 = smul.addr %s728, 4
        %s730 = scalar_lea.vmem %s20, %s729
        %p731 = scmp.lt.s32.totalorder %s38, 1
        %s732 = scalar_select %p731, %s38, 1
        %s733 = smul.addr %s732, 32
        %s734 = smul.addr %s733, 4
        %s735 = scalar_lea.vmem %s0, %s734
        %p736 = scmp.lt.s32.totalorder %s39, 1
        %s737 = scalar_select %p736, %s39, 1
        %s738 = smul.addr %s737, 16
        %s739 = smul.addr %s738, 4
        %s740 = scalar_lea.vmem %s4, %s739
        %p741 = scmp.lt.s32.totalorder %s39, 1
        %s742 = scalar_select %p741, %s39, 1
        %s743 = scalar_lea.vmem %s5, %s742
        %p744 = scmp.lt.s32.totalorder %s39, 1
        %s745 = scalar_select %p744, %s39, 1
        %s746 = scalar_lea.vmem %s6, %s745
        %p747 = scmp.lt.s32.totalorder %s39, 1
        %s748 = scalar_select %p747, %s39, 1
        %s749 = scalar_lea.vmem %s8, %s748
        %p750 = scmp.lt.s32.totalorder %s39, 1
        %s751 = scalar_select %p750, %s39, 1
        %s752 = scalar_lea.vmem %s9, %s751
        %p753 = scmp.lt.s32.totalorder %s38, 1
        %s754 = scalar_select %p753, %s38, 1
        %s755 = smul.addr %s754, 32
        %s756 = smul.addr %s755, 4
        %s757 = scalar_lea.vmem %s20, %s756
        %p759 = scmp.eq.s32.totalorder %s39, 0
        // Predicated region
        $region105: #{bottleneck_csp_pallas.1} parent=99 // pred_check
          %p760 = pneg %p759
        $region106: #{bottleneck_csp_pallas.1} parent=99 // pred_check_branch
          %762 = sbr.rel (%p760) target = $region108
        $region107: #{bottleneck_csp_pallas.1} parent=99 // pred_region
          %763 = vst [vmem:[#allocation3] sm:$0xf] 0
          %764 = vst [vmem:[#allocation3 + $0x4] sm:$0xf] 0
          %765 = vst [vmem:[#allocation3 + $0x8] sm:$0x1] 0
          %766 = vst [vmem:[#allocation3 + $0xc] sm:$0xf] 0
          %767 = vst [vmem:[#allocation3 + $0x10] sm:$0xf] 0
          %768 = vst [vmem:[#allocation3 + $0x14] sm:$0x1] 0
          %769 = vst [vmem:[#allocation3 + $0x18] sm:$0xf] 0
          %770 = vst [vmem:[#allocation3 + $0x1c] sm:$0xf] 0
          %771 = vst [vmem:[#allocation3 + $0x20] sm:$0x1] 0
          %772 = vst [vmem:[#allocation3 + $0x24] sm:$0xf] 0
          %773 = vst [vmem:[#allocation3 + $0x28] sm:$0xf] 0
          %774 = vst [vmem:[#allocation3 + $0x2c] sm:$0x1] 0
          %775 = vst [vmem:[#allocation3 + $0x30] sm:$0xf] 0
          %776 = vst [vmem:[#allocation3 + $0x34] sm:$0xf] 0
          %777 = vst [vmem:[#allocation3 + $0x38] sm:$0x1] 0
          %778 = vst [vmem:[#allocation3 + $0x3c] sm:$0xf] 0
          %779 = vst [vmem:[#allocation3 + $0x40] sm:$0xf] 0
          %780 = vst [vmem:[#allocation3 + $0x44] sm:$0x1] 0
          %781 = vst [vmem:[#allocation3 + $0x48] sm:$0xf] 0
          %782 = vst [vmem:[#allocation3 + $0x4c] sm:$0xf] 0
          %783 = vst [vmem:[#allocation3 + $0x50] sm:$0x1] 0
          %784 = vst [vmem:[#allocation3 + $0x54] sm:$0xf] 0
          %785 = vst [vmem:[#allocation3 + $0x58] sm:$0xf] 0
          %786 = vst [vmem:[#allocation3 + $0x5c] sm:$0x1] 0
          %787 = vst [vmem:[#allocation3 + $0x60] sm:$0xf] 0
          %788 = vst [vmem:[#allocation3 + $0x64] sm:$0xf] 0
          %789 = vst [vmem:[#allocation3 + $0x68] sm:$0x1] 0
          %790 = vst [vmem:[#allocation3 + $0x6c] sm:$0xf] 0
          %791 = vst [vmem:[#allocation3 + $0x70] sm:$0xf] 0
          %792 = vst [vmem:[#allocation3 + $0x74] sm:$0x1] 0
          %793 = vst [vmem:[#allocation3 + $0x78] sm:$0xf] 0
          %794 = vst [vmem:[#allocation3 + $0x7c] sm:$0xf] 0
          %795 = vst [vmem:[#allocation3 + $0x80] sm:$0x1] 0
          %796 = vst [vmem:[#allocation3 + $0x84] sm:$0xf] 0
          %797 = vst [vmem:[#allocation3 + $0x88] sm:$0xf] 0
          %798 = vst [vmem:[#allocation3 + $0x8c] sm:$0x1] 0
          %799 = vst [vmem:[#allocation3 + $0x90] sm:$0xf] 0
          %800 = vst [vmem:[#allocation3 + $0x94] sm:$0xf] 0
          %801 = vst [vmem:[#allocation3 + $0x98] sm:$0x1] 0
          %802 = vst [vmem:[#allocation3 + $0x9c] sm:$0xf] 0
          %803 = vst [vmem:[#allocation3 + $0xa0] sm:$0xf] 0
          %804 = vst [vmem:[#allocation3 + $0xa4] sm:$0x1] 0
          %805 = vst [vmem:[#allocation3 + $0xa8] sm:$0xf] 0
          %806 = vst [vmem:[#allocation3 + $0xac] sm:$0xf] 0
          %807 = vst [vmem:[#allocation3 + $0xb0] sm:$0x1] 0
          %808 = vst [vmem:[#allocation3 + $0xb4] sm:$0xf] 0
          %809 = vst [vmem:[#allocation3 + $0xb8] sm:$0xf] 0
          %810 = vst [vmem:[#allocation3 + $0xbc] sm:$0x1] 0
          %811 = vst [vmem:[#allocation3 + $0xc0] sm:$0xf] 0
          %812 = vst [vmem:[#allocation3 + $0xc4] sm:$0xf] 0
          %813 = vst [vmem:[#allocation3 + $0xc8] sm:$0x1] 0
          %814 = vst [vmem:[#allocation3 + $0xcc] sm:$0xf] 0
          %815 = vst [vmem:[#allocation3 + $0xd0] sm:$0xf] 0
          %816 = vst [vmem:[#allocation3 + $0xd4] sm:$0x1] 0
          %v817 = vld [vmem:[%s735] sm:$0xf]
          %v818 = vld [vmem:[%s735 + $0x4] sm:$0xf]
          %v819 = vld [vmem:[%s735 + $0x8] sm:$0xf]
          %v820 = vld [vmem:[%s735 + $0xc] sm:$0xf]
          %v821 = vld [vmem:[%s735 + $0x10] sm:$0xf]
          %v822 = vld [vmem:[%s735 + $0x14] sm:$0xf]
          %v823 = vld [vmem:[%s735 + $0x18] sm:$0xf]
          %v824 = vld [vmem:[%s735 + $0x1c] sm:$0xf]
          %v825 = vld [vmem:[%s735 + $0x20] sm:$0xf]
          %v826 = vld [vmem:[%s735 + $0x24] sm:$0xf]
          %v827 = vld [vmem:[%s735 + $0x28] sm:$0xf]
          %v828 = vld [vmem:[%s735 + $0x2c] sm:$0xf]
          %v829 = vld [vmem:[%s735 + $0x30] sm:$0xf]
          %v830 = vld [vmem:[%s735 + $0x34] sm:$0xf]
          %v831 = vld [vmem:[%s735 + $0x38] sm:$0xf]
          %v832 = vld [vmem:[%s735 + $0x3c] sm:$0xf]
          %v833 = vld [vmem:[%s735 + $0x40] sm:$0xf]
          %v834 = vld [vmem:[%s735 + $0x44] sm:$0xf]
          %v835 = vld [vmem:[%s735 + $0x48] sm:$0xf]
          %v836 = vld [vmem:[%s735 + $0x4c] sm:$0xf]
          %v837 = vld [vmem:[%s735 + $0x50] sm:$0xf]
          %v838 = vld [vmem:[%s735 + $0x54] sm:$0xf]
          %v839 = vld [vmem:[%s735 + $0x58] sm:$0xf]
          %v840 = vld [vmem:[%s735 + $0x5c] sm:$0xf]
          %v841 = vld [vmem:[%s735 + $0x60] sm:$0xf]
          %v842 = vld [vmem:[%s735 + $0x64] sm:$0xf]
          %v843 = vld [vmem:[%s735 + $0x68] sm:$0xf]
          %v844 = vld [vmem:[%s735 + $0x6c] sm:$0xf]
          %v845 = vld [vmem:[%s735 + $0x70] sm:$0xf]
          %v846 = vld [vmem:[%s735 + $0x74] sm:$0xf]
          %v847 = vld [vmem:[%s735 + $0x78] sm:$0xf]
          %v848 = vld [vmem:[%s735 + $0x7c] sm:$0xf]
          %v849 = vld [vmem:[%s1] sm:$0xf]
          %v882 = vunpack.c.l.b16 %v817
          %v883 = vunpack.c.l.b16 %v818
          %v884 = vunpack.c.l.b16 %v819
          %v885 = vunpack.c.l.b16 %v820
          %v886 = vunpack.c.l.b16 %v821
          %v887 = vunpack.c.l.b16 %v822
          %v888 = vunpack.c.l.b16 %v823
          %v889 = vunpack.c.l.b16 %v824
          %v890 = vunpack.c.l.b16 %v825
          %v891 = vunpack.c.l.b16 %v826
          %v892 = vunpack.c.l.b16 %v827
          %v893 = vunpack.c.l.b16 %v828
          %v894 = vunpack.c.l.b16 %v829
          %v895 = vunpack.c.l.b16 %v830
          %v896 = vunpack.c.l.b16 %v831
          %v897 = vunpack.c.l.b16 %v832
          %v898 = vunpack.c.l.b16 %v833
          %v899 = vunpack.c.l.b16 %v834
          %v900 = vunpack.c.l.b16 %v835
          %v901 = vunpack.c.l.b16 %v836
          %v902 = vunpack.c.l.b16 %v837
          %v903 = vunpack.c.l.b16 %v838
          %v904 = vunpack.c.l.b16 %v839
          %v905 = vunpack.c.l.b16 %v840
          %v906 = vunpack.c.l.b16 %v841
          %v907 = vunpack.c.l.b16 %v842
          %v908 = vunpack.c.l.b16 %v843
          %v909 = vunpack.c.l.b16 %v844
          %v910 = vunpack.c.l.b16 %v845
          %v911 = vunpack.c.l.b16 %v846
          %v912 = vunpack.c.l.b16 %v847
          %v913 = vunpack.c.l.b16 %v848
          %v914 = vpack.c.b16 %v883, %v882
          %v915 = vpack.c.b16 %v885, %v884
          %v916 = vpack.c.b16 %v887, %v886
          %v917 = vpack.c.b16 %v889, %v888
          %v918 = vpack.c.b16 %v891, %v890
          %v919 = vpack.c.b16 %v893, %v892
          %v920 = vpack.c.b16 %v895, %v894
          %v921 = vpack.c.b16 %v897, %v896
          %v922 = vpack.c.b16 %v899, %v898
          %v923 = vpack.c.b16 %v901, %v900
          %v924 = vpack.c.b16 %v903, %v902
          %v925 = vpack.c.b16 %v905, %v904
          %v926 = vpack.c.b16 %v907, %v906
          %v927 = vpack.c.b16 %v909, %v908
          %v928 = vpack.c.b16 %v911, %v910
          %v929 = vpack.c.b16 %v913, %v912
          %vm930 = vcmask 64512
          %v932 = vsel %vm930, %v914, 0
          %v935 = vsel %vm930, %v915, 0
          %v938 = vsel %vm930, %v916, 0
          %v941 = vsel %vm930, %v917, 0
          %v944 = vsel %vm930, %v918, 0
          %v947 = vsel %vm930, %v919, 0
          %v950 = vsel %vm930, %v920, 0
          %v953 = vsel %vm930, %v921, 0
          %v956 = vsel %vm930, %v922, 0
          %v959 = vsel %vm930, %v923, 0
          %v962 = vsel %vm930, %v924, 0
          %v965 = vsel %vm930, %v925, 0
          %v968 = vsel %vm930, %v926, 0
          %v971 = vsel %vm930, %v927, 0
          %v974 = vsel %vm930, %v928, 0
          %v977 = vsel %vm930, %v929, 0
          %vm979 = vcmask 1043456
          %v981 = vsel %vm979, %v849, 0
          %983 = vmatprep.subr.bf16.mxu0 0
          %984 = vmatpush1.bf16.msra.mxu0 %v981
          %985 = vmatprep.subr.bf16.mxu0 0
          %986 = vmatpush1.bf16.msra.mxu0 0
          %987 = vmatprep.subr.bf16.mxu0 0
          %988 = vmatpush1.bf16.msra.mxu0 0
          %989 = vmatprep.subr.bf16.mxu0 0
          %990 = vmatpush1.bf16.msra.mxu0 0
          %991 = vmatprep.subr.bf16.mxu0 0
          %992 = vmatpush1.bf16.msra.mxu0 0
          %993 = vmatprep.subr.bf16.mxu0 0
          %994 = vmatpush1.bf16.msra.mxu0 0
          %995 = vmatprep.subr.bf16.mxu0 0
          %996 = vmatpush1.bf16.msra.mxu0 0
          %997 = vmatprep.subr.bf16.mxu0 0
          %998 = vmatpush1.bf16.msra.mxu0 0
          %999 = vmatprep.subr.bf16.mxu0 0
          %1000 = vmatpush1.bf16.msra.mxu0 0
          %1001 = vmatprep.subr.bf16.mxu0 0
          %1002 = vmatpush1.bf16.msra.mxu0 0
          %1003 = vmatprep.subr.bf16.mxu0 0
          %1004 = vmatpush1.bf16.msra.mxu0 0
          %1005 = vmatprep.subr.bf16.mxu0 0
          %1006 = vmatpush1.bf16.msra.mxu0 0
          %1007 = vmatprep.subr.bf16.mxu0 0
          %1008 = vmatpush1.bf16.msra.mxu0 0
          %1009 = vmatprep.subr.bf16.mxu0 0
          %1010 = vmatpush1.bf16.msra.mxu0 0
          %1011 = vmatprep.subr.bf16.mxu0 0
          %1012 = vmatpush1.bf16.msra.mxu0 0
          %1013 = vmatprep.subr.bf16.mxu0 0
          %1014 = vmatpush1.bf16.msra.mxu0 0
          %1015 = vmatprep.mubr.bf16.mxu0 0
          %1016 = vmatmul.mubr.bf16.gmra.mrb[0].mxu0 %v932
          %v1017 = vpop.f32.mrb[0].mxu0
          %v1018 = vadd.f32 0.0, %v1017
          %v1019 = vpop.f32.mrb[0].mxu0
          %v1020 = vpop.f32.mrb[0].mxu0
          %v1021 = vadd.f32 0.0, %v1020
          %v1022 = vpop.f32.mrb[0].mxu0
          %1023 = vmatprep.mubr.bf16.mxu0 0
          %1024 = vmatmul.mubr.bf16.gmra.mrb[0].mxu0 %v935
          %v1025 = vpop.f32.mrb[0].mxu0
          %v1026 = vadd.f32 0.0, %v1025
          %v1027 = vpop.f32.mrb[0].mxu0
          %v1028 = vpop.f32.mrb[0].mxu0
          %v1029 = vadd.f32 0.0, %v1028
          %v1030 = vpop.f32.mrb[0].mxu0
          %1031 = vmatprep.mubr.bf16.mxu0 0
          %1032 = vmatmul.mubr.bf16.gmra.mrb[0].mxu0 %v938
          %v1033 = vpop.f32.mrb[0].mxu0
          %v1034 = vadd.f32 0.0, %v1033
          %v1035 = vpop.f32.mrb[0].mxu0
          %v1036 = vpop.f32.mrb[0].mxu0
          %v1037 = vadd.f32 0.0, %v1036
          %v1038 = vpop.f32.mrb[0].mxu0
          %1039 = vmatprep.mubr.bf16.mxu0 0
          %1040 = vmatmul.mubr.bf16.gmra.mrb[0].mxu0 %v941
          %v1041 = vpop.f32.mrb[0].mxu0
          %v1042 = vadd.f32 0.0, %v1041
          %v1043 = vpop.f32.mrb[0].mxu0
          %v1044 = vpop.f32.mrb[0].mxu0
          %v1045 = vadd.f32 0.0, %v1044
          %v1046 = vpop.f32.mrb[0].mxu0
          %1047 = vmatprep.mubr.bf16.mxu0 0
          %1048 = vmatmul.mubr.bf16.gmra.mrb[0].mxu0 %v944
          %v1049 = vpop.f32.mrb[0].mxu0
          %v1050 = vadd.f32 0.0, %v1049
          %v1051 = vpop.f32.mrb[0].mxu0
          %v1052 = vpop.f32.mrb[0].mxu0
          %v1053 = vadd.f32 0.0, %v1052
          %v1054 = vpop.f32.mrb[0].mxu0
          %1055 = vmatprep.mubr.bf16.mxu0 0
          %1056 = vmatmul.mubr.bf16.gmra.mrb[0].mxu0 %v947
          %v1057 = vpop.f32.mrb[0].mxu0
          %v1058 = vadd.f32 0.0, %v1057
          %v1059 = vpop.f32.mrb[0].mxu0
          %v1060 = vpop.f32.mrb[0].mxu0
          %v1061 = vadd.f32 0.0, %v1060
          %v1062 = vpop.f32.mrb[0].mxu0
          %1063 = vmatprep.mubr.bf16.mxu0 0
          %1064 = vmatmul.mubr.bf16.gmra.mrb[0].mxu0 %v950
          %v1065 = vpop.f32.mrb[0].mxu0
          %v1066 = vadd.f32 0.0, %v1065
          %v1067 = vpop.f32.mrb[0].mxu0
          %v1068 = vpop.f32.mrb[0].mxu0
          %v1069 = vadd.f32 0.0, %v1068
          %v1070 = vpop.f32.mrb[0].mxu0
          %1071 = vmatprep.mubr.bf16.mxu0 0
          %1072 = vmatmul.mubr.bf16.gmra.mrb[0].mxu0 %v953
          %v1073 = vpop.f32.mrb[0].mxu0
          %v1074 = vadd.f32 0.0, %v1073
          %v1075 = vpop.f32.mrb[0].mxu0
          %v1076 = vpop.f32.mrb[0].mxu0
          %v1077 = vadd.f32 0.0, %v1076
          %v1078 = vpop.f32.mrb[0].mxu0
          %1079 = vmatprep.mubr.bf16.mxu0 0
          %1080 = vmatmul.mubr.bf16.gmra.mrb[0].mxu0 %v956
          %v1081 = vpop.f32.mrb[0].mxu0
          %v1082 = vadd.f32 0.0, %v1081
          %v1083 = vpop.f32.mrb[0].mxu0
          %v1084 = vpop.f32.mrb[0].mxu0
          %v1085 = vadd.f32 0.0, %v1084
          %v1086 = vpop.f32.mrb[0].mxu0
          %1087 = vmatprep.mubr.bf16.mxu0 0
          %1088 = vmatmul.mubr.bf16.gmra.mrb[0].mxu0 %v959
          %v1089 = vpop.f32.mrb[0].mxu0
          %v1090 = vadd.f32 0.0, %v1089
          %v1091 = vpop.f32.mrb[0].mxu0
          %v1092 = vpop.f32.mrb[0].mxu0
          %v1093 = vadd.f32 0.0, %v1092
          %v1094 = vpop.f32.mrb[0].mxu0
          %1095 = vmatprep.mubr.bf16.mxu0 0
          %1096 = vmatmul.mubr.bf16.gmra.mrb[0].mxu0 %v962
          %v1097 = vpop.f32.mrb[0].mxu0
          %v1098 = vadd.f32 0.0, %v1097
          %v1099 = vpop.f32.mrb[0].mxu0
          %v1100 = vpop.f32.mrb[0].mxu0
          %v1101 = vadd.f32 0.0, %v1100
          %v1102 = vpop.f32.mrb[0].mxu0
          %1103 = vmatprep.mubr.bf16.mxu0 0
          %1104 = vmatmul.mubr.bf16.gmra.mrb[0].mxu0 %v965
          %v1105 = vpop.f32.mrb[0].mxu0
          %v1106 = vadd.f32 0.0, %v1105
          %v1107 = vpop.f32.mrb[0].mxu0
          %v1108 = vpop.f32.mrb[0].mxu0
          %v1109 = vadd.f32 0.0, %v1108
          %v1110 = vpop.f32.mrb[0].mxu0
          %1111 = vmatprep.mubr.bf16.mxu0 0
          %1112 = vmatmul.mubr.bf16.gmra.mrb[0].mxu0 %v968
          %v1113 = vpop.f32.mrb[0].mxu0
          %v1114 = vadd.f32 0.0, %v1113
          %v1115 = vpop.f32.mrb[0].mxu0
          %v1116 = vpop.f32.mrb[0].mxu0
          %v1117 = vadd.f32 0.0, %v1116
          %v1118 = vpop.f32.mrb[0].mxu0
          %1119 = vmatprep.mubr.bf16.mxu0 0
          %1120 = vmatmul.mubr.bf16.gmra.mrb[0].mxu0 %v971
          %v1121 = vpop.f32.mrb[0].mxu0
          %v1122 = vadd.f32 0.0, %v1121
          %v1123 = vpop.f32.mrb[0].mxu0
          %v1124 = vpop.f32.mrb[0].mxu0
          %v1125 = vadd.f32 0.0, %v1124
          %v1126 = vpop.f32.mrb[0].mxu0
          %1127 = vmatprep.mubr.bf16.mxu0 0
          %1128 = vmatmul.mubr.bf16.gmra.mrb[0].mxu0 %v974
          %v1129 = vpop.f32.mrb[0].mxu0
          %v1130 = vadd.f32 0.0, %v1129
          %v1131 = vpop.f32.mrb[0].mxu0
          %v1132 = vpop.f32.mrb[0].mxu0
          %v1133 = vadd.f32 0.0, %v1132
          %v1134 = vpop.f32.mrb[0].mxu0
          %1135 = vmatprep.mubr.bf16.mxu0 0
          %1136 = vmatmul.mubr.bf16.gmra.mrb[0].mxu0 %v977
          %v1137 = vpop.f32.mrb[0].mxu0
          %v1138 = vadd.f32 0.0, %v1137
          %v1139 = vpop.f32.mrb[0].mxu0
          %v1140 = vpop.f32.mrb[0].mxu0
          %v1141 = vadd.f32 0.0, %v1140
          %v1142 = vpop.f32.mrb[0].mxu0
          %1143 = vdwg.mxu0
          %v1144 = vld [vmem:[%s2] sm:$0x1]
          %v1146 = vlaneseq
          %v1147 = vshrl.u32 %v1146, 7
          %v1148 = vsub.s32 0, %v1147
          %v1149 = vrot.slane %v1144, %v1148
          %v1151 = vmul.f32 %v1018, %v1149
          %v1152 = vmul.f32 %v1021, %v1149
          %v1153 = vmul.f32 %v1026, %v1149
          %v1154 = vmul.f32 %v1029, %v1149
          %v1155 = vmul.f32 %v1034, %v1149
          %v1156 = vmul.f32 %v1037, %v1149
          %v1157 = vmul.f32 %v1042, %v1149
          %v1158 = vmul.f32 %v1045, %v1149
          %v1159 = vmul.f32 %v1050, %v1149
          %v1160 = vmul.f32 %v1053, %v1149
          %v1161 = vmul.f32 %v1058, %v1149
          %v1162 = vmul.f32 %v1061, %v1149
          %v1163 = vmul.f32 %v1066, %v1149
          %v1164 = vmul.f32 %v1069, %v1149
          %v1165 = vmul.f32 %v1074, %v1149
          %v1166 = vmul.f32 %v1077, %v1149
          %v1167 = vmul.f32 %v1082, %v1149
          %v1168 = vmul.f32 %v1085, %v1149
          %v1169 = vmul.f32 %v1090, %v1149
          %v1170 = vmul.f32 %v1093, %v1149
          %v1171 = vmul.f32 %v1098, %v1149
          %v1172 = vmul.f32 %v1101, %v1149
          %v1173 = vmul.f32 %v1106, %v1149
          %v1174 = vmul.f32 %v1109, %v1149
          %v1175 = vmul.f32 %v1114, %v1149
          %v1176 = vmul.f32 %v1117, %v1149
          %v1177 = vmul.f32 %v1122, %v1149
          %v1178 = vmul.f32 %v1125, %v1149
          %v1179 = vmul.f32 %v1130, %v1149
          %v1180 = vmul.f32 %v1133, %v1149
          %v1181 = vmul.f32 %v1138, %v1149
          %v1182 = vmul.f32 %v1141, %v1149
          %v1183 = vld [vmem:[%s3] sm:$0x1]
          %v1185 = vlaneseq
          %v1186 = vshrl.u32 %v1185, 7
          %v1187 = vsub.s32 0, %v1186
          %v1188 = vrot.slane %v1183, %v1187
          %v1190 = vadd.f32 %v1151, %v1188
          %v1191 = vadd.f32 %v1152, %v1188
          %v1192 = vadd.f32 %v1153, %v1188
          %v1193 = vadd.f32 %v1154, %v1188
          %v1194 = vadd.f32 %v1155, %v1188
          %v1195 = vadd.f32 %v1156, %v1188
          %v1196 = vadd.f32 %v1157, %v1188
          %v1197 = vadd.f32 %v1158, %v1188
          %v1198 = vadd.f32 %v1159, %v1188
          %v1199 = vadd.f32 %v1160, %v1188
          %v1200 = vadd.f32 %v1161, %v1188
          %v1201 = vadd.f32 %v1162, %v1188
          %v1202 = vadd.f32 %v1163, %v1188
          %v1203 = vadd.f32 %v1164, %v1188
          %v1204 = vadd.f32 %v1165, %v1188
          %v1205 = vadd.f32 %v1166, %v1188
          %v1206 = vadd.f32 %v1167, %v1188
          %v1207 = vadd.f32 %v1168, %v1188
          %v1208 = vadd.f32 %v1169, %v1188
          %v1209 = vadd.f32 %v1170, %v1188
          %v1210 = vadd.f32 %v1171, %v1188
          %v1211 = vadd.f32 %v1172, %v1188
          %v1212 = vadd.f32 %v1173, %v1188
          %v1213 = vadd.f32 %v1174, %v1188
          %v1214 = vadd.f32 %v1175, %v1188
          %v1215 = vadd.f32 %v1176, %v1188
          %v1216 = vadd.f32 %v1177, %v1188
          %v1217 = vadd.f32 %v1178, %v1188
          %v1218 = vadd.f32 %v1179, %v1188
          %v1219 = vadd.f32 %v1180, %v1188
          %v1220 = vadd.f32 %v1181, %v1188
          %v1221 = vadd.f32 %v1182, %v1188
          %v1222 = vsub.f32 0.0, %v1190
          %v1223 = vsub.f32 0.0, %v1191
          %v1224 = vsub.f32 0.0, %v1192
          %v1225 = vsub.f32 0.0, %v1193
          %v1226 = vsub.f32 0.0, %v1194
          %v1227 = vsub.f32 0.0, %v1195
          %v1228 = vsub.f32 0.0, %v1196
          %v1229 = vsub.f32 0.0, %v1197
          %v1230 = vsub.f32 0.0, %v1198
          %v1231 = vsub.f32 0.0, %v1199
          %v1232 = vsub.f32 0.0, %v1200
          %v1233 = vsub.f32 0.0, %v1201
          %v1234 = vsub.f32 0.0, %v1202
          %v1235 = vsub.f32 0.0, %v1203
          %v1236 = vsub.f32 0.0, %v1204
          %v1237 = vsub.f32 0.0, %v1205
          %v1238 = vsub.f32 0.0, %v1206
          %v1239 = vsub.f32 0.0, %v1207
          %v1240 = vsub.f32 0.0, %v1208
          %v1241 = vsub.f32 0.0, %v1209
          %v1242 = vsub.f32 0.0, %v1210
          %v1243 = vsub.f32 0.0, %v1211
          %v1244 = vsub.f32 0.0, %v1212
          %v1245 = vsub.f32 0.0, %v1213
          %v1246 = vsub.f32 0.0, %v1214
          %v1247 = vsub.f32 0.0, %v1215
          %v1248 = vsub.f32 0.0, %v1216
          %v1249 = vsub.f32 0.0, %v1217
          %v1250 = vsub.f32 0.0, %v1218
          %v1251 = vsub.f32 0.0, %v1219
          %v1252 = vsub.f32 0.0, %v1220
          %v1253 = vsub.f32 0.0, %v1221
          %v1254 = vmul.f32 %v1222, 1.442695
          %v1255 = vpow.pop %v1254
          %v1256 = vmul.f32 %v1223, 1.442695
          %v1257 = vpow.pop %v1256
          %v1258 = vmul.f32 %v1224, 1.442695
          %v1259 = vpow.pop %v1258
          %v1260 = vmul.f32 %v1225, 1.442695
          %v1261 = vpow.pop %v1260
          %v1262 = vmul.f32 %v1226, 1.442695
          %v1263 = vpow.pop %v1262
          %v1264 = vmul.f32 %v1227, 1.442695
          %v1265 = vpow.pop %v1264
          %v1266 = vmul.f32 %v1228, 1.442695
          %v1267 = vpow.pop %v1266
          %v1268 = vmul.f32 %v1229, 1.442695
          %v1269 = vpow.pop %v1268
          %v1270 = vmul.f32 %v1230, 1.442695
          %v1271 = vpow.pop %v1270
          %v1272 = vmul.f32 %v1231, 1.442695
          %v1273 = vpow.pop %v1272
          %v1274 = vmul.f32 %v1232, 1.442695
          %v1275 = vpow.pop %v1274
          %v1276 = vmul.f32 %v1233, 1.442695
          %v1277 = vpow.pop %v1276
          %v1278 = vmul.f32 %v1234, 1.442695
          %v1279 = vpow.pop %v1278
          %v1280 = vmul.f32 %v1235, 1.442695
          %v1281 = vpow.pop %v1280
          %v1282 = vmul.f32 %v1236, 1.442695
          %v1283 = vpow.pop %v1282
          %v1284 = vmul.f32 %v1237, 1.442695
          %v1285 = vpow.pop %v1284
          %v1286 = vmul.f32 %v1238, 1.442695
          %v1287 = vpow.pop %v1286
          %v1288 = vmul.f32 %v1239, 1.442695
          %v1289 = vpow.pop %v1288
          %v1290 = vmul.f32 %v1240, 1.442695
          %v1291 = vpow.pop %v1290
          %v1292 = vmul.f32 %v1241, 1.442695
          %v1293 = vpow.pop %v1292
          %v1294 = vmul.f32 %v1242, 1.442695
          %v1295 = vpow.pop %v1294
          %v1296 = vmul.f32 %v1243, 1.442695
          %v1297 = vpow.pop %v1296
          %v1298 = vmul.f32 %v1244, 1.442695
          %v1299 = vpow.pop %v1298
          %v1300 = vmul.f32 %v1245, 1.442695
          %v1301 = vpow.pop %v1300
          %v1302 = vmul.f32 %v1246, 1.442695
          %v1303 = vpow.pop %v1302
          %v1304 = vmul.f32 %v1247, 1.442695
          %v1305 = vpow.pop %v1304
          %v1306 = vmul.f32 %v1248, 1.442695
          %v1307 = vpow.pop %v1306
          %v1308 = vmul.f32 %v1249, 1.442695
          %v1309 = vpow.pop %v1308
          %v1310 = vmul.f32 %v1250, 1.442695
          %v1311 = vpow.pop %v1310
          %v1312 = vmul.f32 %v1251, 1.442695
          %v1313 = vpow.pop %v1312
          %v1314 = vmul.f32 %v1252, 1.442695
          %v1315 = vpow.pop %v1314
          %v1316 = vmul.f32 %v1253, 1.442695
          %v1317 = vpow.pop %v1316
          %v1318 = vadd.f32 %v1255, 1.0
          %v1319 = vadd.f32 %v1257, 1.0
          %v1320 = vadd.f32 %v1259, 1.0
          %v1321 = vadd.f32 %v1261, 1.0
          %v1322 = vadd.f32 %v1263, 1.0
          %v1323 = vadd.f32 %v1265, 1.0
          %v1324 = vadd.f32 %v1267, 1.0
          %v1325 = vadd.f32 %v1269, 1.0
          %v1326 = vadd.f32 %v1271, 1.0
          %v1327 = vadd.f32 %v1273, 1.0
          %v1328 = vadd.f32 %v1275, 1.0
          %v1329 = vadd.f32 %v1277, 1.0
          %v1330 = vadd.f32 %v1279, 1.0
          %v1331 = vadd.f32 %v1281, 1.0
          %v1332 = vadd.f32 %v1283, 1.0
          %v1333 = vadd.f32 %v1285, 1.0
          %v1334 = vadd.f32 %v1287, 1.0
          %v1335 = vadd.f32 %v1289, 1.0
          %v1336 = vadd.f32 %v1291, 1.0
          %v1337 = vadd.f32 %v1293, 1.0
          %v1338 = vadd.f32 %v1295, 1.0
          %v1339 = vadd.f32 %v1297, 1.0
          %v1340 = vadd.f32 %v1299, 1.0
          %v1341 = vadd.f32 %v1301, 1.0
          %v1342 = vadd.f32 %v1303, 1.0
          %v1343 = vadd.f32 %v1305, 1.0
          %v1344 = vadd.f32 %v1307, 1.0
          %v1345 = vadd.f32 %v1309, 1.0
          %v1346 = vadd.f32 %v1311, 1.0
          %v1347 = vadd.f32 %v1313, 1.0
          %v1348 = vadd.f32 %v1315, 1.0
          %v1349 = vadd.f32 %v1317, 1.0
          %v1350 = vrcp.pop %v1318
          %v1351 = vrcp.pop %v1319
          %v1352 = vrcp.pop %v1320
          %v1353 = vrcp.pop %v1321
          %v1354 = vrcp.pop %v1322
          %v1355 = vrcp.pop %v1323
          %v1356 = vrcp.pop %v1324
          %v1357 = vrcp.pop %v1325
          %v1358 = vrcp.pop %v1326
          %v1359 = vrcp.pop %v1327
          %v1360 = vrcp.pop %v1328
          %v1361 = vrcp.pop %v1329
          %v1362 = vrcp.pop %v1330
          %v1363 = vrcp.pop %v1331
          %v1364 = vrcp.pop %v1332
          %v1365 = vrcp.pop %v1333
          %v1366 = vrcp.pop %v1334
          %v1367 = vrcp.pop %v1335
          %v1368 = vrcp.pop %v1336
          %v1369 = vrcp.pop %v1337
          %v1370 = vrcp.pop %v1338
          %v1371 = vrcp.pop %v1339
          %v1372 = vrcp.pop %v1340
          %v1373 = vrcp.pop %v1341
          %v1374 = vrcp.pop %v1342
          %v1375 = vrcp.pop %v1343
          %v1376 = vrcp.pop %v1344
          %v1377 = vrcp.pop %v1345
          %v1378 = vrcp.pop %v1346
          %v1379 = vrcp.pop %v1347
          %v1380 = vrcp.pop %v1348
          %v1381 = vrcp.pop %v1349
          %v1382 = vmul.f32 %v1190, %v1350
          %v1383 = vmul.f32 %v1191, %v1351
          %v1384 = vmul.f32 %v1192, %v1352
          %v1385 = vmul.f32 %v1193, %v1353
          %v1386 = vmul.f32 %v1194, %v1354
          %v1387 = vmul.f32 %v1195, %v1355
          %v1388 = vmul.f32 %v1196, %v1356
          %v1389 = vmul.f32 %v1197, %v1357
          %v1390 = vmul.f32 %v1198, %v1358
          %v1391 = vmul.f32 %v1199, %v1359
          %v1392 = vmul.f32 %v1200, %v1360
          %v1393 = vmul.f32 %v1201, %v1361
          %v1394 = vmul.f32 %v1202, %v1362
          %v1395 = vmul.f32 %v1203, %v1363
          %v1396 = vmul.f32 %v1204, %v1364
          %v1397 = vmul.f32 %v1205, %v1365
          %v1398 = vmul.f32 %v1206, %v1366
          %v1399 = vmul.f32 %v1207, %v1367
          %v1400 = vmul.f32 %v1208, %v1368
          %v1401 = vmul.f32 %v1209, %v1369
          %v1402 = vmul.f32 %v1210, %v1370
          %v1403 = vmul.f32 %v1211, %v1371
          %v1404 = vmul.f32 %v1212, %v1372
          %v1405 = vmul.f32 %v1213, %v1373
          %v1406 = vmul.f32 %v1214, %v1374
          %v1407 = vmul.f32 %v1215, %v1375
          %v1408 = vmul.f32 %v1216, %v1376
          %v1409 = vmul.f32 %v1217, %v1377
          %v1410 = vmul.f32 %v1218, %v1378
          %v1411 = vmul.f32 %v1219, %v1379
          %v1412 = vmul.f32 %v1220, %v1380
          %v1413 = vmul.f32 %v1221, %v1381
          %1414 = vst [vmem:[#allocation2] sm:$0xff] %v1382
          %1415 = vst [vmem:[#allocation2 + $0x8] sm:$0xff] %v1383
          %1416 = vst [vmem:[#allocation2 + $0x10] sm:$0xff] %v1384
          %1417 = vst [vmem:[#allocation2 + $0x18] sm:$0xff] %v1385
          %1418 = vst [vmem:[#allocation2 + $0x20] sm:$0xff] %v1386
          %1419 = vst [vmem:[#allocation2 + $0x28] sm:$0xff] %v1387
          %1420 = vst [vmem:[#allocation2 + $0x30] sm:$0xff] %v1388
          %1421 = vst [vmem:[#allocation2 + $0x38] sm:$0xff] %v1389
          %1422 = vst [vmem:[#allocation2 + $0x40] sm:$0xff] %v1390
          %1423 = vst [vmem:[#allocation2 + $0x48] sm:$0xff] %v1391
          %1424 = vst [vmem:[#allocation2 + $0x50] sm:$0xff] %v1392
          %1425 = vst [vmem:[#allocation2 + $0x58] sm:$0xff] %v1393
          %1426 = vst [vmem:[#allocation2 + $0x60] sm:$0xff] %v1394
          %1427 = vst [vmem:[#allocation2 + $0x68] sm:$0xff] %v1395
          %1428 = vst [vmem:[#allocation2 + $0x70] sm:$0xff] %v1396
          %1429 = vst [vmem:[#allocation2 + $0x78] sm:$0xff] %v1397
          %1430 = vst [vmem:[#allocation2 + $0x80] sm:$0xff] %v1398
          %1431 = vst [vmem:[#allocation2 + $0x88] sm:$0xff] %v1399
          %1432 = vst [vmem:[#allocation2 + $0x90] sm:$0xff] %v1400
          %1433 = vst [vmem:[#allocation2 + $0x98] sm:$0xff] %v1401
          %1434 = vst [vmem:[#allocation2 + $0xa0] sm:$0xff] %v1402
          %1435 = vst [vmem:[#allocation2 + $0xa8] sm:$0xff] %v1403
          %1436 = vst [vmem:[#allocation2 + $0xb0] sm:$0xff] %v1404
          %1437 = vst [vmem:[#allocation2 + $0xb8] sm:$0xff] %v1405
          %1438 = vst [vmem:[#allocation2 + $0xc0] sm:$0xff] %v1406
          %1439 = vst [vmem:[#allocation2 + $0xc8] sm:$0xff] %v1407
          %1440 = vst [vmem:[#allocation2 + $0xd0] sm:$0xff] %v1408
          %1441 = vst [vmem:[#allocation2 + $0xd8] sm:$0xff] %v1409
          %1442 = vst [vmem:[#allocation2 + $0xe0] sm:$0xff] %v1410
          %1443 = vst [vmem:[#allocation2 + $0xe8] sm:$0xff] %v1411
          %1444 = vst [vmem:[#allocation2 + $0xf0] sm:$0xff] %v1412
          %1445 = vst [vmem:[#allocation2 + $0xf8] sm:$0xff] %v1413
        $region108: #{bottleneck_csp_pallas.1} parent=99 // pred_fallthru
          _
        %v1446 = vld [vmem:[#allocation2] sm:$0xff]
        %v1447 = vld [vmem:[#allocation2 + $0x8] sm:$0xff]
        %v1448 = vld [vmem:[#allocation2 + $0x10] sm:$0xff]
        %v1449 = vld [vmem:[#allocation2 + $0x18] sm:$0xff]
        %v1450 = vld [vmem:[#allocation2 + $0x20] sm:$0xff]
        %v1451 = vld [vmem:[#allocation2 + $0x28] sm:$0xff]
        %v1452 = vld [vmem:[#allocation2 + $0x30] sm:$0xff]
        %v1453 = vld [vmem:[#allocation2 + $0x38] sm:$0xff]
        %v1454 = vld [vmem:[#allocation2 + $0x40] sm:$0xff]
        %v1455 = vld [vmem:[#allocation2 + $0x48] sm:$0xff]
        %v1456 = vld [vmem:[#allocation2 + $0x50] sm:$0xff]
        %v1457 = vld [vmem:[#allocation2 + $0x58] sm:$0xff]
        %v1458 = vld [vmem:[#allocation2 + $0x60] sm:$0xff]
        %v1459 = vld [vmem:[#allocation2 + $0x68] sm:$0xff]
        %v1460 = vld [vmem:[#allocation2 + $0x70] sm:$0xff]
        %v1461 = vld [vmem:[#allocation2 + $0x78] sm:$0xff]
        %v1462 = vld [vmem:[#allocation2 + $0x80] sm:$0xff]
        %v1463 = vld [vmem:[#allocation2 + $0x88] sm:$0xff]
        %v1464 = vld [vmem:[#allocation2 + $0x90] sm:$0xff]
        %v1465 = vld [vmem:[#allocation2 + $0x98] sm:$0xff]
        %v1466 = vld [vmem:[#allocation2 + $0xa0] sm:$0xff]
        %v1467 = vld [vmem:[#allocation2 + $0xa8] sm:$0xff]
        %v1468 = vld [vmem:[#allocation2 + $0xb0] sm:$0xff]
        %v1469 = vld [vmem:[#allocation2 + $0xb8] sm:$0xff]
        %v1470 = vld [vmem:[#allocation2 + $0xc0] sm:$0xff]
        %v1471 = vld [vmem:[#allocation2 + $0xc8] sm:$0xff]
        %v1472 = vld [vmem:[#allocation2 + $0xd0] sm:$0xff]
        %v1473 = vld [vmem:[#allocation2 + $0xd8] sm:$0xff]
        %v1474 = vld [vmem:[#allocation2 + $0xe0] sm:$0xff]
        %v1475 = vld [vmem:[#allocation2 + $0xe8] sm:$0xff]
        %v1476 = vld [vmem:[#allocation2 + $0xf0] sm:$0xff]
        %v1477 = vld [vmem:[#allocation2 + $0xf8] sm:$0xff]
        %v1478 = vpack.c.bf16 %v1447, %v1446
        %v1479 = vpack.c.bf16 %v1449, %v1448
        %v1480 = vpack.c.bf16 %v1451, %v1450
        %v1481 = vpack.c.bf16 %v1453, %v1452
        %v1482 = vpack.c.bf16 %v1455, %v1454
        %v1483 = vpack.c.bf16 %v1457, %v1456
        %v1484 = vpack.c.bf16 %v1459, %v1458
        %v1485 = vpack.c.bf16 %v1461, %v1460
        %v1486 = vpack.c.bf16 %v1463, %v1462
        %v1487 = vpack.c.bf16 %v1465, %v1464
        %v1488 = vpack.c.bf16 %v1467, %v1466
        %v1489 = vpack.c.bf16 %v1469, %v1468
        %v1490 = vpack.c.bf16 %v1471, %v1470
        %v1491 = vpack.c.bf16 %v1473, %v1472
        %v1492 = vpack.c.bf16 %v1475, %v1474
        %v1493 = vpack.c.bf16 %v1477, %v1476
        %v1494 = vld [vmem:[%s740] sm:$0xf]
        %v1495 = vld [vmem:[%s740 + $0x4] sm:$0xf]
        %v1496 = vld [vmem:[%s740 + $0x8] sm:$0xf]
        %v1497 = vld [vmem:[%s740 + $0xc] sm:$0xf]
        %v1498 = vld [vmem:[%s740 + $0x10] sm:$0xf]
        %v1499 = vld [vmem:[%s740 + $0x14] sm:$0xf]
        %v1500 = vld [vmem:[%s740 + $0x18] sm:$0xf]
        %v1501 = vld [vmem:[%s740 + $0x1c] sm:$0xf]
        %v1502 = vld [vmem:[%s740 + $0x20] sm:$0xf]
        %v1503 = vld [vmem:[%s740 + $0x24] sm:$0xf]
        %v1504 = vld [vmem:[%s740 + $0x28] sm:$0xf]
        %v1505 = vld [vmem:[%s740 + $0x2c] sm:$0xf]
        %v1506 = vld [vmem:[%s740 + $0x30] sm:$0xf]
        %v1507 = vld [vmem:[%s740 + $0x34] sm:$0xf]
        %v1508 = vld [vmem:[%s740 + $0x38] sm:$0xf]
        %v1509 = vld [vmem:[%s740 + $0x3c] sm:$0xf]
        %v1526 = vunpack.c.l.b16 %v1494
        %v1527 = vunpack.c.l.b16 %v1495
        %v1528 = vunpack.c.l.b16 %v1496
        %v1529 = vunpack.c.l.b16 %v1497
        %v1530 = vunpack.c.l.b16 %v1498
        %v1531 = vunpack.c.l.b16 %v1499
        %v1532 = vunpack.c.l.b16 %v1500
        %v1533 = vunpack.c.l.b16 %v1501
        %v1534 = vunpack.c.l.b16 %v1502
        %v1535 = vunpack.c.l.b16 %v1503
        %v1536 = vunpack.c.l.b16 %v1504
        %v1537 = vunpack.c.l.b16 %v1505
        %v1538 = vunpack.c.l.b16 %v1506
        %v1539 = vunpack.c.l.b16 %v1507
        %v1540 = vunpack.c.l.b16 %v1508
        %v1541 = vunpack.c.l.b16 %v1509
        %v1542 = vpack.c.b16 %v1527, %v1526
        %v1543 = vpack.c.b16 %v1529, %v1528
        %v1544 = vpack.c.b16 %v1531, %v1530
        %v1545 = vpack.c.b16 %v1533, %v1532
        %v1546 = vpack.c.b16 %v1535, %v1534
        %v1547 = vpack.c.b16 %v1537, %v1536
        %v1548 = vpack.c.b16 %v1539, %v1538
        %v1549 = vpack.c.b16 %v1541, %v1540
        %1558 = vmatprep.subr.bf16.mxu0 0
        %1559 = vmatpush1.bf16.msra.mxu0 %v1542
        %1560 = vmatprep.subr.bf16.mxu0 0
        %1561 = vmatpush1.bf16.msra.mxu0 %v1543
        %1562 = vmatprep.subr.bf16.mxu0 0
        %1563 = vmatpush1.bf16.msra.mxu0 %v1544
        %1564 = vmatprep.subr.bf16.mxu0 0
        %1565 = vmatpush1.bf16.msra.mxu0 %v1545
        %1566 = vmatprep.subr.bf16.mxu0 0
        %1567 = vmatpush1.bf16.msra.mxu0 %v1546
        %1568 = vmatprep.subr.bf16.mxu0 0
        %1569 = vmatpush1.bf16.msra.mxu0 %v1547
        %1570 = vmatprep.subr.bf16.mxu0 0
        %1571 = vmatpush1.bf16.msra.mxu0 %v1548
        %1572 = vmatprep.subr.bf16.mxu0 0
        %1573 = vmatpush1.bf16.msra.mxu0 %v1549
        %1574 = vmatprep.subr.bf16.mxu0 0
        %1575 = vmatpush1.bf16.msra.mxu0 0
        %1576 = vmatprep.subr.bf16.mxu0 0
        %1577 = vmatpush1.bf16.msra.mxu0 0
        %1578 = vmatprep.subr.bf16.mxu0 0
        %1579 = vmatpush1.bf16.msra.mxu0 0
        %1580 = vmatprep.subr.bf16.mxu0 0
        %1581 = vmatpush1.bf16.msra.mxu0 0
        %1582 = vmatprep.subr.bf16.mxu0 0
        %1583 = vmatpush1.bf16.msra.mxu0 0
        %1584 = vmatprep.subr.bf16.mxu0 0
        %1585 = vmatpush1.bf16.msra.mxu0 0
        %1586 = vmatprep.subr.bf16.mxu0 0
        %1587 = vmatpush1.bf16.msra.mxu0 0
        %1588 = vmatprep.subr.bf16.mxu0 0
        %1589 = vmatpush1.bf16.msra.mxu0 0
        %1590 = vmatprep.mubr.bf16.mxu0 0
        %1591 = vmatmul.mubr.bf16.gmra.mrb[0].mxu0 %v1478
        %v1592 = vpop.f32.mrb[0].mxu0
        %v1593 = vadd.f32 0.0, %v1592
        %v1594 = vpop.f32.mrb[0].mxu0
        %v1595 = vpop.f32.mrb[0].mxu0
        %v1596 = vadd.f32 0.0, %v1595
        %v1597 = vpop.f32.mrb[0].mxu0
        %1598 = vmatprep.mubr.bf16.mxu0 0
        %1599 = vmatmul.mubr.bf16.gmra.mrb[0].mxu0 %v1479
        %v1600 = vpop.f32.mrb[0].mxu0
        %v1601 = vadd.f32 0.0, %v1600
        %v1602 = vpop.f32.mrb[0].mxu0
        %v1603 = vpop.f32.mrb[0].mxu0
        %v1604 = vadd.f32 0.0, %v1603
        %v1605 = vpop.f32.mrb[0].mxu0
        %1606 = vmatprep.mubr.bf16.mxu0 0
        %1607 = vmatmul.mubr.bf16.gmra.mrb[0].mxu0 %v1480
        %v1608 = vpop.f32.mrb[0].mxu0
        %v1609 = vadd.f32 0.0, %v1608
        %v1610 = vpop.f32.mrb[0].mxu0
        %v1611 = vpop.f32.mrb[0].mxu0
        %v1612 = vadd.f32 0.0, %v1611
        %v1613 = vpop.f32.mrb[0].mxu0
        %1614 = vmatprep.mubr.bf16.mxu0 0
        %1615 = vmatmul.mubr.bf16.gmra.mrb[0].mxu0 %v1481
        %v1616 = vpop.f32.mrb[0].mxu0
        %v1617 = vadd.f32 0.0, %v1616
        %v1618 = vpop.f32.mrb[0].mxu0
        %v1619 = vpop.f32.mrb[0].mxu0
        %v1620 = vadd.f32 0.0, %v1619
        %v1621 = vpop.f32.mrb[0].mxu0
        %1622 = vmatprep.mubr.bf16.mxu0 0
        %1623 = vmatmul.mubr.bf16.gmra.mrb[0].mxu0 %v1482
        %v1624 = vpop.f32.mrb[0].mxu0
        %v1625 = vadd.f32 0.0, %v1624
        %v1626 = vpop.f32.mrb[0].mxu0
        %v1627 = vpop.f32.mrb[0].mxu0
        %v1628 = vadd.f32 0.0, %v1627
        %v1629 = vpop.f32.mrb[0].mxu0
        %1630 = vmatprep.mubr.bf16.mxu0 0
        %1631 = vmatmul.mubr.bf16.gmra.mrb[0].mxu0 %v1483
        %v1632 = vpop.f32.mrb[0].mxu0
        %v1633 = vadd.f32 0.0, %v1632
        %v1634 = vpop.f32.mrb[0].mxu0
        %v1635 = vpop.f32.mrb[0].mxu0
        %v1636 = vadd.f32 0.0, %v1635
        %v1637 = vpop.f32.mrb[0].mxu0
        %1638 = vmatprep.mubr.bf16.mxu0 0
        %1639 = vmatmul.mubr.bf16.gmra.mrb[0].mxu0 %v1484
        %v1640 = vpop.f32.mrb[0].mxu0
        %v1641 = vadd.f32 0.0, %v1640
        %v1642 = vpop.f32.mrb[0].mxu0
        %v1643 = vpop.f32.mrb[0].mxu0
        %v1644 = vadd.f32 0.0, %v1643
        %v1645 = vpop.f32.mrb[0].mxu0
        %1646 = vmatprep.mubr.bf16.mxu0 0
        %1647 = vmatmul.mubr.bf16.gmra.mrb[0].mxu0 %v1485
        %v1648 = vpop.f32.mrb[0].mxu0
        %v1649 = vadd.f32 0.0, %v1648
        %v1650 = vpop.f32.mrb[0].mxu0
        %v1651 = vpop.f32.mrb[0].mxu0
        %v1652 = vadd.f32 0.0, %v1651
        %v1653 = vpop.f32.mrb[0].mxu0
        %1654 = vmatprep.mubr.bf16.mxu0 0
        %1655 = vmatmul.mubr.bf16.gmra.mrb[0].mxu0 %v1486
        %v1656 = vpop.f32.mrb[0].mxu0
        %v1657 = vadd.f32 0.0, %v1656
        %v1658 = vpop.f32.mrb[0].mxu0
        %v1659 = vpop.f32.mrb[0].mxu0
        %v1660 = vadd.f32 0.0, %v1659
        %v1661 = vpop.f32.mrb[0].mxu0
        %1662 = vmatprep.mubr.bf16.mxu0 0
        %1663 = vmatmul.mubr.bf16.gmra.mrb[0].mxu0 %v1487
        %v1664 = vpop.f32.mrb[0].mxu0
        %v1665 = vadd.f32 0.0, %v1664
        %v1666 = vpop.f32.mrb[0].mxu0
        %v1667 = vpop.f32.mrb[0].mxu0
        %v1668 = vadd.f32 0.0, %v1667
        %v1669 = vpop.f32.mrb[0].mxu0
        %1670 = vmatprep.mubr.bf16.mxu0 0
        %1671 = vmatmul.mubr.bf16.gmra.mrb[0].mxu0 %v1488
        %v1672 = vpop.f32.mrb[0].mxu0
        %v1673 = vadd.f32 0.0, %v1672
        %v1674 = vpop.f32.mrb[0].mxu0
        %v1675 = vpop.f32.mrb[0].mxu0
        %v1676 = vadd.f32 0.0, %v1675
        %v1677 = vpop.f32.mrb[0].mxu0
        %1678 = vmatprep.mubr.bf16.mxu0 0
        %1679 = vmatmul.mubr.bf16.gmra.mrb[0].mxu0 %v1489
        %v1680 = vpop.f32.mrb[0].mxu0
        %v1681 = vadd.f32 0.0, %v1680
        %v1682 = vpop.f32.mrb[0].mxu0
        %v1683 = vpop.f32.mrb[0].mxu0
        %v1684 = vadd.f32 0.0, %v1683
        %v1685 = vpop.f32.mrb[0].mxu0
        %1686 = vmatprep.mubr.bf16.mxu0 0
        %1687 = vmatmul.mubr.bf16.gmra.mrb[0].mxu0 %v1490
        %v1688 = vpop.f32.mrb[0].mxu0
        %v1689 = vadd.f32 0.0, %v1688
        %v1690 = vpop.f32.mrb[0].mxu0
        %v1691 = vpop.f32.mrb[0].mxu0
        %v1692 = vadd.f32 0.0, %v1691
        %v1693 = vpop.f32.mrb[0].mxu0
        %1694 = vmatprep.mubr.bf16.mxu0 0
        %1695 = vmatmul.mubr.bf16.gmra.mrb[0].mxu0 %v1491
        %v1696 = vpop.f32.mrb[0].mxu0
        %v1697 = vadd.f32 0.0, %v1696
        %v1698 = vpop.f32.mrb[0].mxu0
        %v1699 = vpop.f32.mrb[0].mxu0
        %v1700 = vadd.f32 0.0, %v1699
        %v1701 = vpop.f32.mrb[0].mxu0
        %1702 = vmatprep.mubr.bf16.mxu0 0
        %1703 = vmatmul.mubr.bf16.gmra.mrb[0].mxu0 %v1492
        %v1704 = vpop.f32.mrb[0].mxu0
        %v1705 = vadd.f32 0.0, %v1704
        %v1706 = vpop.f32.mrb[0].mxu0
        %v1707 = vpop.f32.mrb[0].mxu0
        %v1708 = vadd.f32 0.0, %v1707
        %v1709 = vpop.f32.mrb[0].mxu0
        %1710 = vmatprep.mubr.bf16.mxu0 0
        %1711 = vmatmul.mubr.bf16.gmra.mrb[0].mxu0 %v1493
        %v1712 = vpop.f32.mrb[0].mxu0
        %v1713 = vadd.f32 0.0, %v1712
        %v1714 = vpop.f32.mrb[0].mxu0
        %v1715 = vpop.f32.mrb[0].mxu0
        %v1716 = vadd.f32 0.0, %v1715
        %v1717 = vpop.f32.mrb[0].mxu0
        %1718 = vdwg.mxu0
        %v1719 = vld [vmem:[%s743] sm:$0x1]
        %v1721 = vlaneseq
        %v1722 = vshrl.u32 %v1721, 7
        %v1723 = vsub.s32 0, %v1722
        %v1724 = vrot.slane %v1719, %v1723
        %v1726 = vmul.f32 %v1593, %v1724
        %v1727 = vmul.f32 %v1596, %v1724
        %v1728 = vmul.f32 %v1601, %v1724
        %v1729 = vmul.f32 %v1604, %v1724
        %v1730 = vmul.f32 %v1609, %v1724
        %v1731 = vmul.f32 %v1612, %v1724
        %v1732 = vmul.f32 %v1617, %v1724
        %v1733 = vmul.f32 %v1620, %v1724
        %v1734 = vmul.f32 %v1625, %v1724
        %v1735 = vmul.f32 %v1628, %v1724
        %v1736 = vmul.f32 %v1633, %v1724
        %v1737 = vmul.f32 %v1636, %v1724
        %v1738 = vmul.f32 %v1641, %v1724
        %v1739 = vmul.f32 %v1644, %v1724
        %v1740 = vmul.f32 %v1649, %v1724
        %v1741 = vmul.f32 %v1652, %v1724
        %v1742 = vmul.f32 %v1657, %v1724
        %v1743 = vmul.f32 %v1660, %v1724
        %v1744 = vmul.f32 %v1665, %v1724
        %v1745 = vmul.f32 %v1668, %v1724
        %v1746 = vmul.f32 %v1673, %v1724
        %v1747 = vmul.f32 %v1676, %v1724
        %v1748 = vmul.f32 %v1681, %v1724
        %v1749 = vmul.f32 %v1684, %v1724
        %v1750 = vmul.f32 %v1689, %v1724
        %v1751 = vmul.f32 %v1692, %v1724
        %v1752 = vmul.f32 %v1697, %v1724
        %v1753 = vmul.f32 %v1700, %v1724
        %v1754 = vmul.f32 %v1705, %v1724
        %v1755 = vmul.f32 %v1708, %v1724
        %v1756 = vmul.f32 %v1713, %v1724
        %v1757 = vmul.f32 %v1716, %v1724
        %v1758 = vld [vmem:[%s746] sm:$0x1]
        %v1760 = vlaneseq
        %v1761 = vshrl.u32 %v1760, 7
        %v1762 = vsub.s32 0, %v1761
        %v1763 = vrot.slane %v1758, %v1762
        %v1765 = vadd.f32 %v1726, %v1763
        %v1766 = vadd.f32 %v1727, %v1763
        %v1767 = vadd.f32 %v1728, %v1763
        %v1768 = vadd.f32 %v1729, %v1763
        %v1769 = vadd.f32 %v1730, %v1763
        %v1770 = vadd.f32 %v1731, %v1763
        %v1771 = vadd.f32 %v1732, %v1763
        %v1772 = vadd.f32 %v1733, %v1763
        %v1773 = vadd.f32 %v1734, %v1763
        %v1774 = vadd.f32 %v1735, %v1763
        %v1775 = vadd.f32 %v1736, %v1763
        %v1776 = vadd.f32 %v1737, %v1763
        %v1777 = vadd.f32 %v1738, %v1763
        %v1778 = vadd.f32 %v1739, %v1763
        %v1779 = vadd.f32 %v1740, %v1763
        %v1780 = vadd.f32 %v1741, %v1763
        %v1781 = vadd.f32 %v1742, %v1763
        %v1782 = vadd.f32 %v1743, %v1763
        %v1783 = vadd.f32 %v1744, %v1763
        %v1784 = vadd.f32 %v1745, %v1763
        %v1785 = vadd.f32 %v1746, %v1763
        %v1786 = vadd.f32 %v1747, %v1763
        %v1787 = vadd.f32 %v1748, %v1763
        %v1788 = vadd.f32 %v1749, %v1763
        %v1789 = vadd.f32 %v1750, %v1763
        %v1790 = vadd.f32 %v1751, %v1763
        %v1791 = vadd.f32 %v1752, %v1763
        %v1792 = vadd.f32 %v1753, %v1763
        %v1793 = vadd.f32 %v1754, %v1763
        %v1794 = vadd.f32 %v1755, %v1763
        %v1795 = vadd.f32 %v1756, %v1763
        %v1796 = vadd.f32 %v1757, %v1763
        %v1797 = vsub.f32 0.0, %v1765
        %v1798 = vsub.f32 0.0, %v1766
        %v1799 = vsub.f32 0.0, %v1767
        %v1800 = vsub.f32 0.0, %v1768
        %v1801 = vsub.f32 0.0, %v1769
        %v1802 = vsub.f32 0.0, %v1770
        %v1803 = vsub.f32 0.0, %v1771
        %v1804 = vsub.f32 0.0, %v1772
        %v1805 = vsub.f32 0.0, %v1773
        %v1806 = vsub.f32 0.0, %v1774
        %v1807 = vsub.f32 0.0, %v1775
        %v1808 = vsub.f32 0.0, %v1776
        %v1809 = vsub.f32 0.0, %v1777
        %v1810 = vsub.f32 0.0, %v1778
        %v1811 = vsub.f32 0.0, %v1779
        %v1812 = vsub.f32 0.0, %v1780
        %v1813 = vsub.f32 0.0, %v1781
        %v1814 = vsub.f32 0.0, %v1782
        %v1815 = vsub.f32 0.0, %v1783
        %v1816 = vsub.f32 0.0, %v1784
        %v1817 = vsub.f32 0.0, %v1785
        %v1818 = vsub.f32 0.0, %v1786
        %v1819 = vsub.f32 0.0, %v1787
        %v1820 = vsub.f32 0.0, %v1788
        %v1821 = vsub.f32 0.0, %v1789
        %v1822 = vsub.f32 0.0, %v1790
        %v1823 = vsub.f32 0.0, %v1791
        %v1824 = vsub.f32 0.0, %v1792
        %v1825 = vsub.f32 0.0, %v1793
        %v1826 = vsub.f32 0.0, %v1794
        %v1827 = vsub.f32 0.0, %v1795
        %v1828 = vsub.f32 0.0, %v1796
        %v1829 = vmul.f32 %v1797, 1.442695
        %v1830 = vpow.pop %v1829
        %v1831 = vmul.f32 %v1798, 1.442695
        %v1832 = vpow.pop %v1831
        %v1833 = vmul.f32 %v1799, 1.442695
        %v1834 = vpow.pop %v1833
        %v1835 = vmul.f32 %v1800, 1.442695
        %v1836 = vpow.pop %v1835
        %v1837 = vmul.f32 %v1801, 1.442695
        %v1838 = vpow.pop %v1837
        %v1839 = vmul.f32 %v1802, 1.442695
        %v1840 = vpow.pop %v1839
        %v1841 = vmul.f32 %v1803, 1.442695
        %v1842 = vpow.pop %v1841
        %v1843 = vmul.f32 %v1804, 1.442695
        %v1844 = vpow.pop %v1843
        %v1845 = vmul.f32 %v1805, 1.442695
        %v1846 = vpow.pop %v1845
        %v1847 = vmul.f32 %v1806, 1.442695
        %v1848 = vpow.pop %v1847
        %v1849 = vmul.f32 %v1807, 1.442695
        %v1850 = vpow.pop %v1849
        %v1851 = vmul.f32 %v1808, 1.442695
        %v1852 = vpow.pop %v1851
        %v1853 = vmul.f32 %v1809, 1.442695
        %v1854 = vpow.pop %v1853
        %v1855 = vmul.f32 %v1810, 1.442695
        %v1856 = vpow.pop %v1855
        %v1857 = vmul.f32 %v1811, 1.442695
        %v1858 = vpow.pop %v1857
        %v1859 = vmul.f32 %v1812, 1.442695
        %v1860 = vpow.pop %v1859
        %v1861 = vmul.f32 %v1813, 1.442695
        %v1862 = vpow.pop %v1861
        %v1863 = vmul.f32 %v1814, 1.442695
        %v1864 = vpow.pop %v1863
        %v1865 = vmul.f32 %v1815, 1.442695
        %v1866 = vpow.pop %v1865
        %v1867 = vmul.f32 %v1816, 1.442695
        %v1868 = vpow.pop %v1867
        %v1869 = vmul.f32 %v1817, 1.442695
        %v1870 = vpow.pop %v1869
        %v1871 = vmul.f32 %v1818, 1.442695
        %v1872 = vpow.pop %v1871
        %v1873 = vmul.f32 %v1819, 1.442695
        %v1874 = vpow.pop %v1873
        %v1875 = vmul.f32 %v1820, 1.442695
        %v1876 = vpow.pop %v1875
        %v1877 = vmul.f32 %v1821, 1.442695
        %v1878 = vpow.pop %v1877
        %v1879 = vmul.f32 %v1822, 1.442695
        %v1880 = vpow.pop %v1879
        %v1881 = vmul.f32 %v1823, 1.442695
        %v1882 = vpow.pop %v1881
        %v1883 = vmul.f32 %v1824, 1.442695
        %v1884 = vpow.pop %v1883
        %v1885 = vmul.f32 %v1825, 1.442695
        %v1886 = vpow.pop %v1885
        %v1887 = vmul.f32 %v1826, 1.442695
        %v1888 = vpow.pop %v1887
        %v1889 = vmul.f32 %v1827, 1.442695
        %v1890 = vpow.pop %v1889
        %v1891 = vmul.f32 %v1828, 1.442695
        %v1892 = vpow.pop %v1891
        %v1893 = vadd.f32 %v1830, 1.0
        %v1894 = vadd.f32 %v1832, 1.0
        %v1895 = vadd.f32 %v1834, 1.0
        %v1896 = vadd.f32 %v1836, 1.0
        %v1897 = vadd.f32 %v1838, 1.0
        %v1898 = vadd.f32 %v1840, 1.0
        %v1899 = vadd.f32 %v1842, 1.0
        %v1900 = vadd.f32 %v1844, 1.0
        %v1901 = vadd.f32 %v1846, 1.0
        %v1902 = vadd.f32 %v1848, 1.0
        %v1903 = vadd.f32 %v1850, 1.0
        %v1904 = vadd.f32 %v1852, 1.0
        %v1905 = vadd.f32 %v1854, 1.0
        %v1906 = vadd.f32 %v1856, 1.0
        %v1907 = vadd.f32 %v1858, 1.0
        %v1908 = vadd.f32 %v1860, 1.0
        %v1909 = vadd.f32 %v1862, 1.0
        %v1910 = vadd.f32 %v1864, 1.0
        %v1911 = vadd.f32 %v1866, 1.0
        %v1912 = vadd.f32 %v1868, 1.0
        %v1913 = vadd.f32 %v1870, 1.0
        %v1914 = vadd.f32 %v1872, 1.0
        %v1915 = vadd.f32 %v1874, 1.0
        %v1916 = vadd.f32 %v1876, 1.0
        %v1917 = vadd.f32 %v1878, 1.0
        %v1918 = vadd.f32 %v1880, 1.0
        %v1919 = vadd.f32 %v1882, 1.0
        %v1920 = vadd.f32 %v1884, 1.0
        %v1921 = vadd.f32 %v1886, 1.0
        %v1922 = vadd.f32 %v1888, 1.0
        %v1923 = vadd.f32 %v1890, 1.0
        %v1924 = vadd.f32 %v1892, 1.0
        %v1925 = vrcp.pop %v1893
        %v1926 = vrcp.pop %v1894
        %v1927 = vrcp.pop %v1895
        %v1928 = vrcp.pop %v1896
        %v1929 = vrcp.pop %v1897
        %v1930 = vrcp.pop %v1898
        %v1931 = vrcp.pop %v1899
        %v1932 = vrcp.pop %v1900
        %v1933 = vrcp.pop %v1901
        %v1934 = vrcp.pop %v1902
        %v1935 = vrcp.pop %v1903
        %v1936 = vrcp.pop %v1904
        %v1937 = vrcp.pop %v1905
        %v1938 = vrcp.pop %v1906
        %v1939 = vrcp.pop %v1907
        %v1940 = vrcp.pop %v1908
        %v1941 = vrcp.pop %v1909
        %v1942 = vrcp.pop %v1910
        %v1943 = vrcp.pop %v1911
        %v1944 = vrcp.pop %v1912
        %v1945 = vrcp.pop %v1913
        %v1946 = vrcp.pop %v1914
        %v1947 = vrcp.pop %v1915
        %v1948 = vrcp.pop %v1916
        %v1949 = vrcp.pop %v1917
        %v1950 = vrcp.pop %v1918
        %v1951 = vrcp.pop %v1919
        %v1952 = vrcp.pop %v1920
        %v1953 = vrcp.pop %v1921
        %v1954 = vrcp.pop %v1922
        %v1955 = vrcp.pop %v1923
        %v1956 = vrcp.pop %v1924
        %v1957 = vmul.f32 %v1765, %v1925
        %v1958 = vmul.f32 %v1766, %v1926
        %v1959 = vmul.f32 %v1767, %v1927
        %v1960 = vmul.f32 %v1768, %v1928
        %v1961 = vmul.f32 %v1769, %v1929
        %v1962 = vmul.f32 %v1770, %v1930
        %v1963 = vmul.f32 %v1771, %v1931
        %v1964 = vmul.f32 %v1772, %v1932
        %v1965 = vmul.f32 %v1773, %v1933
        %v1966 = vmul.f32 %v1774, %v1934
        %v1967 = vmul.f32 %v1775, %v1935
        %v1968 = vmul.f32 %v1776, %v1936
        %v1969 = vmul.f32 %v1777, %v1937
        %v1970 = vmul.f32 %v1778, %v1938
        %v1971 = vmul.f32 %v1779, %v1939
        %v1972 = vmul.f32 %v1780, %v1940
        %v1973 = vmul.f32 %v1781, %v1941
        %v1974 = vmul.f32 %v1782, %v1942
        %v1975 = vmul.f32 %v1783, %v1943
        %v1976 = vmul.f32 %v1784, %v1944
        %v1977 = vmul.f32 %v1785, %v1945
        %v1978 = vmul.f32 %v1786, %v1946
        %v1979 = vmul.f32 %v1787, %v1947
        %v1980 = vmul.f32 %v1788, %v1948
        %v1981 = vmul.f32 %v1789, %v1949
        %v1982 = vmul.f32 %v1790, %v1950
        %v1983 = vmul.f32 %v1791, %v1951
        %v1984 = vmul.f32 %v1792, %v1952
        %v1985 = vmul.f32 %v1793, %v1953
        %v1986 = vmul.f32 %v1794, %v1954
        %v1987 = vmul.f32 %v1795, %v1955
        %v1988 = vmul.f32 %v1796, %v1956
        %v1989 = vpack.c.bf16 %v1958, %v1957
        %v1990 = vpack.c.bf16 %v1960, %v1959
        %v1991 = vpack.c.bf16 %v1962, %v1961
        %v1992 = vpack.c.bf16 %v1964, %v1963
        %v1993 = vpack.c.bf16 %v1966, %v1965
        %v1994 = vpack.c.bf16 %v1968, %v1967
        %v1995 = vpack.c.bf16 %v1970, %v1969
        %v1996 = vpack.c.bf16 %v1972, %v1971
        %v1997 = vpack.c.bf16 %v1974, %v1973
        %v1998 = vpack.c.bf16 %v1976, %v1975
        %v1999 = vpack.c.bf16 %v1978, %v1977
        %v2000 = vpack.c.bf16 %v1980, %v1979
        %v2001 = vpack.c.bf16 %v1982, %v1981
        %v2002 = vpack.c.bf16 %v1984, %v1983
        %v2003 = vpack.c.bf16 %v1986, %v1985
        %v2004 = vpack.c.bf16 %v1988, %v1987
        %v2006 = vshrl.u32 %v1989, 16
        %v2008 = vrot.slane %v2006, 7
        %v2009 = vshll.u32 %v1989, 16
        %v2011 = vor.u32 %v2008, %v2009
        %v2013 = vshrl.u32 %v1990, 16
        %v2015 = vrot.slane %v2013, 7
        %v2016 = vshll.u32 %v1990, 16
        %v2018 = vor.u32 %v2015, %v2016
        %v2020 = vshrl.u32 %v1991, 16
        %v2022 = vrot.slane %v2020, 7
        %v2023 = vshll.u32 %v1991, 16
        %v2025 = vor.u32 %v2022, %v2023
        %v2027 = vshrl.u32 %v1992, 16
        %v2029 = vrot.slane %v2027, 7
        %v2030 = vshll.u32 %v1992, 16
        %v2032 = vor.u32 %v2029, %v2030
        %v2034 = vshrl.u32 %v1993, 16
        %v2036 = vrot.slane %v2034, 7
        %v2037 = vshll.u32 %v1993, 16
        %v2039 = vor.u32 %v2036, %v2037
        %v2041 = vshrl.u32 %v1994, 16
        %v2043 = vrot.slane %v2041, 7
        %v2044 = vshll.u32 %v1994, 16
        %v2046 = vor.u32 %v2043, %v2044
        %v2048 = vshrl.u32 %v1995, 16
        %v2050 = vrot.slane %v2048, 7
        %v2051 = vshll.u32 %v1995, 16
        %v2053 = vor.u32 %v2050, %v2051
        %v2055 = vshrl.u32 %v1996, 16
        %v2057 = vrot.slane %v2055, 7
        %v2058 = vshll.u32 %v1996, 16
        %v2060 = vor.u32 %v2057, %v2058
        %v2062 = vshrl.u32 %v1997, 16
        %v2064 = vrot.slane %v2062, 7
        %v2065 = vshll.u32 %v1997, 16
        %v2067 = vor.u32 %v2064, %v2065
        %v2069 = vshrl.u32 %v1998, 16
        %v2071 = vrot.slane %v2069, 7
        %v2072 = vshll.u32 %v1998, 16
        %v2074 = vor.u32 %v2071, %v2072
        %v2076 = vshrl.u32 %v1999, 16
        %v2078 = vrot.slane %v2076, 7
        %v2079 = vshll.u32 %v1999, 16
        %v2081 = vor.u32 %v2078, %v2079
        %v2083 = vshrl.u32 %v2000, 16
        %v2085 = vrot.slane %v2083, 7
        %v2086 = vshll.u32 %v2000, 16
        %v2088 = vor.u32 %v2085, %v2086
        %v2090 = vshrl.u32 %v2001, 16
        %v2092 = vrot.slane %v2090, 7
        %v2093 = vshll.u32 %v2001, 16
        %v2095 = vor.u32 %v2092, %v2093
        %v2097 = vshrl.u32 %v2002, 16
        %v2099 = vrot.slane %v2097, 7
        %v2100 = vshll.u32 %v2002, 16
        %v2102 = vor.u32 %v2099, %v2100
        %v2104 = vshrl.u32 %v2003, 16
        %v2106 = vrot.slane %v2104, 7
        %v2107 = vshll.u32 %v2003, 16
        %v2109 = vor.u32 %v2106, %v2107
        %v2111 = vshrl.u32 %v2004, 16
        %v2113 = vrot.slane %v2111, 7
        %v2114 = vshll.u32 %v2004, 16
        %v2116 = vor.u32 %v2113, %v2114
        %vm2149 = vcmask 1040384
        %vm2150 = vsmask.f32 256
        %vm2151 = vmand %vm2149, %vm2150
        %v2152 = vsel %vm2151, 0, %v2011
        %v2153 = vsel %vm2151, 0, %v2018
        %v2154 = vsel %vm2151, 0, %v2025
        %v2155 = vsel %vm2151, 0, %v2032
        %v2156 = vsel %vm2151, 0, %v2039
        %v2157 = vsel %vm2151, 0, %v2046
        %v2158 = vsel %vm2151, 0, %v2053
        %v2159 = vsel %vm2151, 0, %v2060
        %v2160 = vsel %vm2151, 0, %v2067
        %v2161 = vsel %vm2151, 0, %v2074
        %v2162 = vsel %vm2151, 0, %v2081
        %v2163 = vsel %vm2151, 0, %v2088
        %v2164 = vsel %vm2151, 0, %v2095
        %v2165 = vsel %vm2151, 0, %v2102
        %v2166 = vsel %vm2151, 0, %v2109
        %v2167 = vsel %vm2151, 0, %v2116
        %v2168 = vsel %vm2151, %v2008, 0
        %v2169 = vsel %vm2151, %v2015, 0
        %v2170 = vsel %vm2151, %v2022, 0
        %v2171 = vsel %vm2151, %v2029, 0
        %v2172 = vsel %vm2151, %v2036, 0
        %v2173 = vsel %vm2151, %v2043, 0
        %v2174 = vsel %vm2151, %v2050, 0
        %v2175 = vsel %vm2151, %v2057, 0
        %v2176 = vsel %vm2151, %v2064, 0
        %v2177 = vsel %vm2151, %v2071, 0
        %v2178 = vsel %vm2151, %v2078, 0
        %v2179 = vsel %vm2151, %v2085, 0
        %v2180 = vsel %vm2151, %v2092, 0
        %v2181 = vsel %vm2151, %v2099, 0
        %v2182 = vsel %vm2151, %v2106, 0
        %v2183 = vsel %vm2151, %v2113, 0
        %v2216 = vunpack.c.l.b16 %v2152
        %v2217 = vunpack.c.h.b16 %v2152
        %v2218 = vunpack.c.l.b16 %v2168
        %v2219 = vunpack.c.l.b16 %v2153
        %v2220 = vunpack.c.h.b16 %v2153
        %v2221 = vunpack.c.l.b16 %v2169
        %v2222 = vunpack.c.l.b16 %v2154
        %v2223 = vunpack.c.h.b16 %v2154
        %v2224 = vunpack.c.l.b16 %v2170
        %v2225 = vunpack.c.l.b16 %v2155
        %v2226 = vunpack.c.h.b16 %v2155
        %v2227 = vunpack.c.l.b16 %v2171
        %v2228 = vunpack.c.l.b16 %v2156
        %v2229 = vunpack.c.h.b16 %v2156
        %v2230 = vunpack.c.l.b16 %v2172
        %v2231 = vunpack.c.l.b16 %v2157
        %v2232 = vunpack.c.h.b16 %v2157
        %v2233 = vunpack.c.l.b16 %v2173
        %v2234 = vunpack.c.l.b16 %v2158
        %v2235 = vunpack.c.h.b16 %v2158
        %v2236 = vunpack.c.l.b16 %v2174
        %v2237 = vunpack.c.l.b16 %v2159
        %v2238 = vunpack.c.h.b16 %v2159
        %v2239 = vunpack.c.l.b16 %v2175
        %v2240 = vunpack.c.l.b16 %v2160
        %v2241 = vunpack.c.h.b16 %v2160
        %v2242 = vunpack.c.l.b16 %v2176
        %v2243 = vunpack.c.l.b16 %v2161
        %v2244 = vunpack.c.h.b16 %v2161
        %v2245 = vunpack.c.l.b16 %v2177
        %v2246 = vunpack.c.l.b16 %v2162
        %v2247 = vunpack.c.h.b16 %v2162
        %v2248 = vunpack.c.l.b16 %v2178
        %v2249 = vunpack.c.l.b16 %v2163
        %v2250 = vunpack.c.h.b16 %v2163
        %v2251 = vunpack.c.l.b16 %v2179
        %v2252 = vunpack.c.l.b16 %v2164
        %v2253 = vunpack.c.h.b16 %v2164
        %v2254 = vunpack.c.l.b16 %v2180
        %v2255 = vunpack.c.l.b16 %v2165
        %v2256 = vunpack.c.h.b16 %v2165
        %v2257 = vunpack.c.l.b16 %v2181
        %v2258 = vunpack.c.l.b16 %v2166
        %v2259 = vunpack.c.h.b16 %v2166
        %v2260 = vunpack.c.l.b16 %v2182
        %v2261 = vunpack.c.l.b16 %v2167
        %v2262 = vunpack.c.h.b16 %v2167
        %v2263 = vunpack.c.l.b16 %v2183
        %v2264 = vpack.c.b16 %v2216, %v2216
        %v2265 = vpack.c.b16 %v2217, %v2217
        %v2266 = vpack.c.b16 %v2218, %v2218
        %v2267 = vpack.c.b16 %v2219, %v2219
        %v2268 = vpack.c.b16 %v2220, %v2220
        %v2269 = vpack.c.b16 %v2221, %v2221
        %v2270 = vpack.c.b16 %v2222, %v2222
        %v2271 = vpack.c.b16 %v2223, %v2223
        %v2272 = vpack.c.b16 %v2224, %v2224
        %v2273 = vpack.c.b16 %v2225, %v2225
        %v2274 = vpack.c.b16 %v2226, %v2226
        %v2275 = vpack.c.b16 %v2227, %v2227
        %v2276 = vpack.c.b16 %v2228, %v2228
        %v2277 = vpack.c.b16 %v2229, %v2229
        %v2278 = vpack.c.b16 %v2230, %v2230
        %v2279 = vpack.c.b16 %v2231, %v2231
        %v2280 = vpack.c.b16 %v2232, %v2232
        %v2281 = vpack.c.b16 %v2233, %v2233
        %v2282 = vpack.c.b16 %v2234, %v2234
        %v2283 = vpack.c.b16 %v2235, %v2235
        %v2284 = vpack.c.b16 %v2236, %v2236
        %v2285 = vpack.c.b16 %v2237, %v2237
        %v2286 = vpack.c.b16 %v2238, %v2238
        %v2287 = vpack.c.b16 %v2239, %v2239
        %v2288 = vpack.c.b16 %v2240, %v2240
        %v2289 = vpack.c.b16 %v2241, %v2241
        %v2290 = vpack.c.b16 %v2242, %v2242
        %v2291 = vpack.c.b16 %v2243, %v2243
        %v2292 = vpack.c.b16 %v2244, %v2244
        %v2293 = vpack.c.b16 %v2245, %v2245
        %v2294 = vpack.c.b16 %v2246, %v2246
        %v2295 = vpack.c.b16 %v2247, %v2247
        %v2296 = vpack.c.b16 %v2248, %v2248
        %v2297 = vpack.c.b16 %v2249, %v2249
        %v2298 = vpack.c.b16 %v2250, %v2250
        %v2299 = vpack.c.b16 %v2251, %v2251
        %v2300 = vpack.c.b16 %v2252, %v2252
        %v2301 = vpack.c.b16 %v2253, %v2253
        %v2302 = vpack.c.b16 %v2254, %v2254
        %v2303 = vpack.c.b16 %v2255, %v2255
        %v2304 = vpack.c.b16 %v2256, %v2256
        %v2305 = vpack.c.b16 %v2257, %v2257
        %v2306 = vpack.c.b16 %v2258, %v2258
        %v2307 = vpack.c.b16 %v2259, %v2259
        %v2308 = vpack.c.b16 %v2260, %v2260
        %v2309 = vpack.c.b16 %v2261, %v2261
        %v2310 = vpack.c.b16 %v2262, %v2262
        %v2311 = vpack.c.b16 %v2263, %v2263
        %s2360 = scalar_lea.vmem [#allocation3], 12
        %2361 = vst [vmem:[%s2360] sm:$0xf] %v2264
        %2362 = vst [vmem:[%s2360 + $0x4] sm:$0xf] %v2265
        %2363 = vst [vmem:[%s2360 + $0x8] sm:$0x1] %v2266
        %2364 = vst [vmem:[%s2360 + $0xc] sm:$0xf] %v2267
        %2365 = vst [vmem:[%s2360 + $0x10] sm:$0xf] %v2268
        %2366 = vst [vmem:[%s2360 + $0x14] sm:$0x1] %v2269
        %2367 = vst [vmem:[%s2360 + $0x18] sm:$0xf] %v2270
        %2368 = vst [vmem:[%s2360 + $0x1c] sm:$0xf] %v2271
        %2369 = vst [vmem:[%s2360 + $0x20] sm:$0x1] %v2272
        %2370 = vst [vmem:[%s2360 + $0x24] sm:$0xf] %v2273
        %2371 = vst [vmem:[%s2360 + $0x28] sm:$0xf] %v2274
        %2372 = vst [vmem:[%s2360 + $0x2c] sm:$0x1] %v2275
        %2373 = vst [vmem:[%s2360 + $0x30] sm:$0xf] %v2276
        %2374 = vst [vmem:[%s2360 + $0x34] sm:$0xf] %v2277
        %2375 = vst [vmem:[%s2360 + $0x38] sm:$0x1] %v2278
        %2376 = vst [vmem:[%s2360 + $0x3c] sm:$0xf] %v2279
        %2377 = vst [vmem:[%s2360 + $0x40] sm:$0xf] %v2280
        %2378 = vst [vmem:[%s2360 + $0x44] sm:$0x1] %v2281
        %2379 = vst [vmem:[%s2360 + $0x48] sm:$0xf] %v2282
        %2380 = vst [vmem:[%s2360 + $0x4c] sm:$0xf] %v2283
        %2381 = vst [vmem:[%s2360 + $0x50] sm:$0x1] %v2284
        %2382 = vst [vmem:[%s2360 + $0x54] sm:$0xf] %v2285
        %2383 = vst [vmem:[%s2360 + $0x58] sm:$0xf] %v2286
        %2384 = vst [vmem:[%s2360 + $0x5c] sm:$0x1] %v2287
        %2385 = vst [vmem:[%s2360 + $0x60] sm:$0xf] %v2288
        %2386 = vst [vmem:[%s2360 + $0x64] sm:$0xf] %v2289
        %2387 = vst [vmem:[%s2360 + $0x68] sm:$0x1] %v2290
        %2388 = vst [vmem:[%s2360 + $0x6c] sm:$0xf] %v2291
        %2389 = vst [vmem:[%s2360 + $0x70] sm:$0xf] %v2292
        %2390 = vst [vmem:[%s2360 + $0x74] sm:$0x1] %v2293
        %2391 = vst [vmem:[%s2360 + $0x78] sm:$0xf] %v2294
        %2392 = vst [vmem:[%s2360 + $0x7c] sm:$0xf] %v2295
        %2393 = vst [vmem:[%s2360 + $0x80] sm:$0x1] %v2296
        %2394 = vst [vmem:[%s2360 + $0x84] sm:$0xf] %v2297
        %2395 = vst [vmem:[%s2360 + $0x88] sm:$0xf] %v2298
        %2396 = vst [vmem:[%s2360 + $0x8c] sm:$0x1] %v2299
        %2397 = vst [vmem:[%s2360 + $0x90] sm:$0xf] %v2300
        %2398 = vst [vmem:[%s2360 + $0x94] sm:$0xf] %v2301
        %2399 = vst [vmem:[%s2360 + $0x98] sm:$0x1] %v2302
        %2400 = vst [vmem:[%s2360 + $0x9c] sm:$0xf] %v2303
        %2401 = vst [vmem:[%s2360 + $0xa0] sm:$0xf] %v2304
        %2402 = vst [vmem:[%s2360 + $0xa4] sm:$0x1] %v2305
        %2403 = vst [vmem:[%s2360 + $0xa8] sm:$0xf] %v2306
        %2404 = vst [vmem:[%s2360 + $0xac] sm:$0xf] %v2307
        %2405 = vst [vmem:[%s2360 + $0xb0] sm:$0x1] %v2308
        %2406 = vst [vmem:[%s2360 + $0xb4] sm:$0xf] %v2309
        %2407 = vst [vmem:[%s2360 + $0xb8] sm:$0xf] %v2310
        %2408 = vst [vmem:[%s2360 + $0xbc] sm:$0x1] %v2311
        %v2409 = vld [vmem:[#allocation3] sm:$0xf]
        %v2410 = vld [vmem:[#allocation3 + $0x4] sm:$0xf]
        %v2411 = vld [vmem:[#allocation3 + $0x8] sm:$0x1]
        %v2412 = vld [vmem:[#allocation3 + $0xc] sm:$0xf]
        %v2413 = vld [vmem:[#allocation3 + $0x10] sm:$0xf]
        %v2414 = vld [vmem:[#allocation3 + $0x14] sm:$0x1]
        %v2415 = vld [vmem:[#allocation3 + $0x18] sm:$0xf]
        %v2416 = vld [vmem:[#allocation3 + $0x1c] sm:$0xf]
        %v2417 = vld [vmem:[#allocation3 + $0x20] sm:$0x1]
        %v2418 = vld [vmem:[#allocation3 + $0x24] sm:$0xf]
        %v2419 = vld [vmem:[#allocation3 + $0x28] sm:$0xf]
        %v2420 = vld [vmem:[#allocation3 + $0x2c] sm:$0x1]
        %v2421 = vld [vmem:[#allocation3 + $0x30] sm:$0xf]
        %v2422 = vld [vmem:[#allocation3 + $0x34] sm:$0xf]
        %v2423 = vld [vmem:[#allocation3 + $0x38] sm:$0x1]
        %v2424 = vld [vmem:[#allocation3 + $0x3c] sm:$0xf]
        %v2425 = vld [vmem:[#allocation3 + $0x40] sm:$0xf]
        %v2426 = vld [vmem:[#allocation3 + $0x44] sm:$0x1]
        %v2427 = vld [vmem:[#allocation3 + $0x48] sm:$0xf]
        %v2428 = vld [vmem:[#allocation3 + $0x4c] sm:$0xf]
        %v2429 = vld [vmem:[#allocation3 + $0x50] sm:$0x1]
        %v2430 = vld [vmem:[#allocation3 + $0x54] sm:$0xf]
        %v2431 = vld [vmem:[#allocation3 + $0x58] sm:$0xf]
        %v2432 = vld [vmem:[#allocation3 + $0x5c] sm:$0x1]
        %v2433 = vld [vmem:[#allocation3 + $0x60] sm:$0xf]
        %v2434 = vld [vmem:[#allocation3 + $0x64] sm:$0xf]
        %v2435 = vld [vmem:[#allocation3 + $0x68] sm:$0x1]
        %v2436 = vld [vmem:[#allocation3 + $0x6c] sm:$0xf]
        %v2437 = vld [vmem:[#allocation3 + $0x70] sm:$0xf]
        %v2438 = vld [vmem:[#allocation3 + $0x74] sm:$0x1]
        %v2439 = vld [vmem:[#allocation3 + $0x78] sm:$0xf]
        %v2440 = vld [vmem:[#allocation3 + $0x7c] sm:$0xf]
        %v2441 = vld [vmem:[#allocation3 + $0x80] sm:$0x1]
        %v2442 = vld [vmem:[#allocation3 + $0x84] sm:$0xf]
        %v2443 = vld [vmem:[#allocation3 + $0x88] sm:$0xf]
        %v2444 = vld [vmem:[#allocation3 + $0x8c] sm:$0x1]
        %v2445 = vld [vmem:[#allocation3 + $0x90] sm:$0xf]
        %v2446 = vld [vmem:[#allocation3 + $0x94] sm:$0xf]
        %v2447 = vld [vmem:[#allocation3 + $0x98] sm:$0x1]
        %v2448 = vld [vmem:[#allocation3 + $0x9c] sm:$0xf]
        %v2449 = vld [vmem:[#allocation3 + $0xa0] sm:$0xf]
        %v2450 = vld [vmem:[#allocation3 + $0xa4] sm:$0x1]
        %v2451 = vld [vmem:[#allocation3 + $0xa8] sm:$0xf]
        %v2452 = vld [vmem:[#allocation3 + $0xac] sm:$0xf]
        %v2453 = vld [vmem:[#allocation3 + $0xb0] sm:$0x1]
        %v2454 = vld [vmem:[#allocation3 + $0xb4] sm:$0xf]
        %v2455 = vld [vmem:[#allocation3 + $0xb8] sm:$0xf]
        %v2456 = vld [vmem:[#allocation3 + $0xbc] sm:$0x1]
        %v2457 = vld [vmem:[%s2360] sm:$0xf]
        %v2458 = vld [vmem:[%s2360 + $0x4] sm:$0xf]
        %v2459 = vld [vmem:[%s2360 + $0x8] sm:$0x1]
        %v2460 = vld [vmem:[%s2360 + $0xc] sm:$0xf]
        %v2461 = vld [vmem:[%s2360 + $0x10] sm:$0xf]
        %v2462 = vld [vmem:[%s2360 + $0x14] sm:$0x1]
        %v2463 = vld [vmem:[%s2360 + $0x18] sm:$0xf]
        %v2464 = vld [vmem:[%s2360 + $0x1c] sm:$0xf]
        %v2465 = vld [vmem:[%s2360 + $0x20] sm:$0x1]
        %v2466 = vld [vmem:[%s2360 + $0x24] sm:$0xf]
        %v2467 = vld [vmem:[%s2360 + $0x28] sm:$0xf]
        %v2468 = vld [vmem:[%s2360 + $0x2c] sm:$0x1]
        %v2469 = vld [vmem:[%s2360 + $0x30] sm:$0xf]
        %v2470 = vld [vmem:[%s2360 + $0x34] sm:$0xf]
        %v2471 = vld [vmem:[%s2360 + $0x38] sm:$0x1]
        %v2472 = vld [vmem:[%s2360 + $0x3c] sm:$0xf]
        %v2473 = vld [vmem:[%s2360 + $0x40] sm:$0xf]
        %v2474 = vld [vmem:[%s2360 + $0x44] sm:$0x1]
        %v2475 = vld [vmem:[%s2360 + $0x48] sm:$0xf]
        %v2476 = vld [vmem:[%s2360 + $0x4c] sm:$0xf]
        %v2477 = vld [vmem:[%s2360 + $0x50] sm:$0x1]
        %v2478 = vld [vmem:[%s2360 + $0x54] sm:$0xf]
        %v2479 = vld [vmem:[%s2360 + $0x58] sm:$0xf]
        %v2480 = vld [vmem:[%s2360 + $0x5c] sm:$0x1]
        %v2481 = vld [vmem:[%s2360 + $0x60] sm:$0xf]
        %v2482 = vld [vmem:[%s2360 + $0x64] sm:$0xf]
        %v2483 = vld [vmem:[%s2360 + $0x68] sm:$0x1]
        %v2484 = vld [vmem:[%s2360 + $0x6c] sm:$0xf]
        %v2485 = vld [vmem:[%s2360 + $0x70] sm:$0xf]
        %v2486 = vld [vmem:[%s2360 + $0x74] sm:$0x1]
        %v2487 = vld [vmem:[%s2360 + $0x78] sm:$0xf]
        %v2488 = vld [vmem:[%s2360 + $0x7c] sm:$0xf]
        %v2489 = vld [vmem:[%s2360 + $0x80] sm:$0x1]
        %v2490 = vld [vmem:[%s2360 + $0x84] sm:$0xf]
        %v2491 = vld [vmem:[%s2360 + $0x88] sm:$0xf]
        %v2492 = vld [vmem:[%s2360 + $0x8c] sm:$0x1]
        %v2493 = vld [vmem:[%s2360 + $0x90] sm:$0xf]
        %v2494 = vld [vmem:[%s2360 + $0x94] sm:$0xf]
        %v2495 = vld [vmem:[%s2360 + $0x98] sm:$0x1]
        %v2496 = vld [vmem:[%s2360 + $0x9c] sm:$0xf]
        %v2497 = vld [vmem:[%s2360 + $0xa0] sm:$0xf]
        %v2498 = vld [vmem:[%s2360 + $0xa4] sm:$0x1]
        %v2499 = vld [vmem:[%s2360 + $0xa8] sm:$0xf]
        %v2500 = vld [vmem:[%s2360 + $0xac] sm:$0xf]
        %v2501 = vld [vmem:[%s2360 + $0xb0] sm:$0x1]
        %v2502 = vld [vmem:[%s2360 + $0xb4] sm:$0xf]
        %v2503 = vld [vmem:[%s2360 + $0xb8] sm:$0xf]
        %v2504 = vld [vmem:[%s2360 + $0xbc] sm:$0x1]
        %s2505 = scalar_lea.vmem [#allocation3], 24
        %v2506 = vld [vmem:[%s2505] sm:$0xf]
        %v2507 = vld [vmem:[%s2505 + $0x4] sm:$0xf]
        %v2508 = vld [vmem:[%s2505 + $0x8] sm:$0x1]
        %v2509 = vld [vmem:[%s2505 + $0xc] sm:$0xf]
        %v2510 = vld [vmem:[%s2505 + $0x10] sm:$0xf]
        %v2511 = vld [vmem:[%s2505 + $0x14] sm:$0x1]
        %v2512 = vld [vmem:[%s2505 + $0x18] sm:$0xf]
        %v2513 = vld [vmem:[%s2505 + $0x1c] sm:$0xf]
        %v2514 = vld [vmem:[%s2505 + $0x20] sm:$0x1]
        %v2515 = vld [vmem:[%s2505 + $0x24] sm:$0xf]
        %v2516 = vld [vmem:[%s2505 + $0x28] sm:$0xf]
        %v2517 = vld [vmem:[%s2505 + $0x2c] sm:$0x1]
        %v2518 = vld [vmem:[%s2505 + $0x30] sm:$0xf]
        %v2519 = vld [vmem:[%s2505 + $0x34] sm:$0xf]
        %v2520 = vld [vmem:[%s2505 + $0x38] sm:$0x1]
        %v2521 = vld [vmem:[%s2505 + $0x3c] sm:$0xf]
        %v2522 = vld [vmem:[%s2505 + $0x40] sm:$0xf]
        %v2523 = vld [vmem:[%s2505 + $0x44] sm:$0x1]
        %v2524 = vld [vmem:[%s2505 + $0x48] sm:$0xf]
        %v2525 = vld [vmem:[%s2505 + $0x4c] sm:$0xf]
        %v2526 = vld [vmem:[%s2505 + $0x50] sm:$0x1]
        %v2527 = vld [vmem:[%s2505 + $0x54] sm:$0xf]
        %v2528 = vld [vmem:[%s2505 + $0x58] sm:$0xf]
        %v2529 = vld [vmem:[%s2505 + $0x5c] sm:$0x1]
        %v2530 = vld [vmem:[%s2505 + $0x60] sm:$0xf]
        %v2531 = vld [vmem:[%s2505 + $0x64] sm:$0xf]
        %v2532 = vld [vmem:[%s2505 + $0x68] sm:$0x1]
        %v2533 = vld [vmem:[%s2505 + $0x6c] sm:$0xf]
        %v2534 = vld [vmem:[%s2505 + $0x70] sm:$0xf]
        %v2535 = vld [vmem:[%s2505 + $0x74] sm:$0x1]
        %v2536 = vld [vmem:[%s2505 + $0x78] sm:$0xf]
        %v2537 = vld [vmem:[%s2505 + $0x7c] sm:$0xf]
        %v2538 = vld [vmem:[%s2505 + $0x80] sm:$0x1]
        %v2539 = vld [vmem:[%s2505 + $0x84] sm:$0xf]
        %v2540 = vld [vmem:[%s2505 + $0x88] sm:$0xf]
        %v2541 = vld [vmem:[%s2505 + $0x8c] sm:$0x1]
        %v2542 = vld [vmem:[%s2505 + $0x90] sm:$0xf]
        %v2543 = vld [vmem:[%s2505 + $0x94] sm:$0xf]
        %v2544 = vld [vmem:[%s2505 + $0x98] sm:$0x1]
        %v2545 = vld [vmem:[%s2505 + $0x9c] sm:$0xf]
        %v2546 = vld [vmem:[%s2505 + $0xa0] sm:$0xf]
        %v2547 = vld [vmem:[%s2505 + $0xa4] sm:$0x1]
        %v2548 = vld [vmem:[%s2505 + $0xa8] sm:$0xf]
        %v2549 = vld [vmem:[%s2505 + $0xac] sm:$0xf]
        %v2550 = vld [vmem:[%s2505 + $0xb0] sm:$0x1]
        %v2551 = vld [vmem:[%s2505 + $0xb4] sm:$0xf]
        %v2552 = vld [vmem:[%s2505 + $0xb8] sm:$0xf]
        %v2553 = vld [vmem:[%s2505 + $0xbc] sm:$0x1]
        %v2602 = vunpack.c.l.b16 %v2409
        %v2603 = vunpack.c.l.b16 %v2410
        %v2604 = vunpack.c.l.b16 %v2411
        %v2605 = vunpack.c.l.b16 %v2412
        %v2606 = vunpack.c.l.b16 %v2413
        %v2607 = vunpack.c.l.b16 %v2414
        %v2608 = vunpack.c.l.b16 %v2415
        %v2609 = vunpack.c.l.b16 %v2416
        %v2610 = vunpack.c.l.b16 %v2417
        %v2611 = vunpack.c.l.b16 %v2418
        %v2612 = vunpack.c.l.b16 %v2419
        %v2613 = vunpack.c.l.b16 %v2420
        %v2614 = vunpack.c.l.b16 %v2421
        %v2615 = vunpack.c.l.b16 %v2422
        %v2616 = vunpack.c.l.b16 %v2423
        %v2617 = vunpack.c.l.b16 %v2424
        %v2618 = vunpack.c.l.b16 %v2425
        %v2619 = vunpack.c.l.b16 %v2426
        %v2620 = vunpack.c.l.b16 %v2427
        %v2621 = vunpack.c.l.b16 %v2428
        %v2622 = vunpack.c.l.b16 %v2429
        %v2623 = vunpack.c.l.b16 %v2430
        %v2624 = vunpack.c.l.b16 %v2431
        %v2625 = vunpack.c.l.b16 %v2432
        %v2626 = vunpack.c.l.b16 %v2433
        %v2627 = vunpack.c.l.b16 %v2434
        %v2628 = vunpack.c.l.b16 %v2435
        %v2629 = vunpack.c.l.b16 %v2436
        %v2630 = vunpack.c.l.b16 %v2437
        %v2631 = vunpack.c.l.b16 %v2438
        %v2632 = vunpack.c.l.b16 %v2439
        %v2633 = vunpack.c.l.b16 %v2440
        %v2634 = vunpack.c.l.b16 %v2441
        %v2635 = vunpack.c.l.b16 %v2442
        %v2636 = vunpack.c.l.b16 %v2443
        %v2637 = vunpack.c.l.b16 %v2444
        %v2638 = vunpack.c.l.b16 %v2445
        %v2639 = vunpack.c.l.b16 %v2446
        %v2640 = vunpack.c.l.b16 %v2447
        %v2641 = vunpack.c.l.b16 %v2448
        %v2642 = vunpack.c.l.b16 %v2449
        %v2643 = vunpack.c.l.b16 %v2450
        %v2644 = vunpack.c.l.b16 %v2451
        %v2645 = vunpack.c.l.b16 %v2452
        %v2646 = vunpack.c.l.b16 %v2453
        %v2647 = vunpack.c.l.b16 %v2454
        %v2648 = vunpack.c.l.b16 %v2455
        %v2649 = vunpack.c.l.b16 %v2456
        %v2650 = vpack.c.b16 %v2603, %v2602
        %v2651 = vpack.c.b16 %v2604, %v2604
        %v2652 = vpack.c.b16 %v2606, %v2605
        %v2653 = vpack.c.b16 %v2607, %v2607
        %v2654 = vpack.c.b16 %v2609, %v2608
        %v2655 = vpack.c.b16 %v2610, %v2610
        %v2656 = vpack.c.b16 %v2612, %v2611
        %v2657 = vpack.c.b16 %v2613, %v2613
        %v2658 = vpack.c.b16 %v2615, %v2614
        %v2659 = vpack.c.b16 %v2616, %v2616
        %v2660 = vpack.c.b16 %v2618, %v2617
        %v2661 = vpack.c.b16 %v2619, %v2619
        %v2662 = vpack.c.b16 %v2621, %v2620
        %v2663 = vpack.c.b16 %v2622, %v2622
        %v2664 = vpack.c.b16 %v2624, %v2623
        %v2665 = vpack.c.b16 %v2625, %v2625
        %v2666 = vpack.c.b16 %v2627, %v2626
        %v2667 = vpack.c.b16 %v2628, %v2628
        %v2668 = vpack.c.b16 %v2630, %v2629
        %v2669 = vpack.c.b16 %v2631, %v2631
        %v2670 = vpack.c.b16 %v2633, %v2632
        %v2671 = vpack.c.b16 %v2634, %v2634
        %v2672 = vpack.c.b16 %v2636, %v2635
        %v2673 = vpack.c.b16 %v2637, %v2637
        %v2674 = vpack.c.b16 %v2639, %v2638
        %v2675 = vpack.c.b16 %v2640, %v2640
        %v2676 = vpack.c.b16 %v2642, %v2641
        %v2677 = vpack.c.b16 %v2643, %v2643
        %v2678 = vpack.c.b16 %v2645, %v2644
        %v2679 = vpack.c.b16 %v2646, %v2646
        %v2680 = vpack.c.b16 %v2648, %v2647
        %v2681 = vpack.c.b16 %v2649, %v2649
        %v2746 = vunpack.c.l.b16 %v2457
        %v2747 = vunpack.c.l.b16 %v2458
        %v2748 = vunpack.c.l.b16 %v2459
        %v2749 = vunpack.c.l.b16 %v2460
        %v2750 = vunpack.c.l.b16 %v2461
        %v2751 = vunpack.c.l.b16 %v2462
        %v2752 = vunpack.c.l.b16 %v2463
        %v2753 = vunpack.c.l.b16 %v2464
        %v2754 = vunpack.c.l.b16 %v2465
        %v2755 = vunpack.c.l.b16 %v2466
        %v2756 = vunpack.c.l.b16 %v2467
        %v2757 = vunpack.c.l.b16 %v2468
        %v2758 = vunpack.c.l.b16 %v2469
        %v2759 = vunpack.c.l.b16 %v2470
        %v2760 = vunpack.c.l.b16 %v2471
        %v2761 = vunpack.c.l.b16 %v2472
        %v2762 = vunpack.c.l.b16 %v2473
        %v2763 = vunpack.c.l.b16 %v2474
        %v2764 = vunpack.c.l.b16 %v2475
        %v2765 = vunpack.c.l.b16 %v2476
        %v2766 = vunpack.c.l.b16 %v2477
        %v2767 = vunpack.c.l.b16 %v2478
        %v2768 = vunpack.c.l.b16 %v2479
        %v2769 = vunpack.c.l.b16 %v2480
        %v2770 = vunpack.c.l.b16 %v2481
        %v2771 = vunpack.c.l.b16 %v2482
        %v2772 = vunpack.c.l.b16 %v2483
        %v2773 = vunpack.c.l.b16 %v2484
        %v2774 = vunpack.c.l.b16 %v2485
        %v2775 = vunpack.c.l.b16 %v2486
        %v2776 = vunpack.c.l.b16 %v2487
        %v2777 = vunpack.c.l.b16 %v2488
        %v2778 = vunpack.c.l.b16 %v2489
        %v2779 = vunpack.c.l.b16 %v2490
        %v2780 = vunpack.c.l.b16 %v2491
        %v2781 = vunpack.c.l.b16 %v2492
        %v2782 = vunpack.c.l.b16 %v2493
        %v2783 = vunpack.c.l.b16 %v2494
        %v2784 = vunpack.c.l.b16 %v2495
        %v2785 = vunpack.c.l.b16 %v2496
        %v2786 = vunpack.c.l.b16 %v2497
        %v2787 = vunpack.c.l.b16 %v2498
        %v2788 = vunpack.c.l.b16 %v2499
        %v2789 = vunpack.c.l.b16 %v2500
        %v2790 = vunpack.c.l.b16 %v2501
        %v2791 = vunpack.c.l.b16 %v2502
        %v2792 = vunpack.c.l.b16 %v2503
        %v2793 = vunpack.c.l.b16 %v2504
        %v2794 = vpack.c.b16 %v2747, %v2746
        %v2795 = vpack.c.b16 %v2748, %v2748
        %v2796 = vpack.c.b16 %v2750, %v2749
        %v2797 = vpack.c.b16 %v2751, %v2751
        %v2798 = vpack.c.b16 %v2753, %v2752
        %v2799 = vpack.c.b16 %v2754, %v2754
        %v2800 = vpack.c.b16 %v2756, %v2755
        %v2801 = vpack.c.b16 %v2757, %v2757
        %v2802 = vpack.c.b16 %v2759, %v2758
        %v2803 = vpack.c.b16 %v2760, %v2760
        %v2804 = vpack.c.b16 %v2762, %v2761
        %v2805 = vpack.c.b16 %v2763, %v2763
        %v2806 = vpack.c.b16 %v2765, %v2764
        %v2807 = vpack.c.b16 %v2766, %v2766
        %v2808 = vpack.c.b16 %v2768, %v2767
        %v2809 = vpack.c.b16 %v2769, %v2769
        %v2810 = vpack.c.b16 %v2771, %v2770
        %v2811 = vpack.c.b16 %v2772, %v2772
        %v2812 = vpack.c.b16 %v2774, %v2773
        %v2813 = vpack.c.b16 %v2775, %v2775
        %v2814 = vpack.c.b16 %v2777, %v2776
        %v2815 = vpack.c.b16 %v2778, %v2778
        %v2816 = vpack.c.b16 %v2780, %v2779
        %v2817 = vpack.c.b16 %v2781, %v2781
        %v2818 = vpack.c.b16 %v2783, %v2782
        %v2819 = vpack.c.b16 %v2784, %v2784
        %v2820 = vpack.c.b16 %v2786, %v2785
        %v2821 = vpack.c.b16 %v2787, %v2787
        %v2822 = vpack.c.b16 %v2789, %v2788
        %v2823 = vpack.c.b16 %v2790, %v2790
        %v2824 = vpack.c.b16 %v2792, %v2791
        %v2825 = vpack.c.b16 %v2793, %v2793
        %v2890 = vunpack.c.l.b16 %v2506
        %v2891 = vunpack.c.l.b16 %v2507
        %v2892 = vunpack.c.l.b16 %v2508
        %v2893 = vunpack.c.l.b16 %v2509
        %v2894 = vunpack.c.l.b16 %v2510
        %v2895 = vunpack.c.l.b16 %v2511
        %v2896 = vunpack.c.l.b16 %v2512
        %v2897 = vunpack.c.l.b16 %v2513
        %v2898 = vunpack.c.l.b16 %v2514
        %v2899 = vunpack.c.l.b16 %v2515
        %v2900 = vunpack.c.l.b16 %v2516
        %v2901 = vunpack.c.l.b16 %v2517
        %v2902 = vunpack.c.l.b16 %v2518
        %v2903 = vunpack.c.l.b16 %v2519
        %v2904 = vunpack.c.l.b16 %v2520
        %v2905 = vunpack.c.l.b16 %v2521
        %v2906 = vunpack.c.l.b16 %v2522
        %v2907 = vunpack.c.l.b16 %v2523
        %v2908 = vunpack.c.l.b16 %v2524
        %v2909 = vunpack.c.l.b16 %v2525
        %v2910 = vunpack.c.l.b16 %v2526
        %v2911 = vunpack.c.l.b16 %v2527
        %v2912 = vunpack.c.l.b16 %v2528
        %v2913 = vunpack.c.l.b16 %v2529
        %v2914 = vunpack.c.l.b16 %v2530
        %v2915 = vunpack.c.l.b16 %v2531
        %v2916 = vunpack.c.l.b16 %v2532
        %v2917 = vunpack.c.l.b16 %v2533
        %v2918 = vunpack.c.l.b16 %v2534
        %v2919 = vunpack.c.l.b16 %v2535
        %v2920 = vunpack.c.l.b16 %v2536
        %v2921 = vunpack.c.l.b16 %v2537
        %v2922 = vunpack.c.l.b16 %v2538
        %v2923 = vunpack.c.l.b16 %v2539
        %v2924 = vunpack.c.l.b16 %v2540
        %v2925 = vunpack.c.l.b16 %v2541
        %v2926 = vunpack.c.l.b16 %v2542
        %v2927 = vunpack.c.l.b16 %v2543
        %v2928 = vunpack.c.l.b16 %v2544
        %v2929 = vunpack.c.l.b16 %v2545
        %v2930 = vunpack.c.l.b16 %v2546
        %v2931 = vunpack.c.l.b16 %v2547
        %v2932 = vunpack.c.l.b16 %v2548
        %v2933 = vunpack.c.l.b16 %v2549
        %v2934 = vunpack.c.l.b16 %v2550
        %v2935 = vunpack.c.l.b16 %v2551
        %v2936 = vunpack.c.l.b16 %v2552
        %v2937 = vunpack.c.l.b16 %v2553
        %v2938 = vpack.c.b16 %v2891, %v2890
        %v2939 = vpack.c.b16 %v2892, %v2892
        %v2940 = vpack.c.b16 %v2894, %v2893
        %v2941 = vpack.c.b16 %v2895, %v2895
        %v2942 = vpack.c.b16 %v2897, %v2896
        %v2943 = vpack.c.b16 %v2898, %v2898
        %v2944 = vpack.c.b16 %v2900, %v2899
        %v2945 = vpack.c.b16 %v2901, %v2901
        %v2946 = vpack.c.b16 %v2903, %v2902
        %v2947 = vpack.c.b16 %v2904, %v2904
        %v2948 = vpack.c.b16 %v2906, %v2905
        %v2949 = vpack.c.b16 %v2907, %v2907
        %v2950 = vpack.c.b16 %v2909, %v2908
        %v2951 = vpack.c.b16 %v2910, %v2910
        %v2952 = vpack.c.b16 %v2912, %v2911
        %v2953 = vpack.c.b16 %v2913, %v2913
        %v2954 = vpack.c.b16 %v2915, %v2914
        %v2955 = vpack.c.b16 %v2916, %v2916
        %v2956 = vpack.c.b16 %v2918, %v2917
        %v2957 = vpack.c.b16 %v2919, %v2919
        %v2958 = vpack.c.b16 %v2921, %v2920
        %v2959 = vpack.c.b16 %v2922, %v2922
        %v2960 = vpack.c.b16 %v2924, %v2923
        %v2961 = vpack.c.b16 %v2925, %v2925
        %v2962 = vpack.c.b16 %v2927, %v2926
        %v2963 = vpack.c.b16 %v2928, %v2928
        %v2964 = vpack.c.b16 %v2930, %v2929
        %v2965 = vpack.c.b16 %v2931, %v2931
        %v2966 = vpack.c.b16 %v2933, %v2932
        %v2967 = vpack.c.b16 %v2934, %v2934
        %v2968 = vpack.c.b16 %v2936, %v2935
        %v2969 = vpack.c.b16 %v2937, %v2937
        %v2986 = vld [vmem:[%s652] sm:$0xf]
        %v2987 = vld [vmem:[%s652 + $0x4] sm:$0xf]
        %v2988 = vld [vmem:[%s652 + $0x8] sm:$0xf]
        %v2989 = vld [vmem:[%s652 + $0xc] sm:$0xf]
        %v2990 = vld [vmem:[%s652 + $0x10] sm:$0xf]
        %v2991 = vld [vmem:[%s652 + $0x14] sm:$0xf]
        %v2992 = vld [vmem:[%s652 + $0x18] sm:$0xf]
        %v2993 = vld [vmem:[%s652 + $0x1c] sm:$0xf]
        %v2994 = vld [vmem:[%s652 + $0x20] sm:$0xf]
        %v2995 = vld [vmem:[%s652 + $0x24] sm:$0xf]
        %v2996 = vld [vmem:[%s652 + $0x28] sm:$0xf]
        %v2997 = vld [vmem:[%s652 + $0x2c] sm:$0xf]
        %v2998 = vld [vmem:[%s652 + $0x30] sm:$0xf]
        %v2999 = vld [vmem:[%s652 + $0x34] sm:$0xf]
        %v3000 = vld [vmem:[%s652 + $0x38] sm:$0xf]
        %v3001 = vld [vmem:[%s652 + $0x3c] sm:$0xf]
        %v3002 = vld [vmem:[%s652 + $0x40] sm:$0xf]
        %v3003 = vld [vmem:[%s652 + $0x44] sm:$0xf]
        %v3004 = vld [vmem:[%s652 + $0x48] sm:$0xf]
        %v3005 = vld [vmem:[%s652 + $0x4c] sm:$0xf]
        %v3006 = vld [vmem:[%s652 + $0x50] sm:$0xf]
        %v3007 = vld [vmem:[%s652 + $0x54] sm:$0xf]
        %v3008 = vld [vmem:[%s652 + $0x58] sm:$0xf]
        %v3009 = vld [vmem:[%s652 + $0x5c] sm:$0xf]
        %v3010 = vld [vmem:[%s652 + $0x60] sm:$0xf]
        %v3011 = vld [vmem:[%s652 + $0x64] sm:$0xf]
        %v3012 = vld [vmem:[%s652 + $0x68] sm:$0xf]
        %v3013 = vld [vmem:[%s652 + $0x6c] sm:$0xf]
        %v3014 = vld [vmem:[%s652 + $0x70] sm:$0xf]
        %v3015 = vld [vmem:[%s652 + $0x74] sm:$0xf]
        %v3016 = vld [vmem:[%s652 + $0x78] sm:$0xf]
        %v3017 = vld [vmem:[%s652 + $0x7c] sm:$0xf]
        %v3018 = vld [vmem:[%s652 + $0x80] sm:$0xf]
        %v3019 = vld [vmem:[%s652 + $0x84] sm:$0xf]
        %v3020 = vld [vmem:[%s652 + $0x88] sm:$0xf]
        %v3021 = vld [vmem:[%s652 + $0x8c] sm:$0xf]
        %v3022 = vld [vmem:[%s652 + $0x90] sm:$0xf]
        %v3023 = vld [vmem:[%s652 + $0x94] sm:$0xf]
        %v3024 = vld [vmem:[%s652 + $0x98] sm:$0xf]
        %v3025 = vld [vmem:[%s652 + $0x9c] sm:$0xf]
        %v3026 = vld [vmem:[%s652 + $0xa0] sm:$0xf]
        %v3027 = vld [vmem:[%s652 + $0xa4] sm:$0xf]
        %v3028 = vld [vmem:[%s652 + $0xa8] sm:$0xf]
        %v3029 = vld [vmem:[%s652 + $0xac] sm:$0xf]
        %v3030 = vld [vmem:[%s652 + $0xb0] sm:$0xf]
        %v3031 = vld [vmem:[%s652 + $0xb4] sm:$0xf]
        %v3032 = vld [vmem:[%s652 + $0xb8] sm:$0xf]
        %v3033 = vld [vmem:[%s652 + $0xbc] sm:$0xf]
        %vm3034 = vsmask.f32 7424
        %v3036 = vshrl.u32 %v2650, 16
        %v3038 = vshll.u32 %v2650, 16
        %v3040 = vrot.slane %v3038, 1
        %v3041 = vor.u32 %v3036, %v3040
        %v3043 = vshll.u32 %v2651, 16
        %v3045 = vrot.slane %v3043, 1
        %v3046 = vsel %vm3034, %v3041, %v3045
        %v3048 = vshrl.u32 %v2794, 16
        %v3050 = vshll.u32 %v2794, 16
        %v3052 = vrot.slane %v3050, 1
        %v3053 = vor.u32 %v3048, %v3052
        %v3055 = vshll.u32 %v2795, 16
        %v3057 = vrot.slane %v3055, 1
        %v3058 = vsel %vm3034, %v3053, %v3057
        %v3060 = vshrl.u32 %v2938, 16
        %v3062 = vshll.u32 %v2938, 16
        %v3064 = vrot.slane %v3062, 1
        %v3065 = vor.u32 %v3060, %v3064
        %v3067 = vshll.u32 %v2939, 16
        %v3069 = vrot.slane %v3067, 1
        %v3070 = vsel %vm3034, %v3065, %v3069
        %v3072 = vshrl.u32 %v2652, 16
        %v3074 = vshll.u32 %v2652, 16
        %v3076 = vrot.slane %v3074, 1
        %v3077 = vor.u32 %v3072, %v3076
        %v3079 = vshll.u32 %v2653, 16
        %v3081 = vrot.slane %v3079, 1
        %v3082 = vsel %vm3034, %v3077, %v3081
        %v3084 = vshrl.u32 %v2796, 16
        %v3086 = vshll.u32 %v2796, 16
        %v3088 = vrot.slane %v3086, 1
        %v3089 = vor.u32 %v3084, %v3088
        %v3091 = vshll.u32 %v2797, 16
        %v3093 = vrot.slane %v3091, 1
        %v3094 = vsel %vm3034, %v3089, %v3093
        %v3096 = vshrl.u32 %v2940, 16
        %v3098 = vshll.u32 %v2940, 16
        %v3100 = vrot.slane %v3098, 1
        %v3101 = vor.u32 %v3096, %v3100
        %v3103 = vshll.u32 %v2941, 16
        %v3105 = vrot.slane %v3103, 1
        %v3106 = vsel %vm3034, %v3101, %v3105
        %v3108 = vshrl.u32 %v2654, 16
        %v3110 = vshll.u32 %v2654, 16
        %v3112 = vrot.slane %v3110, 1
        %v3113 = vor.u32 %v3108, %v3112
        %v3115 = vshll.u32 %v2655, 16
        %v3117 = vrot.slane %v3115, 1
        %v3118 = vsel %vm3034, %v3113, %v3117
        %v3120 = vshrl.u32 %v2798, 16
        %v3122 = vshll.u32 %v2798, 16
        %v3124 = vrot.slane %v3122, 1
        %v3125 = vor.u32 %v3120, %v3124
        %v3127 = vshll.u32 %v2799, 16
        %v3129 = vrot.slane %v3127, 1
        %v3130 = vsel %vm3034, %v3125, %v3129
        %v3132 = vshrl.u32 %v2942, 16
        %v3134 = vshll.u32 %v2942, 16
        %v3136 = vrot.slane %v3134, 1
        %v3137 = vor.u32 %v3132, %v3136
        %v3139 = vshll.u32 %v2943, 16
        %v3141 = vrot.slane %v3139, 1
        %v3142 = vsel %vm3034, %v3137, %v3141
        %v3144 = vshrl.u32 %v2656, 16
        %v3146 = vshll.u32 %v2656, 16
        %v3148 = vrot.slane %v3146, 1
        %v3149 = vor.u32 %v3144, %v3148
        %v3151 = vshll.u32 %v2657, 16
        %v3153 = vrot.slane %v3151, 1
        %v3154 = vsel %vm3034, %v3149, %v3153
        %v3156 = vshrl.u32 %v2800, 16
        %v3158 = vshll.u32 %v2800, 16
        %v3160 = vrot.slane %v3158, 1
        %v3161 = vor.u32 %v3156, %v3160
        %v3163 = vshll.u32 %v2801, 16
        %v3165 = vrot.slane %v3163, 1
        %v3166 = vsel %vm3034, %v3161, %v3165
        %v3168 = vshrl.u32 %v2944, 16
        %v3170 = vshll.u32 %v2944, 16
        %v3172 = vrot.slane %v3170, 1
        %v3173 = vor.u32 %v3168, %v3172
        %v3175 = vshll.u32 %v2945, 16
        %v3177 = vrot.slane %v3175, 1
        %v3178 = vsel %vm3034, %v3173, %v3177
        %v3180 = vshrl.u32 %v2658, 16
        %v3182 = vshll.u32 %v2658, 16
        %v3184 = vrot.slane %v3182, 1
        %v3185 = vor.u32 %v3180, %v3184
        %v3187 = vshll.u32 %v2659, 16
        %v3189 = vrot.slane %v3187, 1
        %v3190 = vsel %vm3034, %v3185, %v3189
        %v3192 = vshrl.u32 %v2802, 16
        %v3194 = vshll.u32 %v2802, 16
        %v3196 = vrot.slane %v3194, 1
        %v3197 = vor.u32 %v3192, %v3196
        %v3199 = vshll.u32 %v2803, 16
        %v3201 = vrot.slane %v3199, 1
        %v3202 = vsel %vm3034, %v3197, %v3201
        %v3204 = vshrl.u32 %v2946, 16
        %v3206 = vshll.u32 %v2946, 16
        %v3208 = vrot.slane %v3206, 1
        %v3209 = vor.u32 %v3204, %v3208
        %v3211 = vshll.u32 %v2947, 16
        %v3213 = vrot.slane %v3211, 1
        %v3214 = vsel %vm3034, %v3209, %v3213
        %v3216 = vshrl.u32 %v2660, 16
        %v3218 = vshll.u32 %v2660, 16
        %v3220 = vrot.slane %v3218, 1
        %v3221 = vor.u32 %v3216, %v3220
        %v3223 = vshll.u32 %v2661, 16
        %v3225 = vrot.slane %v3223, 1
        %v3226 = vsel %vm3034, %v3221, %v3225
        %v3228 = vshrl.u32 %v2804, 16
        %v3230 = vshll.u32 %v2804, 16
        %v3232 = vrot.slane %v3230, 1
        %v3233 = vor.u32 %v3228, %v3232
        %v3235 = vshll.u32 %v2805, 16
        %v3237 = vrot.slane %v3235, 1
        %v3238 = vsel %vm3034, %v3233, %v3237
        %v3240 = vshrl.u32 %v2948, 16
        %v3242 = vshll.u32 %v2948, 16
        %v3244 = vrot.slane %v3242, 1
        %v3245 = vor.u32 %v3240, %v3244
        %v3247 = vshll.u32 %v2949, 16
        %v3249 = vrot.slane %v3247, 1
        %v3250 = vsel %vm3034, %v3245, %v3249
        %v3252 = vshrl.u32 %v2662, 16
        %v3254 = vshll.u32 %v2662, 16
        %v3256 = vrot.slane %v3254, 1
        %v3257 = vor.u32 %v3252, %v3256
        %v3259 = vshll.u32 %v2663, 16
        %v3261 = vrot.slane %v3259, 1
        %v3262 = vsel %vm3034, %v3257, %v3261
        %v3264 = vshrl.u32 %v2806, 16
        %v3266 = vshll.u32 %v2806, 16
        %v3268 = vrot.slane %v3266, 1
        %v3269 = vor.u32 %v3264, %v3268
        %v3271 = vshll.u32 %v2807, 16
        %v3273 = vrot.slane %v3271, 1
        %v3274 = vsel %vm3034, %v3269, %v3273
        %v3276 = vshrl.u32 %v2950, 16
        %v3278 = vshll.u32 %v2950, 16
        %v3280 = vrot.slane %v3278, 1
        %v3281 = vor.u32 %v3276, %v3280
        %v3283 = vshll.u32 %v2951, 16
        %v3285 = vrot.slane %v3283, 1
        %v3286 = vsel %vm3034, %v3281, %v3285
        %v3288 = vshrl.u32 %v2664, 16
        %v3290 = vshll.u32 %v2664, 16
        %v3292 = vrot.slane %v3290, 1
        %v3293 = vor.u32 %v3288, %v3292
        %v3295 = vshll.u32 %v2665, 16
        %v3297 = vrot.slane %v3295, 1
        %v3298 = vsel %vm3034, %v3293, %v3297
        %v3300 = vshrl.u32 %v2808, 16
        %v3302 = vshll.u32 %v2808, 16
        %v3304 = vrot.slane %v3302, 1
        %v3305 = vor.u32 %v3300, %v3304
        %v3307 = vshll.u32 %v2809, 16
        %v3309 = vrot.slane %v3307, 1
        %v3310 = vsel %vm3034, %v3305, %v3309
        %v3312 = vshrl.u32 %v2952, 16
        %v3314 = vshll.u32 %v2952, 16
        %v3316 = vrot.slane %v3314, 1
        %v3317 = vor.u32 %v3312, %v3316
        %v3319 = vshll.u32 %v2953, 16
        %v3321 = vrot.slane %v3319, 1
        %v3322 = vsel %vm3034, %v3317, %v3321
        %v3324 = vshrl.u32 %v2666, 16
        %v3326 = vshll.u32 %v2666, 16
        %v3328 = vrot.slane %v3326, 1
        %v3329 = vor.u32 %v3324, %v3328
        %v3331 = vshll.u32 %v2667, 16
        %v3333 = vrot.slane %v3331, 1
        %v3334 = vsel %vm3034, %v3329, %v3333
        %v3336 = vshrl.u32 %v2810, 16
        %v3338 = vshll.u32 %v2810, 16
        %v3340 = vrot.slane %v3338, 1
        %v3341 = vor.u32 %v3336, %v3340
        %v3343 = vshll.u32 %v2811, 16
        %v3345 = vrot.slane %v3343, 1
        %v3346 = vsel %vm3034, %v3341, %v3345
        %v3348 = vshrl.u32 %v2954, 16
        %v3350 = vshll.u32 %v2954, 16
        %v3352 = vrot.slane %v3350, 1
        %v3353 = vor.u32 %v3348, %v3352
        %v3355 = vshll.u32 %v2955, 16
        %v3357 = vrot.slane %v3355, 1
        %v3358 = vsel %vm3034, %v3353, %v3357
        %v3360 = vshrl.u32 %v2668, 16
        %v3362 = vshll.u32 %v2668, 16
        %v3364 = vrot.slane %v3362, 1
        %v3365 = vor.u32 %v3360, %v3364
        %v3367 = vshll.u32 %v2669, 16
        %v3369 = vrot.slane %v3367, 1
        %v3370 = vsel %vm3034, %v3365, %v3369
        %v3372 = vshrl.u32 %v2812, 16
        %v3374 = vshll.u32 %v2812, 16
        %v3376 = vrot.slane %v3374, 1
        %v3377 = vor.u32 %v3372, %v3376
        %v3379 = vshll.u32 %v2813, 16
        %v3381 = vrot.slane %v3379, 1
        %v3382 = vsel %vm3034, %v3377, %v3381
        %v3384 = vshrl.u32 %v2956, 16
        %v3386 = vshll.u32 %v2956, 16
        %v3388 = vrot.slane %v3386, 1
        %v3389 = vor.u32 %v3384, %v3388
        %v3391 = vshll.u32 %v2957, 16
        %v3393 = vrot.slane %v3391, 1
        %v3394 = vsel %vm3034, %v3389, %v3393
        %v3396 = vshrl.u32 %v2670, 16
        %v3398 = vshll.u32 %v2670, 16
        %v3400 = vrot.slane %v3398, 1
        %v3401 = vor.u32 %v3396, %v3400
        %v3403 = vshll.u32 %v2671, 16
        %v3405 = vrot.slane %v3403, 1
        %v3406 = vsel %vm3034, %v3401, %v3405
        %v3408 = vshrl.u32 %v2814, 16
        %v3410 = vshll.u32 %v2814, 16
        %v3412 = vrot.slane %v3410, 1
        %v3413 = vor.u32 %v3408, %v3412
        %v3415 = vshll.u32 %v2815, 16
        %v3417 = vrot.slane %v3415, 1
        %v3418 = vsel %vm3034, %v3413, %v3417
        %v3420 = vshrl.u32 %v2958, 16
        %v3422 = vshll.u32 %v2958, 16
        %v3424 = vrot.slane %v3422, 1
        %v3425 = vor.u32 %v3420, %v3424
        %v3427 = vshll.u32 %v2959, 16
        %v3429 = vrot.slane %v3427, 1
        %v3430 = vsel %vm3034, %v3425, %v3429
        %v3432 = vshrl.u32 %v2672, 16
        %v3434 = vshll.u32 %v2672, 16
        %v3436 = vrot.slane %v3434, 1
        %v3437 = vor.u32 %v3432, %v3436
        %v3439 = vshll.u32 %v2673, 16
        %v3441 = vrot.slane %v3439, 1
        %v3442 = vsel %vm3034, %v3437, %v3441
        %v3444 = vshrl.u32 %v2816, 16
        %v3446 = vshll.u32 %v2816, 16
        %v3448 = vrot.slane %v3446, 1
        %v3449 = vor.u32 %v3444, %v3448
        %v3451 = vshll.u32 %v2817, 16
        %v3453 = vrot.slane %v3451, 1
        %v3454 = vsel %vm3034, %v3449, %v3453
        %v3456 = vshrl.u32 %v2960, 16
        %v3458 = vshll.u32 %v2960, 16
        %v3460 = vrot.slane %v3458, 1
        %v3461 = vor.u32 %v3456, %v3460
        %v3463 = vshll.u32 %v2961, 16
        %v3465 = vrot.slane %v3463, 1
        %v3466 = vsel %vm3034, %v3461, %v3465
        %v3468 = vshrl.u32 %v2674, 16
        %v3470 = vshll.u32 %v2674, 16
        %v3472 = vrot.slane %v3470, 1
        %v3473 = vor.u32 %v3468, %v3472
        %v3475 = vshll.u32 %v2675, 16
        %v3477 = vrot.slane %v3475, 1
        %v3478 = vsel %vm3034, %v3473, %v3477
        %v3480 = vshrl.u32 %v2818, 16
        %v3482 = vshll.u32 %v2818, 16
        %v3484 = vrot.slane %v3482, 1
        %v3485 = vor.u32 %v3480, %v3484
        %v3487 = vshll.u32 %v2819, 16
        %v3489 = vrot.slane %v3487, 1
        %v3490 = vsel %vm3034, %v3485, %v3489
        %v3492 = vshrl.u32 %v2962, 16
        %v3494 = vshll.u32 %v2962, 16
        %v3496 = vrot.slane %v3494, 1
        %v3497 = vor.u32 %v3492, %v3496
        %v3499 = vshll.u32 %v2963, 16
        %v3501 = vrot.slane %v3499, 1
        %v3502 = vsel %vm3034, %v3497, %v3501
        %v3504 = vshrl.u32 %v2676, 16
        %v3506 = vshll.u32 %v2676, 16
        %v3508 = vrot.slane %v3506, 1
        %v3509 = vor.u32 %v3504, %v3508
        %v3511 = vshll.u32 %v2677, 16
        %v3513 = vrot.slane %v3511, 1
        %v3514 = vsel %vm3034, %v3509, %v3513
        %v3516 = vshrl.u32 %v2820, 16
        %v3518 = vshll.u32 %v2820, 16
        %v3520 = vrot.slane %v3518, 1
        %v3521 = vor.u32 %v3516, %v3520
        %v3523 = vshll.u32 %v2821, 16
        %v3525 = vrot.slane %v3523, 1
        %v3526 = vsel %vm3034, %v3521, %v3525
        %v3528 = vshrl.u32 %v2964, 16
        %v3530 = vshll.u32 %v2964, 16
        %v3532 = vrot.slane %v3530, 1
        %v3533 = vor.u32 %v3528, %v3532
        %v3535 = vshll.u32 %v2965, 16
        %v3537 = vrot.slane %v3535, 1
        %v3538 = vsel %vm3034, %v3533, %v3537
        %v3540 = vshrl.u32 %v2678, 16
        %v3542 = vshll.u32 %v2678, 16
        %v3544 = vrot.slane %v3542, 1
        %v3545 = vor.u32 %v3540, %v3544
        %v3547 = vshll.u32 %v2679, 16
        %v3549 = vrot.slane %v3547, 1
        %v3550 = vsel %vm3034, %v3545, %v3549
        %v3552 = vshrl.u32 %v2822, 16
        %v3554 = vshll.u32 %v2822, 16
        %v3556 = vrot.slane %v3554, 1
        %v3557 = vor.u32 %v3552, %v3556
        %v3559 = vshll.u32 %v2823, 16
        %v3561 = vrot.slane %v3559, 1
        %v3562 = vsel %vm3034, %v3557, %v3561
        %v3564 = vshrl.u32 %v2966, 16
        %v3566 = vshll.u32 %v2966, 16
        %v3568 = vrot.slane %v3566, 1
        %v3569 = vor.u32 %v3564, %v3568
        %v3571 = vshll.u32 %v2967, 16
        %v3573 = vrot.slane %v3571, 1
        %v3574 = vsel %vm3034, %v3569, %v3573
        %v3576 = vshrl.u32 %v2680, 16
        %v3578 = vshll.u32 %v2680, 16
        %v3580 = vrot.slane %v3578, 1
        %v3581 = vor.u32 %v3576, %v3580
        %v3583 = vshll.u32 %v2681, 16
        %v3585 = vrot.slane %v3583, 1
        %v3586 = vsel %vm3034, %v3581, %v3585
        %v3588 = vshrl.u32 %v2824, 16
        %v3590 = vshll.u32 %v2824, 16
        %v3592 = vrot.slane %v3590, 1
        %v3593 = vor.u32 %v3588, %v3592
        %v3595 = vshll.u32 %v2825, 16
        %v3597 = vrot.slane %v3595, 1
        %v3598 = vsel %vm3034, %v3593, %v3597
        %v3600 = vshrl.u32 %v2968, 16
        %v3602 = vshll.u32 %v2968, 16
        %v3604 = vrot.slane %v3602, 1
        %v3605 = vor.u32 %v3600, %v3604
        %v3607 = vshll.u32 %v2969, 16
        %v3609 = vrot.slane %v3607, 1
        %v3610 = vsel %vm3034, %v3605, %v3609
        %s3659 = scalar_lea.vmem %s652, 192 [#allocation4]
        %v3660 = vld [vmem:[%s3659] sm:$0xf]
        %v3661 = vld [vmem:[%s3659 + $0x4] sm:$0xf]
        %v3662 = vld [vmem:[%s3659 + $0x8] sm:$0xf]
        %v3663 = vld [vmem:[%s3659 + $0xc] sm:$0xf]
        %v3664 = vld [vmem:[%s3659 + $0x10] sm:$0xf]
        %v3665 = vld [vmem:[%s3659 + $0x14] sm:$0xf]
        %v3666 = vld [vmem:[%s3659 + $0x18] sm:$0xf]
        %v3667 = vld [vmem:[%s3659 + $0x1c] sm:$0xf]
        %v3668 = vld [vmem:[%s3659 + $0x20] sm:$0xf]
        %v3669 = vld [vmem:[%s3659 + $0x24] sm:$0xf]
        %v3670 = vld [vmem:[%s3659 + $0x28] sm:$0xf]
        %v3671 = vld [vmem:[%s3659 + $0x2c] sm:$0xf]
        %v3672 = vld [vmem:[%s3659 + $0x30] sm:$0xf]
        %v3673 = vld [vmem:[%s3659 + $0x34] sm:$0xf]
        %v3674 = vld [vmem:[%s3659 + $0x38] sm:$0xf]
        %v3675 = vld [vmem:[%s3659 + $0x3c] sm:$0xf]
        %v3676 = vld [vmem:[%s3659 + $0x40] sm:$0xf]
        %v3677 = vld [vmem:[%s3659 + $0x44] sm:$0xf]
        %v3678 = vld [vmem:[%s3659 + $0x48] sm:$0xf]
        %v3679 = vld [vmem:[%s3659 + $0x4c] sm:$0xf]
        %v3680 = vld [vmem:[%s3659 + $0x50] sm:$0xf]
        %v3681 = vld [vmem:[%s3659 + $0x54] sm:$0xf]
        %v3682 = vld [vmem:[%s3659 + $0x58] sm:$0xf]
        %v3683 = vld [vmem:[%s3659 + $0x5c] sm:$0xf]
        %v3684 = vld [vmem:[%s3659 + $0x60] sm:$0xf]
        %v3685 = vld [vmem:[%s3659 + $0x64] sm:$0xf]
        %v3686 = vld [vmem:[%s3659 + $0x68] sm:$0xf]
        %v3687 = vld [vmem:[%s3659 + $0x6c] sm:$0xf]
        %v3688 = vld [vmem:[%s3659 + $0x70] sm:$0xf]
        %v3689 = vld [vmem:[%s3659 + $0x74] sm:$0xf]
        %v3690 = vld [vmem:[%s3659 + $0x78] sm:$0xf]
        %v3691 = vld [vmem:[%s3659 + $0x7c] sm:$0xf]
        %v3692 = vld [vmem:[%s3659 + $0x80] sm:$0xf]
        %v3693 = vld [vmem:[%s3659 + $0x84] sm:$0xf]
        %v3694 = vld [vmem:[%s3659 + $0x88] sm:$0xf]
        %v3695 = vld [vmem:[%s3659 + $0x8c] sm:$0xf]
        %v3696 = vld [vmem:[%s3659 + $0x90] sm:$0xf]
        %v3697 = vld [vmem:[%s3659 + $0x94] sm:$0xf]
        %v3698 = vld [vmem:[%s3659 + $0x98] sm:$0xf]
        %v3699 = vld [vmem:[%s3659 + $0x9c] sm:$0xf]
        %v3700 = vld [vmem:[%s3659 + $0xa0] sm:$0xf]
        %v3701 = vld [vmem:[%s3659 + $0xa4] sm:$0xf]
        %v3702 = vld [vmem:[%s3659 + $0xa8] sm:$0xf]
        %v3703 = vld [vmem:[%s3659 + $0xac] sm:$0xf]
        %v3704 = vld [vmem:[%s3659 + $0xb0] sm:$0xf]
        %v3705 = vld [vmem:[%s3659 + $0xb4] sm:$0xf]
        %v3706 = vld [vmem:[%s3659 + $0xb8] sm:$0xf]
        %v3707 = vld [vmem:[%s3659 + $0xbc] sm:$0xf]
        %v3756 = vunpack.c.l.b16 %v3660
        %v3757 = vunpack.c.l.b16 %v3661
        %v3758 = vunpack.c.l.b16 %v3662
        %v3759 = vunpack.c.l.b16 %v3663
        %v3760 = vunpack.c.l.b16 %v3664
        %v3761 = vunpack.c.l.b16 %v3665
        %v3762 = vunpack.c.l.b16 %v3666
        %v3763 = vunpack.c.l.b16 %v3667
        %v3764 = vunpack.c.l.b16 %v3668
        %v3765 = vunpack.c.l.b16 %v3669
        %v3766 = vunpack.c.l.b16 %v3670
        %v3767 = vunpack.c.l.b16 %v3671
        %v3768 = vunpack.c.l.b16 %v3672
        %v3769 = vunpack.c.l.b16 %v3673
        %v3770 = vunpack.c.l.b16 %v3674
        %v3771 = vunpack.c.l.b16 %v3675
        %v3772 = vunpack.c.l.b16 %v3676
        %v3773 = vunpack.c.l.b16 %v3677
        %v3774 = vunpack.c.l.b16 %v3678
        %v3775 = vunpack.c.l.b16 %v3679
        %v3776 = vunpack.c.l.b16 %v3680
        %v3777 = vunpack.c.l.b16 %v3681
        %v3778 = vunpack.c.l.b16 %v3682
        %v3779 = vunpack.c.l.b16 %v3683
        %v3780 = vunpack.c.l.b16 %v3684
        %v3781 = vunpack.c.l.b16 %v3685
        %v3782 = vunpack.c.l.b16 %v3686
        %v3783 = vunpack.c.l.b16 %v3687
        %v3784 = vunpack.c.l.b16 %v3688
        %v3785 = vunpack.c.l.b16 %v3689
        %v3786 = vunpack.c.l.b16 %v3690
        %v3787 = vunpack.c.l.b16 %v3691
        %v3788 = vunpack.c.l.b16 %v3692
        %v3789 = vunpack.c.l.b16 %v3693
        %v3790 = vunpack.c.l.b16 %v3694
        %v3791 = vunpack.c.l.b16 %v3695
        %v3792 = vunpack.c.l.b16 %v3696
        %v3793 = vunpack.c.l.b16 %v3697
        %v3794 = vunpack.c.l.b16 %v3698
        %v3795 = vunpack.c.l.b16 %v3699
        %v3796 = vunpack.c.l.b16 %v3700
        %v3797 = vunpack.c.l.b16 %v3701
        %v3798 = vunpack.c.l.b16 %v3702
        %v3799 = vunpack.c.l.b16 %v3703
        %v3800 = vunpack.c.l.b16 %v3704
        %v3801 = vunpack.c.l.b16 %v3705
        %v3802 = vunpack.c.l.b16 %v3706
        %v3803 = vunpack.c.l.b16 %v3707
        %v3804 = vpack.c.b16 %v3757, %v3756
        %v3805 = vpack.c.b16 %v3759, %v3758
        %v3806 = vpack.c.b16 %v3761, %v3760
        %v3807 = vpack.c.b16 %v3763, %v3762
        %v3808 = vpack.c.b16 %v3765, %v3764
        %v3809 = vpack.c.b16 %v3767, %v3766
        %v3810 = vpack.c.b16 %v3769, %v3768
        %v3811 = vpack.c.b16 %v3771, %v3770
        %v3812 = vpack.c.b16 %v3773, %v3772
        %v3813 = vpack.c.b16 %v3775, %v3774
        %v3814 = vpack.c.b16 %v3777, %v3776
        %v3815 = vpack.c.b16 %v3779, %v3778
        %v3816 = vpack.c.b16 %v3781, %v3780
        %v3817 = vpack.c.b16 %v3783, %v3782
        %v3818 = vpack.c.b16 %v3785, %v3784
        %v3819 = vpack.c.b16 %v3787, %v3786
        %v3820 = vpack.c.b16 %v3789, %v3788
        %v3821 = vpack.c.b16 %v3791, %v3790
        %v3822 = vpack.c.b16 %v3793, %v3792
        %v3823 = vpack.c.b16 %v3795, %v3794
        %v3824 = vpack.c.b16 %v3797, %v3796
        %v3825 = vpack.c.b16 %v3799, %v3798
        %v3826 = vpack.c.b16 %v3801, %v3800
        %v3827 = vpack.c.b16 %v3803, %v3802
        %3852 = vmatprep.subr.bf16.mxu0 0
        %3853 = vmatpush1.bf16.msra.mxu0 %v3804
        %3854 = vmatprep.subr.bf16.mxu0 0
        %3855 = vmatpush1.bf16.msra.mxu0 %v3805
        %3856 = vmatprep.subr.bf16.mxu0 0
        %3857 = vmatpush1.bf16.msra.mxu0 %v3806
        %3858 = vmatprep.subr.bf16.mxu0 0
        %3859 = vmatpush1.bf16.msra.mxu0 %v3807
        %3860 = vmatprep.subr.bf16.mxu0 0
        %3861 = vmatpush1.bf16.msra.mxu0 %v3808
        %3862 = vmatprep.subr.bf16.mxu0 0
        %3863 = vmatpush1.bf16.msra.mxu0 %v3809
        %3864 = vmatprep.subr.bf16.mxu0 0
        %3865 = vmatpush1.bf16.msra.mxu0 %v3810
        %3866 = vmatprep.subr.bf16.mxu0 0
        %3867 = vmatpush1.bf16.msra.mxu0 %v3811
        %3868 = vmatprep.subr.bf16.mxu0 0
        %3869 = vmatpush1.bf16.msra.mxu0 %v3812
        %3870 = vmatprep.subr.bf16.mxu0 0
        %3871 = vmatpush1.bf16.msra.mxu0 %v3813
        %3872 = vmatprep.subr.bf16.mxu0 0
        %3873 = vmatpush1.bf16.msra.mxu0 %v3814
        %3874 = vmatprep.subr.bf16.mxu0 0
        %3875 = vmatpush1.bf16.msra.mxu0 %v3815
        %3876 = vmatprep.subr.bf16.mxu0 0
        %3877 = vmatpush1.bf16.msra.mxu0 %v3816
        %3878 = vmatprep.subr.bf16.mxu0 0
        %3879 = vmatpush1.bf16.msra.mxu0 %v3817
        %3880 = vmatprep.subr.bf16.mxu0 0
        %3881 = vmatpush1.bf16.msra.mxu0 %v3818
        %3882 = vmatprep.subr.bf16.mxu0 0
        %3883 = vmatpush1.bf16.msra.mxu0 %v3819
        %3884 = vmatprep.mubr.bf16.mxu0 %v3058
        %3885 = vmatmul.mubr.bf16.gmra.mrb[0].mxu0 %v3046
        %v3886 = vpop.f32.mrb[0].mxu0
        %v3887 = vadd.f32 0.0, %v3886
        %v3888 = vpop.f32.mrb[0].mxu0
        %v3889 = vpop.f32.mrb[0].mxu0
        %v3890 = vadd.f32 0.0, %v3889
        %v3891 = vpop.f32.mrb[0].mxu0
        %3892 = vmatprep.mubr.bf16.mxu0 %v3094
        %3893 = vmatmul.mubr.bf16.gmra.mrb[0].mxu0 %v3082
        %v3894 = vpop.f32.mrb[0].mxu0
        %v3895 = vadd.f32 0.0, %v3894
        %v3896 = vpop.f32.mrb[0].mxu0
        %v3897 = vpop.f32.mrb[0].mxu0
        %v3898 = vadd.f32 0.0, %v3897
        %v3899 = vpop.f32.mrb[0].mxu0
        %3900 = vmatprep.mubr.bf16.mxu0 %v3130
        %3901 = vmatmul.mubr.bf16.gmra.mrb[0].mxu0 %v3118
        %v3902 = vpop.f32.mrb[0].mxu0
        %v3903 = vadd.f32 0.0, %v3902
        %v3904 = vpop.f32.mrb[0].mxu0
        %v3905 = vpop.f32.mrb[0].mxu0
        %v3906 = vadd.f32 0.0, %v3905
        %v3907 = vpop.f32.mrb[0].mxu0
        %3908 = vmatprep.mubr.bf16.mxu0 %v3166
        %3909 = vmatmul.mubr.bf16.gmra.mrb[0].mxu0 %v3154
        %v3910 = vpop.f32.mrb[0].mxu0
        %v3911 = vadd.f32 0.0, %v3910
        %v3912 = vpop.f32.mrb[0].mxu0
        %v3913 = vpop.f32.mrb[0].mxu0
        %v3914 = vadd.f32 0.0, %v3913
        %v3915 = vpop.f32.mrb[0].mxu0
        %3916 = vmatprep.mubr.bf16.mxu0 %v3202
        %3917 = vmatmul.mubr.bf16.gmra.mrb[0].mxu0 %v3190
        %v3918 = vpop.f32.mrb[0].mxu0
        %v3919 = vadd.f32 0.0, %v3918
        %v3920 = vpop.f32.mrb[0].mxu0
        %v3921 = vpop.f32.mrb[0].mxu0
        %v3922 = vadd.f32 0.0, %v3921
        %v3923 = vpop.f32.mrb[0].mxu0
        %3924 = vmatprep.mubr.bf16.mxu0 %v3238
        %3925 = vmatmul.mubr.bf16.gmra.mrb[0].mxu0 %v3226
        %v3926 = vpop.f32.mrb[0].mxu0
        %v3927 = vadd.f32 0.0, %v3926
        %v3928 = vpop.f32.mrb[0].mxu0
        %v3929 = vpop.f32.mrb[0].mxu0
        %v3930 = vadd.f32 0.0, %v3929
        %v3931 = vpop.f32.mrb[0].mxu0
        %3932 = vmatprep.mubr.bf16.mxu0 %v3274
        %3933 = vmatmul.mubr.bf16.gmra.mrb[0].mxu0 %v3262
        %v3934 = vpop.f32.mrb[0].mxu0
        %v3935 = vadd.f32 0.0, %v3934
        %v3936 = vpop.f32.mrb[0].mxu0
        %v3937 = vpop.f32.mrb[0].mxu0
        %v3938 = vadd.f32 0.0, %v3937
        %v3939 = vpop.f32.mrb[0].mxu0
        %3940 = vmatprep.mubr.bf16.mxu0 %v3310
        %3941 = vmatmul.mubr.bf16.gmra.mrb[0].mxu0 %v3298
        %v3942 = vpop.f32.mrb[0].mxu0
        %v3943 = vadd.f32 0.0, %v3942
        %v3944 = vpop.f32.mrb[0].mxu0
        %v3945 = vpop.f32.mrb[0].mxu0
        %v3946 = vadd.f32 0.0, %v3945
        %v3947 = vpop.f32.mrb[0].mxu0
        %3948 = vmatprep.mubr.bf16.mxu0 %v3346
        %3949 = vmatmul.mubr.bf16.gmra.mrb[0].mxu0 %v3334
        %v3950 = vpop.f32.mrb[0].mxu0
        %v3951 = vadd.f32 0.0, %v3950
        %v3952 = vpop.f32.mrb[0].mxu0
        %v3953 = vpop.f32.mrb[0].mxu0
        %v3954 = vadd.f32 0.0, %v3953
        %v3955 = vpop.f32.mrb[0].mxu0
        %3956 = vmatprep.mubr.bf16.mxu0 %v3382
        %3957 = vmatmul.mubr.bf16.gmra.mrb[0].mxu0 %v3370
        %v3958 = vpop.f32.mrb[0].mxu0
        %v3959 = vadd.f32 0.0, %v3958
        %v3960 = vpop.f32.mrb[0].mxu0
        %v3961 = vpop.f32.mrb[0].mxu0
        %v3962 = vadd.f32 0.0, %v3961
        %v3963 = vpop.f32.mrb[0].mxu0
        %3964 = vmatprep.mubr.bf16.mxu0 %v3418
        %3965 = vmatmul.mubr.bf16.gmra.mrb[0].mxu0 %v3406
        %v3966 = vpop.f32.mrb[0].mxu0
        %v3967 = vadd.f32 0.0, %v3966
        %v3968 = vpop.f32.mrb[0].mxu0
        %v3969 = vpop.f32.mrb[0].mxu0
        %v3970 = vadd.f32 0.0, %v3969
        %v3971 = vpop.f32.mrb[0].mxu0
        %3972 = vmatprep.mubr.bf16.mxu0 %v3454
        %3973 = vmatmul.mubr.bf16.gmra.mrb[0].mxu0 %v3442
        %v3974 = vpop.f32.mrb[0].mxu0
        %v3975 = vadd.f32 0.0, %v3974
        %v3976 = vpop.f32.mrb[0].mxu0
        %v3977 = vpop.f32.mrb[0].mxu0
        %v3978 = vadd.f32 0.0, %v3977
        %v3979 = vpop.f32.mrb[0].mxu0
        %3980 = vmatprep.mubr.bf16.mxu0 %v3490
        %3981 = vmatmul.mubr.bf16.gmra.mrb[0].mxu0 %v3478
        %v3982 = vpop.f32.mrb[0].mxu0
        %v3983 = vadd.f32 0.0, %v3982
        %v3984 = vpop.f32.mrb[0].mxu0
        %v3985 = vpop.f32.mrb[0].mxu0
        %v3986 = vadd.f32 0.0, %v3985
        %v3987 = vpop.f32.mrb[0].mxu0
        %3988 = vmatprep.mubr.bf16.mxu0 %v3526
        %3989 = vmatmul.mubr.bf16.gmra.mrb[0].mxu0 %v3514
        %v3990 = vpop.f32.mrb[0].mxu0
        %v3991 = vadd.f32 0.0, %v3990
        %v3992 = vpop.f32.mrb[0].mxu0
        %v3993 = vpop.f32.mrb[0].mxu0
        %v3994 = vadd.f32 0.0, %v3993
        %v3995 = vpop.f32.mrb[0].mxu0
        %3996 = vmatprep.mubr.bf16.mxu0 %v3562
        %3997 = vmatmul.mubr.bf16.gmra.mrb[0].mxu0 %v3550
        %v3998 = vpop.f32.mrb[0].mxu0
        %v3999 = vadd.f32 0.0, %v3998
        %v4000 = vpop.f32.mrb[0].mxu0
        %v4001 = vpop.f32.mrb[0].mxu0
        %v4002 = vadd.f32 0.0, %v4001
        %v4003 = vpop.f32.mrb[0].mxu0
        %4004 = vmatprep.mubr.bf16.mxu0 %v3598
        %4005 = vmatmul.mubr.bf16.gmra.mrb[0].mxu0 %v3586
        %v4006 = vpop.f32.mrb[0].mxu0
        %v4007 = vadd.f32 0.0, %v4006
        %v4008 = vpop.f32.mrb[0].mxu0
        %v4009 = vpop.f32.mrb[0].mxu0
        %v4010 = vadd.f32 0.0, %v4009
        %v4011 = vpop.f32.mrb[0].mxu0
        %4012 = vdwg.mxu0
        %4013 = vmatprep.subr.bf16.mxu0 0
        %4014 = vmatpush1.bf16.msra.mxu0 %v3820
        %4015 = vmatprep.subr.bf16.mxu0 0
        %4016 = vmatpush1.bf16.msra.mxu0 %v3821
        %4017 = vmatprep.subr.bf16.mxu0 0
        %4018 = vmatpush1.bf16.msra.mxu0 %v3822
        %4019 = vmatprep.subr.bf16.mxu0 0
        %4020 = vmatpush1.bf16.msra.mxu0 %v3823
        %4021 = vmatprep.subr.bf16.mxu0 0
        %4022 = vmatpush1.bf16.msra.mxu0 %v3824
        %4023 = vmatprep.subr.bf16.mxu0 0
        %4024 = vmatpush1.bf16.msra.mxu0 %v3825
        %4025 = vmatprep.subr.bf16.mxu0 0
        %4026 = vmatpush1.bf16.msra.mxu0 %v3826
        %4027 = vmatprep.subr.bf16.mxu0 0
        %4028 = vmatpush1.bf16.msra.mxu0 %v3827
        %4029 = vmatprep.subr.bf16.mxu0 0
        %4030 = vmatpush1.bf16.msra.mxu0 0
        %4031 = vmatprep.subr.bf16.mxu0 0
        %4032 = vmatpush1.bf16.msra.mxu0 0
        %4033 = vmatprep.subr.bf16.mxu0 0
        %4034 = vmatpush1.bf16.msra.mxu0 0
        %4035 = vmatprep.subr.bf16.mxu0 0
        %4036 = vmatpush1.bf16.msra.mxu0 0
        %4037 = vmatprep.subr.bf16.mxu0 0
        %4038 = vmatpush1.bf16.msra.mxu0 0
        %4039 = vmatprep.subr.bf16.mxu0 0
        %4040 = vmatpush1.bf16.msra.mxu0 0
        %4041 = vmatprep.subr.bf16.mxu0 0
        %4042 = vmatpush1.bf16.msra.mxu0 0
        %4043 = vmatprep.subr.bf16.mxu0 0
        %4044 = vmatpush1.bf16.msra.mxu0 0
        %4045 = vmatprep.mubr.bf16.mxu0 0
        %4046 = vmatmul.mubr.bf16.gmra.mrb[0].mxu0 %v3070
        %v4047 = vpop.f32.mrb[0].mxu0
        %v4048 = vadd.f32 %v3887, %v4047
        %v4049 = vpop.f32.mrb[0].mxu0
        %v4050 = vpop.f32.mrb[0].mxu0
        %v4051 = vadd.f32 %v3890, %v4050
        %v4052 = vpop.f32.mrb[0].mxu0
        %4053 = vmatprep.mubr.bf16.mxu0 0
        %4054 = vmatmul.mubr.bf16.gmra.mrb[0].mxu0 %v3106
        %v4055 = vpop.f32.mrb[0].mxu0
        %v4056 = vadd.f32 %v3895, %v4055
        %v4057 = vpop.f32.mrb[0].mxu0
        %v4058 = vpop.f32.mrb[0].mxu0
        %v4059 = vadd.f32 %v3898, %v4058
        %v4060 = vpop.f32.mrb[0].mxu0
        %4061 = vmatprep.mubr.bf16.mxu0 0
        %4062 = vmatmul.mubr.bf16.gmra.mrb[0].mxu0 %v3142
        %v4063 = vpop.f32.mrb[0].mxu0
        %v4064 = vadd.f32 %v3903, %v4063
        %v4065 = vpop.f32.mrb[0].mxu0
        %v4066 = vpop.f32.mrb[0].mxu0
        %v4067 = vadd.f32 %v3906, %v4066
        %v4068 = vpop.f32.mrb[0].mxu0
        %4069 = vmatprep.mubr.bf16.mxu0 0
        %4070 = vmatmul.mubr.bf16.gmra.mrb[0].mxu0 %v3178
        %v4071 = vpop.f32.mrb[0].mxu0
        %v4072 = vadd.f32 %v3911, %v4071
        %v4073 = vpop.f32.mrb[0].mxu0
        %v4074 = vpop.f32.mrb[0].mxu0
        %v4075 = vadd.f32 %v3914, %v4074
        %v4076 = vpop.f32.mrb[0].mxu0
        %4077 = vmatprep.mubr.bf16.mxu0 0
        %4078 = vmatmul.mubr.bf16.gmra.mrb[0].mxu0 %v3214
        %v4079 = vpop.f32.mrb[0].mxu0
        %v4080 = vadd.f32 %v3919, %v4079
        %v4081 = vpop.f32.mrb[0].mxu0
        %v4082 = vpop.f32.mrb[0].mxu0
        %v4083 = vadd.f32 %v3922, %v4082
        %v4084 = vpop.f32.mrb[0].mxu0
        %4085 = vmatprep.mubr.bf16.mxu0 0
        %4086 = vmatmul.mubr.bf16.gmra.mrb[0].mxu0 %v3250
        %v4087 = vpop.f32.mrb[0].mxu0
        %v4088 = vadd.f32 %v3927, %v4087
        %v4089 = vpop.f32.mrb[0].mxu0
        %v4090 = vpop.f32.mrb[0].mxu0
        %v4091 = vadd.f32 %v3930, %v4090
        %v4092 = vpop.f32.mrb[0].mxu0
        %4093 = vmatprep.mubr.bf16.mxu0 0
        %4094 = vmatmul.mubr.bf16.gmra.mrb[0].mxu0 %v3286
        %v4095 = vpop.f32.mrb[0].mxu0
        %v4096 = vadd.f32 %v3935, %v4095
        %v4097 = vpop.f32.mrb[0].mxu0
        %v4098 = vpop.f32.mrb[0].mxu0
        %v4099 = vadd.f32 %v3938, %v4098
        %v4100 = vpop.f32.mrb[0].mxu0
        %4101 = vmatprep.mubr.bf16.mxu0 0
        %4102 = vmatmul.mubr.bf16.gmra.mrb[0].mxu0 %v3322
        %v4103 = vpop.f32.mrb[0].mxu0
        %v4104 = vadd.f32 %v3943, %v4103
        %v4105 = vpop.f32.mrb[0].mxu0
        %v4106 = vpop.f32.mrb[0].mxu0
        %v4107 = vadd.f32 %v3946, %v4106
        %v4108 = vpop.f32.mrb[0].mxu0
        %4109 = vmatprep.mubr.bf16.mxu0 0
        %4110 = vmatmul.mubr.bf16.gmra.mrb[0].mxu0 %v3358
        %v4111 = vpop.f32.mrb[0].mxu0
        %v4112 = vadd.f32 %v3951, %v4111
        %v4113 = vpop.f32.mrb[0].mxu0
        %v4114 = vpop.f32.mrb[0].mxu0
        %v4115 = vadd.f32 %v3954, %v4114
        %v4116 = vpop.f32.mrb[0].mxu0
        %4117 = vmatprep.mubr.bf16.mxu0 0
        %4118 = vmatmul.mubr.bf16.gmra.mrb[0].mxu0 %v3394
        %v4119 = vpop.f32.mrb[0].mxu0
        %v4120 = vadd.f32 %v3959, %v4119
        %v4121 = vpop.f32.mrb[0].mxu0
        %v4122 = vpop.f32.mrb[0].mxu0
        %v4123 = vadd.f32 %v3962, %v4122
        %v4124 = vpop.f32.mrb[0].mxu0
        %4125 = vmatprep.mubr.bf16.mxu0 0
        %4126 = vmatmul.mubr.bf16.gmra.mrb[0].mxu0 %v3430
        %v4127 = vpop.f32.mrb[0].mxu0
        %v4128 = vadd.f32 %v3967, %v4127
        %v4129 = vpop.f32.mrb[0].mxu0
        %v4130 = vpop.f32.mrb[0].mxu0
        %v4131 = vadd.f32 %v3970, %v4130
        %v4132 = vpop.f32.mrb[0].mxu0
        %4133 = vmatprep.mubr.bf16.mxu0 0
        %4134 = vmatmul.mubr.bf16.gmra.mrb[0].mxu0 %v3466
        %v4135 = vpop.f32.mrb[0].mxu0
        %v4136 = vadd.f32 %v3975, %v4135
        %v4137 = vpop.f32.mrb[0].mxu0
        %v4138 = vpop.f32.mrb[0].mxu0
        %v4139 = vadd.f32 %v3978, %v4138
        %v4140 = vpop.f32.mrb[0].mxu0
        %4141 = vmatprep.mubr.bf16.mxu0 0
        %4142 = vmatmul.mubr.bf16.gmra.mrb[0].mxu0 %v3502
        %v4143 = vpop.f32.mrb[0].mxu0
        %v4144 = vadd.f32 %v3983, %v4143
        %v4145 = vpop.f32.mrb[0].mxu0
        %v4146 = vpop.f32.mrb[0].mxu0
        %v4147 = vadd.f32 %v3986, %v4146
        %v4148 = vpop.f32.mrb[0].mxu0
        %4149 = vmatprep.mubr.bf16.mxu0 0
        %4150 = vmatmul.mubr.bf16.gmra.mrb[0].mxu0 %v3538
        %v4151 = vpop.f32.mrb[0].mxu0
        %v4152 = vadd.f32 %v3991, %v4151
        %v4153 = vpop.f32.mrb[0].mxu0
        %v4154 = vpop.f32.mrb[0].mxu0
        %v4155 = vadd.f32 %v3994, %v4154
        %v4156 = vpop.f32.mrb[0].mxu0
        %4157 = vmatprep.mubr.bf16.mxu0 0
        %4158 = vmatmul.mubr.bf16.gmra.mrb[0].mxu0 %v3574
        %v4159 = vpop.f32.mrb[0].mxu0
        %v4160 = vadd.f32 %v3999, %v4159
        %v4161 = vpop.f32.mrb[0].mxu0
        %v4162 = vpop.f32.mrb[0].mxu0
        %v4163 = vadd.f32 %v4002, %v4162
        %v4164 = vpop.f32.mrb[0].mxu0
        %4165 = vmatprep.mubr.bf16.mxu0 0
        %4166 = vmatmul.mubr.bf16.gmra.mrb[0].mxu0 %v3610
        %v4167 = vpop.f32.mrb[0].mxu0
        %v4168 = vadd.f32 %v4007, %v4167
        %v4169 = vpop.f32.mrb[0].mxu0
        %v4170 = vpop.f32.mrb[0].mxu0
        %v4171 = vadd.f32 %v4010, %v4170
        %v4172 = vpop.f32.mrb[0].mxu0
        %4173 = vdwg.mxu0
        %v4222 = vunpack.c.l.b16 %v2986
        %v4223 = vunpack.c.l.b16 %v2987
        %v4224 = vunpack.c.l.b16 %v2988
        %v4225 = vunpack.c.l.b16 %v2989
        %v4226 = vunpack.c.l.b16 %v2990
        %v4227 = vunpack.c.l.b16 %v2991
        %v4228 = vunpack.c.l.b16 %v2992
        %v4229 = vunpack.c.l.b16 %v2993
        %v4230 = vunpack.c.l.b16 %v2994
        %v4231 = vunpack.c.l.b16 %v2995
        %v4232 = vunpack.c.l.b16 %v2996
        %v4233 = vunpack.c.l.b16 %v2997
        %v4234 = vunpack.c.l.b16 %v2998
        %v4235 = vunpack.c.l.b16 %v2999
        %v4236 = vunpack.c.l.b16 %v3000
        %v4237 = vunpack.c.l.b16 %v3001
        %v4238 = vunpack.c.l.b16 %v3002
        %v4239 = vunpack.c.l.b16 %v3003
        %v4240 = vunpack.c.l.b16 %v3004
        %v4241 = vunpack.c.l.b16 %v3005
        %v4242 = vunpack.c.l.b16 %v3006
        %v4243 = vunpack.c.l.b16 %v3007
        %v4244 = vunpack.c.l.b16 %v3008
        %v4245 = vunpack.c.l.b16 %v3009
        %v4246 = vunpack.c.l.b16 %v3010
        %v4247 = vunpack.c.l.b16 %v3011
        %v4248 = vunpack.c.l.b16 %v3012
        %v4249 = vunpack.c.l.b16 %v3013
        %v4250 = vunpack.c.l.b16 %v3014
        %v4251 = vunpack.c.l.b16 %v3015
        %v4252 = vunpack.c.l.b16 %v3016
        %v4253 = vunpack.c.l.b16 %v3017
        %v4254 = vunpack.c.l.b16 %v3018
        %v4255 = vunpack.c.l.b16 %v3019
        %v4256 = vunpack.c.l.b16 %v3020
        %v4257 = vunpack.c.l.b16 %v3021
        %v4258 = vunpack.c.l.b16 %v3022
        %v4259 = vunpack.c.l.b16 %v3023
        %v4260 = vunpack.c.l.b16 %v3024
        %v4261 = vunpack.c.l.b16 %v3025
        %v4262 = vunpack.c.l.b16 %v3026
        %v4263 = vunpack.c.l.b16 %v3027
        %v4264 = vunpack.c.l.b16 %v3028
        %v4265 = vunpack.c.l.b16 %v3029
        %v4266 = vunpack.c.l.b16 %v3030
        %v4267 = vunpack.c.l.b16 %v3031
        %v4268 = vunpack.c.l.b16 %v3032
        %v4269 = vunpack.c.l.b16 %v3033
        %v4270 = vpack.c.b16 %v4223, %v4222
        %v4271 = vpack.c.b16 %v4225, %v4224
        %v4272 = vpack.c.b16 %v4227, %v4226
        %v4273 = vpack.c.b16 %v4229, %v4228
        %v4274 = vpack.c.b16 %v4231, %v4230
        %v4275 = vpack.c.b16 %v4233, %v4232
        %v4276 = vpack.c.b16 %v4235, %v4234
        %v4277 = vpack.c.b16 %v4237, %v4236
        %v4278 = vpack.c.b16 %v4239, %v4238
        %v4279 = vpack.c.b16 %v4241, %v4240
        %v4280 = vpack.c.b16 %v4243, %v4242
        %v4281 = vpack.c.b16 %v4245, %v4244
        %v4282 = vpack.c.b16 %v4247, %v4246
        %v4283 = vpack.c.b16 %v4249, %v4248
        %v4284 = vpack.c.b16 %v4251, %v4250
        %v4285 = vpack.c.b16 %v4253, %v4252
        %v4286 = vpack.c.b16 %v4255, %v4254
        %v4287 = vpack.c.b16 %v4257, %v4256
        %v4288 = vpack.c.b16 %v4259, %v4258
        %v4289 = vpack.c.b16 %v4261, %v4260
        %v4290 = vpack.c.b16 %v4263, %v4262
        %v4291 = vpack.c.b16 %v4265, %v4264
        %v4292 = vpack.c.b16 %v4267, %v4266
        %v4293 = vpack.c.b16 %v4269, %v4268
        %4318 = vmatprep.subr.bf16.mxu0 0
        %4319 = vmatpush1.bf16.msra.mxu0 %v4270
        %4320 = vmatprep.subr.bf16.mxu0 0
        %4321 = vmatpush1.bf16.msra.mxu0 %v4271
        %4322 = vmatprep.subr.bf16.mxu0 0
        %4323 = vmatpush1.bf16.msra.mxu0 %v4272
        %4324 = vmatprep.subr.bf16.mxu0 0
        %4325 = vmatpush1.bf16.msra.mxu0 %v4273
        %4326 = vmatprep.subr.bf16.mxu0 0
        %4327 = vmatpush1.bf16.msra.mxu0 %v4274
        %4328 = vmatprep.subr.bf16.mxu0 0
        %4329 = vmatpush1.bf16.msra.mxu0 %v4275
        %4330 = vmatprep.subr.bf16.mxu0 0
        %4331 = vmatpush1.bf16.msra.mxu0 %v4276
        %4332 = vmatprep.subr.bf16.mxu0 0
        %4333 = vmatpush1.bf16.msra.mxu0 %v4277
        %4334 = vmatprep.subr.bf16.mxu0 0
        %4335 = vmatpush1.bf16.msra.mxu0 %v4278
        %4336 = vmatprep.subr.bf16.mxu0 0
        %4337 = vmatpush1.bf16.msra.mxu0 %v4279
        %4338 = vmatprep.subr.bf16.mxu0 0
        %4339 = vmatpush1.bf16.msra.mxu0 %v4280
        %4340 = vmatprep.subr.bf16.mxu0 0
        %4341 = vmatpush1.bf16.msra.mxu0 %v4281
        %4342 = vmatprep.subr.bf16.mxu0 0
        %4343 = vmatpush1.bf16.msra.mxu0 %v4282
        %4344 = vmatprep.subr.bf16.mxu0 0
        %4345 = vmatpush1.bf16.msra.mxu0 %v4283
        %4346 = vmatprep.subr.bf16.mxu0 0
        %4347 = vmatpush1.bf16.msra.mxu0 %v4284
        %4348 = vmatprep.subr.bf16.mxu0 0
        %4349 = vmatpush1.bf16.msra.mxu0 %v4285
        %4350 = vmatprep.mubr.bf16.mxu0 %v2794
        %4351 = vmatmul.mubr.bf16.gmra.mrb[0].mxu0 %v2650
        %v4352 = vpop.f32.mrb[0].mxu0
        %v4353 = vadd.f32 %v4048, %v4352
        %v4354 = vpop.f32.mrb[0].mxu0
        %v4355 = vpop.f32.mrb[0].mxu0
        %v4356 = vadd.f32 %v4051, %v4355
        %v4357 = vpop.f32.mrb[0].mxu0
        %4358 = vmatprep.mubr.bf16.mxu0 %v2796
        %4359 = vmatmul.mubr.bf16.gmra.mrb[0].mxu0 %v2652
        %v4360 = vpop.f32.mrb[0].mxu0
        %v4361 = vadd.f32 %v4056, %v4360
        %v4362 = vpop.f32.mrb[0].mxu0
        %v4363 = vpop.f32.mrb[0].mxu0
        %v4364 = vadd.f32 %v4059, %v4363
        %v4365 = vpop.f32.mrb[0].mxu0
        %4366 = vmatprep.mubr.bf16.mxu0 %v2798
        %4367 = vmatmul.mubr.bf16.gmra.mrb[0].mxu0 %v2654
        %v4368 = vpop.f32.mrb[0].mxu0
        %v4369 = vadd.f32 %v4064, %v4368
        %v4370 = vpop.f32.mrb[0].mxu0
        %v4371 = vpop.f32.mrb[0].mxu0
        %v4372 = vadd.f32 %v4067, %v4371
        %v4373 = vpop.f32.mrb[0].mxu0
        %4374 = vmatprep.mubr.bf16.mxu0 %v2800
        %4375 = vmatmul.mubr.bf16.gmra.mrb[0].mxu0 %v2656
        %v4376 = vpop.f32.mrb[0].mxu0
        %v4377 = vadd.f32 %v4072, %v4376
        %v4378 = vpop.f32.mrb[0].mxu0
        %v4379 = vpop.f32.mrb[0].mxu0
        %v4380 = vadd.f32 %v4075, %v4379
        %v4381 = vpop.f32.mrb[0].mxu0
        %4382 = vmatprep.mubr.bf16.mxu0 %v2802
        %4383 = vmatmul.mubr.bf16.gmra.mrb[0].mxu0 %v2658
        %v4384 = vpop.f32.mrb[0].mxu0
        %v4385 = vadd.f32 %v4080, %v4384
        %v4386 = vpop.f32.mrb[0].mxu0
        %v4387 = vpop.f32.mrb[0].mxu0
        %v4388 = vadd.f32 %v4083, %v4387
        %v4389 = vpop.f32.mrb[0].mxu0
        %4390 = vmatprep.mubr.bf16.mxu0 %v2804
        %4391 = vmatmul.mubr.bf16.gmra.mrb[0].mxu0 %v2660
        %v4392 = vpop.f32.mrb[0].mxu0
        %v4393 = vadd.f32 %v4088, %v4392
        %v4394 = vpop.f32.mrb[0].mxu0
        %v4395 = vpop.f32.mrb[0].mxu0
        %v4396 = vadd.f32 %v4091, %v4395
        %v4397 = vpop.f32.mrb[0].mxu0
        %4398 = vmatprep.mubr.bf16.mxu0 %v2806
        %4399 = vmatmul.mubr.bf16.gmra.mrb[0].mxu0 %v2662
        %v4400 = vpop.f32.mrb[0].mxu0
        %v4401 = vadd.f32 %v4096, %v4400
        %v4402 = vpop.f32.mrb[0].mxu0
        %v4403 = vpop.f32.mrb[0].mxu0
        %v4404 = vadd.f32 %v4099, %v4403
        %v4405 = vpop.f32.mrb[0].mxu0
        %4406 = vmatprep.mubr.bf16.mxu0 %v2808
        %4407 = vmatmul.mubr.bf16.gmra.mrb[0].mxu0 %v2664
        %v4408 = vpop.f32.mrb[0].mxu0
        %v4409 = vadd.f32 %v4104, %v4408
        %v4410 = vpop.f32.mrb[0].mxu0
        %v4411 = vpop.f32.mrb[0].mxu0
        %v4412 = vadd.f32 %v4107, %v4411
        %v4413 = vpop.f32.mrb[0].mxu0
        %4414 = vmatprep.mubr.bf16.mxu0 %v2810
        %4415 = vmatmul.mubr.bf16.gmra.mrb[0].mxu0 %v2666
        %v4416 = vpop.f32.mrb[0].mxu0
        %v4417 = vadd.f32 %v4112, %v4416
        %v4418 = vpop.f32.mrb[0].mxu0
        %v4419 = vpop.f32.mrb[0].mxu0
        %v4420 = vadd.f32 %v4115, %v4419
        %v4421 = vpop.f32.mrb[0].mxu0
        %4422 = vmatprep.mubr.bf16.mxu0 %v2812
        %4423 = vmatmul.mubr.bf16.gmra.mrb[0].mxu0 %v2668
        %v4424 = vpop.f32.mrb[0].mxu0
        %v4425 = vadd.f32 %v4120, %v4424
        %v4426 = vpop.f32.mrb[0].mxu0
        %v4427 = vpop.f32.mrb[0].mxu0
        %v4428 = vadd.f32 %v4123, %v4427
        %v4429 = vpop.f32.mrb[0].mxu0
        %4430 = vmatprep.mubr.bf16.mxu0 %v2814
        %4431 = vmatmul.mubr.bf16.gmra.mrb[0].mxu0 %v2670
        %v4432 = vpop.f32.mrb[0].mxu0
        %v4433 = vadd.f32 %v4128, %v4432
        %v4434 = vpop.f32.mrb[0].mxu0
        %v4435 = vpop.f32.mrb[0].mxu0
        %v4436 = vadd.f32 %v4131, %v4435
        %v4437 = vpop.f32.mrb[0].mxu0
        %4438 = vmatprep.mubr.bf16.mxu0 %v2816
        %4439 = vmatmul.mubr.bf16.gmra.mrb[0].mxu0 %v2672
        %v4440 = vpop.f32.mrb[0].mxu0
        %v4441 = vadd.f32 %v4136, %v4440
        %v4442 = vpop.f32.mrb[0].mxu0
        %v4443 = vpop.f32.mrb[0].mxu0
        %v4444 = vadd.f32 %v4139, %v4443
        %v4445 = vpop.f32.mrb[0].mxu0
        %4446 = vmatprep.mubr.bf16.mxu0 %v2818
        %4447 = vmatmul.mubr.bf16.gmra.mrb[0].mxu0 %v2674
        %v4448 = vpop.f32.mrb[0].mxu0
        %v4449 = vadd.f32 %v4144, %v4448
        %v4450 = vpop.f32.mrb[0].mxu0
        %v4451 = vpop.f32.mrb[0].mxu0
        %v4452 = vadd.f32 %v4147, %v4451
        %v4453 = vpop.f32.mrb[0].mxu0
        %4454 = vmatprep.mubr.bf16.mxu0 %v2820
        %4455 = vmatmul.mubr.bf16.gmra.mrb[0].mxu0 %v2676
        %v4456 = vpop.f32.mrb[0].mxu0
        %v4457 = vadd.f32 %v4152, %v4456
        %v4458 = vpop.f32.mrb[0].mxu0
        %v4459 = vpop.f32.mrb[0].mxu0
        %v4460 = vadd.f32 %v4155, %v4459
        %v4461 = vpop.f32.mrb[0].mxu0
        %4462 = vmatprep.mubr.bf16.mxu0 %v2822
        %4463 = vmatmul.mubr.bf16.gmra.mrb[0].mxu0 %v2678
        %v4464 = vpop.f32.mrb[0].mxu0
        %v4465 = vadd.f32 %v4160, %v4464
        %v4466 = vpop.f32.mrb[0].mxu0
        %v4467 = vpop.f32.mrb[0].mxu0
        %v4468 = vadd.f32 %v4163, %v4467
        %v4469 = vpop.f32.mrb[0].mxu0
        %4470 = vmatprep.mubr.bf16.mxu0 %v2824
        %4471 = vmatmul.mubr.bf16.gmra.mrb[0].mxu0 %v2680
        %v4472 = vpop.f32.mrb[0].mxu0
        %v4473 = vadd.f32 %v4168, %v4472
        %v4474 = vpop.f32.mrb[0].mxu0
        %v4475 = vpop.f32.mrb[0].mxu0
        %v4476 = vadd.f32 %v4171, %v4475
        %v4477 = vpop.f32.mrb[0].mxu0
        %4478 = vdwg.mxu0
        %4479 = vmatprep.subr.bf16.mxu0 0
        %4480 = vmatpush1.bf16.msra.mxu0 %v4286
        %4481 = vmatprep.subr.bf16.mxu0 0
        %4482 = vmatpush1.bf16.msra.mxu0 %v4287
        %4483 = vmatprep.subr.bf16.mxu0 0
        %4484 = vmatpush1.bf16.msra.mxu0 %v4288
        %4485 = vmatprep.subr.bf16.mxu0 0
        %4486 = vmatpush1.bf16.msra.mxu0 %v4289
        %4487 = vmatprep.subr.bf16.mxu0 0
        %4488 = vmatpush1.bf16.msra.mxu0 %v4290
        %4489 = vmatprep.subr.bf16.mxu0 0
        %4490 = vmatpush1.bf16.msra.mxu0 %v4291
        %4491 = vmatprep.subr.bf16.mxu0 0
        %4492 = vmatpush1.bf16.msra.mxu0 %v4292
        %4493 = vmatprep.subr.bf16.mxu0 0
        %4494 = vmatpush1.bf16.msra.mxu0 %v4293
        %4495 = vmatprep.subr.bf16.mxu0 0
        %4496 = vmatpush1.bf16.msra.mxu0 0
        %4497 = vmatprep.subr.bf16.mxu0 0
        %4498 = vmatpush1.bf16.msra.mxu0 0
        %4499 = vmatprep.subr.bf16.mxu0 0
        %4500 = vmatpush1.bf16.msra.mxu0 0
        %4501 = vmatprep.subr.bf16.mxu0 0
        %4502 = vmatpush1.bf16.msra.mxu0 0
        %4503 = vmatprep.subr.bf16.mxu0 0
        %4504 = vmatpush1.bf16.msra.mxu0 0
        %4505 = vmatprep.subr.bf16.mxu0 0
        %4506 = vmatpush1.bf16.msra.mxu0 0
        %4507 = vmatprep.subr.bf16.mxu0 0
        %4508 = vmatpush1.bf16.msra.mxu0 0
        %4509 = vmatprep.subr.bf16.mxu0 0
        %4510 = vmatpush1.bf16.msra.mxu0 0
        %4511 = vmatprep.mubr.bf16.mxu0 0
        %4512 = vmatmul.mubr.bf16.gmra.mrb[0].mxu0 %v2938
        %v4513 = vpop.f32.mrb[0].mxu0
        %v4514 = vadd.f32 %v4353, %v4513
        %v4515 = vpop.f32.mrb[0].mxu0
        %v4516 = vpop.f32.mrb[0].mxu0
        %v4517 = vadd.f32 %v4356, %v4516
        %v4518 = vpop.f32.mrb[0].mxu0
        %4519 = vmatprep.mubr.bf16.mxu0 0
        %4520 = vmatmul.mubr.bf16.gmra.mrb[0].mxu0 %v2940
        %v4521 = vpop.f32.mrb[0].mxu0
        %v4522 = vadd.f32 %v4361, %v4521
        %v4523 = vpop.f32.mrb[0].mxu0
        %v4524 = vpop.f32.mrb[0].mxu0
        %v4525 = vadd.f32 %v4364, %v4524
        %v4526 = vpop.f32.mrb[0].mxu0
        %4527 = vmatprep.mubr.bf16.mxu0 0
        %4528 = vmatmul.mubr.bf16.gmra.mrb[0].mxu0 %v2942
        %v4529 = vpop.f32.mrb[0].mxu0
        %v4530 = vadd.f32 %v4369, %v4529
        %v4531 = vpop.f32.mrb[0].mxu0
        %v4532 = vpop.f32.mrb[0].mxu0
        %v4533 = vadd.f32 %v4372, %v4532
        %v4534 = vpop.f32.mrb[0].mxu0
        %4535 = vmatprep.mubr.bf16.mxu0 0
        %4536 = vmatmul.mubr.bf16.gmra.mrb[0].mxu0 %v2944
        %v4537 = vpop.f32.mrb[0].mxu0
        %v4538 = vadd.f32 %v4377, %v4537
        %v4539 = vpop.f32.mrb[0].mxu0
        %v4540 = vpop.f32.mrb[0].mxu0
        %v4541 = vadd.f32 %v4380, %v4540
        %v4542 = vpop.f32.mrb[0].mxu0
        %4543 = vmatprep.mubr.bf16.mxu0 0
        %4544 = vmatmul.mubr.bf16.gmra.mrb[0].mxu0 %v2946
        %v4545 = vpop.f32.mrb[0].mxu0
        %v4546 = vadd.f32 %v4385, %v4545
        %v4547 = vpop.f32.mrb[0].mxu0
        %v4548 = vpop.f32.mrb[0].mxu0
        %v4549 = vadd.f32 %v4388, %v4548
        %v4550 = vpop.f32.mrb[0].mxu0
        %4551 = vmatprep.mubr.bf16.mxu0 0
        %4552 = vmatmul.mubr.bf16.gmra.mrb[0].mxu0 %v2948
        %v4553 = vpop.f32.mrb[0].mxu0
        %v4554 = vadd.f32 %v4393, %v4553
        %v4555 = vpop.f32.mrb[0].mxu0
        %v4556 = vpop.f32.mrb[0].mxu0
        %v4557 = vadd.f32 %v4396, %v4556
        %v4558 = vpop.f32.mrb[0].mxu0
        %4559 = vmatprep.mubr.bf16.mxu0 0
        %4560 = vmatmul.mubr.bf16.gmra.mrb[0].mxu0 %v2950
        %v4561 = vpop.f32.mrb[0].mxu0
        %v4562 = vadd.f32 %v4401, %v4561
        %v4563 = vpop.f32.mrb[0].mxu0
        %v4564 = vpop.f32.mrb[0].mxu0
        %v4565 = vadd.f32 %v4404, %v4564
        %v4566 = vpop.f32.mrb[0].mxu0
        %4567 = vmatprep.mubr.bf16.mxu0 0
        %4568 = vmatmul.mubr.bf16.gmra.mrb[0].mxu0 %v2952
        %v4569 = vpop.f32.mrb[0].mxu0
        %v4570 = vadd.f32 %v4409, %v4569
        %v4571 = vpop.f32.mrb[0].mxu0
        %v4572 = vpop.f32.mrb[0].mxu0
        %v4573 = vadd.f32 %v4412, %v4572
        %v4574 = vpop.f32.mrb[0].mxu0
        %4575 = vmatprep.mubr.bf16.mxu0 0
        %4576 = vmatmul.mubr.bf16.gmra.mrb[0].mxu0 %v2954
        %v4577 = vpop.f32.mrb[0].mxu0
        %v4578 = vadd.f32 %v4417, %v4577
        %v4579 = vpop.f32.mrb[0].mxu0
        %v4580 = vpop.f32.mrb[0].mxu0
        %v4581 = vadd.f32 %v4420, %v4580
        %v4582 = vpop.f32.mrb[0].mxu0
        %4583 = vmatprep.mubr.bf16.mxu0 0
        %4584 = vmatmul.mubr.bf16.gmra.mrb[0].mxu0 %v2956
        %v4585 = vpop.f32.mrb[0].mxu0
        %v4586 = vadd.f32 %v4425, %v4585
        %v4587 = vpop.f32.mrb[0].mxu0
        %v4588 = vpop.f32.mrb[0].mxu0
        %v4589 = vadd.f32 %v4428, %v4588
        %v4590 = vpop.f32.mrb[0].mxu0
        %4591 = vmatprep.mubr.bf16.mxu0 0
        %4592 = vmatmul.mubr.bf16.gmra.mrb[0].mxu0 %v2958
        %v4593 = vpop.f32.mrb[0].mxu0
        %v4594 = vadd.f32 %v4433, %v4593
        %v4595 = vpop.f32.mrb[0].mxu0
        %v4596 = vpop.f32.mrb[0].mxu0
        %v4597 = vadd.f32 %v4436, %v4596
        %v4598 = vpop.f32.mrb[0].mxu0
        %4599 = vmatprep.mubr.bf16.mxu0 0
        %4600 = vmatmul.mubr.bf16.gmra.mrb[0].mxu0 %v2960
        %v4601 = vpop.f32.mrb[0].mxu0
        %v4602 = vadd.f32 %v4441, %v4601
        %v4603 = vpop.f32.mrb[0].mxu0
        %v4604 = vpop.f32.mrb[0].mxu0
        %v4605 = vadd.f32 %v4444, %v4604
        %v4606 = vpop.f32.mrb[0].mxu0
        %4607 = vmatprep.mubr.bf16.mxu0 0
        %4608 = vmatmul.mubr.bf16.gmra.mrb[0].mxu0 %v2962
        %v4609 = vpop.f32.mrb[0].mxu0
        %v4610 = vadd.f32 %v4449, %v4609
        %v4611 = vpop.f32.mrb[0].mxu0
        %v4612 = vpop.f32.mrb[0].mxu0
        %v4613 = vadd.f32 %v4452, %v4612
        %v4614 = vpop.f32.mrb[0].mxu0
        %4615 = vmatprep.mubr.bf16.mxu0 0
        %4616 = vmatmul.mubr.bf16.gmra.mrb[0].mxu0 %v2964
        %v4617 = vpop.f32.mrb[0].mxu0
        %v4618 = vadd.f32 %v4457, %v4617
        %v4619 = vpop.f32.mrb[0].mxu0
        %v4620 = vpop.f32.mrb[0].mxu0
        %v4621 = vadd.f32 %v4460, %v4620
        %v4622 = vpop.f32.mrb[0].mxu0
        %4623 = vmatprep.mubr.bf16.mxu0 0
        %4624 = vmatmul.mubr.bf16.gmra.mrb[0].mxu0 %v2966
        %v4625 = vpop.f32.mrb[0].mxu0
        %v4626 = vadd.f32 %v4465, %v4625
        %v4627 = vpop.f32.mrb[0].mxu0
        %v4628 = vpop.f32.mrb[0].mxu0
        %v4629 = vadd.f32 %v4468, %v4628
        %v4630 = vpop.f32.mrb[0].mxu0
        %4631 = vmatprep.mubr.bf16.mxu0 0
        %4632 = vmatmul.mubr.bf16.gmra.mrb[0].mxu0 %v2968
        %v4633 = vpop.f32.mrb[0].mxu0
        %v4634 = vadd.f32 %v4473, %v4633
        %v4635 = vpop.f32.mrb[0].mxu0
        %v4636 = vpop.f32.mrb[0].mxu0
        %v4637 = vadd.f32 %v4476, %v4636
        %v4638 = vpop.f32.mrb[0].mxu0
        %4639 = vdwg.mxu0
        %vm4640 = vcmask 1046528
        %v4641 = vrot.slane %v2650, 1
        %v4642 = vrot.slane %v2651, 1
        %v4643 = vsel %vm4640, %v4641, %v4642
        %v4644 = vrot.slane %v2794, 1
        %v4645 = vrot.slane %v2795, 1
        %v4646 = vsel %vm4640, %v4644, %v4645
        %v4647 = vrot.slane %v2938, 1
        %v4648 = vrot.slane %v2939, 1
        %v4649 = vsel %vm4640, %v4647, %v4648
        %v4650 = vrot.slane %v2652, 1
        %v4651 = vrot.slane %v2653, 1
        %v4652 = vsel %vm4640, %v4650, %v4651
        %v4653 = vrot.slane %v2796, 1
        %v4654 = vrot.slane %v2797, 1
        %v4655 = vsel %vm4640, %v4653, %v4654
        %v4656 = vrot.slane %v2940, 1
        %v4657 = vrot.slane %v2941, 1
        %v4658 = vsel %vm4640, %v4656, %v4657
        %v4659 = vrot.slane %v2654, 1
        %v4660 = vrot.slane %v2655, 1
        %v4661 = vsel %vm4640, %v4659, %v4660
        %v4662 = vrot.slane %v2798, 1
        %v4663 = vrot.slane %v2799, 1
        %v4664 = vsel %vm4640, %v4662, %v4663
        %v4665 = vrot.slane %v2942, 1
        %v4666 = vrot.slane %v2943, 1
        %v4667 = vsel %vm4640, %v4665, %v4666
        %v4668 = vrot.slane %v2656, 1
        %v4669 = vrot.slane %v2657, 1
        %v4670 = vsel %vm4640, %v4668, %v4669
        %v4671 = vrot.slane %v2800, 1
        %v4672 = vrot.slane %v2801, 1
        %v4673 = vsel %vm4640, %v4671, %v4672
        %v4674 = vrot.slane %v2944, 1
        %v4675 = vrot.slane %v2945, 1
        %v4676 = vsel %vm4640, %v4674, %v4675
        %v4677 = vrot.slane %v2658, 1
        %v4678 = vrot.slane %v2659, 1
        %v4679 = vsel %vm4640, %v4677, %v4678
        %v4680 = vrot.slane %v2802, 1
        %v4681 = vrot.slane %v2803, 1
        %v4682 = vsel %vm4640, %v4680, %v4681
        %v4683 = vrot.slane %v2946, 1
        %v4684 = vrot.slane %v2947, 1
        %v4685 = vsel %vm4640, %v4683, %v4684
        %v4686 = vrot.slane %v2660, 1
        %v4687 = vrot.slane %v2661, 1
        %v4688 = vsel %vm4640, %v4686, %v4687
        %v4689 = vrot.slane %v2804, 1
        %v4690 = vrot.slane %v2805, 1
        %v4691 = vsel %vm4640, %v4689, %v4690
        %v4692 = vrot.slane %v2948, 1
        %v4693 = vrot.slane %v2949, 1
        %v4694 = vsel %vm4640, %v4692, %v4693
        %v4695 = vrot.slane %v2662, 1
        %v4696 = vrot.slane %v2663, 1
        %v4697 = vsel %vm4640, %v4695, %v4696
        %v4698 = vrot.slane %v2806, 1
        %v4699 = vrot.slane %v2807, 1
        %v4700 = vsel %vm4640, %v4698, %v4699
        %v4701 = vrot.slane %v2950, 1
        %v4702 = vrot.slane %v2951, 1
        %v4703 = vsel %vm4640, %v4701, %v4702
        %v4704 = vrot.slane %v2664, 1
        %v4705 = vrot.slane %v2665, 1
        %v4706 = vsel %vm4640, %v4704, %v4705
        %v4707 = vrot.slane %v2808, 1
        %v4708 = vrot.slane %v2809, 1
        %v4709 = vsel %vm4640, %v4707, %v4708
        %v4710 = vrot.slane %v2952, 1
        %v4711 = vrot.slane %v2953, 1
        %v4712 = vsel %vm4640, %v4710, %v4711
        %v4713 = vrot.slane %v2666, 1
        %v4714 = vrot.slane %v2667, 1
        %v4715 = vsel %vm4640, %v4713, %v4714
        %v4716 = vrot.slane %v2810, 1
        %v4717 = vrot.slane %v2811, 1
        %v4718 = vsel %vm4640, %v4716, %v4717
        %v4719 = vrot.slane %v2954, 1
        %v4720 = vrot.slane %v2955, 1
        %v4721 = vsel %vm4640, %v4719, %v4720
        %v4722 = vrot.slane %v2668, 1
        %v4723 = vrot.slane %v2669, 1
        %v4724 = vsel %vm4640, %v4722, %v4723
        %v4725 = vrot.slane %v2812, 1
        %v4726 = vrot.slane %v2813, 1
        %v4727 = vsel %vm4640, %v4725, %v4726
        %v4728 = vrot.slane %v2956, 1
        %v4729 = vrot.slane %v2957, 1
        %v4730 = vsel %vm4640, %v4728, %v4729
        %v4731 = vrot.slane %v2670, 1
        %v4732 = vrot.slane %v2671, 1
        %v4733 = vsel %vm4640, %v4731, %v4732
        %v4734 = vrot.slane %v2814, 1
        %v4735 = vrot.slane %v2815, 1
        %v4736 = vsel %vm4640, %v4734, %v4735
        %v4737 = vrot.slane %v2958, 1
        %v4738 = vrot.slane %v2959, 1
        %v4739 = vsel %vm4640, %v4737, %v4738
        %v4740 = vrot.slane %v2672, 1
        %v4741 = vrot.slane %v2673, 1
        %v4742 = vsel %vm4640, %v4740, %v4741
        %v4743 = vrot.slane %v2816, 1
        %v4744 = vrot.slane %v2817, 1
        %v4745 = vsel %vm4640, %v4743, %v4744
        %v4746 = vrot.slane %v2960, 1
        %v4747 = vrot.slane %v2961, 1
        %v4748 = vsel %vm4640, %v4746, %v4747
        %v4749 = vrot.slane %v2674, 1
        %v4750 = vrot.slane %v2675, 1
        %v4751 = vsel %vm4640, %v4749, %v4750
        %v4752 = vrot.slane %v2818, 1
        %v4753 = vrot.slane %v2819, 1
        %v4754 = vsel %vm4640, %v4752, %v4753
        %v4755 = vrot.slane %v2962, 1
        %v4756 = vrot.slane %v2963, 1
        %v4757 = vsel %vm4640, %v4755, %v4756
        %v4758 = vrot.slane %v2676, 1
        %v4759 = vrot.slane %v2677, 1
        %v4760 = vsel %vm4640, %v4758, %v4759
        %v4761 = vrot.slane %v2820, 1
        %v4762 = vrot.slane %v2821, 1
        %v4763 = vsel %vm4640, %v4761, %v4762
        %v4764 = vrot.slane %v2964, 1
        %v4765 = vrot.slane %v2965, 1
        %v4766 = vsel %vm4640, %v4764, %v4765
        %v4767 = vrot.slane %v2678, 1
        %v4768 = vrot.slane %v2679, 1
        %v4769 = vsel %vm4640, %v4767, %v4768
        %v4770 = vrot.slane %v2822, 1
        %v4771 = vrot.slane %v2823, 1
        %v4772 = vsel %vm4640, %v4770, %v4771
        %v4773 = vrot.slane %v2966, 1
        %v4774 = vrot.slane %v2967, 1
        %v4775 = vsel %vm4640, %v4773, %v4774
        %v4776 = vrot.slane %v2680, 1
        %v4777 = vrot.slane %v2681, 1
        %v4778 = vsel %vm4640, %v4776, %v4777
        %v4779 = vrot.slane %v2824, 1
        %v4780 = vrot.slane %v2825, 1
        %v4781 = vsel %vm4640, %v4779, %v4780
        %v4782 = vrot.slane %v2968, 1
        %v4783 = vrot.slane %v2969, 1
        %v4784 = vsel %vm4640, %v4782, %v4783
        %s4833 = scalar_lea.vmem %s652, 384 [#allocation4]
        %v4834 = vld [vmem:[%s4833] sm:$0xf]
        %v4835 = vld [vmem:[%s4833 + $0x4] sm:$0xf]
        %v4836 = vld [vmem:[%s4833 + $0x8] sm:$0xf]
        %v4837 = vld [vmem:[%s4833 + $0xc] sm:$0xf]
        %v4838 = vld [vmem:[%s4833 + $0x10] sm:$0xf]
        %v4839 = vld [vmem:[%s4833 + $0x14] sm:$0xf]
        %v4840 = vld [vmem:[%s4833 + $0x18] sm:$0xf]
        %v4841 = vld [vmem:[%s4833 + $0x1c] sm:$0xf]
        %v4842 = vld [vmem:[%s4833 + $0x20] sm:$0xf]
        %v4843 = vld [vmem:[%s4833 + $0x24] sm:$0xf]
        %v4844 = vld [vmem:[%s4833 + $0x28] sm:$0xf]
        %v4845 = vld [vmem:[%s4833 + $0x2c] sm:$0xf]
        %v4846 = vld [vmem:[%s4833 + $0x30] sm:$0xf]
        %v4847 = vld [vmem:[%s4833 + $0x34] sm:$0xf]
        %v4848 = vld [vmem:[%s4833 + $0x38] sm:$0xf]
        %v4849 = vld [vmem:[%s4833 + $0x3c] sm:$0xf]
        %v4850 = vld [vmem:[%s4833 + $0x40] sm:$0xf]
        %v4851 = vld [vmem:[%s4833 + $0x44] sm:$0xf]
        %v4852 = vld [vmem:[%s4833 + $0x48] sm:$0xf]
        %v4853 = vld [vmem:[%s4833 + $0x4c] sm:$0xf]
        %v4854 = vld [vmem:[%s4833 + $0x50] sm:$0xf]
        %v4855 = vld [vmem:[%s4833 + $0x54] sm:$0xf]
        %v4856 = vld [vmem:[%s4833 + $0x58] sm:$0xf]
        %v4857 = vld [vmem:[%s4833 + $0x5c] sm:$0xf]
        %v4858 = vld [vmem:[%s4833 + $0x60] sm:$0xf]
        %v4859 = vld [vmem:[%s4833 + $0x64] sm:$0xf]
        %v4860 = vld [vmem:[%s4833 + $0x68] sm:$0xf]
        %v4861 = vld [vmem:[%s4833 + $0x6c] sm:$0xf]
        %v4862 = vld [vmem:[%s4833 + $0x70] sm:$0xf]
        %v4863 = vld [vmem:[%s4833 + $0x74] sm:$0xf]
        %v4864 = vld [vmem:[%s4833 + $0x78] sm:$0xf]
        %v4865 = vld [vmem:[%s4833 + $0x7c] sm:$0xf]
        %v4866 = vld [vmem:[%s4833 + $0x80] sm:$0xf]
        %v4867 = vld [vmem:[%s4833 + $0x84] sm:$0xf]
        %v4868 = vld [vmem:[%s4833 + $0x88] sm:$0xf]
        %v4869 = vld [vmem:[%s4833 + $0x8c] sm:$0xf]
        %v4870 = vld [vmem:[%s4833 + $0x90] sm:$0xf]
        %v4871 = vld [vmem:[%s4833 + $0x94] sm:$0xf]
        %v4872 = vld [vmem:[%s4833 + $0x98] sm:$0xf]
        %v4873 = vld [vmem:[%s4833 + $0x9c] sm:$0xf]
        %v4874 = vld [vmem:[%s4833 + $0xa0] sm:$0xf]
        %v4875 = vld [vmem:[%s4833 + $0xa4] sm:$0xf]
        %v4876 = vld [vmem:[%s4833 + $0xa8] sm:$0xf]
        %v4877 = vld [vmem:[%s4833 + $0xac] sm:$0xf]
        %v4878 = vld [vmem:[%s4833 + $0xb0] sm:$0xf]
        %v4879 = vld [vmem:[%s4833 + $0xb4] sm:$0xf]
        %v4880 = vld [vmem:[%s4833 + $0xb8] sm:$0xf]
        %v4881 = vld [vmem:[%s4833 + $0xbc] sm:$0xf]
        %v4930 = vunpack.c.l.b16 %v4834
        %v4931 = vunpack.c.l.b16 %v4835
        %v4932 = vunpack.c.l.b16 %v4836
        %v4933 = vunpack.c.l.b16 %v4837
        %v4934 = vunpack.c.l.b16 %v4838
        %v4935 = vunpack.c.l.b16 %v4839
        %v4936 = vunpack.c.l.b16 %v4840
        %v4937 = vunpack.c.l.b16 %v4841
        %v4938 = vunpack.c.l.b16 %v4842
        %v4939 = vunpack.c.l.b16 %v4843
        %v4940 = vunpack.c.l.b16 %v4844
        %v4941 = vunpack.c.l.b16 %v4845
        %v4942 = vunpack.c.l.b16 %v4846
        %v4943 = vunpack.c.l.b16 %v4847
        %v4944 = vunpack.c.l.b16 %v4848
        %v4945 = vunpack.c.l.b16 %v4849
        %v4946 = vunpack.c.l.b16 %v4850
        %v4947 = vunpack.c.l.b16 %v4851
        %v4948 = vunpack.c.l.b16 %v4852
        %v4949 = vunpack.c.l.b16 %v4853
        %v4950 = vunpack.c.l.b16 %v4854
        %v4951 = vunpack.c.l.b16 %v4855
        %v4952 = vunpack.c.l.b16 %v4856
        %v4953 = vunpack.c.l.b16 %v4857
        %v4954 = vunpack.c.l.b16 %v4858
        %v4955 = vunpack.c.l.b16 %v4859
        %v4956 = vunpack.c.l.b16 %v4860
        %v4957 = vunpack.c.l.b16 %v4861
        %v4958 = vunpack.c.l.b16 %v4862
        %v4959 = vunpack.c.l.b16 %v4863
        %v4960 = vunpack.c.l.b16 %v4864
        %v4961 = vunpack.c.l.b16 %v4865
        %v4962 = vunpack.c.l.b16 %v4866
        %v4963 = vunpack.c.l.b16 %v4867
        %v4964 = vunpack.c.l.b16 %v4868
        %v4965 = vunpack.c.l.b16 %v4869
        %v4966 = vunpack.c.l.b16 %v4870
        %v4967 = vunpack.c.l.b16 %v4871
        %v4968 = vunpack.c.l.b16 %v4872
        %v4969 = vunpack.c.l.b16 %v4873
        %v4970 = vunpack.c.l.b16 %v4874
        %v4971 = vunpack.c.l.b16 %v4875
        %v4972 = vunpack.c.l.b16 %v4876
        %v4973 = vunpack.c.l.b16 %v4877
        %v4974 = vunpack.c.l.b16 %v4878
        %v4975 = vunpack.c.l.b16 %v4879
        %v4976 = vunpack.c.l.b16 %v4880
        %v4977 = vunpack.c.l.b16 %v4881
        %v4978 = vpack.c.b16 %v4931, %v4930
        %v4979 = vpack.c.b16 %v4933, %v4932
        %v4980 = vpack.c.b16 %v4935, %v4934
        %v4981 = vpack.c.b16 %v4937, %v4936
        %v4982 = vpack.c.b16 %v4939, %v4938
        %v4983 = vpack.c.b16 %v4941, %v4940
        %v4984 = vpack.c.b16 %v4943, %v4942
        %v4985 = vpack.c.b16 %v4945, %v4944
        %v4986 = vpack.c.b16 %v4947, %v4946
        %v4987 = vpack.c.b16 %v4949, %v4948
        %v4988 = vpack.c.b16 %v4951, %v4950
        %v4989 = vpack.c.b16 %v4953, %v4952
        %v4990 = vpack.c.b16 %v4955, %v4954
        %v4991 = vpack.c.b16 %v4957, %v4956
        %v4992 = vpack.c.b16 %v4959, %v4958
        %v4993 = vpack.c.b16 %v4961, %v4960
        %v4994 = vpack.c.b16 %v4963, %v4962
        %v4995 = vpack.c.b16 %v4965, %v4964
        %v4996 = vpack.c.b16 %v4967, %v4966
        %v4997 = vpack.c.b16 %v4969, %v4968
        %v4998 = vpack.c.b16 %v4971, %v4970
        %v4999 = vpack.c.b16 %v4973, %v4972
        %v5000 = vpack.c.b16 %v4975, %v4974
        %v5001 = vpack.c.b16 %v4977, %v4976
        %5026 = vmatprep.subr.bf16.mxu0 0
        %5027 = vmatpush1.bf16.msra.mxu0 %v4978
        %5028 = vmatprep.subr.bf16.mxu0 0
        %5029 = vmatpush1.bf16.msra.mxu0 %v4979
        %5030 = vmatprep.subr.bf16.mxu0 0
        %5031 = vmatpush1.bf16.msra.mxu0 %v4980
        %5032 = vmatprep.subr.bf16.mxu0 0
        %5033 = vmatpush1.bf16.msra.mxu0 %v4981
        %5034 = vmatprep.subr.bf16.mxu0 0
        %5035 = vmatpush1.bf16.msra.mxu0 %v4982
        %5036 = vmatprep.subr.bf16.mxu0 0
        %5037 = vmatpush1.bf16.msra.mxu0 %v4983
        %5038 = vmatprep.subr.bf16.mxu0 0
        %5039 = vmatpush1.bf16.msra.mxu0 %v4984
        %5040 = vmatprep.subr.bf16.mxu0 0
        %5041 = vmatpush1.bf16.msra.mxu0 %v4985
        %5042 = vmatprep.subr.bf16.mxu0 0
        %5043 = vmatpush1.bf16.msra.mxu0 %v4986
        %5044 = vmatprep.subr.bf16.mxu0 0
        %5045 = vmatpush1.bf16.msra.mxu0 %v4987
        %5046 = vmatprep.subr.bf16.mxu0 0
        %5047 = vmatpush1.bf16.msra.mxu0 %v4988
        %5048 = vmatprep.subr.bf16.mxu0 0
        %5049 = vmatpush1.bf16.msra.mxu0 %v4989
        %5050 = vmatprep.subr.bf16.mxu0 0
        %5051 = vmatpush1.bf16.msra.mxu0 %v4990
        %5052 = vmatprep.subr.bf16.mxu0 0
        %5053 = vmatpush1.bf16.msra.mxu0 %v4991
        %5054 = vmatprep.subr.bf16.mxu0 0
        %5055 = vmatpush1.bf16.msra.mxu0 %v4992
        %5056 = vmatprep.subr.bf16.mxu0 0
        %5057 = vmatpush1.bf16.msra.mxu0 %v4993
        %5058 = vmatprep.mubr.bf16.mxu0 %v4646
        %5059 = vmatmul.mubr.bf16.gmra.mrb[0].mxu0 %v4643
        %v5060 = vpop.f32.mrb[0].mxu0
        %v5061 = vadd.f32 0.0, %v5060
        %v5062 = vpop.f32.mrb[0].mxu0
        %v5063 = vpop.f32.mrb[0].mxu0
        %v5064 = vadd.f32 0.0, %v5063
        %v5065 = vpop.f32.mrb[0].mxu0
        %5066 = vmatprep.mubr.bf16.mxu0 %v4655
        %5067 = vmatmul.mubr.bf16.gmra.mrb[0].mxu0 %v4652
        %v5068 = vpop.f32.mrb[0].mxu0
        %v5069 = vadd.f32 0.0, %v5068
        %v5070 = vpop.f32.mrb[0].mxu0
        %v5071 = vpop.f32.mrb[0].mxu0
        %v5072 = vadd.f32 0.0, %v5071
        %v5073 = vpop.f32.mrb[0].mxu0
        %5074 = vmatprep.mubr.bf16.mxu0 %v4664
        %5075 = vmatmul.mubr.bf16.gmra.mrb[0].mxu0 %v4661
        %v5076 = vpop.f32.mrb[0].mxu0
        %v5077 = vadd.f32 0.0, %v5076
        %v5078 = vpop.f32.mrb[0].mxu0
        %v5079 = vpop.f32.mrb[0].mxu0
        %v5080 = vadd.f32 0.0, %v5079
        %v5081 = vpop.f32.mrb[0].mxu0
        %5082 = vmatprep.mubr.bf16.mxu0 %v4673
        %5083 = vmatmul.mubr.bf16.gmra.mrb[0].mxu0 %v4670
        %v5084 = vpop.f32.mrb[0].mxu0
        %v5085 = vadd.f32 0.0, %v5084
        %v5086 = vpop.f32.mrb[0].mxu0
        %v5087 = vpop.f32.mrb[0].mxu0
        %v5088 = vadd.f32 0.0, %v5087
        %v5089 = vpop.f32.mrb[0].mxu0
        %5090 = vmatprep.mubr.bf16.mxu0 %v4682
        %5091 = vmatmul.mubr.bf16.gmra.mrb[0].mxu0 %v4679
        %v5092 = vpop.f32.mrb[0].mxu0
        %v5093 = vadd.f32 0.0, %v5092
        %v5094 = vpop.f32.mrb[0].mxu0
        %v5095 = vpop.f32.mrb[0].mxu0
        %v5096 = vadd.f32 0.0, %v5095
        %v5097 = vpop.f32.mrb[0].mxu0
        %5098 = vmatprep.mubr.bf16.mxu0 %v4691
        %5099 = vmatmul.mubr.bf16.gmra.mrb[0].mxu0 %v4688
        %v5100 = vpop.f32.mrb[0].mxu0
        %v5101 = vadd.f32 0.0, %v5100
        %v5102 = vpop.f32.mrb[0].mxu0
        %v5103 = vpop.f32.mrb[0].mxu0
        %v5104 = vadd.f32 0.0, %v5103
        %v5105 = vpop.f32.mrb[0].mxu0
        %5106 = vmatprep.mubr.bf16.mxu0 %v4700
        %5107 = vmatmul.mubr.bf16.gmra.mrb[0].mxu0 %v4697
        %v5108 = vpop.f32.mrb[0].mxu0
        %v5109 = vadd.f32 0.0, %v5108
        %v5110 = vpop.f32.mrb[0].mxu0
        %v5111 = vpop.f32.mrb[0].mxu0
        %v5112 = vadd.f32 0.0, %v5111
        %v5113 = vpop.f32.mrb[0].mxu0
        %5114 = vmatprep.mubr.bf16.mxu0 %v4709
        %5115 = vmatmul.mubr.bf16.gmra.mrb[0].mxu0 %v4706
        %v5116 = vpop.f32.mrb[0].mxu0
        %v5117 = vadd.f32 0.0, %v5116
        %v5118 = vpop.f32.mrb[0].mxu0
        %v5119 = vpop.f32.mrb[0].mxu0
        %v5120 = vadd.f32 0.0, %v5119
        %v5121 = vpop.f32.mrb[0].mxu0
        %5122 = vmatprep.mubr.bf16.mxu0 %v4718
        %5123 = vmatmul.mubr.bf16.gmra.mrb[0].mxu0 %v4715
        %v5124 = vpop.f32.mrb[0].mxu0
        %v5125 = vadd.f32 0.0, %v5124
        %v5126 = vpop.f32.mrb[0].mxu0
        %v5127 = vpop.f32.mrb[0].mxu0
        %v5128 = vadd.f32 0.0, %v5127
        %v5129 = vpop.f32.mrb[0].mxu0
        %5130 = vmatprep.mubr.bf16.mxu0 %v4727
        %5131 = vmatmul.mubr.bf16.gmra.mrb[0].mxu0 %v4724
        %v5132 = vpop.f32.mrb[0].mxu0
        %v5133 = vadd.f32 0.0, %v5132
        %v5134 = vpop.f32.mrb[0].mxu0
        %v5135 = vpop.f32.mrb[0].mxu0
        %v5136 = vadd.f32 0.0, %v5135
        %v5137 = vpop.f32.mrb[0].mxu0
        %5138 = vmatprep.mubr.bf16.mxu0 %v4736
        %5139 = vmatmul.mubr.bf16.gmra.mrb[0].mxu0 %v4733
        %v5140 = vpop.f32.mrb[0].mxu0
        %v5141 = vadd.f32 0.0, %v5140
        %v5142 = vpop.f32.mrb[0].mxu0
        %v5143 = vpop.f32.mrb[0].mxu0
        %v5144 = vadd.f32 0.0, %v5143
        %v5145 = vpop.f32.mrb[0].mxu0
        %5146 = vmatprep.mubr.bf16.mxu0 %v4745
        %5147 = vmatmul.mubr.bf16.gmra.mrb[0].mxu0 %v4742
        %v5148 = vpop.f32.mrb[0].mxu0
        %v5149 = vadd.f32 0.0, %v5148
        %v5150 = vpop.f32.mrb[0].mxu0
        %v5151 = vpop.f32.mrb[0].mxu0
        %v5152 = vadd.f32 0.0, %v5151
        %v5153 = vpop.f32.mrb[0].mxu0
        %5154 = vmatprep.mubr.bf16.mxu0 %v4754
        %5155 = vmatmul.mubr.bf16.gmra.mrb[0].mxu0 %v4751
        %v5156 = vpop.f32.mrb[0].mxu0
        %v5157 = vadd.f32 0.0, %v5156
        %v5158 = vpop.f32.mrb[0].mxu0
        %v5159 = vpop.f32.mrb[0].mxu0
        %v5160 = vadd.f32 0.0, %v5159
        %v5161 = vpop.f32.mrb[0].mxu0
        %5162 = vmatprep.mubr.bf16.mxu0 %v4763
        %5163 = vmatmul.mubr.bf16.gmra.mrb[0].mxu0 %v4760
        %v5164 = vpop.f32.mrb[0].mxu0
        %v5165 = vadd.f32 0.0, %v5164
        %v5166 = vpop.f32.mrb[0].mxu0
        %v5167 = vpop.f32.mrb[0].mxu0
        %v5168 = vadd.f32 0.0, %v5167
        %v5169 = vpop.f32.mrb[0].mxu0
        %5170 = vmatprep.mubr.bf16.mxu0 %v4772
        %5171 = vmatmul.mubr.bf16.gmra.mrb[0].mxu0 %v4769
        %v5172 = vpop.f32.mrb[0].mxu0
        %v5173 = vadd.f32 0.0, %v5172
        %v5174 = vpop.f32.mrb[0].mxu0
        %v5175 = vpop.f32.mrb[0].mxu0
        %v5176 = vadd.f32 0.0, %v5175
        %v5177 = vpop.f32.mrb[0].mxu0
        %5178 = vmatprep.mubr.bf16.mxu0 %v4781
        %5179 = vmatmul.mubr.bf16.gmra.mrb[0].mxu0 %v4778
        %v5180 = vpop.f32.mrb[0].mxu0
        %v5181 = vadd.f32 0.0, %v5180
        %v5182 = vpop.f32.mrb[0].mxu0
        %v5183 = vpop.f32.mrb[0].mxu0
        %v5184 = vadd.f32 0.0, %v5183
        %v5185 = vpop.f32.mrb[0].mxu0
        %5186 = vdwg.mxu0
        %5187 = vmatprep.subr.bf16.mxu0 0
        %5188 = vmatpush1.bf16.msra.mxu0 %v4994
        %5189 = vmatprep.subr.bf16.mxu0 0
        %5190 = vmatpush1.bf16.msra.mxu0 %v4995
        %5191 = vmatprep.subr.bf16.mxu0 0
        %5192 = vmatpush1.bf16.msra.mxu0 %v4996
        %5193 = vmatprep.subr.bf16.mxu0 0
        %5194 = vmatpush1.bf16.msra.mxu0 %v4997
        %5195 = vmatprep.subr.bf16.mxu0 0
        %5196 = vmatpush1.bf16.msra.mxu0 %v4998
        %5197 = vmatprep.subr.bf16.mxu0 0
        %5198 = vmatpush1.bf16.msra.mxu0 %v4999
        %5199 = vmatprep.subr.bf16.mxu0 0
        %5200 = vmatpush1.bf16.msra.mxu0 %v5000
        %5201 = vmatprep.subr.bf16.mxu0 0
        %5202 = vmatpush1.bf16.msra.mxu0 %v5001
        %5203 = vmatprep.subr.bf16.mxu0 0
        %5204 = vmatpush1.bf16.msra.mxu0 0
        %5205 = vmatprep.subr.bf16.mxu0 0
        %5206 = vmatpush1.bf16.msra.mxu0 0
        %5207 = vmatprep.subr.bf16.mxu0 0
        %5208 = vmatpush1.bf16.msra.mxu0 0
        %5209 = vmatprep.subr.bf16.mxu0 0
        %5210 = vmatpush1.bf16.msra.mxu0 0
        %5211 = vmatprep.subr.bf16.mxu0 0
        %5212 = vmatpush1.bf16.msra.mxu0 0
        %5213 = vmatprep.subr.bf16.mxu0 0
        %5214 = vmatpush1.bf16.msra.mxu0 0
        %5215 = vmatprep.subr.bf16.mxu0 0
        %5216 = vmatpush1.bf16.msra.mxu0 0
        %5217 = vmatprep.subr.bf16.mxu0 0
        %5218 = vmatpush1.bf16.msra.mxu0 0
        %5219 = vmatprep.mubr.bf16.mxu0 0
        %5220 = vmatmul.mubr.bf16.gmra.mrb[0].mxu0 %v4649
        %v5221 = vpop.f32.mrb[0].mxu0
        %v5222 = vadd.f32 %v5061, %v5221
        %v5223 = vpop.f32.mrb[0].mxu0
        %v5224 = vpop.f32.mrb[0].mxu0
        %v5225 = vadd.f32 %v5064, %v5224
        %v5226 = vpop.f32.mrb[0].mxu0
        %5227 = vmatprep.mubr.bf16.mxu0 0
        %5228 = vmatmul.mubr.bf16.gmra.mrb[0].mxu0 %v4658
        %v5229 = vpop.f32.mrb[0].mxu0
        %v5230 = vadd.f32 %v5069, %v5229
        %v5231 = vpop.f32.mrb[0].mxu0
        %v5232 = vpop.f32.mrb[0].mxu0
        %v5233 = vadd.f32 %v5072, %v5232
        %v5234 = vpop.f32.mrb[0].mxu0
        %5235 = vmatprep.mubr.bf16.mxu0 0
        %5236 = vmatmul.mubr.bf16.gmra.mrb[0].mxu0 %v4667
        %v5237 = vpop.f32.mrb[0].mxu0
        %v5238 = vadd.f32 %v5077, %v5237
        %v5239 = vpop.f32.mrb[0].mxu0
        %v5240 = vpop.f32.mrb[0].mxu0
        %v5241 = vadd.f32 %v5080, %v5240
        %v5242 = vpop.f32.mrb[0].mxu0
        %5243 = vmatprep.mubr.bf16.mxu0 0
        %5244 = vmatmul.mubr.bf16.gmra.mrb[0].mxu0 %v4676
        %v5245 = vpop.f32.mrb[0].mxu0
        %v5246 = vadd.f32 %v5085, %v5245
        %v5247 = vpop.f32.mrb[0].mxu0
        %v5248 = vpop.f32.mrb[0].mxu0
        %v5249 = vadd.f32 %v5088, %v5248
        %v5250 = vpop.f32.mrb[0].mxu0
        %5251 = vmatprep.mubr.bf16.mxu0 0
        %5252 = vmatmul.mubr.bf16.gmra.mrb[0].mxu0 %v4685
        %v5253 = vpop.f32.mrb[0].mxu0
        %v5254 = vadd.f32 %v5093, %v5253
        %v5255 = vpop.f32.mrb[0].mxu0
        %v5256 = vpop.f32.mrb[0].mxu0
        %v5257 = vadd.f32 %v5096, %v5256
        %v5258 = vpop.f32.mrb[0].mxu0
        %5259 = vmatprep.mubr.bf16.mxu0 0
        %5260 = vmatmul.mubr.bf16.gmra.mrb[0].mxu0 %v4694
        %v5261 = vpop.f32.mrb[0].mxu0
        %v5262 = vadd.f32 %v5101, %v5261
        %v5263 = vpop.f32.mrb[0].mxu0
        %v5264 = vpop.f32.mrb[0].mxu0
        %v5265 = vadd.f32 %v5104, %v5264
        %v5266 = vpop.f32.mrb[0].mxu0
        %5267 = vmatprep.mubr.bf16.mxu0 0
        %5268 = vmatmul.mubr.bf16.gmra.mrb[0].mxu0 %v4703
        %v5269 = vpop.f32.mrb[0].mxu0
        %v5270 = vadd.f32 %v5109, %v5269
        %v5271 = vpop.f32.mrb[0].mxu0
        %v5272 = vpop.f32.mrb[0].mxu0
        %v5273 = vadd.f32 %v5112, %v5272
        %v5274 = vpop.f32.mrb[0].mxu0
        %5275 = vmatprep.mubr.bf16.mxu0 0
        %5276 = vmatmul.mubr.bf16.gmra.mrb[0].mxu0 %v4712
        %v5277 = vpop.f32.mrb[0].mxu0
        %v5278 = vadd.f32 %v5117, %v5277
        %v5279 = vpop.f32.mrb[0].mxu0
        %v5280 = vpop.f32.mrb[0].mxu0
        %v5281 = vadd.f32 %v5120, %v5280
        %v5282 = vpop.f32.mrb[0].mxu0
        %5283 = vmatprep.mubr.bf16.mxu0 0
        %5284 = vmatmul.mubr.bf16.gmra.mrb[0].mxu0 %v4721
        %v5285 = vpop.f32.mrb[0].mxu0
        %v5286 = vadd.f32 %v5125, %v5285
        %v5287 = vpop.f32.mrb[0].mxu0
        %v5288 = vpop.f32.mrb[0].mxu0
        %v5289 = vadd.f32 %v5128, %v5288
        %v5290 = vpop.f32.mrb[0].mxu0
        %5291 = vmatprep.mubr.bf16.mxu0 0
        %5292 = vmatmul.mubr.bf16.gmra.mrb[0].mxu0 %v4730
        %v5293 = vpop.f32.mrb[0].mxu0
        %v5294 = vadd.f32 %v5133, %v5293
        %v5295 = vpop.f32.mrb[0].mxu0
        %v5296 = vpop.f32.mrb[0].mxu0
        %v5297 = vadd.f32 %v5136, %v5296
        %v5298 = vpop.f32.mrb[0].mxu0
        %5299 = vmatprep.mubr.bf16.mxu0 0
        %5300 = vmatmul.mubr.bf16.gmra.mrb[0].mxu0 %v4739
        %v5301 = vpop.f32.mrb[0].mxu0
        %v5302 = vadd.f32 %v5141, %v5301
        %v5303 = vpop.f32.mrb[0].mxu0
        %v5304 = vpop.f32.mrb[0].mxu0
        %v5305 = vadd.f32 %v5144, %v5304
        %v5306 = vpop.f32.mrb[0].mxu0
        %5307 = vmatprep.mubr.bf16.mxu0 0
        %5308 = vmatmul.mubr.bf16.gmra.mrb[0].mxu0 %v4748
        %v5309 = vpop.f32.mrb[0].mxu0
        %v5310 = vadd.f32 %v5149, %v5309
        %v5311 = vpop.f32.mrb[0].mxu0
        %v5312 = vpop.f32.mrb[0].mxu0
        %v5313 = vadd.f32 %v5152, %v5312
        %v5314 = vpop.f32.mrb[0].mxu0
        %5315 = vmatprep.mubr.bf16.mxu0 0
        %5316 = vmatmul.mubr.bf16.gmra.mrb[0].mxu0 %v4757
        %v5317 = vpop.f32.mrb[0].mxu0
        %v5318 = vadd.f32 %v5157, %v5317
        %v5319 = vpop.f32.mrb[0].mxu0
        %v5320 = vpop.f32.mrb[0].mxu0
        %v5321 = vadd.f32 %v5160, %v5320
        %v5322 = vpop.f32.mrb[0].mxu0
        %5323 = vmatprep.mubr.bf16.mxu0 0
        %5324 = vmatmul.mubr.bf16.gmra.mrb[0].mxu0 %v4766
        %v5325 = vpop.f32.mrb[0].mxu0
        %v5326 = vadd.f32 %v5165, %v5325
        %v5327 = vpop.f32.mrb[0].mxu0
        %v5328 = vpop.f32.mrb[0].mxu0
        %v5329 = vadd.f32 %v5168, %v5328
        %v5330 = vpop.f32.mrb[0].mxu0
        %5331 = vmatprep.mubr.bf16.mxu0 0
        %5332 = vmatmul.mubr.bf16.gmra.mrb[0].mxu0 %v4775
        %v5333 = vpop.f32.mrb[0].mxu0
        %v5334 = vadd.f32 %v5173, %v5333
        %v5335 = vpop.f32.mrb[0].mxu0
        %v5336 = vpop.f32.mrb[0].mxu0
        %v5337 = vadd.f32 %v5176, %v5336
        %v5338 = vpop.f32.mrb[0].mxu0
        %5339 = vmatprep.mubr.bf16.mxu0 0
        %5340 = vmatmul.mubr.bf16.gmra.mrb[0].mxu0 %v4784
        %v5341 = vpop.f32.mrb[0].mxu0
        %v5342 = vadd.f32 %v5181, %v5341
        %v5343 = vpop.f32.mrb[0].mxu0
        %v5344 = vpop.f32.mrb[0].mxu0
        %v5345 = vadd.f32 %v5184, %v5344
        %v5346 = vpop.f32.mrb[0].mxu0
        %5347 = vdwg.mxu0
        %v5348 = vadd.f32 %v4514, %v5222
        %v5349 = vadd.f32 %v4517, %v5225
        %v5350 = vadd.f32 %v4522, %v5230
        %v5351 = vadd.f32 %v4525, %v5233
        %v5352 = vadd.f32 %v4530, %v5238
        %v5353 = vadd.f32 %v4533, %v5241
        %v5354 = vadd.f32 %v4538, %v5246
        %v5355 = vadd.f32 %v4541, %v5249
        %v5356 = vadd.f32 %v4546, %v5254
        %v5357 = vadd.f32 %v4549, %v5257
        %v5358 = vadd.f32 %v4554, %v5262
        %v5359 = vadd.f32 %v4557, %v5265
        %v5360 = vadd.f32 %v4562, %v5270
        %v5361 = vadd.f32 %v4565, %v5273
        %v5362 = vadd.f32 %v4570, %v5278
        %v5363 = vadd.f32 %v4573, %v5281
        %v5364 = vadd.f32 %v4578, %v5286
        %v5365 = vadd.f32 %v4581, %v5289
        %v5366 = vadd.f32 %v4586, %v5294
        %v5367 = vadd.f32 %v4589, %v5297
        %v5368 = vadd.f32 %v4594, %v5302
        %v5369 = vadd.f32 %v4597, %v5305
        %v5370 = vadd.f32 %v4602, %v5310
        %v5371 = vadd.f32 %v4605, %v5313
        %v5372 = vadd.f32 %v4610, %v5318
        %v5373 = vadd.f32 %v4613, %v5321
        %v5374 = vadd.f32 %v4618, %v5326
        %v5375 = vadd.f32 %v4621, %v5329
        %v5376 = vadd.f32 %v4626, %v5334
        %v5377 = vadd.f32 %v4629, %v5337
        %v5378 = vadd.f32 %v4634, %v5342
        %v5379 = vadd.f32 %v4637, %v5345
        %v5380 = vld [vmem:[%s749] sm:$0x1]
        %v5382 = vlaneseq
        %v5383 = vshrl.u32 %v5382, 7
        %v5384 = vsub.s32 0, %v5383
        %v5385 = vrot.slane %v5380, %v5384
        %v5387 = vmul.f32 %v5348, %v5385
        %v5388 = vmul.f32 %v5349, %v5385
        %v5389 = vmul.f32 %v5350, %v5385
        %v5390 = vmul.f32 %v5351, %v5385
        %v5391 = vmul.f32 %v5352, %v5385
        %v5392 = vmul.f32 %v5353, %v5385
        %v5393 = vmul.f32 %v5354, %v5385
        %v5394 = vmul.f32 %v5355, %v5385
        %v5395 = vmul.f32 %v5356, %v5385
        %v5396 = vmul.f32 %v5357, %v5385
        %v5397 = vmul.f32 %v5358, %v5385
        %v5398 = vmul.f32 %v5359, %v5385
        %v5399 = vmul.f32 %v5360, %v5385
        %v5400 = vmul.f32 %v5361, %v5385
        %v5401 = vmul.f32 %v5362, %v5385
        %v5402 = vmul.f32 %v5363, %v5385
        %v5403 = vmul.f32 %v5364, %v5385
        %v5404 = vmul.f32 %v5365, %v5385
        %v5405 = vmul.f32 %v5366, %v5385
        %v5406 = vmul.f32 %v5367, %v5385
        %v5407 = vmul.f32 %v5368, %v5385
        %v5408 = vmul.f32 %v5369, %v5385
        %v5409 = vmul.f32 %v5370, %v5385
        %v5410 = vmul.f32 %v5371, %v5385
        %v5411 = vmul.f32 %v5372, %v5385
        %v5412 = vmul.f32 %v5373, %v5385
        %v5413 = vmul.f32 %v5374, %v5385
        %v5414 = vmul.f32 %v5375, %v5385
        %v5415 = vmul.f32 %v5376, %v5385
        %v5416 = vmul.f32 %v5377, %v5385
        %v5417 = vmul.f32 %v5378, %v5385
        %v5418 = vmul.f32 %v5379, %v5385
        %v5419 = vld [vmem:[%s752] sm:$0x1]
        %v5421 = vlaneseq
        %v5422 = vshrl.u32 %v5421, 7
        %v5423 = vsub.s32 0, %v5422
        %v5424 = vrot.slane %v5419, %v5423
        %v5426 = vadd.f32 %v5387, %v5424
        %v5427 = vadd.f32 %v5388, %v5424
        %v5428 = vadd.f32 %v5389, %v5424
        %v5429 = vadd.f32 %v5390, %v5424
        %v5430 = vadd.f32 %v5391, %v5424
        %v5431 = vadd.f32 %v5392, %v5424
        %v5432 = vadd.f32 %v5393, %v5424
        %v5433 = vadd.f32 %v5394, %v5424
        %v5434 = vadd.f32 %v5395, %v5424
        %v5435 = vadd.f32 %v5396, %v5424
        %v5436 = vadd.f32 %v5397, %v5424
        %v5437 = vadd.f32 %v5398, %v5424
        %v5438 = vadd.f32 %v5399, %v5424
        %v5439 = vadd.f32 %v5400, %v5424
        %v5440 = vadd.f32 %v5401, %v5424
        %v5441 = vadd.f32 %v5402, %v5424
        %v5442 = vadd.f32 %v5403, %v5424
        %v5443 = vadd.f32 %v5404, %v5424
        %v5444 = vadd.f32 %v5405, %v5424
        %v5445 = vadd.f32 %v5406, %v5424
        %v5446 = vadd.f32 %v5407, %v5424
        %v5447 = vadd.f32 %v5408, %v5424
        %v5448 = vadd.f32 %v5409, %v5424
        %v5449 = vadd.f32 %v5410, %v5424
        %v5450 = vadd.f32 %v5411, %v5424
        %v5451 = vadd.f32 %v5412, %v5424
        %v5452 = vadd.f32 %v5413, %v5424
        %v5453 = vadd.f32 %v5414, %v5424
        %v5454 = vadd.f32 %v5415, %v5424
        %v5455 = vadd.f32 %v5416, %v5424
        %v5456 = vadd.f32 %v5417, %v5424
        %v5457 = vadd.f32 %v5418, %v5424
        %v5458 = vsub.f32 0.0, %v5426
        %v5459 = vsub.f32 0.0, %v5427
        %v5460 = vsub.f32 0.0, %v5428
        %v5461 = vsub.f32 0.0, %v5429
        %v5462 = vsub.f32 0.0, %v5430
        %v5463 = vsub.f32 0.0, %v5431
        %v5464 = vsub.f32 0.0, %v5432
        %v5465 = vsub.f32 0.0, %v5433
        %v5466 = vsub.f32 0.0, %v5434
        %v5467 = vsub.f32 0.0, %v5435
        %v5468 = vsub.f32 0.0, %v5436
        %v5469 = vsub.f32 0.0, %v5437
        %v5470 = vsub.f32 0.0, %v5438
        %v5471 = vsub.f32 0.0, %v5439
        %v5472 = vsub.f32 0.0, %v5440
        %v5473 = vsub.f32 0.0, %v5441
        %v5474 = vsub.f32 0.0, %v5442
        %v5475 = vsub.f32 0.0, %v5443
        %v5476 = vsub.f32 0.0, %v5444
        %v5477 = vsub.f32 0.0, %v5445
        %v5478 = vsub.f32 0.0, %v5446
        %v5479 = vsub.f32 0.0, %v5447
        %v5480 = vsub.f32 0.0, %v5448
        %v5481 = vsub.f32 0.0, %v5449
        %v5482 = vsub.f32 0.0, %v5450
        %v5483 = vsub.f32 0.0, %v5451
        %v5484 = vsub.f32 0.0, %v5452
        %v5485 = vsub.f32 0.0, %v5453
        %v5486 = vsub.f32 0.0, %v5454
        %v5487 = vsub.f32 0.0, %v5455
        %v5488 = vsub.f32 0.0, %v5456
        %v5489 = vsub.f32 0.0, %v5457
        %v5490 = vmul.f32 %v5458, 1.442695
        %v5491 = vpow.pop %v5490
        %v5492 = vmul.f32 %v5459, 1.442695
        %v5493 = vpow.pop %v5492
        %v5494 = vmul.f32 %v5460, 1.442695
        %v5495 = vpow.pop %v5494
        %v5496 = vmul.f32 %v5461, 1.442695
        %v5497 = vpow.pop %v5496
        %v5498 = vmul.f32 %v5462, 1.442695
        %v5499 = vpow.pop %v5498
        %v5500 = vmul.f32 %v5463, 1.442695
        %v5501 = vpow.pop %v5500
        %v5502 = vmul.f32 %v5464, 1.442695
        %v5503 = vpow.pop %v5502
        %v5504 = vmul.f32 %v5465, 1.442695
        %v5505 = vpow.pop %v5504
        %v5506 = vmul.f32 %v5466, 1.442695
        %v5507 = vpow.pop %v5506
        %v5508 = vmul.f32 %v5467, 1.442695
        %v5509 = vpow.pop %v5508
        %v5510 = vmul.f32 %v5468, 1.442695
        %v5511 = vpow.pop %v5510
        %v5512 = vmul.f32 %v5469, 1.442695
        %v5513 = vpow.pop %v5512
        %v5514 = vmul.f32 %v5470, 1.442695
        %v5515 = vpow.pop %v5514
        %v5516 = vmul.f32 %v5471, 1.442695
        %v5517 = vpow.pop %v5516
        %v5518 = vmul.f32 %v5472, 1.442695
        %v5519 = vpow.pop %v5518
        %v5520 = vmul.f32 %v5473, 1.442695
        %v5521 = vpow.pop %v5520
        %v5522 = vmul.f32 %v5474, 1.442695
        %v5523 = vpow.pop %v5522
        %v5524 = vmul.f32 %v5475, 1.442695
        %v5525 = vpow.pop %v5524
        %v5526 = vmul.f32 %v5476, 1.442695
        %v5527 = vpow.pop %v5526
        %v5528 = vmul.f32 %v5477, 1.442695
        %v5529 = vpow.pop %v5528
        %v5530 = vmul.f32 %v5478, 1.442695
        %v5531 = vpow.pop %v5530
        %v5532 = vmul.f32 %v5479, 1.442695
        %v5533 = vpow.pop %v5532
        %v5534 = vmul.f32 %v5480, 1.442695
        %v5535 = vpow.pop %v5534
        %v5536 = vmul.f32 %v5481, 1.442695
        %v5537 = vpow.pop %v5536
        %v5538 = vmul.f32 %v5482, 1.442695
        %v5539 = vpow.pop %v5538
        %v5540 = vmul.f32 %v5483, 1.442695
        %v5541 = vpow.pop %v5540
        %v5542 = vmul.f32 %v5484, 1.442695
        %v5543 = vpow.pop %v5542
        %v5544 = vmul.f32 %v5485, 1.442695
        %v5545 = vpow.pop %v5544
        %v5546 = vmul.f32 %v5486, 1.442695
        %v5547 = vpow.pop %v5546
        %v5548 = vmul.f32 %v5487, 1.442695
        %v5549 = vpow.pop %v5548
        %v5550 = vmul.f32 %v5488, 1.442695
        %v5551 = vpow.pop %v5550
        %v5552 = vmul.f32 %v5489, 1.442695
        %v5553 = vpow.pop %v5552
        %v5554 = vadd.f32 %v5491, 1.0
        %v5555 = vadd.f32 %v5493, 1.0
        %v5556 = vadd.f32 %v5495, 1.0
        %v5557 = vadd.f32 %v5497, 1.0
        %v5558 = vadd.f32 %v5499, 1.0
        %v5559 = vadd.f32 %v5501, 1.0
        %v5560 = vadd.f32 %v5503, 1.0
        %v5561 = vadd.f32 %v5505, 1.0
        %v5562 = vadd.f32 %v5507, 1.0
        %v5563 = vadd.f32 %v5509, 1.0
        %v5564 = vadd.f32 %v5511, 1.0
        %v5565 = vadd.f32 %v5513, 1.0
        %v5566 = vadd.f32 %v5515, 1.0
        %v5567 = vadd.f32 %v5517, 1.0
        %v5568 = vadd.f32 %v5519, 1.0
        %v5569 = vadd.f32 %v5521, 1.0
        %v5570 = vadd.f32 %v5523, 1.0
        %v5571 = vadd.f32 %v5525, 1.0
        %v5572 = vadd.f32 %v5527, 1.0
        %v5573 = vadd.f32 %v5529, 1.0
        %v5574 = vadd.f32 %v5531, 1.0
        %v5575 = vadd.f32 %v5533, 1.0
        %v5576 = vadd.f32 %v5535, 1.0
        %v5577 = vadd.f32 %v5537, 1.0
        %v5578 = vadd.f32 %v5539, 1.0
        %v5579 = vadd.f32 %v5541, 1.0
        %v5580 = vadd.f32 %v5543, 1.0
        %v5581 = vadd.f32 %v5545, 1.0
        %v5582 = vadd.f32 %v5547, 1.0
        %v5583 = vadd.f32 %v5549, 1.0
        %v5584 = vadd.f32 %v5551, 1.0
        %v5585 = vadd.f32 %v5553, 1.0
        %v5586 = vrcp.pop %v5554
        %v5587 = vrcp.pop %v5555
        %v5588 = vrcp.pop %v5556
        %v5589 = vrcp.pop %v5557
        %v5590 = vrcp.pop %v5558
        %v5591 = vrcp.pop %v5559
        %v5592 = vrcp.pop %v5560
        %v5593 = vrcp.pop %v5561
        %v5594 = vrcp.pop %v5562
        %v5595 = vrcp.pop %v5563
        %v5596 = vrcp.pop %v5564
        %v5597 = vrcp.pop %v5565
        %v5598 = vrcp.pop %v5566
        %v5599 = vrcp.pop %v5567
        %v5600 = vrcp.pop %v5568
        %v5601 = vrcp.pop %v5569
        %v5602 = vrcp.pop %v5570
        %v5603 = vrcp.pop %v5571
        %v5604 = vrcp.pop %v5572
        %v5605 = vrcp.pop %v5573
        %v5606 = vrcp.pop %v5574
        %v5607 = vrcp.pop %v5575
        %v5608 = vrcp.pop %v5576
        %v5609 = vrcp.pop %v5577
        %v5610 = vrcp.pop %v5578
        %v5611 = vrcp.pop %v5579
        %v5612 = vrcp.pop %v5580
        %v5613 = vrcp.pop %v5581
        %v5614 = vrcp.pop %v5582
        %v5615 = vrcp.pop %v5583
        %v5616 = vrcp.pop %v5584
        %v5617 = vrcp.pop %v5585
        %v5618 = vmul.f32 %v5426, %v5586
        %v5619 = vmul.f32 %v5427, %v5587
        %v5620 = vmul.f32 %v5428, %v5588
        %v5621 = vmul.f32 %v5429, %v5589
        %v5622 = vmul.f32 %v5430, %v5590
        %v5623 = vmul.f32 %v5431, %v5591
        %v5624 = vmul.f32 %v5432, %v5592
        %v5625 = vmul.f32 %v5433, %v5593
        %v5626 = vmul.f32 %v5434, %v5594
        %v5627 = vmul.f32 %v5435, %v5595
        %v5628 = vmul.f32 %v5436, %v5596
        %v5629 = vmul.f32 %v5437, %v5597
        %v5630 = vmul.f32 %v5438, %v5598
        %v5631 = vmul.f32 %v5439, %v5599
        %v5632 = vmul.f32 %v5440, %v5600
        %v5633 = vmul.f32 %v5441, %v5601
        %v5634 = vmul.f32 %v5442, %v5602
        %v5635 = vmul.f32 %v5443, %v5603
        %v5636 = vmul.f32 %v5444, %v5604
        %v5637 = vmul.f32 %v5445, %v5605
        %v5638 = vmul.f32 %v5446, %v5606
        %v5639 = vmul.f32 %v5447, %v5607
        %v5640 = vmul.f32 %v5448, %v5608
        %v5641 = vmul.f32 %v5449, %v5609
        %v5642 = vmul.f32 %v5450, %v5610
        %v5643 = vmul.f32 %v5451, %v5611
        %v5644 = vmul.f32 %v5452, %v5612
        %v5645 = vmul.f32 %v5453, %v5613
        %v5646 = vmul.f32 %v5454, %v5614
        %v5647 = vmul.f32 %v5455, %v5615
        %v5648 = vmul.f32 %v5456, %v5616
        %v5649 = vmul.f32 %v5457, %v5617
        %v5650 = vadd.f32 %v5618, %v1446
        %v5651 = vadd.f32 %v5619, %v1447
        %v5652 = vadd.f32 %v5620, %v1448
        %v5653 = vadd.f32 %v5621, %v1449
        %v5654 = vadd.f32 %v5622, %v1450
        %v5655 = vadd.f32 %v5623, %v1451
        %v5656 = vadd.f32 %v5624, %v1452
        %v5657 = vadd.f32 %v5625, %v1453
        %v5658 = vadd.f32 %v5626, %v1454
        %v5659 = vadd.f32 %v5627, %v1455
        %v5660 = vadd.f32 %v5628, %v1456
        %v5661 = vadd.f32 %v5629, %v1457
        %v5662 = vadd.f32 %v5630, %v1458
        %v5663 = vadd.f32 %v5631, %v1459
        %v5664 = vadd.f32 %v5632, %v1460
        %v5665 = vadd.f32 %v5633, %v1461
        %v5666 = vadd.f32 %v5634, %v1462
        %v5667 = vadd.f32 %v5635, %v1463
        %v5668 = vadd.f32 %v5636, %v1464
        %v5669 = vadd.f32 %v5637, %v1465
        %v5670 = vadd.f32 %v5638, %v1466
        %v5671 = vadd.f32 %v5639, %v1467
        %v5672 = vadd.f32 %v5640, %v1468
        %v5673 = vadd.f32 %v5641, %v1469
        %v5674 = vadd.f32 %v5642, %v1470
        %v5675 = vadd.f32 %v5643, %v1471
        %v5676 = vadd.f32 %v5644, %v1472
        %v5677 = vadd.f32 %v5645, %v1473
        %v5678 = vadd.f32 %v5646, %v1474
        %v5679 = vadd.f32 %v5647, %v1475
        %v5680 = vadd.f32 %v5648, %v1476
        %v5681 = vadd.f32 %v5649, %v1477
        %5682 = vst [vmem:[#allocation2] sm:$0xff] %v5650
        %5683 = vst [vmem:[#allocation2 + $0x8] sm:$0xff] %v5651
        %5684 = vst [vmem:[#allocation2 + $0x10] sm:$0xff] %v5652
        %5685 = vst [vmem:[#allocation2 + $0x18] sm:$0xff] %v5653
        %5686 = vst [vmem:[#allocation2 + $0x20] sm:$0xff] %v5654
        %5687 = vst [vmem:[#allocation2 + $0x28] sm:$0xff] %v5655
        %5688 = vst [vmem:[#allocation2 + $0x30] sm:$0xff] %v5656
        %5689 = vst [vmem:[#allocation2 + $0x38] sm:$0xff] %v5657
        %5690 = vst [vmem:[#allocation2 + $0x40] sm:$0xff] %v5658
        %5691 = vst [vmem:[#allocation2 + $0x48] sm:$0xff] %v5659
        %5692 = vst [vmem:[#allocation2 + $0x50] sm:$0xff] %v5660
        %5693 = vst [vmem:[#allocation2 + $0x58] sm:$0xff] %v5661
        %5694 = vst [vmem:[#allocation2 + $0x60] sm:$0xff] %v5662
        %5695 = vst [vmem:[#allocation2 + $0x68] sm:$0xff] %v5663
        %5696 = vst [vmem:[#allocation2 + $0x70] sm:$0xff] %v5664
        %5697 = vst [vmem:[#allocation2 + $0x78] sm:$0xff] %v5665
        %5698 = vst [vmem:[#allocation2 + $0x80] sm:$0xff] %v5666
        %5699 = vst [vmem:[#allocation2 + $0x88] sm:$0xff] %v5667
        %5700 = vst [vmem:[#allocation2 + $0x90] sm:$0xff] %v5668
        %5701 = vst [vmem:[#allocation2 + $0x98] sm:$0xff] %v5669
        %5702 = vst [vmem:[#allocation2 + $0xa0] sm:$0xff] %v5670
        %5703 = vst [vmem:[#allocation2 + $0xa8] sm:$0xff] %v5671
        %5704 = vst [vmem:[#allocation2 + $0xb0] sm:$0xff] %v5672
        %5705 = vst [vmem:[#allocation2 + $0xb8] sm:$0xff] %v5673
        %5706 = vst [vmem:[#allocation2 + $0xc0] sm:$0xff] %v5674
        %5707 = vst [vmem:[#allocation2 + $0xc8] sm:$0xff] %v5675
        %5708 = vst [vmem:[#allocation2 + $0xd0] sm:$0xff] %v5676
        %5709 = vst [vmem:[#allocation2 + $0xd8] sm:$0xff] %v5677
        %5710 = vst [vmem:[#allocation2 + $0xe0] sm:$0xff] %v5678
        %5711 = vst [vmem:[#allocation2 + $0xe8] sm:$0xff] %v5679
        %5712 = vst [vmem:[#allocation2 + $0xf0] sm:$0xff] %v5680
        %5713 = vst [vmem:[#allocation2 + $0xf8] sm:$0xff] %v5681
        %p5714 = scmp.eq.s32.totalorder %s39, 1
        // Predicated region
        $region109: #{bottleneck_csp_pallas.1} parent=99 // pred_check
          %p5715 = pneg %p5714
        $region110: #{bottleneck_csp_pallas.1} parent=99 // pred_check_branch
          %5717 = sbr.rel (%p5715) target = $region112
        $region111: #{bottleneck_csp_pallas.1} parent=99 // pred_region
          %v5718 = vpack.c.bf16 %v5651, %v5650
          %v5719 = vpack.c.bf16 %v5653, %v5652
          %v5720 = vpack.c.bf16 %v5655, %v5654
          %v5721 = vpack.c.bf16 %v5657, %v5656
          %v5722 = vpack.c.bf16 %v5659, %v5658
          %v5723 = vpack.c.bf16 %v5661, %v5660
          %v5724 = vpack.c.bf16 %v5663, %v5662
          %v5725 = vpack.c.bf16 %v5665, %v5664
          %v5726 = vpack.c.bf16 %v5667, %v5666
          %v5727 = vpack.c.bf16 %v5669, %v5668
          %v5728 = vpack.c.bf16 %v5671, %v5670
          %v5729 = vpack.c.bf16 %v5673, %v5672
          %v5730 = vpack.c.bf16 %v5675, %v5674
          %v5731 = vpack.c.bf16 %v5677, %v5676
          %v5732 = vpack.c.bf16 %v5679, %v5678
          %v5733 = vpack.c.bf16 %v5681, %v5680
          %v5734 = vld [vmem:[%s10] sm:$0xf]
          %v5735 = vld [vmem:[%s10 + $0x4] sm:$0xf]
          %v5736 = vld [vmem:[%s10 + $0x8] sm:$0xf]
          %v5737 = vld [vmem:[%s10 + $0xc] sm:$0xf]
          %v5738 = vld [vmem:[%s10 + $0x10] sm:$0xf]
          %v5739 = vld [vmem:[%s10 + $0x14] sm:$0xf]
          %v5740 = vld [vmem:[%s10 + $0x18] sm:$0xf]
          %v5741 = vld [vmem:[%s10 + $0x1c] sm:$0xf]
          %v5742 = vld [vmem:[%s10 + $0x20] sm:$0xf]
          %v5743 = vld [vmem:[%s10 + $0x24] sm:$0xf]
          %v5744 = vld [vmem:[%s10 + $0x28] sm:$0xf]
          %v5745 = vld [vmem:[%s10 + $0x2c] sm:$0xf]
          %v5746 = vld [vmem:[%s10 + $0x30] sm:$0xf]
          %v5747 = vld [vmem:[%s10 + $0x34] sm:$0xf]
          %v5748 = vld [vmem:[%s10 + $0x38] sm:$0xf]
          %v5749 = vld [vmem:[%s10 + $0x3c] sm:$0xf]
          %v5766 = vunpack.c.l.b16 %v5734
          %v5767 = vunpack.c.l.b16 %v5735
          %v5768 = vunpack.c.l.b16 %v5736
          %v5769 = vunpack.c.l.b16 %v5737
          %v5770 = vunpack.c.l.b16 %v5738
          %v5771 = vunpack.c.l.b16 %v5739
          %v5772 = vunpack.c.l.b16 %v5740
          %v5773 = vunpack.c.l.b16 %v5741
          %v5774 = vunpack.c.l.b16 %v5742
          %v5775 = vunpack.c.l.b16 %v5743
          %v5776 = vunpack.c.l.b16 %v5744
          %v5777 = vunpack.c.l.b16 %v5745
          %v5778 = vunpack.c.l.b16 %v5746
          %v5779 = vunpack.c.l.b16 %v5747
          %v5780 = vunpack.c.l.b16 %v5748
          %v5781 = vunpack.c.l.b16 %v5749
          %v5782 = vpack.c.b16 %v5767, %v5766
          %v5783 = vpack.c.b16 %v5769, %v5768
          %v5784 = vpack.c.b16 %v5771, %v5770
          %v5785 = vpack.c.b16 %v5773, %v5772
          %v5786 = vpack.c.b16 %v5775, %v5774
          %v5787 = vpack.c.b16 %v5777, %v5776
          %v5788 = vpack.c.b16 %v5779, %v5778
          %v5789 = vpack.c.b16 %v5781, %v5780
          %5798 = vmatprep.subr.bf16.mxu0 0
          %5799 = vmatpush1.bf16.msra.mxu0 %v5782
          %5800 = vmatprep.subr.bf16.mxu0 0
          %5801 = vmatpush1.bf16.msra.mxu0 %v5783
          %5802 = vmatprep.subr.bf16.mxu0 0
          %5803 = vmatpush1.bf16.msra.mxu0 %v5784
          %5804 = vmatprep.subr.bf16.mxu0 0
          %5805 = vmatpush1.bf16.msra.mxu0 %v5785
          %5806 = vmatprep.subr.bf16.mxu0 0
          %5807 = vmatpush1.bf16.msra.mxu0 %v5786
          %5808 = vmatprep.subr.bf16.mxu0 0
          %5809 = vmatpush1.bf16.msra.mxu0 %v5787
          %5810 = vmatprep.subr.bf16.mxu0 0
          %5811 = vmatpush1.bf16.msra.mxu0 %v5788
          %5812 = vmatprep.subr.bf16.mxu0 0
          %5813 = vmatpush1.bf16.msra.mxu0 %v5789
          %5814 = vmatprep.subr.bf16.mxu0 0
          %5815 = vmatpush1.bf16.msra.mxu0 0
          %5816 = vmatprep.subr.bf16.mxu0 0
          %5817 = vmatpush1.bf16.msra.mxu0 0
          %5818 = vmatprep.subr.bf16.mxu0 0
          %5819 = vmatpush1.bf16.msra.mxu0 0
          %5820 = vmatprep.subr.bf16.mxu0 0
          %5821 = vmatpush1.bf16.msra.mxu0 0
          %5822 = vmatprep.subr.bf16.mxu0 0
          %5823 = vmatpush1.bf16.msra.mxu0 0
          %5824 = vmatprep.subr.bf16.mxu0 0
          %5825 = vmatpush1.bf16.msra.mxu0 0
          %5826 = vmatprep.subr.bf16.mxu0 0
          %5827 = vmatpush1.bf16.msra.mxu0 0
          %5828 = vmatprep.subr.bf16.mxu0 0
          %5829 = vmatpush1.bf16.msra.mxu0 0
          %5830 = vmatprep.mubr.bf16.mxu0 0
          %5831 = vmatmul.mubr.bf16.gmra.mrb[0].mxu0 %v5718
          %v5832 = vpop.f32.mrb[0].mxu0
          %v5833 = vadd.f32 0.0, %v5832
          %v5834 = vpop.f32.mrb[0].mxu0
          %v5835 = vpop.f32.mrb[0].mxu0
          %v5836 = vadd.f32 0.0, %v5835
          %v5837 = vpop.f32.mrb[0].mxu0
          %5838 = vmatprep.mubr.bf16.mxu0 0
          %5839 = vmatmul.mubr.bf16.gmra.mrb[0].mxu0 %v5719
          %v5840 = vpop.f32.mrb[0].mxu0
          %v5841 = vadd.f32 0.0, %v5840
          %v5842 = vpop.f32.mrb[0].mxu0
          %v5843 = vpop.f32.mrb[0].mxu0
          %v5844 = vadd.f32 0.0, %v5843
          %v5845 = vpop.f32.mrb[0].mxu0
          %5846 = vmatprep.mubr.bf16.mxu0 0
          %5847 = vmatmul.mubr.bf16.gmra.mrb[0].mxu0 %v5720
          %v5848 = vpop.f32.mrb[0].mxu0
          %v5849 = vadd.f32 0.0, %v5848
          %v5850 = vpop.f32.mrb[0].mxu0
          %v5851 = vpop.f32.mrb[0].mxu0
          %v5852 = vadd.f32 0.0, %v5851
          %v5853 = vpop.f32.mrb[0].mxu0
          %5854 = vmatprep.mubr.bf16.mxu0 0
          %5855 = vmatmul.mubr.bf16.gmra.mrb[0].mxu0 %v5721
          %v5856 = vpop.f32.mrb[0].mxu0
          %v5857 = vadd.f32 0.0, %v5856
          %v5858 = vpop.f32.mrb[0].mxu0
          %v5859 = vpop.f32.mrb[0].mxu0
          %v5860 = vadd.f32 0.0, %v5859
          %v5861 = vpop.f32.mrb[0].mxu0
          %5862 = vmatprep.mubr.bf16.mxu0 0
          %5863 = vmatmul.mubr.bf16.gmra.mrb[0].mxu0 %v5722
          %v5864 = vpop.f32.mrb[0].mxu0
          %v5865 = vadd.f32 0.0, %v5864
          %v5866 = vpop.f32.mrb[0].mxu0
          %v5867 = vpop.f32.mrb[0].mxu0
          %v5868 = vadd.f32 0.0, %v5867
          %v5869 = vpop.f32.mrb[0].mxu0
          %5870 = vmatprep.mubr.bf16.mxu0 0
          %5871 = vmatmul.mubr.bf16.gmra.mrb[0].mxu0 %v5723
          %v5872 = vpop.f32.mrb[0].mxu0
          %v5873 = vadd.f32 0.0, %v5872
          %v5874 = vpop.f32.mrb[0].mxu0
          %v5875 = vpop.f32.mrb[0].mxu0
          %v5876 = vadd.f32 0.0, %v5875
          %v5877 = vpop.f32.mrb[0].mxu0
          %5878 = vmatprep.mubr.bf16.mxu0 0
          %5879 = vmatmul.mubr.bf16.gmra.mrb[0].mxu0 %v5724
          %v5880 = vpop.f32.mrb[0].mxu0
          %v5881 = vadd.f32 0.0, %v5880
          %v5882 = vpop.f32.mrb[0].mxu0
          %v5883 = vpop.f32.mrb[0].mxu0
          %v5884 = vadd.f32 0.0, %v5883
          %v5885 = vpop.f32.mrb[0].mxu0
          %5886 = vmatprep.mubr.bf16.mxu0 0
          %5887 = vmatmul.mubr.bf16.gmra.mrb[0].mxu0 %v5725
          %v5888 = vpop.f32.mrb[0].mxu0
          %v5889 = vadd.f32 0.0, %v5888
          %v5890 = vpop.f32.mrb[0].mxu0
          %v5891 = vpop.f32.mrb[0].mxu0
          %v5892 = vadd.f32 0.0, %v5891
          %v5893 = vpop.f32.mrb[0].mxu0
          %5894 = vmatprep.mubr.bf16.mxu0 0
          %5895 = vmatmul.mubr.bf16.gmra.mrb[0].mxu0 %v5726
          %v5896 = vpop.f32.mrb[0].mxu0
          %v5897 = vadd.f32 0.0, %v5896
          %v5898 = vpop.f32.mrb[0].mxu0
          %v5899 = vpop.f32.mrb[0].mxu0
          %v5900 = vadd.f32 0.0, %v5899
          %v5901 = vpop.f32.mrb[0].mxu0
          %5902 = vmatprep.mubr.bf16.mxu0 0
          %5903 = vmatmul.mubr.bf16.gmra.mrb[0].mxu0 %v5727
          %v5904 = vpop.f32.mrb[0].mxu0
          %v5905 = vadd.f32 0.0, %v5904
          %v5906 = vpop.f32.mrb[0].mxu0
          %v5907 = vpop.f32.mrb[0].mxu0
          %v5908 = vadd.f32 0.0, %v5907
          %v5909 = vpop.f32.mrb[0].mxu0
          %5910 = vmatprep.mubr.bf16.mxu0 0
          %5911 = vmatmul.mubr.bf16.gmra.mrb[0].mxu0 %v5728
          %v5912 = vpop.f32.mrb[0].mxu0
          %v5913 = vadd.f32 0.0, %v5912
          %v5914 = vpop.f32.mrb[0].mxu0
          %v5915 = vpop.f32.mrb[0].mxu0
          %v5916 = vadd.f32 0.0, %v5915
          %v5917 = vpop.f32.mrb[0].mxu0
          %5918 = vmatprep.mubr.bf16.mxu0 0
          %5919 = vmatmul.mubr.bf16.gmra.mrb[0].mxu0 %v5729
          %v5920 = vpop.f32.mrb[0].mxu0
          %v5921 = vadd.f32 0.0, %v5920
          %v5922 = vpop.f32.mrb[0].mxu0
          %v5923 = vpop.f32.mrb[0].mxu0
          %v5924 = vadd.f32 0.0, %v5923
          %v5925 = vpop.f32.mrb[0].mxu0
          %5926 = vmatprep.mubr.bf16.mxu0 0
          %5927 = vmatmul.mubr.bf16.gmra.mrb[0].mxu0 %v5730
          %v5928 = vpop.f32.mrb[0].mxu0
          %v5929 = vadd.f32 0.0, %v5928
          %v5930 = vpop.f32.mrb[0].mxu0
          %v5931 = vpop.f32.mrb[0].mxu0
          %v5932 = vadd.f32 0.0, %v5931
          %v5933 = vpop.f32.mrb[0].mxu0
          %5934 = vmatprep.mubr.bf16.mxu0 0
          %5935 = vmatmul.mubr.bf16.gmra.mrb[0].mxu0 %v5731
          %v5936 = vpop.f32.mrb[0].mxu0
          %v5937 = vadd.f32 0.0, %v5936
          %v5938 = vpop.f32.mrb[0].mxu0
          %v5939 = vpop.f32.mrb[0].mxu0
          %v5940 = vadd.f32 0.0, %v5939
          %v5941 = vpop.f32.mrb[0].mxu0
          %5942 = vmatprep.mubr.bf16.mxu0 0
          %5943 = vmatmul.mubr.bf16.gmra.mrb[0].mxu0 %v5732
          %v5944 = vpop.f32.mrb[0].mxu0
          %v5945 = vadd.f32 0.0, %v5944
          %v5946 = vpop.f32.mrb[0].mxu0
          %v5947 = vpop.f32.mrb[0].mxu0
          %v5948 = vadd.f32 0.0, %v5947
          %v5949 = vpop.f32.mrb[0].mxu0
          %5950 = vmatprep.mubr.bf16.mxu0 0
          %5951 = vmatmul.mubr.bf16.gmra.mrb[0].mxu0 %v5733
          %v5952 = vpop.f32.mrb[0].mxu0
          %v5953 = vadd.f32 0.0, %v5952
          %v5954 = vpop.f32.mrb[0].mxu0
          %v5955 = vpop.f32.mrb[0].mxu0
          %v5956 = vadd.f32 0.0, %v5955
          %v5957 = vpop.f32.mrb[0].mxu0
          %5958 = vdwg.mxu0
          %v5959 = vld [vmem:[%s735] sm:$0xf]
          %v5960 = vld [vmem:[%s735 + $0x4] sm:$0xf]
          %v5961 = vld [vmem:[%s735 + $0x8] sm:$0xf]
          %v5962 = vld [vmem:[%s735 + $0xc] sm:$0xf]
          %v5963 = vld [vmem:[%s735 + $0x10] sm:$0xf]
          %v5964 = vld [vmem:[%s735 + $0x14] sm:$0xf]
          %v5965 = vld [vmem:[%s735 + $0x18] sm:$0xf]
          %v5966 = vld [vmem:[%s735 + $0x1c] sm:$0xf]
          %v5967 = vld [vmem:[%s735 + $0x20] sm:$0xf]
          %v5968 = vld [vmem:[%s735 + $0x24] sm:$0xf]
          %v5969 = vld [vmem:[%s735 + $0x28] sm:$0xf]
          %v5970 = vld [vmem:[%s735 + $0x2c] sm:$0xf]
          %v5971 = vld [vmem:[%s735 + $0x30] sm:$0xf]
          %v5972 = vld [vmem:[%s735 + $0x34] sm:$0xf]
          %v5973 = vld [vmem:[%s735 + $0x38] sm:$0xf]
          %v5974 = vld [vmem:[%s735 + $0x3c] sm:$0xf]
          %v5975 = vld [vmem:[%s735 + $0x40] sm:$0xf]
          %v5976 = vld [vmem:[%s735 + $0x44] sm:$0xf]
          %v5977 = vld [vmem:[%s735 + $0x48] sm:$0xf]
          %v5978 = vld [vmem:[%s735 + $0x4c] sm:$0xf]
          %v5979 = vld [vmem:[%s735 + $0x50] sm:$0xf]
          %v5980 = vld [vmem:[%s735 + $0x54] sm:$0xf]
          %v5981 = vld [vmem:[%s735 + $0x58] sm:$0xf]
          %v5982 = vld [vmem:[%s735 + $0x5c] sm:$0xf]
          %v5983 = vld [vmem:[%s735 + $0x60] sm:$0xf]
          %v5984 = vld [vmem:[%s735 + $0x64] sm:$0xf]
          %v5985 = vld [vmem:[%s735 + $0x68] sm:$0xf]
          %v5986 = vld [vmem:[%s735 + $0x6c] sm:$0xf]
          %v5987 = vld [vmem:[%s735 + $0x70] sm:$0xf]
          %v5988 = vld [vmem:[%s735 + $0x74] sm:$0xf]
          %v5989 = vld [vmem:[%s735 + $0x78] sm:$0xf]
          %v5990 = vld [vmem:[%s735 + $0x7c] sm:$0xf]
          %v5991 = vld [vmem:[%s11] sm:$0xf]
          %v6024 = vunpack.c.l.b16 %v5959
          %v6025 = vunpack.c.l.b16 %v5960
          %v6026 = vunpack.c.l.b16 %v5961
          %v6027 = vunpack.c.l.b16 %v5962
          %v6028 = vunpack.c.l.b16 %v5963
          %v6029 = vunpack.c.l.b16 %v5964
          %v6030 = vunpack.c.l.b16 %v5965
          %v6031 = vunpack.c.l.b16 %v5966
          %v6032 = vunpack.c.l.b16 %v5967
          %v6033 = vunpack.c.l.b16 %v5968
          %v6034 = vunpack.c.l.b16 %v5969
          %v6035 = vunpack.c.l.b16 %v5970
          %v6036 = vunpack.c.l.b16 %v5971
          %v6037 = vunpack.c.l.b16 %v5972
          %v6038 = vunpack.c.l.b16 %v5973
          %v6039 = vunpack.c.l.b16 %v5974
          %v6040 = vunpack.c.l.b16 %v5975
          %v6041 = vunpack.c.l.b16 %v5976
          %v6042 = vunpack.c.l.b16 %v5977
          %v6043 = vunpack.c.l.b16 %v5978
          %v6044 = vunpack.c.l.b16 %v5979
          %v6045 = vunpack.c.l.b16 %v5980
          %v6046 = vunpack.c.l.b16 %v5981
          %v6047 = vunpack.c.l.b16 %v5982
          %v6048 = vunpack.c.l.b16 %v5983
          %v6049 = vunpack.c.l.b16 %v5984
          %v6050 = vunpack.c.l.b16 %v5985
          %v6051 = vunpack.c.l.b16 %v5986
          %v6052 = vunpack.c.l.b16 %v5987
          %v6053 = vunpack.c.l.b16 %v5988
          %v6054 = vunpack.c.l.b16 %v5989
          %v6055 = vunpack.c.l.b16 %v5990
          %v6056 = vpack.c.b16 %v6025, %v6024
          %v6057 = vpack.c.b16 %v6027, %v6026
          %v6058 = vpack.c.b16 %v6029, %v6028
          %v6059 = vpack.c.b16 %v6031, %v6030
          %v6060 = vpack.c.b16 %v6033, %v6032
          %v6061 = vpack.c.b16 %v6035, %v6034
          %v6062 = vpack.c.b16 %v6037, %v6036
          %v6063 = vpack.c.b16 %v6039, %v6038
          %v6064 = vpack.c.b16 %v6041, %v6040
          %v6065 = vpack.c.b16 %v6043, %v6042
          %v6066 = vpack.c.b16 %v6045, %v6044
          %v6067 = vpack.c.b16 %v6047, %v6046
          %v6068 = vpack.c.b16 %v6049, %v6048
          %v6069 = vpack.c.b16 %v6051, %v6050
          %v6070 = vpack.c.b16 %v6053, %v6052
          %v6071 = vpack.c.b16 %v6055, %v6054
          %vm6072 = vcmask 64512
          %v6074 = vsel %vm6072, %v6056, 0
          %v6077 = vsel %vm6072, %v6057, 0
          %v6080 = vsel %vm6072, %v6058, 0
          %v6083 = vsel %vm6072, %v6059, 0
          %v6086 = vsel %vm6072, %v6060, 0
          %v6089 = vsel %vm6072, %v6061, 0
          %v6092 = vsel %vm6072, %v6062, 0
          %v6095 = vsel %vm6072, %v6063, 0
          %v6098 = vsel %vm6072, %v6064, 0
          %v6101 = vsel %vm6072, %v6065, 0
          %v6104 = vsel %vm6072, %v6066, 0
          %v6107 = vsel %vm6072, %v6067, 0
          %v6110 = vsel %vm6072, %v6068, 0
          %v6113 = vsel %vm6072, %v6069, 0
          %v6116 = vsel %vm6072, %v6070, 0
          %v6119 = vsel %vm6072, %v6071, 0
          %vm6121 = vcmask 1043456
          %v6123 = vsel %vm6121, %v5991, 0
          %6125 = vmatprep.subr.bf16.mxu0 0
          %6126 = vmatpush1.bf16.msra.mxu0 %v6123
          %6127 = vmatprep.subr.bf16.mxu0 0
          %6128 = vmatpush1.bf16.msra.mxu0 0
          %6129 = vmatprep.subr.bf16.mxu0 0
          %6130 = vmatpush1.bf16.msra.mxu0 0
          %6131 = vmatprep.subr.bf16.mxu0 0
          %6132 = vmatpush1.bf16.msra.mxu0 0
          %6133 = vmatprep.subr.bf16.mxu0 0
          %6134 = vmatpush1.bf16.msra.mxu0 0
          %6135 = vmatprep.subr.bf16.mxu0 0
          %6136 = vmatpush1.bf16.msra.mxu0 0
          %6137 = vmatprep.subr.bf16.mxu0 0
          %6138 = vmatpush1.bf16.msra.mxu0 0
          %6139 = vmatprep.subr.bf16.mxu0 0
          %6140 = vmatpush1.bf16.msra.mxu0 0
          %6141 = vmatprep.subr.bf16.mxu0 0
          %6142 = vmatpush1.bf16.msra.mxu0 0
          %6143 = vmatprep.subr.bf16.mxu0 0
          %6144 = vmatpush1.bf16.msra.mxu0 0
          %6145 = vmatprep.subr.bf16.mxu0 0
          %6146 = vmatpush1.bf16.msra.mxu0 0
          %6147 = vmatprep.subr.bf16.mxu0 0
          %6148 = vmatpush1.bf16.msra.mxu0 0
          %6149 = vmatprep.subr.bf16.mxu0 0
          %6150 = vmatpush1.bf16.msra.mxu0 0
          %6151 = vmatprep.subr.bf16.mxu0 0
          %6152 = vmatpush1.bf16.msra.mxu0 0
          %6153 = vmatprep.subr.bf16.mxu0 0
          %6154 = vmatpush1.bf16.msra.mxu0 0
          %6155 = vmatprep.subr.bf16.mxu0 0
          %6156 = vmatpush1.bf16.msra.mxu0 0
          %6157 = vmatprep.mubr.bf16.mxu0 0
          %6158 = vmatmul.mubr.bf16.gmra.mrb[0].mxu0 %v6074
          %v6159 = vpop.f32.mrb[0].mxu0
          %v6160 = vadd.f32 0.0, %v6159
          %v6161 = vpop.f32.mrb[0].mxu0
          %v6162 = vpop.f32.mrb[0].mxu0
          %v6163 = vadd.f32 0.0, %v6162
          %v6164 = vpop.f32.mrb[0].mxu0
          %6165 = vmatprep.mubr.bf16.mxu0 0
          %6166 = vmatmul.mubr.bf16.gmra.mrb[0].mxu0 %v6077
          %v6167 = vpop.f32.mrb[0].mxu0
          %v6168 = vadd.f32 0.0, %v6167
          %v6169 = vpop.f32.mrb[0].mxu0
          %v6170 = vpop.f32.mrb[0].mxu0
          %v6171 = vadd.f32 0.0, %v6170
          %v6172 = vpop.f32.mrb[0].mxu0
          %6173 = vmatprep.mubr.bf16.mxu0 0
          %6174 = vmatmul.mubr.bf16.gmra.mrb[0].mxu0 %v6080
          %v6175 = vpop.f32.mrb[0].mxu0
          %v6176 = vadd.f32 0.0, %v6175
          %v6177 = vpop.f32.mrb[0].mxu0
          %v6178 = vpop.f32.mrb[0].mxu0
          %v6179 = vadd.f32 0.0, %v6178
          %v6180 = vpop.f32.mrb[0].mxu0
          %6181 = vmatprep.mubr.bf16.mxu0 0
          %6182 = vmatmul.mubr.bf16.gmra.mrb[0].mxu0 %v6083
          %v6183 = vpop.f32.mrb[0].mxu0
          %v6184 = vadd.f32 0.0, %v6183
          %v6185 = vpop.f32.mrb[0].mxu0
          %v6186 = vpop.f32.mrb[0].mxu0
          %v6187 = vadd.f32 0.0, %v6186
          %v6188 = vpop.f32.mrb[0].mxu0
          %6189 = vmatprep.mubr.bf16.mxu0 0
          %6190 = vmatmul.mubr.bf16.gmra.mrb[0].mxu0 %v6086
          %v6191 = vpop.f32.mrb[0].mxu0
          %v6192 = vadd.f32 0.0, %v6191
          %v6193 = vpop.f32.mrb[0].mxu0
          %v6194 = vpop.f32.mrb[0].mxu0
          %v6195 = vadd.f32 0.0, %v6194
          %v6196 = vpop.f32.mrb[0].mxu0
          %6197 = vmatprep.mubr.bf16.mxu0 0
          %6198 = vmatmul.mubr.bf16.gmra.mrb[0].mxu0 %v6089
          %v6199 = vpop.f32.mrb[0].mxu0
          %v6200 = vadd.f32 0.0, %v6199
          %v6201 = vpop.f32.mrb[0].mxu0
          %v6202 = vpop.f32.mrb[0].mxu0
          %v6203 = vadd.f32 0.0, %v6202
          %v6204 = vpop.f32.mrb[0].mxu0
          %6205 = vmatprep.mubr.bf16.mxu0 0
          %6206 = vmatmul.mubr.bf16.gmra.mrb[0].mxu0 %v6092
          %v6207 = vpop.f32.mrb[0].mxu0
          %v6208 = vadd.f32 0.0, %v6207
          %v6209 = vpop.f32.mrb[0].mxu0
          %v6210 = vpop.f32.mrb[0].mxu0
          %v6211 = vadd.f32 0.0, %v6210
          %v6212 = vpop.f32.mrb[0].mxu0
          %6213 = vmatprep.mubr.bf16.mxu0 0
          %6214 = vmatmul.mubr.bf16.gmra.mrb[0].mxu0 %v6095
          %v6215 = vpop.f32.mrb[0].mxu0
          %v6216 = vadd.f32 0.0, %v6215
          %v6217 = vpop.f32.mrb[0].mxu0
          %v6218 = vpop.f32.mrb[0].mxu0
          %v6219 = vadd.f32 0.0, %v6218
          %v6220 = vpop.f32.mrb[0].mxu0
          %6221 = vmatprep.mubr.bf16.mxu0 0
          %6222 = vmatmul.mubr.bf16.gmra.mrb[0].mxu0 %v6098
          %v6223 = vpop.f32.mrb[0].mxu0
          %v6224 = vadd.f32 0.0, %v6223
          %v6225 = vpop.f32.mrb[0].mxu0
          %v6226 = vpop.f32.mrb[0].mxu0
          %v6227 = vadd.f32 0.0, %v6226
          %v6228 = vpop.f32.mrb[0].mxu0
          %6229 = vmatprep.mubr.bf16.mxu0 0
          %6230 = vmatmul.mubr.bf16.gmra.mrb[0].mxu0 %v6101
          %v6231 = vpop.f32.mrb[0].mxu0
          %v6232 = vadd.f32 0.0, %v6231
          %v6233 = vpop.f32.mrb[0].mxu0
          %v6234 = vpop.f32.mrb[0].mxu0
          %v6235 = vadd.f32 0.0, %v6234
          %v6236 = vpop.f32.mrb[0].mxu0
          %6237 = vmatprep.mubr.bf16.mxu0 0
          %6238 = vmatmul.mubr.bf16.gmra.mrb[0].mxu0 %v6104
          %v6239 = vpop.f32.mrb[0].mxu0
          %v6240 = vadd.f32 0.0, %v6239
          %v6241 = vpop.f32.mrb[0].mxu0
          %v6242 = vpop.f32.mrb[0].mxu0
          %v6243 = vadd.f32 0.0, %v6242
          %v6244 = vpop.f32.mrb[0].mxu0
          %6245 = vmatprep.mubr.bf16.mxu0 0
          %6246 = vmatmul.mubr.bf16.gmra.mrb[0].mxu0 %v6107
          %v6247 = vpop.f32.mrb[0].mxu0
          %v6248 = vadd.f32 0.0, %v6247
          %v6249 = vpop.f32.mrb[0].mxu0
          %v6250 = vpop.f32.mrb[0].mxu0
          %v6251 = vadd.f32 0.0, %v6250
          %v6252 = vpop.f32.mrb[0].mxu0
          %6253 = vmatprep.mubr.bf16.mxu0 0
          %6254 = vmatmul.mubr.bf16.gmra.mrb[0].mxu0 %v6110
          %v6255 = vpop.f32.mrb[0].mxu0
          %v6256 = vadd.f32 0.0, %v6255
          %v6257 = vpop.f32.mrb[0].mxu0
          %v6258 = vpop.f32.mrb[0].mxu0
          %v6259 = vadd.f32 0.0, %v6258
          %v6260 = vpop.f32.mrb[0].mxu0
          %6261 = vmatprep.mubr.bf16.mxu0 0
          %6262 = vmatmul.mubr.bf16.gmra.mrb[0].mxu0 %v6113
          %v6263 = vpop.f32.mrb[0].mxu0
          %v6264 = vadd.f32 0.0, %v6263
          %v6265 = vpop.f32.mrb[0].mxu0
          %v6266 = vpop.f32.mrb[0].mxu0
          %v6267 = vadd.f32 0.0, %v6266
          %v6268 = vpop.f32.mrb[0].mxu0
          %6269 = vmatprep.mubr.bf16.mxu0 0
          %6270 = vmatmul.mubr.bf16.gmra.mrb[0].mxu0 %v6116
          %v6271 = vpop.f32.mrb[0].mxu0
          %v6272 = vadd.f32 0.0, %v6271
          %v6273 = vpop.f32.mrb[0].mxu0
          %v6274 = vpop.f32.mrb[0].mxu0
          %v6275 = vadd.f32 0.0, %v6274
          %v6276 = vpop.f32.mrb[0].mxu0
          %6277 = vmatprep.mubr.bf16.mxu0 0
          %6278 = vmatmul.mubr.bf16.gmra.mrb[0].mxu0 %v6119
          %v6279 = vpop.f32.mrb[0].mxu0
          %v6280 = vadd.f32 0.0, %v6279
          %v6281 = vpop.f32.mrb[0].mxu0
          %v6282 = vpop.f32.mrb[0].mxu0
          %v6283 = vadd.f32 0.0, %v6282
          %v6284 = vpop.f32.mrb[0].mxu0
          %6285 = vdwg.mxu0
          %v6286 = vld [vmem:[%s12] sm:$0x1]
          %v6288 = vlaneseq
          %v6289 = vshrl.u32 %v6288, 7
          %v6290 = vsub.s32 0, %v6289
          %v6291 = vrot.slane %v6286, %v6290
          %v6293 = vmul.f32 %v5833, %v6291
          %v6294 = vmul.f32 %v5836, %v6291
          %v6295 = vmul.f32 %v5841, %v6291
          %v6296 = vmul.f32 %v5844, %v6291
          %v6297 = vmul.f32 %v5849, %v6291
          %v6298 = vmul.f32 %v5852, %v6291
          %v6299 = vmul.f32 %v5857, %v6291
          %v6300 = vmul.f32 %v5860, %v6291
          %v6301 = vmul.f32 %v5865, %v6291
          %v6302 = vmul.f32 %v5868, %v6291
          %v6303 = vmul.f32 %v5873, %v6291
          %v6304 = vmul.f32 %v5876, %v6291
          %v6305 = vmul.f32 %v5881, %v6291
          %v6306 = vmul.f32 %v5884, %v6291
          %v6307 = vmul.f32 %v5889, %v6291
          %v6308 = vmul.f32 %v5892, %v6291
          %v6309 = vmul.f32 %v5897, %v6291
          %v6310 = vmul.f32 %v5900, %v6291
          %v6311 = vmul.f32 %v5905, %v6291
          %v6312 = vmul.f32 %v5908, %v6291
          %v6313 = vmul.f32 %v5913, %v6291
          %v6314 = vmul.f32 %v5916, %v6291
          %v6315 = vmul.f32 %v5921, %v6291
          %v6316 = vmul.f32 %v5924, %v6291
          %v6317 = vmul.f32 %v5929, %v6291
          %v6318 = vmul.f32 %v5932, %v6291
          %v6319 = vmul.f32 %v5937, %v6291
          %v6320 = vmul.f32 %v5940, %v6291
          %v6321 = vmul.f32 %v5945, %v6291
          %v6322 = vmul.f32 %v5948, %v6291
          %v6323 = vmul.f32 %v5953, %v6291
          %v6324 = vmul.f32 %v5956, %v6291
          %v6325 = vld [vmem:[%s13] sm:$0x1]
          %v6327 = vlaneseq
          %v6328 = vshrl.u32 %v6327, 7
          %v6329 = vsub.s32 0, %v6328
          %v6330 = vrot.slane %v6325, %v6329
          %v6332 = vadd.f32 %v6293, %v6330
          %v6333 = vadd.f32 %v6294, %v6330
          %v6334 = vadd.f32 %v6295, %v6330
          %v6335 = vadd.f32 %v6296, %v6330
          %v6336 = vadd.f32 %v6297, %v6330
          %v6337 = vadd.f32 %v6298, %v6330
          %v6338 = vadd.f32 %v6299, %v6330
          %v6339 = vadd.f32 %v6300, %v6330
          %v6340 = vadd.f32 %v6301, %v6330
          %v6341 = vadd.f32 %v6302, %v6330
          %v6342 = vadd.f32 %v6303, %v6330
          %v6343 = vadd.f32 %v6304, %v6330
          %v6344 = vadd.f32 %v6305, %v6330
          %v6345 = vadd.f32 %v6306, %v6330
          %v6346 = vadd.f32 %v6307, %v6330
          %v6347 = vadd.f32 %v6308, %v6330
          %v6348 = vadd.f32 %v6309, %v6330
          %v6349 = vadd.f32 %v6310, %v6330
          %v6350 = vadd.f32 %v6311, %v6330
          %v6351 = vadd.f32 %v6312, %v6330
          %v6352 = vadd.f32 %v6313, %v6330
          %v6353 = vadd.f32 %v6314, %v6330
          %v6354 = vadd.f32 %v6315, %v6330
          %v6355 = vadd.f32 %v6316, %v6330
          %v6356 = vadd.f32 %v6317, %v6330
          %v6357 = vadd.f32 %v6318, %v6330
          %v6358 = vadd.f32 %v6319, %v6330
          %v6359 = vadd.f32 %v6320, %v6330
          %v6360 = vadd.f32 %v6321, %v6330
          %v6361 = vadd.f32 %v6322, %v6330
          %v6362 = vadd.f32 %v6323, %v6330
          %v6363 = vadd.f32 %v6324, %v6330
          %v6364 = vsub.f32 0.0, %v6332
          %v6365 = vsub.f32 0.0, %v6333
          %v6366 = vsub.f32 0.0, %v6334
          %v6367 = vsub.f32 0.0, %v6335
          %v6368 = vsub.f32 0.0, %v6336
          %v6369 = vsub.f32 0.0, %v6337
          %v6370 = vsub.f32 0.0, %v6338
          %v6371 = vsub.f32 0.0, %v6339
          %v6372 = vsub.f32 0.0, %v6340
          %v6373 = vsub.f32 0.0, %v6341
          %v6374 = vsub.f32 0.0, %v6342
          %v6375 = vsub.f32 0.0, %v6343
          %v6376 = vsub.f32 0.0, %v6344
          %v6377 = vsub.f32 0.0, %v6345
          %v6378 = vsub.f32 0.0, %v6346
          %v6379 = vsub.f32 0.0, %v6347
          %v6380 = vsub.f32 0.0, %v6348
          %v6381 = vsub.f32 0.0, %v6349
          %v6382 = vsub.f32 0.0, %v6350
          %v6383 = vsub.f32 0.0, %v6351
          %v6384 = vsub.f32 0.0, %v6352
          %v6385 = vsub.f32 0.0, %v6353
          %v6386 = vsub.f32 0.0, %v6354
          %v6387 = vsub.f32 0.0, %v6355
          %v6388 = vsub.f32 0.0, %v6356
          %v6389 = vsub.f32 0.0, %v6357
          %v6390 = vsub.f32 0.0, %v6358
          %v6391 = vsub.f32 0.0, %v6359
          %v6392 = vsub.f32 0.0, %v6360
          %v6393 = vsub.f32 0.0, %v6361
          %v6394 = vsub.f32 0.0, %v6362
          %v6395 = vsub.f32 0.0, %v6363
          %v6396 = vmul.f32 %v6364, 1.442695
          %v6397 = vpow.pop %v6396
          %v6398 = vmul.f32 %v6365, 1.442695
          %v6399 = vpow.pop %v6398
          %v6400 = vmul.f32 %v6366, 1.442695
          %v6401 = vpow.pop %v6400
          %v6402 = vmul.f32 %v6367, 1.442695
          %v6403 = vpow.pop %v6402
          %v6404 = vmul.f32 %v6368, 1.442695
          %v6405 = vpow.pop %v6404
          %v6406 = vmul.f32 %v6369, 1.442695
          %v6407 = vpow.pop %v6406
          %v6408 = vmul.f32 %v6370, 1.442695
          %v6409 = vpow.pop %v6408
          %v6410 = vmul.f32 %v6371, 1.442695
          %v6411 = vpow.pop %v6410
          %v6412 = vmul.f32 %v6372, 1.442695
          %v6413 = vpow.pop %v6412
          %v6414 = vmul.f32 %v6373, 1.442695
          %v6415 = vpow.pop %v6414
          %v6416 = vmul.f32 %v6374, 1.442695
          %v6417 = vpow.pop %v6416
          %v6418 = vmul.f32 %v6375, 1.442695
          %v6419 = vpow.pop %v6418
          %v6420 = vmul.f32 %v6376, 1.442695
          %v6421 = vpow.pop %v6420
          %v6422 = vmul.f32 %v6377, 1.442695
          %v6423 = vpow.pop %v6422
          %v6424 = vmul.f32 %v6378, 1.442695
          %v6425 = vpow.pop %v6424
          %v6426 = vmul.f32 %v6379, 1.442695
          %v6427 = vpow.pop %v6426
          %v6428 = vmul.f32 %v6380, 1.442695
          %v6429 = vpow.pop %v6428
          %v6430 = vmul.f32 %v6381, 1.442695
          %v6431 = vpow.pop %v6430
          %v6432 = vmul.f32 %v6382, 1.442695
          %v6433 = vpow.pop %v6432
          %v6434 = vmul.f32 %v6383, 1.442695
          %v6435 = vpow.pop %v6434
          %v6436 = vmul.f32 %v6384, 1.442695
          %v6437 = vpow.pop %v6436
          %v6438 = vmul.f32 %v6385, 1.442695
          %v6439 = vpow.pop %v6438
          %v6440 = vmul.f32 %v6386, 1.442695
          %v6441 = vpow.pop %v6440
          %v6442 = vmul.f32 %v6387, 1.442695
          %v6443 = vpow.pop %v6442
          %v6444 = vmul.f32 %v6388, 1.442695
          %v6445 = vpow.pop %v6444
          %v6446 = vmul.f32 %v6389, 1.442695
          %v6447 = vpow.pop %v6446
          %v6448 = vmul.f32 %v6390, 1.442695
          %v6449 = vpow.pop %v6448
          %v6450 = vmul.f32 %v6391, 1.442695
          %v6451 = vpow.pop %v6450
          %v6452 = vmul.f32 %v6392, 1.442695
          %v6453 = vpow.pop %v6452
          %v6454 = vmul.f32 %v6393, 1.442695
          %v6455 = vpow.pop %v6454
          %v6456 = vmul.f32 %v6394, 1.442695
          %v6457 = vpow.pop %v6456
          %v6458 = vmul.f32 %v6395, 1.442695
          %v6459 = vpow.pop %v6458
          %v6460 = vadd.f32 %v6397, 1.0
          %v6461 = vadd.f32 %v6399, 1.0
          %v6462 = vadd.f32 %v6401, 1.0
          %v6463 = vadd.f32 %v6403, 1.0
          %v6464 = vadd.f32 %v6405, 1.0
          %v6465 = vadd.f32 %v6407, 1.0
          %v6466 = vadd.f32 %v6409, 1.0
          %v6467 = vadd.f32 %v6411, 1.0
          %v6468 = vadd.f32 %v6413, 1.0
          %v6469 = vadd.f32 %v6415, 1.0
          %v6470 = vadd.f32 %v6417, 1.0
          %v6471 = vadd.f32 %v6419, 1.0
          %v6472 = vadd.f32 %v6421, 1.0
          %v6473 = vadd.f32 %v6423, 1.0
          %v6474 = vadd.f32 %v6425, 1.0
          %v6475 = vadd.f32 %v6427, 1.0
          %v6476 = vadd.f32 %v6429, 1.0
          %v6477 = vadd.f32 %v6431, 1.0
          %v6478 = vadd.f32 %v6433, 1.0
          %v6479 = vadd.f32 %v6435, 1.0
          %v6480 = vadd.f32 %v6437, 1.0
          %v6481 = vadd.f32 %v6439, 1.0
          %v6482 = vadd.f32 %v6441, 1.0
          %v6483 = vadd.f32 %v6443, 1.0
          %v6484 = vadd.f32 %v6445, 1.0
          %v6485 = vadd.f32 %v6447, 1.0
          %v6486 = vadd.f32 %v6449, 1.0
          %v6487 = vadd.f32 %v6451, 1.0
          %v6488 = vadd.f32 %v6453, 1.0
          %v6489 = vadd.f32 %v6455, 1.0
          %v6490 = vadd.f32 %v6457, 1.0
          %v6491 = vadd.f32 %v6459, 1.0
          %v6492 = vrcp.pop %v6460
          %v6493 = vrcp.pop %v6461
          %v6494 = vrcp.pop %v6462
          %v6495 = vrcp.pop %v6463
          %v6496 = vrcp.pop %v6464
          %v6497 = vrcp.pop %v6465
          %v6498 = vrcp.pop %v6466
          %v6499 = vrcp.pop %v6467
          %v6500 = vrcp.pop %v6468
          %v6501 = vrcp.pop %v6469
          %v6502 = vrcp.pop %v6470
          %v6503 = vrcp.pop %v6471
          %v6504 = vrcp.pop %v6472
          %v6505 = vrcp.pop %v6473
          %v6506 = vrcp.pop %v6474
          %v6507 = vrcp.pop %v6475
          %v6508 = vrcp.pop %v6476
          %v6509 = vrcp.pop %v6477
          %v6510 = vrcp.pop %v6478
          %v6511 = vrcp.pop %v6479
          %v6512 = vrcp.pop %v6480
          %v6513 = vrcp.pop %v6481
          %v6514 = vrcp.pop %v6482
          %v6515 = vrcp.pop %v6483
          %v6516 = vrcp.pop %v6484
          %v6517 = vrcp.pop %v6485
          %v6518 = vrcp.pop %v6486
          %v6519 = vrcp.pop %v6487
          %v6520 = vrcp.pop %v6488
          %v6521 = vrcp.pop %v6489
          %v6522 = vrcp.pop %v6490
          %v6523 = vrcp.pop %v6491
          %v6524 = vmul.f32 %v6332, %v6492
          %v6525 = vmul.f32 %v6333, %v6493
          %v6526 = vmul.f32 %v6334, %v6494
          %v6527 = vmul.f32 %v6335, %v6495
          %v6528 = vmul.f32 %v6336, %v6496
          %v6529 = vmul.f32 %v6337, %v6497
          %v6530 = vmul.f32 %v6338, %v6498
          %v6531 = vmul.f32 %v6339, %v6499
          %v6532 = vmul.f32 %v6340, %v6500
          %v6533 = vmul.f32 %v6341, %v6501
          %v6534 = vmul.f32 %v6342, %v6502
          %v6535 = vmul.f32 %v6343, %v6503
          %v6536 = vmul.f32 %v6344, %v6504
          %v6537 = vmul.f32 %v6345, %v6505
          %v6538 = vmul.f32 %v6346, %v6506
          %v6539 = vmul.f32 %v6347, %v6507
          %v6540 = vmul.f32 %v6348, %v6508
          %v6541 = vmul.f32 %v6349, %v6509
          %v6542 = vmul.f32 %v6350, %v6510
          %v6543 = vmul.f32 %v6351, %v6511
          %v6544 = vmul.f32 %v6352, %v6512
          %v6545 = vmul.f32 %v6353, %v6513
          %v6546 = vmul.f32 %v6354, %v6514
          %v6547 = vmul.f32 %v6355, %v6515
          %v6548 = vmul.f32 %v6356, %v6516
          %v6549 = vmul.f32 %v6357, %v6517
          %v6550 = vmul.f32 %v6358, %v6518
          %v6551 = vmul.f32 %v6359, %v6519
          %v6552 = vmul.f32 %v6360, %v6520
          %v6553 = vmul.f32 %v6361, %v6521
          %v6554 = vmul.f32 %v6362, %v6522
          %v6555 = vmul.f32 %v6363, %v6523
          %v6556 = vpack.c.bf16 %v6525, %v6524
          %v6557 = vpack.c.bf16 %v6527, %v6526
          %v6558 = vpack.c.bf16 %v6529, %v6528
          %v6559 = vpack.c.bf16 %v6531, %v6530
          %v6560 = vpack.c.bf16 %v6533, %v6532
          %v6561 = vpack.c.bf16 %v6535, %v6534
          %v6562 = vpack.c.bf16 %v6537, %v6536
          %v6563 = vpack.c.bf16 %v6539, %v6538
          %v6564 = vpack.c.bf16 %v6541, %v6540
          %v6565 = vpack.c.bf16 %v6543, %v6542
          %v6566 = vpack.c.bf16 %v6545, %v6544
          %v6567 = vpack.c.bf16 %v6547, %v6546
          %v6568 = vpack.c.bf16 %v6549, %v6548
          %v6569 = vpack.c.bf16 %v6551, %v6550
          %v6570 = vpack.c.bf16 %v6553, %v6552
          %v6571 = vpack.c.bf16 %v6555, %v6554
          %v6572 = vld [vmem:[%s14] sm:$0x1]
          %v6574 = vlaneseq
          %v6575 = vshrl.u32 %v6574, 7
          %v6576 = vsub.s32 0, %v6575
          %v6577 = vrot.slane %v6572, %v6576
          %v6579 = vmul.f32 %v6160, %v6577
          %v6580 = vmul.f32 %v6163, %v6577
          %v6581 = vmul.f32 %v6168, %v6577
          %v6582 = vmul.f32 %v6171, %v6577
          %v6583 = vmul.f32 %v6176, %v6577
          %v6584 = vmul.f32 %v6179, %v6577
          %v6585 = vmul.f32 %v6184, %v6577
          %v6586 = vmul.f32 %v6187, %v6577
          %v6587 = vmul.f32 %v6192, %v6577
          %v6588 = vmul.f32 %v6195, %v6577
          %v6589 = vmul.f32 %v6200, %v6577
          %v6590 = vmul.f32 %v6203, %v6577
          %v6591 = vmul.f32 %v6208, %v6577
          %v6592 = vmul.f32 %v6211, %v6577
          %v6593 = vmul.f32 %v6216, %v6577
          %v6594 = vmul.f32 %v6219, %v6577
          %v6595 = vmul.f32 %v6224, %v6577
          %v6596 = vmul.f32 %v6227, %v6577
          %v6597 = vmul.f32 %v6232, %v6577
          %v6598 = vmul.f32 %v6235, %v6577
          %v6599 = vmul.f32 %v6240, %v6577
          %v6600 = vmul.f32 %v6243, %v6577
          %v6601 = vmul.f32 %v6248, %v6577
          %v6602 = vmul.f32 %v6251, %v6577
          %v6603 = vmul.f32 %v6256, %v6577
          %v6604 = vmul.f32 %v6259, %v6577
          %v6605 = vmul.f32 %v6264, %v6577
          %v6606 = vmul.f32 %v6267, %v6577
          %v6607 = vmul.f32 %v6272, %v6577
          %v6608 = vmul.f32 %v6275, %v6577
          %v6609 = vmul.f32 %v6280, %v6577
          %v6610 = vmul.f32 %v6283, %v6577
          %v6611 = vld [vmem:[%s15] sm:$0x1]
          %v6613 = vlaneseq
          %v6614 = vshrl.u32 %v6613, 7
          %v6615 = vsub.s32 0, %v6614
          %v6616 = vrot.slane %v6611, %v6615
          %v6618 = vadd.f32 %v6579, %v6616
          %v6619 = vadd.f32 %v6580, %v6616
          %v6620 = vadd.f32 %v6581, %v6616
          %v6621 = vadd.f32 %v6582, %v6616
          %v6622 = vadd.f32 %v6583, %v6616
          %v6623 = vadd.f32 %v6584, %v6616
          %v6624 = vadd.f32 %v6585, %v6616
          %v6625 = vadd.f32 %v6586, %v6616
          %v6626 = vadd.f32 %v6587, %v6616
          %v6627 = vadd.f32 %v6588, %v6616
          %v6628 = vadd.f32 %v6589, %v6616
          %v6629 = vadd.f32 %v6590, %v6616
          %v6630 = vadd.f32 %v6591, %v6616
          %v6631 = vadd.f32 %v6592, %v6616
          %v6632 = vadd.f32 %v6593, %v6616
          %v6633 = vadd.f32 %v6594, %v6616
          %v6634 = vadd.f32 %v6595, %v6616
          %v6635 = vadd.f32 %v6596, %v6616
          %v6636 = vadd.f32 %v6597, %v6616
          %v6637 = vadd.f32 %v6598, %v6616
          %v6638 = vadd.f32 %v6599, %v6616
          %v6639 = vadd.f32 %v6600, %v6616
          %v6640 = vadd.f32 %v6601, %v6616
          %v6641 = vadd.f32 %v6602, %v6616
          %v6642 = vadd.f32 %v6603, %v6616
          %v6643 = vadd.f32 %v6604, %v6616
          %v6644 = vadd.f32 %v6605, %v6616
          %v6645 = vadd.f32 %v6606, %v6616
          %v6646 = vadd.f32 %v6607, %v6616
          %v6647 = vadd.f32 %v6608, %v6616
          %v6648 = vadd.f32 %v6609, %v6616
          %v6649 = vadd.f32 %v6610, %v6616
          %v6650 = vsub.f32 0.0, %v6618
          %v6651 = vsub.f32 0.0, %v6619
          %v6652 = vsub.f32 0.0, %v6620
          %v6653 = vsub.f32 0.0, %v6621
          %v6654 = vsub.f32 0.0, %v6622
          %v6655 = vsub.f32 0.0, %v6623
          %v6656 = vsub.f32 0.0, %v6624
          %v6657 = vsub.f32 0.0, %v6625
          %v6658 = vsub.f32 0.0, %v6626
          %v6659 = vsub.f32 0.0, %v6627
          %v6660 = vsub.f32 0.0, %v6628
          %v6661 = vsub.f32 0.0, %v6629
          %v6662 = vsub.f32 0.0, %v6630
          %v6663 = vsub.f32 0.0, %v6631
          %v6664 = vsub.f32 0.0, %v6632
          %v6665 = vsub.f32 0.0, %v6633
          %v6666 = vsub.f32 0.0, %v6634
          %v6667 = vsub.f32 0.0, %v6635
          %v6668 = vsub.f32 0.0, %v6636
          %v6669 = vsub.f32 0.0, %v6637
          %v6670 = vsub.f32 0.0, %v6638
          %v6671 = vsub.f32 0.0, %v6639
          %v6672 = vsub.f32 0.0, %v6640
          %v6673 = vsub.f32 0.0, %v6641
          %v6674 = vsub.f32 0.0, %v6642
          %v6675 = vsub.f32 0.0, %v6643
          %v6676 = vsub.f32 0.0, %v6644
          %v6677 = vsub.f32 0.0, %v6645
          %v6678 = vsub.f32 0.0, %v6646
          %v6679 = vsub.f32 0.0, %v6647
          %v6680 = vsub.f32 0.0, %v6648
          %v6681 = vsub.f32 0.0, %v6649
          %v6682 = vmul.f32 %v6650, 1.442695
          %v6683 = vpow.pop %v6682
          %v6684 = vmul.f32 %v6651, 1.442695
          %v6685 = vpow.pop %v6684
          %v6686 = vmul.f32 %v6652, 1.442695
          %v6687 = vpow.pop %v6686
          %v6688 = vmul.f32 %v6653, 1.442695
          %v6689 = vpow.pop %v6688
          %v6690 = vmul.f32 %v6654, 1.442695
          %v6691 = vpow.pop %v6690
          %v6692 = vmul.f32 %v6655, 1.442695
          %v6693 = vpow.pop %v6692
          %v6694 = vmul.f32 %v6656, 1.442695
          %v6695 = vpow.pop %v6694
          %v6696 = vmul.f32 %v6657, 1.442695
          %v6697 = vpow.pop %v6696
          %v6698 = vmul.f32 %v6658, 1.442695
          %v6699 = vpow.pop %v6698
          %v6700 = vmul.f32 %v6659, 1.442695
          %v6701 = vpow.pop %v6700
          %v6702 = vmul.f32 %v6660, 1.442695
          %v6703 = vpow.pop %v6702
          %v6704 = vmul.f32 %v6661, 1.442695
          %v6705 = vpow.pop %v6704
          %v6706 = vmul.f32 %v6662, 1.442695
          %v6707 = vpow.pop %v6706
          %v6708 = vmul.f32 %v6663, 1.442695
          %v6709 = vpow.pop %v6708
          %v6710 = vmul.f32 %v6664, 1.442695
          %v6711 = vpow.pop %v6710
          %v6712 = vmul.f32 %v6665, 1.442695
          %v6713 = vpow.pop %v6712
          %v6714 = vmul.f32 %v6666, 1.442695
          %v6715 = vpow.pop %v6714
          %v6716 = vmul.f32 %v6667, 1.442695
          %v6717 = vpow.pop %v6716
          %v6718 = vmul.f32 %v6668, 1.442695
          %v6719 = vpow.pop %v6718
          %v6720 = vmul.f32 %v6669, 1.442695
          %v6721 = vpow.pop %v6720
          %v6722 = vmul.f32 %v6670, 1.442695
          %v6723 = vpow.pop %v6722
          %v6724 = vmul.f32 %v6671, 1.442695
          %v6725 = vpow.pop %v6724
          %v6726 = vmul.f32 %v6672, 1.442695
          %v6727 = vpow.pop %v6726
          %v6728 = vmul.f32 %v6673, 1.442695
          %v6729 = vpow.pop %v6728
          %v6730 = vmul.f32 %v6674, 1.442695
          %v6731 = vpow.pop %v6730
          %v6732 = vmul.f32 %v6675, 1.442695
          %v6733 = vpow.pop %v6732
          %v6734 = vmul.f32 %v6676, 1.442695
          %v6735 = vpow.pop %v6734
          %v6736 = vmul.f32 %v6677, 1.442695
          %v6737 = vpow.pop %v6736
          %v6738 = vmul.f32 %v6678, 1.442695
          %v6739 = vpow.pop %v6738
          %v6740 = vmul.f32 %v6679, 1.442695
          %v6741 = vpow.pop %v6740
          %v6742 = vmul.f32 %v6680, 1.442695
          %v6743 = vpow.pop %v6742
          %v6744 = vmul.f32 %v6681, 1.442695
          %v6745 = vpow.pop %v6744
          %v6746 = vadd.f32 %v6683, 1.0
          %v6747 = vadd.f32 %v6685, 1.0
          %v6748 = vadd.f32 %v6687, 1.0
          %v6749 = vadd.f32 %v6689, 1.0
          %v6750 = vadd.f32 %v6691, 1.0
          %v6751 = vadd.f32 %v6693, 1.0
          %v6752 = vadd.f32 %v6695, 1.0
          %v6753 = vadd.f32 %v6697, 1.0
          %v6754 = vadd.f32 %v6699, 1.0
          %v6755 = vadd.f32 %v6701, 1.0
          %v6756 = vadd.f32 %v6703, 1.0
          %v6757 = vadd.f32 %v6705, 1.0
          %v6758 = vadd.f32 %v6707, 1.0
          %v6759 = vadd.f32 %v6709, 1.0
          %v6760 = vadd.f32 %v6711, 1.0
          %v6761 = vadd.f32 %v6713, 1.0
          %v6762 = vadd.f32 %v6715, 1.0
          %v6763 = vadd.f32 %v6717, 1.0
          %v6764 = vadd.f32 %v6719, 1.0
          %v6765 = vadd.f32 %v6721, 1.0
          %v6766 = vadd.f32 %v6723, 1.0
          %v6767 = vadd.f32 %v6725, 1.0
          %v6768 = vadd.f32 %v6727, 1.0
          %v6769 = vadd.f32 %v6729, 1.0
          %v6770 = vadd.f32 %v6731, 1.0
          %v6771 = vadd.f32 %v6733, 1.0
          %v6772 = vadd.f32 %v6735, 1.0
          %v6773 = vadd.f32 %v6737, 1.0
          %v6774 = vadd.f32 %v6739, 1.0
          %v6775 = vadd.f32 %v6741, 1.0
          %v6776 = vadd.f32 %v6743, 1.0
          %v6777 = vadd.f32 %v6745, 1.0
          %v6778 = vrcp.pop %v6746
          %v6779 = vrcp.pop %v6747
          %v6780 = vrcp.pop %v6748
          %v6781 = vrcp.pop %v6749
          %v6782 = vrcp.pop %v6750
          %v6783 = vrcp.pop %v6751
          %v6784 = vrcp.pop %v6752
          %v6785 = vrcp.pop %v6753
          %v6786 = vrcp.pop %v6754
          %v6787 = vrcp.pop %v6755
          %v6788 = vrcp.pop %v6756
          %v6789 = vrcp.pop %v6757
          %v6790 = vrcp.pop %v6758
          %v6791 = vrcp.pop %v6759
          %v6792 = vrcp.pop %v6760
          %v6793 = vrcp.pop %v6761
          %v6794 = vrcp.pop %v6762
          %v6795 = vrcp.pop %v6763
          %v6796 = vrcp.pop %v6764
          %v6797 = vrcp.pop %v6765
          %v6798 = vrcp.pop %v6766
          %v6799 = vrcp.pop %v6767
          %v6800 = vrcp.pop %v6768
          %v6801 = vrcp.pop %v6769
          %v6802 = vrcp.pop %v6770
          %v6803 = vrcp.pop %v6771
          %v6804 = vrcp.pop %v6772
          %v6805 = vrcp.pop %v6773
          %v6806 = vrcp.pop %v6774
          %v6807 = vrcp.pop %v6775
          %v6808 = vrcp.pop %v6776
          %v6809 = vrcp.pop %v6777
          %v6810 = vmul.f32 %v6618, %v6778
          %v6811 = vmul.f32 %v6619, %v6779
          %v6812 = vmul.f32 %v6620, %v6780
          %v6813 = vmul.f32 %v6621, %v6781
          %v6814 = vmul.f32 %v6622, %v6782
          %v6815 = vmul.f32 %v6623, %v6783
          %v6816 = vmul.f32 %v6624, %v6784
          %v6817 = vmul.f32 %v6625, %v6785
          %v6818 = vmul.f32 %v6626, %v6786
          %v6819 = vmul.f32 %v6627, %v6787
          %v6820 = vmul.f32 %v6628, %v6788
          %v6821 = vmul.f32 %v6629, %v6789
          %v6822 = vmul.f32 %v6630, %v6790
          %v6823 = vmul.f32 %v6631, %v6791
          %v6824 = vmul.f32 %v6632, %v6792
          %v6825 = vmul.f32 %v6633, %v6793
          %v6826 = vmul.f32 %v6634, %v6794
          %v6827 = vmul.f32 %v6635, %v6795
          %v6828 = vmul.f32 %v6636, %v6796
          %v6829 = vmul.f32 %v6637, %v6797
          %v6830 = vmul.f32 %v6638, %v6798
          %v6831 = vmul.f32 %v6639, %v6799
          %v6832 = vmul.f32 %v6640, %v6800
          %v6833 = vmul.f32 %v6641, %v6801
          %v6834 = vmul.f32 %v6642, %v6802
          %v6835 = vmul.f32 %v6643, %v6803
          %v6836 = vmul.f32 %v6644, %v6804
          %v6837 = vmul.f32 %v6645, %v6805
          %v6838 = vmul.f32 %v6646, %v6806
          %v6839 = vmul.f32 %v6647, %v6807
          %v6840 = vmul.f32 %v6648, %v6808
          %v6841 = vmul.f32 %v6649, %v6809
          %v6842 = vpack.c.bf16 %v6811, %v6810
          %v6843 = vpack.c.bf16 %v6813, %v6812
          %v6844 = vpack.c.bf16 %v6815, %v6814
          %v6845 = vpack.c.bf16 %v6817, %v6816
          %v6846 = vpack.c.bf16 %v6819, %v6818
          %v6847 = vpack.c.bf16 %v6821, %v6820
          %v6848 = vpack.c.bf16 %v6823, %v6822
          %v6849 = vpack.c.bf16 %v6825, %v6824
          %v6850 = vpack.c.bf16 %v6827, %v6826
          %v6851 = vpack.c.bf16 %v6829, %v6828
          %v6852 = vpack.c.bf16 %v6831, %v6830
          %v6853 = vpack.c.bf16 %v6833, %v6832
          %v6854 = vpack.c.bf16 %v6835, %v6834
          %v6855 = vpack.c.bf16 %v6837, %v6836
          %v6856 = vpack.c.bf16 %v6839, %v6838
          %v6857 = vpack.c.bf16 %v6841, %v6840
          %v6858 = vld [vmem:[%s16] sm:$0xf]
          %v6859 = vld [vmem:[%s16 + $0x4] sm:$0xf]
          %v6860 = vld [vmem:[%s16 + $0x8] sm:$0xf]
          %v6861 = vld [vmem:[%s16 + $0xc] sm:$0xf]
          %v6862 = vld [vmem:[%s16 + $0x10] sm:$0xf]
          %v6863 = vld [vmem:[%s16 + $0x14] sm:$0xf]
          %v6864 = vld [vmem:[%s16 + $0x18] sm:$0xf]
          %v6865 = vld [vmem:[%s16 + $0x1c] sm:$0xf]
          %v6866 = vld [vmem:[%s16 + $0x20] sm:$0xf]
          %v6867 = vld [vmem:[%s16 + $0x24] sm:$0xf]
          %v6868 = vld [vmem:[%s16 + $0x28] sm:$0xf]
          %v6869 = vld [vmem:[%s16 + $0x2c] sm:$0xf]
          %v6870 = vld [vmem:[%s16 + $0x30] sm:$0xf]
          %v6871 = vld [vmem:[%s16 + $0x34] sm:$0xf]
          %v6872 = vld [vmem:[%s16 + $0x38] sm:$0xf]
          %v6873 = vld [vmem:[%s16 + $0x3c] sm:$0xf]
          %v6874 = vld [vmem:[%s17] sm:$0xf]
          %v6875 = vld [vmem:[%s17 + $0x4] sm:$0xf]
          %v6876 = vld [vmem:[%s17 + $0x8] sm:$0xf]
          %v6877 = vld [vmem:[%s17 + $0xc] sm:$0xf]
          %v6878 = vld [vmem:[%s17 + $0x10] sm:$0xf]
          %v6879 = vld [vmem:[%s17 + $0x14] sm:$0xf]
          %v6880 = vld [vmem:[%s17 + $0x18] sm:$0xf]
          %v6881 = vld [vmem:[%s17 + $0x1c] sm:$0xf]
          %v6882 = vld [vmem:[%s17 + $0x20] sm:$0xf]
          %v6883 = vld [vmem:[%s17 + $0x24] sm:$0xf]
          %v6884 = vld [vmem:[%s17 + $0x28] sm:$0xf]
          %v6885 = vld [vmem:[%s17 + $0x2c] sm:$0xf]
          %v6886 = vld [vmem:[%s17 + $0x30] sm:$0xf]
          %v6887 = vld [vmem:[%s17 + $0x34] sm:$0xf]
          %v6888 = vld [vmem:[%s17 + $0x38] sm:$0xf]
          %v6889 = vld [vmem:[%s17 + $0x3c] sm:$0xf]
          %v6906 = vunpack.c.l.b16 %v6874
          %v6907 = vunpack.c.l.b16 %v6875
          %v6908 = vunpack.c.l.b16 %v6876
          %v6909 = vunpack.c.l.b16 %v6877
          %v6910 = vunpack.c.l.b16 %v6878
          %v6911 = vunpack.c.l.b16 %v6879
          %v6912 = vunpack.c.l.b16 %v6880
          %v6913 = vunpack.c.l.b16 %v6881
          %v6914 = vunpack.c.l.b16 %v6882
          %v6915 = vunpack.c.l.b16 %v6883
          %v6916 = vunpack.c.l.b16 %v6884
          %v6917 = vunpack.c.l.b16 %v6885
          %v6918 = vunpack.c.l.b16 %v6886
          %v6919 = vunpack.c.l.b16 %v6887
          %v6920 = vunpack.c.l.b16 %v6888
          %v6921 = vunpack.c.l.b16 %v6889
          %v6922 = vpack.c.b16 %v6907, %v6906
          %v6923 = vpack.c.b16 %v6909, %v6908
          %v6924 = vpack.c.b16 %v6911, %v6910
          %v6925 = vpack.c.b16 %v6913, %v6912
          %v6926 = vpack.c.b16 %v6915, %v6914
          %v6927 = vpack.c.b16 %v6917, %v6916
          %v6928 = vpack.c.b16 %v6919, %v6918
          %v6929 = vpack.c.b16 %v6921, %v6920
          %6938 = vmatprep.subr.bf16.mxu0 0
          %6939 = vmatpush1.bf16.msra.mxu0 %v6922
          %6940 = vmatprep.subr.bf16.mxu0 0
          %6941 = vmatpush1.bf16.msra.mxu0 %v6923
          %6942 = vmatprep.subr.bf16.mxu0 0
          %6943 = vmatpush1.bf16.msra.mxu0 %v6924
          %6944 = vmatprep.subr.bf16.mxu0 0
          %6945 = vmatpush1.bf16.msra.mxu0 %v6925
          %6946 = vmatprep.subr.bf16.mxu0 0
          %6947 = vmatpush1.bf16.msra.mxu0 %v6926
          %6948 = vmatprep.subr.bf16.mxu0 0
          %6949 = vmatpush1.bf16.msra.mxu0 %v6927
          %6950 = vmatprep.subr.bf16.mxu0 0
          %6951 = vmatpush1.bf16.msra.mxu0 %v6928
          %6952 = vmatprep.subr.bf16.mxu0 0
          %6953 = vmatpush1.bf16.msra.mxu0 %v6929
          %6954 = vmatprep.subr.bf16.mxu0 0
          %6955 = vmatpush1.bf16.msra.mxu0 0
          %6956 = vmatprep.subr.bf16.mxu0 0
          %6957 = vmatpush1.bf16.msra.mxu0 0
          %6958 = vmatprep.subr.bf16.mxu0 0
          %6959 = vmatpush1.bf16.msra.mxu0 0
          %6960 = vmatprep.subr.bf16.mxu0 0
          %6961 = vmatpush1.bf16.msra.mxu0 0
          %6962 = vmatprep.subr.bf16.mxu0 0
          %6963 = vmatpush1.bf16.msra.mxu0 0
          %6964 = vmatprep.subr.bf16.mxu0 0
          %6965 = vmatpush1.bf16.msra.mxu0 0
          %6966 = vmatprep.subr.bf16.mxu0 0
          %6967 = vmatpush1.bf16.msra.mxu0 0
          %6968 = vmatprep.subr.bf16.mxu0 0
          %6969 = vmatpush1.bf16.msra.mxu0 0
          %6970 = vmatprep.mubr.bf16.mxu0 0
          %6971 = vmatmul.mubr.bf16.gmra.mrb[0].mxu0 %v6842
          %v6972 = vpop.f32.mrb[0].mxu0
          %v6973 = vadd.f32 0.0, %v6972
          %v6974 = vpop.f32.mrb[0].mxu0
          %v6975 = vpop.f32.mrb[0].mxu0
          %v6976 = vadd.f32 0.0, %v6975
          %v6977 = vpop.f32.mrb[0].mxu0
          %6978 = vmatprep.mubr.bf16.mxu0 0
          %6979 = vmatmul.mubr.bf16.gmra.mrb[0].mxu0 %v6843
          %v6980 = vpop.f32.mrb[0].mxu0
          %v6981 = vadd.f32 0.0, %v6980
          %v6982 = vpop.f32.mrb[0].mxu0
          %v6983 = vpop.f32.mrb[0].mxu0
          %v6984 = vadd.f32 0.0, %v6983
          %v6985 = vpop.f32.mrb[0].mxu0
          %6986 = vmatprep.mubr.bf16.mxu0 0
          %6987 = vmatmul.mubr.bf16.gmra.mrb[0].mxu0 %v6844
          %v6988 = vpop.f32.mrb[0].mxu0
          %v6989 = vadd.f32 0.0, %v6988
          %v6990 = vpop.f32.mrb[0].mxu0
          %v6991 = vpop.f32.mrb[0].mxu0
          %v6992 = vadd.f32 0.0, %v6991
          %v6993 = vpop.f32.mrb[0].mxu0
          %6994 = vmatprep.mubr.bf16.mxu0 0
          %6995 = vmatmul.mubr.bf16.gmra.mrb[0].mxu0 %v6845
          %v6996 = vpop.f32.mrb[0].mxu0
          %v6997 = vadd.f32 0.0, %v6996
          %v6998 = vpop.f32.mrb[0].mxu0
          %v6999 = vpop.f32.mrb[0].mxu0
          %v7000 = vadd.f32 0.0, %v6999
          %v7001 = vpop.f32.mrb[0].mxu0
          %7002 = vmatprep.mubr.bf16.mxu0 0
          %7003 = vmatmul.mubr.bf16.gmra.mrb[0].mxu0 %v6846
          %v7004 = vpop.f32.mrb[0].mxu0
          %v7005 = vadd.f32 0.0, %v7004
          %v7006 = vpop.f32.mrb[0].mxu0
          %v7007 = vpop.f32.mrb[0].mxu0
          %v7008 = vadd.f32 0.0, %v7007
          %v7009 = vpop.f32.mrb[0].mxu0
          %7010 = vmatprep.mubr.bf16.mxu0 0
          %7011 = vmatmul.mubr.bf16.gmra.mrb[0].mxu0 %v6847
          %v7012 = vpop.f32.mrb[0].mxu0
          %v7013 = vadd.f32 0.0, %v7012
          %v7014 = vpop.f32.mrb[0].mxu0
          %v7015 = vpop.f32.mrb[0].mxu0
          %v7016 = vadd.f32 0.0, %v7015
          %v7017 = vpop.f32.mrb[0].mxu0
          %7018 = vmatprep.mubr.bf16.mxu0 0
          %7019 = vmatmul.mubr.bf16.gmra.mrb[0].mxu0 %v6848
          %v7020 = vpop.f32.mrb[0].mxu0
          %v7021 = vadd.f32 0.0, %v7020
          %v7022 = vpop.f32.mrb[0].mxu0
          %v7023 = vpop.f32.mrb[0].mxu0
          %v7024 = vadd.f32 0.0, %v7023
          %v7025 = vpop.f32.mrb[0].mxu0
          %7026 = vmatprep.mubr.bf16.mxu0 0
          %7027 = vmatmul.mubr.bf16.gmra.mrb[0].mxu0 %v6849
          %v7028 = vpop.f32.mrb[0].mxu0
          %v7029 = vadd.f32 0.0, %v7028
          %v7030 = vpop.f32.mrb[0].mxu0
          %v7031 = vpop.f32.mrb[0].mxu0
          %v7032 = vadd.f32 0.0, %v7031
          %v7033 = vpop.f32.mrb[0].mxu0
          %7034 = vmatprep.mubr.bf16.mxu0 0
          %7035 = vmatmul.mubr.bf16.gmra.mrb[0].mxu0 %v6850
          %v7036 = vpop.f32.mrb[0].mxu0
          %v7037 = vadd.f32 0.0, %v7036
          %v7038 = vpop.f32.mrb[0].mxu0
          %v7039 = vpop.f32.mrb[0].mxu0
          %v7040 = vadd.f32 0.0, %v7039
          %v7041 = vpop.f32.mrb[0].mxu0
          %7042 = vmatprep.mubr.bf16.mxu0 0
          %7043 = vmatmul.mubr.bf16.gmra.mrb[0].mxu0 %v6851
          %v7044 = vpop.f32.mrb[0].mxu0
          %v7045 = vadd.f32 0.0, %v7044
          %v7046 = vpop.f32.mrb[0].mxu0
          %v7047 = vpop.f32.mrb[0].mxu0
          %v7048 = vadd.f32 0.0, %v7047
          %v7049 = vpop.f32.mrb[0].mxu0
          %7050 = vmatprep.mubr.bf16.mxu0 0
          %7051 = vmatmul.mubr.bf16.gmra.mrb[0].mxu0 %v6852
          %v7052 = vpop.f32.mrb[0].mxu0
          %v7053 = vadd.f32 0.0, %v7052
          %v7054 = vpop.f32.mrb[0].mxu0
          %v7055 = vpop.f32.mrb[0].mxu0
          %v7056 = vadd.f32 0.0, %v7055
          %v7057 = vpop.f32.mrb[0].mxu0
          %7058 = vmatprep.mubr.bf16.mxu0 0
          %7059 = vmatmul.mubr.bf16.gmra.mrb[0].mxu0 %v6853
          %v7060 = vpop.f32.mrb[0].mxu0
          %v7061 = vadd.f32 0.0, %v7060
          %v7062 = vpop.f32.mrb[0].mxu0
          %v7063 = vpop.f32.mrb[0].mxu0
          %v7064 = vadd.f32 0.0, %v7063
          %v7065 = vpop.f32.mrb[0].mxu0
          %7066 = vmatprep.mubr.bf16.mxu0 0
          %7067 = vmatmul.mubr.bf16.gmra.mrb[0].mxu0 %v6854
          %v7068 = vpop.f32.mrb[0].mxu0
          %v7069 = vadd.f32 0.0, %v7068
          %v7070 = vpop.f32.mrb[0].mxu0
          %v7071 = vpop.f32.mrb[0].mxu0
          %v7072 = vadd.f32 0.0, %v7071
          %v7073 = vpop.f32.mrb[0].mxu0
          %7074 = vmatprep.mubr.bf16.mxu0 0
          %7075 = vmatmul.mubr.bf16.gmra.mrb[0].mxu0 %v6855
          %v7076 = vpop.f32.mrb[0].mxu0
          %v7077 = vadd.f32 0.0, %v7076
          %v7078 = vpop.f32.mrb[0].mxu0
          %v7079 = vpop.f32.mrb[0].mxu0
          %v7080 = vadd.f32 0.0, %v7079
          %v7081 = vpop.f32.mrb[0].mxu0
          %7082 = vmatprep.mubr.bf16.mxu0 0
          %7083 = vmatmul.mubr.bf16.gmra.mrb[0].mxu0 %v6856
          %v7084 = vpop.f32.mrb[0].mxu0
          %v7085 = vadd.f32 0.0, %v7084
          %v7086 = vpop.f32.mrb[0].mxu0
          %v7087 = vpop.f32.mrb[0].mxu0
          %v7088 = vadd.f32 0.0, %v7087
          %v7089 = vpop.f32.mrb[0].mxu0
          %7090 = vmatprep.mubr.bf16.mxu0 0
          %7091 = vmatmul.mubr.bf16.gmra.mrb[0].mxu0 %v6857
          %v7092 = vpop.f32.mrb[0].mxu0
          %v7093 = vadd.f32 0.0, %v7092
          %v7094 = vpop.f32.mrb[0].mxu0
          %v7095 = vpop.f32.mrb[0].mxu0
          %v7096 = vadd.f32 0.0, %v7095
          %v7097 = vpop.f32.mrb[0].mxu0
          %7098 = vdwg.mxu0
          %v7115 = vunpack.c.l.b16 %v6858
          %v7116 = vunpack.c.l.b16 %v6859
          %v7117 = vunpack.c.l.b16 %v6860
          %v7118 = vunpack.c.l.b16 %v6861
          %v7119 = vunpack.c.l.b16 %v6862
          %v7120 = vunpack.c.l.b16 %v6863
          %v7121 = vunpack.c.l.b16 %v6864
          %v7122 = vunpack.c.l.b16 %v6865
          %v7123 = vunpack.c.l.b16 %v6866
          %v7124 = vunpack.c.l.b16 %v6867
          %v7125 = vunpack.c.l.b16 %v6868
          %v7126 = vunpack.c.l.b16 %v6869
          %v7127 = vunpack.c.l.b16 %v6870
          %v7128 = vunpack.c.l.b16 %v6871
          %v7129 = vunpack.c.l.b16 %v6872
          %v7130 = vunpack.c.l.b16 %v6873
          %v7131 = vpack.c.b16 %v7116, %v7115
          %v7132 = vpack.c.b16 %v7118, %v7117
          %v7133 = vpack.c.b16 %v7120, %v7119
          %v7134 = vpack.c.b16 %v7122, %v7121
          %v7135 = vpack.c.b16 %v7124, %v7123
          %v7136 = vpack.c.b16 %v7126, %v7125
          %v7137 = vpack.c.b16 %v7128, %v7127
          %v7138 = vpack.c.b16 %v7130, %v7129
          %7147 = vmatprep.subr.bf16.mxu0 0
          %7148 = vmatpush1.bf16.msra.mxu0 %v7131
          %7149 = vmatprep.subr.bf16.mxu0 0
          %7150 = vmatpush1.bf16.msra.mxu0 %v7132
          %7151 = vmatprep.subr.bf16.mxu0 0
          %7152 = vmatpush1.bf16.msra.mxu0 %v7133
          %7153 = vmatprep.subr.bf16.mxu0 0
          %7154 = vmatpush1.bf16.msra.mxu0 %v7134
          %7155 = vmatprep.subr.bf16.mxu0 0
          %7156 = vmatpush1.bf16.msra.mxu0 %v7135
          %7157 = vmatprep.subr.bf16.mxu0 0
          %7158 = vmatpush1.bf16.msra.mxu0 %v7136
          %7159 = vmatprep.subr.bf16.mxu0 0
          %7160 = vmatpush1.bf16.msra.mxu0 %v7137
          %7161 = vmatprep.subr.bf16.mxu0 0
          %7162 = vmatpush1.bf16.msra.mxu0 %v7138
          %7163 = vmatprep.subr.bf16.mxu0 0
          %7164 = vmatpush1.bf16.msra.mxu0 0
          %7165 = vmatprep.subr.bf16.mxu0 0
          %7166 = vmatpush1.bf16.msra.mxu0 0
          %7167 = vmatprep.subr.bf16.mxu0 0
          %7168 = vmatpush1.bf16.msra.mxu0 0
          %7169 = vmatprep.subr.bf16.mxu0 0
          %7170 = vmatpush1.bf16.msra.mxu0 0
          %7171 = vmatprep.subr.bf16.mxu0 0
          %7172 = vmatpush1.bf16.msra.mxu0 0
          %7173 = vmatprep.subr.bf16.mxu0 0
          %7174 = vmatpush1.bf16.msra.mxu0 0
          %7175 = vmatprep.subr.bf16.mxu0 0
          %7176 = vmatpush1.bf16.msra.mxu0 0
          %7177 = vmatprep.subr.bf16.mxu0 0
          %7178 = vmatpush1.bf16.msra.mxu0 0
          %7179 = vmatprep.mubr.bf16.mxu0 0
          %7180 = vmatmul.mubr.bf16.gmra.mrb[0].mxu0 %v6556
          %v7181 = vpop.f32.mrb[0].mxu0
          %v7182 = vadd.f32 %v6973, %v7181
          %v7183 = vpop.f32.mrb[0].mxu0
          %v7184 = vpop.f32.mrb[0].mxu0
          %v7185 = vadd.f32 %v6976, %v7184
          %v7186 = vpop.f32.mrb[0].mxu0
          %7187 = vmatprep.mubr.bf16.mxu0 0
          %7188 = vmatmul.mubr.bf16.gmra.mrb[0].mxu0 %v6557
          %v7189 = vpop.f32.mrb[0].mxu0
          %v7190 = vadd.f32 %v6981, %v7189
          %v7191 = vpop.f32.mrb[0].mxu0
          %v7192 = vpop.f32.mrb[0].mxu0
          %v7193 = vadd.f32 %v6984, %v7192
          %v7194 = vpop.f32.mrb[0].mxu0
          %7195 = vmatprep.mubr.bf16.mxu0 0
          %7196 = vmatmul.mubr.bf16.gmra.mrb[0].mxu0 %v6558
          %v7197 = vpop.f32.mrb[0].mxu0
          %v7198 = vadd.f32 %v6989, %v7197
          %v7199 = vpop.f32.mrb[0].mxu0
          %v7200 = vpop.f32.mrb[0].mxu0
          %v7201 = vadd.f32 %v6992, %v7200
          %v7202 = vpop.f32.mrb[0].mxu0
          %7203 = vmatprep.mubr.bf16.mxu0 0
          %7204 = vmatmul.mubr.bf16.gmra.mrb[0].mxu0 %v6559
          %v7205 = vpop.f32.mrb[0].mxu0
          %v7206 = vadd.f32 %v6997, %v7205
          %v7207 = vpop.f32.mrb[0].mxu0
          %v7208 = vpop.f32.mrb[0].mxu0
          %v7209 = vadd.f32 %v7000, %v7208
          %v7210 = vpop.f32.mrb[0].mxu0
          %7211 = vmatprep.mubr.bf16.mxu0 0
          %7212 = vmatmul.mubr.bf16.gmra.mrb[0].mxu0 %v6560
          %v7213 = vpop.f32.mrb[0].mxu0
          %v7214 = vadd.f32 %v7005, %v7213
          %v7215 = vpop.f32.mrb[0].mxu0
          %v7216 = vpop.f32.mrb[0].mxu0
          %v7217 = vadd.f32 %v7008, %v7216
          %v7218 = vpop.f32.mrb[0].mxu0
          %7219 = vmatprep.mubr.bf16.mxu0 0
          %7220 = vmatmul.mubr.bf16.gmra.mrb[0].mxu0 %v6561
          %v7221 = vpop.f32.mrb[0].mxu0
          %v7222 = vadd.f32 %v7013, %v7221
          %v7223 = vpop.f32.mrb[0].mxu0
          %v7224 = vpop.f32.mrb[0].mxu0
          %v7225 = vadd.f32 %v7016, %v7224
          %v7226 = vpop.f32.mrb[0].mxu0
          %7227 = vmatprep.mubr.bf16.mxu0 0
          %7228 = vmatmul.mubr.bf16.gmra.mrb[0].mxu0 %v6562
          %v7229 = vpop.f32.mrb[0].mxu0
          %v7230 = vadd.f32 %v7021, %v7229
          %v7231 = vpop.f32.mrb[0].mxu0
          %v7232 = vpop.f32.mrb[0].mxu0
          %v7233 = vadd.f32 %v7024, %v7232
          %v7234 = vpop.f32.mrb[0].mxu0
          %7235 = vmatprep.mubr.bf16.mxu0 0
          %7236 = vmatmul.mubr.bf16.gmra.mrb[0].mxu0 %v6563
          %v7237 = vpop.f32.mrb[0].mxu0
          %v7238 = vadd.f32 %v7029, %v7237
          %v7239 = vpop.f32.mrb[0].mxu0
          %v7240 = vpop.f32.mrb[0].mxu0
          %v7241 = vadd.f32 %v7032, %v7240
          %v7242 = vpop.f32.mrb[0].mxu0
          %7243 = vmatprep.mubr.bf16.mxu0 0
          %7244 = vmatmul.mubr.bf16.gmra.mrb[0].mxu0 %v6564
          %v7245 = vpop.f32.mrb[0].mxu0
          %v7246 = vadd.f32 %v7037, %v7245
          %v7247 = vpop.f32.mrb[0].mxu0
          %v7248 = vpop.f32.mrb[0].mxu0
          %v7249 = vadd.f32 %v7040, %v7248
          %v7250 = vpop.f32.mrb[0].mxu0
          %7251 = vmatprep.mubr.bf16.mxu0 0
          %7252 = vmatmul.mubr.bf16.gmra.mrb[0].mxu0 %v6565
          %v7253 = vpop.f32.mrb[0].mxu0
          %v7254 = vadd.f32 %v7045, %v7253
          %v7255 = vpop.f32.mrb[0].mxu0
          %v7256 = vpop.f32.mrb[0].mxu0
          %v7257 = vadd.f32 %v7048, %v7256
          %v7258 = vpop.f32.mrb[0].mxu0
          %7259 = vmatprep.mubr.bf16.mxu0 0
          %7260 = vmatmul.mubr.bf16.gmra.mrb[0].mxu0 %v6566
          %v7261 = vpop.f32.mrb[0].mxu0
          %v7262 = vadd.f32 %v7053, %v7261
          %v7263 = vpop.f32.mrb[0].mxu0
          %v7264 = vpop.f32.mrb[0].mxu0
          %v7265 = vadd.f32 %v7056, %v7264
          %v7266 = vpop.f32.mrb[0].mxu0
          %7267 = vmatprep.mubr.bf16.mxu0 0
          %7268 = vmatmul.mubr.bf16.gmra.mrb[0].mxu0 %v6567
          %v7269 = vpop.f32.mrb[0].mxu0
          %v7270 = vadd.f32 %v7061, %v7269
          %v7271 = vpop.f32.mrb[0].mxu0
          %v7272 = vpop.f32.mrb[0].mxu0
          %v7273 = vadd.f32 %v7064, %v7272
          %v7274 = vpop.f32.mrb[0].mxu0
          %7275 = vmatprep.mubr.bf16.mxu0 0
          %7276 = vmatmul.mubr.bf16.gmra.mrb[0].mxu0 %v6568
          %v7277 = vpop.f32.mrb[0].mxu0
          %v7278 = vadd.f32 %v7069, %v7277
          %v7279 = vpop.f32.mrb[0].mxu0
          %v7280 = vpop.f32.mrb[0].mxu0
          %v7281 = vadd.f32 %v7072, %v7280
          %v7282 = vpop.f32.mrb[0].mxu0
          %7283 = vmatprep.mubr.bf16.mxu0 0
          %7284 = vmatmul.mubr.bf16.gmra.mrb[0].mxu0 %v6569
          %v7285 = vpop.f32.mrb[0].mxu0
          %v7286 = vadd.f32 %v7077, %v7285
          %v7287 = vpop.f32.mrb[0].mxu0
          %v7288 = vpop.f32.mrb[0].mxu0
          %v7289 = vadd.f32 %v7080, %v7288
          %v7290 = vpop.f32.mrb[0].mxu0
          %7291 = vmatprep.mubr.bf16.mxu0 0
          %7292 = vmatmul.mubr.bf16.gmra.mrb[0].mxu0 %v6570
          %v7293 = vpop.f32.mrb[0].mxu0
          %v7294 = vadd.f32 %v7085, %v7293
          %v7295 = vpop.f32.mrb[0].mxu0
          %v7296 = vpop.f32.mrb[0].mxu0
          %v7297 = vadd.f32 %v7088, %v7296
          %v7298 = vpop.f32.mrb[0].mxu0
          %7299 = vmatprep.mubr.bf16.mxu0 0
          %7300 = vmatmul.mubr.bf16.gmra.mrb[0].mxu0 %v6571
          %v7301 = vpop.f32.mrb[0].mxu0
          %v7302 = vadd.f32 %v7093, %v7301
          %v7303 = vpop.f32.mrb[0].mxu0
          %v7304 = vpop.f32.mrb[0].mxu0
          %v7305 = vadd.f32 %v7096, %v7304
          %v7306 = vpop.f32.mrb[0].mxu0
          %7307 = vdwg.mxu0
          %v7308 = vld [vmem:[%s18] sm:$0x1]
          %v7310 = vlaneseq
          %v7311 = vshrl.u32 %v7310, 7
          %v7312 = vsub.s32 0, %v7311
          %v7313 = vrot.slane %v7308, %v7312
          %v7315 = vmul.f32 %v7182, %v7313
          %v7316 = vmul.f32 %v7185, %v7313
          %v7317 = vmul.f32 %v7190, %v7313
          %v7318 = vmul.f32 %v7193, %v7313
          %v7319 = vmul.f32 %v7198, %v7313
          %v7320 = vmul.f32 %v7201, %v7313
          %v7321 = vmul.f32 %v7206, %v7313
          %v7322 = vmul.f32 %v7209, %v7313
          %v7323 = vmul.f32 %v7214, %v7313
          %v7324 = vmul.f32 %v7217, %v7313
          %v7325 = vmul.f32 %v7222, %v7313
          %v7326 = vmul.f32 %v7225, %v7313
          %v7327 = vmul.f32 %v7230, %v7313
          %v7328 = vmul.f32 %v7233, %v7313
          %v7329 = vmul.f32 %v7238, %v7313
          %v7330 = vmul.f32 %v7241, %v7313
          %v7331 = vmul.f32 %v7246, %v7313
          %v7332 = vmul.f32 %v7249, %v7313
          %v7333 = vmul.f32 %v7254, %v7313
          %v7334 = vmul.f32 %v7257, %v7313
          %v7335 = vmul.f32 %v7262, %v7313
          %v7336 = vmul.f32 %v7265, %v7313
          %v7337 = vmul.f32 %v7270, %v7313
          %v7338 = vmul.f32 %v7273, %v7313
          %v7339 = vmul.f32 %v7278, %v7313
          %v7340 = vmul.f32 %v7281, %v7313
          %v7341 = vmul.f32 %v7286, %v7313
          %v7342 = vmul.f32 %v7289, %v7313
          %v7343 = vmul.f32 %v7294, %v7313
          %v7344 = vmul.f32 %v7297, %v7313
          %v7345 = vmul.f32 %v7302, %v7313
          %v7346 = vmul.f32 %v7305, %v7313
          %v7347 = vld [vmem:[%s19] sm:$0x1]
          %v7349 = vlaneseq
          %v7350 = vshrl.u32 %v7349, 7
          %v7351 = vsub.s32 0, %v7350
          %v7352 = vrot.slane %v7347, %v7351
          %v7354 = vadd.f32 %v7315, %v7352
          %v7355 = vadd.f32 %v7316, %v7352
          %v7356 = vadd.f32 %v7317, %v7352
          %v7357 = vadd.f32 %v7318, %v7352
          %v7358 = vadd.f32 %v7319, %v7352
          %v7359 = vadd.f32 %v7320, %v7352
          %v7360 = vadd.f32 %v7321, %v7352
          %v7361 = vadd.f32 %v7322, %v7352
          %v7362 = vadd.f32 %v7323, %v7352
          %v7363 = vadd.f32 %v7324, %v7352
          %v7364 = vadd.f32 %v7325, %v7352
          %v7365 = vadd.f32 %v7326, %v7352
          %v7366 = vadd.f32 %v7327, %v7352
          %v7367 = vadd.f32 %v7328, %v7352
          %v7368 = vadd.f32 %v7329, %v7352
          %v7369 = vadd.f32 %v7330, %v7352
          %v7370 = vadd.f32 %v7331, %v7352
          %v7371 = vadd.f32 %v7332, %v7352
          %v7372 = vadd.f32 %v7333, %v7352
          %v7373 = vadd.f32 %v7334, %v7352
          %v7374 = vadd.f32 %v7335, %v7352
          %v7375 = vadd.f32 %v7336, %v7352
          %v7376 = vadd.f32 %v7337, %v7352
          %v7377 = vadd.f32 %v7338, %v7352
          %v7378 = vadd.f32 %v7339, %v7352
          %v7379 = vadd.f32 %v7340, %v7352
          %v7380 = vadd.f32 %v7341, %v7352
          %v7381 = vadd.f32 %v7342, %v7352
          %v7382 = vadd.f32 %v7343, %v7352
          %v7383 = vadd.f32 %v7344, %v7352
          %v7384 = vadd.f32 %v7345, %v7352
          %v7385 = vadd.f32 %v7346, %v7352
          %v7386 = vsub.f32 0.0, %v7354
          %v7387 = vsub.f32 0.0, %v7355
          %v7388 = vsub.f32 0.0, %v7356
          %v7389 = vsub.f32 0.0, %v7357
          %v7390 = vsub.f32 0.0, %v7358
          %v7391 = vsub.f32 0.0, %v7359
          %v7392 = vsub.f32 0.0, %v7360
          %v7393 = vsub.f32 0.0, %v7361
          %v7394 = vsub.f32 0.0, %v7362
          %v7395 = vsub.f32 0.0, %v7363
          %v7396 = vsub.f32 0.0, %v7364
          %v7397 = vsub.f32 0.0, %v7365
          %v7398 = vsub.f32 0.0, %v7366
          %v7399 = vsub.f32 0.0, %v7367
          %v7400 = vsub.f32 0.0, %v7368
          %v7401 = vsub.f32 0.0, %v7369
          %v7402 = vsub.f32 0.0, %v7370
          %v7403 = vsub.f32 0.0, %v7371
          %v7404 = vsub.f32 0.0, %v7372
          %v7405 = vsub.f32 0.0, %v7373
          %v7406 = vsub.f32 0.0, %v7374
          %v7407 = vsub.f32 0.0, %v7375
          %v7408 = vsub.f32 0.0, %v7376
          %v7409 = vsub.f32 0.0, %v7377
          %v7410 = vsub.f32 0.0, %v7378
          %v7411 = vsub.f32 0.0, %v7379
          %v7412 = vsub.f32 0.0, %v7380
          %v7413 = vsub.f32 0.0, %v7381
          %v7414 = vsub.f32 0.0, %v7382
          %v7415 = vsub.f32 0.0, %v7383
          %v7416 = vsub.f32 0.0, %v7384
          %v7417 = vsub.f32 0.0, %v7385
          %v7418 = vmul.f32 %v7386, 1.442695
          %v7419 = vpow.pop %v7418
          %v7420 = vmul.f32 %v7387, 1.442695
          %v7421 = vpow.pop %v7420
          %v7422 = vmul.f32 %v7388, 1.442695
          %v7423 = vpow.pop %v7422
          %v7424 = vmul.f32 %v7389, 1.442695
          %v7425 = vpow.pop %v7424
          %v7426 = vmul.f32 %v7390, 1.442695
          %v7427 = vpow.pop %v7426
          %v7428 = vmul.f32 %v7391, 1.442695
          %v7429 = vpow.pop %v7428
          %v7430 = vmul.f32 %v7392, 1.442695
          %v7431 = vpow.pop %v7430
          %v7432 = vmul.f32 %v7393, 1.442695
          %v7433 = vpow.pop %v7432
          %v7434 = vmul.f32 %v7394, 1.442695
          %v7435 = vpow.pop %v7434
          %v7436 = vmul.f32 %v7395, 1.442695
          %v7437 = vpow.pop %v7436
          %v7438 = vmul.f32 %v7396, 1.442695
          %v7439 = vpow.pop %v7438
          %v7440 = vmul.f32 %v7397, 1.442695
          %v7441 = vpow.pop %v7440
          %v7442 = vmul.f32 %v7398, 1.442695
          %v7443 = vpow.pop %v7442
          %v7444 = vmul.f32 %v7399, 1.442695
          %v7445 = vpow.pop %v7444
          %v7446 = vmul.f32 %v7400, 1.442695
          %v7447 = vpow.pop %v7446
          %v7448 = vmul.f32 %v7401, 1.442695
          %v7449 = vpow.pop %v7448
          %v7450 = vmul.f32 %v7402, 1.442695
          %v7451 = vpow.pop %v7450
          %v7452 = vmul.f32 %v7403, 1.442695
          %v7453 = vpow.pop %v7452
          %v7454 = vmul.f32 %v7404, 1.442695
          %v7455 = vpow.pop %v7454
          %v7456 = vmul.f32 %v7405, 1.442695
          %v7457 = vpow.pop %v7456
          %v7458 = vmul.f32 %v7406, 1.442695
          %v7459 = vpow.pop %v7458
          %v7460 = vmul.f32 %v7407, 1.442695
          %v7461 = vpow.pop %v7460
          %v7462 = vmul.f32 %v7408, 1.442695
          %v7463 = vpow.pop %v7462
          %v7464 = vmul.f32 %v7409, 1.442695
          %v7465 = vpow.pop %v7464
          %v7466 = vmul.f32 %v7410, 1.442695
          %v7467 = vpow.pop %v7466
          %v7468 = vmul.f32 %v7411, 1.442695
          %v7469 = vpow.pop %v7468
          %v7470 = vmul.f32 %v7412, 1.442695
          %v7471 = vpow.pop %v7470
          %v7472 = vmul.f32 %v7413, 1.442695
          %v7473 = vpow.pop %v7472
          %v7474 = vmul.f32 %v7414, 1.442695
          %v7475 = vpow.pop %v7474
          %v7476 = vmul.f32 %v7415, 1.442695
          %v7477 = vpow.pop %v7476
          %v7478 = vmul.f32 %v7416, 1.442695
          %v7479 = vpow.pop %v7478
          %v7480 = vmul.f32 %v7417, 1.442695
          %v7481 = vpow.pop %v7480
          %v7482 = vadd.f32 %v7419, 1.0
          %v7483 = vadd.f32 %v7421, 1.0
          %v7484 = vadd.f32 %v7423, 1.0
          %v7485 = vadd.f32 %v7425, 1.0
          %v7486 = vadd.f32 %v7427, 1.0
          %v7487 = vadd.f32 %v7429, 1.0
          %v7488 = vadd.f32 %v7431, 1.0
          %v7489 = vadd.f32 %v7433, 1.0
          %v7490 = vadd.f32 %v7435, 1.0
          %v7491 = vadd.f32 %v7437, 1.0
          %v7492 = vadd.f32 %v7439, 1.0
          %v7493 = vadd.f32 %v7441, 1.0
          %v7494 = vadd.f32 %v7443, 1.0
          %v7495 = vadd.f32 %v7445, 1.0
          %v7496 = vadd.f32 %v7447, 1.0
          %v7497 = vadd.f32 %v7449, 1.0
          %v7498 = vadd.f32 %v7451, 1.0
          %v7499 = vadd.f32 %v7453, 1.0
          %v7500 = vadd.f32 %v7455, 1.0
          %v7501 = vadd.f32 %v7457, 1.0
          %v7502 = vadd.f32 %v7459, 1.0
          %v7503 = vadd.f32 %v7461, 1.0
          %v7504 = vadd.f32 %v7463, 1.0
          %v7505 = vadd.f32 %v7465, 1.0
          %v7506 = vadd.f32 %v7467, 1.0
          %v7507 = vadd.f32 %v7469, 1.0
          %v7508 = vadd.f32 %v7471, 1.0
          %v7509 = vadd.f32 %v7473, 1.0
          %v7510 = vadd.f32 %v7475, 1.0
          %v7511 = vadd.f32 %v7477, 1.0
          %v7512 = vadd.f32 %v7479, 1.0
          %v7513 = vadd.f32 %v7481, 1.0
          %v7514 = vrcp.pop %v7482
          %v7515 = vrcp.pop %v7483
          %v7516 = vrcp.pop %v7484
          %v7517 = vrcp.pop %v7485
          %v7518 = vrcp.pop %v7486
          %v7519 = vrcp.pop %v7487
          %v7520 = vrcp.pop %v7488
          %v7521 = vrcp.pop %v7489
          %v7522 = vrcp.pop %v7490
          %v7523 = vrcp.pop %v7491
          %v7524 = vrcp.pop %v7492
          %v7525 = vrcp.pop %v7493
          %v7526 = vrcp.pop %v7494
          %v7527 = vrcp.pop %v7495
          %v7528 = vrcp.pop %v7496
          %v7529 = vrcp.pop %v7497
          %v7530 = vrcp.pop %v7498
          %v7531 = vrcp.pop %v7499
          %v7532 = vrcp.pop %v7500
          %v7533 = vrcp.pop %v7501
          %v7534 = vrcp.pop %v7502
          %v7535 = vrcp.pop %v7503
          %v7536 = vrcp.pop %v7504
          %v7537 = vrcp.pop %v7505
          %v7538 = vrcp.pop %v7506
          %v7539 = vrcp.pop %v7507
          %v7540 = vrcp.pop %v7508
          %v7541 = vrcp.pop %v7509
          %v7542 = vrcp.pop %v7510
          %v7543 = vrcp.pop %v7511
          %v7544 = vrcp.pop %v7512
          %v7545 = vrcp.pop %v7513
          %v7546 = vmul.f32 %v7354, %v7514
          %v7547 = vmul.f32 %v7355, %v7515
          %v7548 = vmul.f32 %v7356, %v7516
          %v7549 = vmul.f32 %v7357, %v7517
          %v7550 = vmul.f32 %v7358, %v7518
          %v7551 = vmul.f32 %v7359, %v7519
          %v7552 = vmul.f32 %v7360, %v7520
          %v7553 = vmul.f32 %v7361, %v7521
          %v7554 = vmul.f32 %v7362, %v7522
          %v7555 = vmul.f32 %v7363, %v7523
          %v7556 = vmul.f32 %v7364, %v7524
          %v7557 = vmul.f32 %v7365, %v7525
          %v7558 = vmul.f32 %v7366, %v7526
          %v7559 = vmul.f32 %v7367, %v7527
          %v7560 = vmul.f32 %v7368, %v7528
          %v7561 = vmul.f32 %v7369, %v7529
          %v7562 = vmul.f32 %v7370, %v7530
          %v7563 = vmul.f32 %v7371, %v7531
          %v7564 = vmul.f32 %v7372, %v7532
          %v7565 = vmul.f32 %v7373, %v7533
          %v7566 = vmul.f32 %v7374, %v7534
          %v7567 = vmul.f32 %v7375, %v7535
          %v7568 = vmul.f32 %v7376, %v7536
          %v7569 = vmul.f32 %v7377, %v7537
          %v7570 = vmul.f32 %v7378, %v7538
          %v7571 = vmul.f32 %v7379, %v7539
          %v7572 = vmul.f32 %v7380, %v7540
          %v7573 = vmul.f32 %v7381, %v7541
          %v7574 = vmul.f32 %v7382, %v7542
          %v7575 = vmul.f32 %v7383, %v7543
          %v7576 = vmul.f32 %v7384, %v7544
          %v7577 = vmul.f32 %v7385, %v7545
          %v7578 = vpack.c.bf16 %v7547, %v7546
          %v7579 = vpack.c.bf16 %v7549, %v7548
          %v7580 = vpack.c.bf16 %v7551, %v7550
          %v7581 = vpack.c.bf16 %v7553, %v7552
          %v7582 = vpack.c.bf16 %v7555, %v7554
          %v7583 = vpack.c.bf16 %v7557, %v7556
          %v7584 = vpack.c.bf16 %v7559, %v7558
          %v7585 = vpack.c.bf16 %v7561, %v7560
          %v7586 = vpack.c.bf16 %v7563, %v7562
          %v7587 = vpack.c.bf16 %v7565, %v7564
          %v7588 = vpack.c.bf16 %v7567, %v7566
          %v7589 = vpack.c.bf16 %v7569, %v7568
          %v7590 = vpack.c.bf16 %v7571, %v7570
          %v7591 = vpack.c.bf16 %v7573, %v7572
          %v7592 = vpack.c.bf16 %v7575, %v7574
          %v7593 = vpack.c.bf16 %v7577, %v7576
          %v7610 = vunpack.c.l.b16 %v7578
          %v7611 = vunpack.c.h.b16 %v7578
          %v7612 = vunpack.c.l.b16 %v7579
          %v7613 = vunpack.c.h.b16 %v7579
          %v7614 = vunpack.c.l.b16 %v7580
          %v7615 = vunpack.c.h.b16 %v7580
          %v7616 = vunpack.c.l.b16 %v7581
          %v7617 = vunpack.c.h.b16 %v7581
          %v7618 = vunpack.c.l.b16 %v7582
          %v7619 = vunpack.c.h.b16 %v7582
          %v7620 = vunpack.c.l.b16 %v7583
          %v7621 = vunpack.c.h.b16 %v7583
          %v7622 = vunpack.c.l.b16 %v7584
          %v7623 = vunpack.c.h.b16 %v7584
          %v7624 = vunpack.c.l.b16 %v7585
          %v7625 = vunpack.c.h.b16 %v7585
          %v7626 = vunpack.c.l.b16 %v7586
          %v7627 = vunpack.c.h.b16 %v7586
          %v7628 = vunpack.c.l.b16 %v7587
          %v7629 = vunpack.c.h.b16 %v7587
          %v7630 = vunpack.c.l.b16 %v7588
          %v7631 = vunpack.c.h.b16 %v7588
          %v7632 = vunpack.c.l.b16 %v7589
          %v7633 = vunpack.c.h.b16 %v7589
          %v7634 = vunpack.c.l.b16 %v7590
          %v7635 = vunpack.c.h.b16 %v7590
          %v7636 = vunpack.c.l.b16 %v7591
          %v7637 = vunpack.c.h.b16 %v7591
          %v7638 = vunpack.c.l.b16 %v7592
          %v7639 = vunpack.c.h.b16 %v7592
          %v7640 = vunpack.c.l.b16 %v7593
          %v7641 = vunpack.c.h.b16 %v7593
          %v7642 = vpack.c.b16 %v7610, %v7610
          %v7643 = vpack.c.b16 %v7611, %v7611
          %v7644 = vpack.c.b16 %v7612, %v7612
          %v7645 = vpack.c.b16 %v7613, %v7613
          %v7646 = vpack.c.b16 %v7614, %v7614
          %v7647 = vpack.c.b16 %v7615, %v7615
          %v7648 = vpack.c.b16 %v7616, %v7616
          %v7649 = vpack.c.b16 %v7617, %v7617
          %v7650 = vpack.c.b16 %v7618, %v7618
          %v7651 = vpack.c.b16 %v7619, %v7619
          %v7652 = vpack.c.b16 %v7620, %v7620
          %v7653 = vpack.c.b16 %v7621, %v7621
          %v7654 = vpack.c.b16 %v7622, %v7622
          %v7655 = vpack.c.b16 %v7623, %v7623
          %v7656 = vpack.c.b16 %v7624, %v7624
          %v7657 = vpack.c.b16 %v7625, %v7625
          %v7658 = vpack.c.b16 %v7626, %v7626
          %v7659 = vpack.c.b16 %v7627, %v7627
          %v7660 = vpack.c.b16 %v7628, %v7628
          %v7661 = vpack.c.b16 %v7629, %v7629
          %v7662 = vpack.c.b16 %v7630, %v7630
          %v7663 = vpack.c.b16 %v7631, %v7631
          %v7664 = vpack.c.b16 %v7632, %v7632
          %v7665 = vpack.c.b16 %v7633, %v7633
          %v7666 = vpack.c.b16 %v7634, %v7634
          %v7667 = vpack.c.b16 %v7635, %v7635
          %v7668 = vpack.c.b16 %v7636, %v7636
          %v7669 = vpack.c.b16 %v7637, %v7637
          %v7670 = vpack.c.b16 %v7638, %v7638
          %v7671 = vpack.c.b16 %v7639, %v7639
          %v7672 = vpack.c.b16 %v7640, %v7640
          %v7673 = vpack.c.b16 %v7641, %v7641
          %7706 = vst [vmem:[%s757] sm:$0xf] %v7642
          %7707 = vst [vmem:[%s757 + $0x4] sm:$0xf] %v7643
          %7708 = vst [vmem:[%s757 + $0x8] sm:$0xf] %v7644
          %7709 = vst [vmem:[%s757 + $0xc] sm:$0xf] %v7645
          %7710 = vst [vmem:[%s757 + $0x10] sm:$0xf] %v7646
          %7711 = vst [vmem:[%s757 + $0x14] sm:$0xf] %v7647
          %7712 = vst [vmem:[%s757 + $0x18] sm:$0xf] %v7648
          %7713 = vst [vmem:[%s757 + $0x1c] sm:$0xf] %v7649
          %7714 = vst [vmem:[%s757 + $0x20] sm:$0xf] %v7650
          %7715 = vst [vmem:[%s757 + $0x24] sm:$0xf] %v7651
          %7716 = vst [vmem:[%s757 + $0x28] sm:$0xf] %v7652
          %7717 = vst [vmem:[%s757 + $0x2c] sm:$0xf] %v7653
          %7718 = vst [vmem:[%s757 + $0x30] sm:$0xf] %v7654
          %7719 = vst [vmem:[%s757 + $0x34] sm:$0xf] %v7655
          %7720 = vst [vmem:[%s757 + $0x38] sm:$0xf] %v7656
          %7721 = vst [vmem:[%s757 + $0x3c] sm:$0xf] %v7657
          %7722 = vst [vmem:[%s757 + $0x40] sm:$0xf] %v7658
          %7723 = vst [vmem:[%s757 + $0x44] sm:$0xf] %v7659
          %7724 = vst [vmem:[%s757 + $0x48] sm:$0xf] %v7660
          %7725 = vst [vmem:[%s757 + $0x4c] sm:$0xf] %v7661
          %7726 = vst [vmem:[%s757 + $0x50] sm:$0xf] %v7662
          %7727 = vst [vmem:[%s757 + $0x54] sm:$0xf] %v7663
          %7728 = vst [vmem:[%s757 + $0x58] sm:$0xf] %v7664
          %7729 = vst [vmem:[%s757 + $0x5c] sm:$0xf] %v7665
          %7730 = vst [vmem:[%s757 + $0x60] sm:$0xf] %v7666
          %7731 = vst [vmem:[%s757 + $0x64] sm:$0xf] %v7667
          %7732 = vst [vmem:[%s757 + $0x68] sm:$0xf] %v7668
          %7733 = vst [vmem:[%s757 + $0x6c] sm:$0xf] %v7669
          %7734 = vst [vmem:[%s757 + $0x70] sm:$0xf] %v7670
          %7735 = vst [vmem:[%s757 + $0x74] sm:$0xf] %v7671
          %7736 = vst [vmem:[%s757 + $0x78] sm:$0xf] %v7672
          %7737 = vst [vmem:[%s757 + $0x7c] sm:$0xf] %v7673
        $region112: #{bottleneck_csp_pallas.1} parent=99 // pred_fallthru
          _
        %p7738 = scmp.lt.s32.totalorder %s38, 1
        %s7739 = scalar_select %p7738, %s38, 1
        %s7740 = smul.addr %s7739, 32
        %s7741 = smul.addr %s7740, 4
        %s7742 = scalar_lea.vmem %s20, %s7741
        // Predicated region
        $region113: #{bottleneck_csp_pallas.1} parent=99 // pred_check
          %p7743 = pneg %p519
        $region114: #{bottleneck_csp_pallas.1} parent=99 // pred_check_branch
          %7745 = sbr.rel (%p7743) target = $region116
        $region115: #{bottleneck_csp_pallas.1} parent=99 // pred_region
          _
        $region116: #{bottleneck_csp_pallas.1} parent=99 // pred_fallthru
          _
      $region100: #{bottleneck_csp_pallas.1} parent=5 // pred_fallthru
        _
      %p7746 = scmp.le.s32.totalorder 2, %s29
      // Predicated region
      $region117: #{bottleneck_csp_pallas.1} parent=5 // pred_check
        %p7747 = pneg %p7746
      $region118: #{bottleneck_csp_pallas.1} parent=5 // pred_check_branch
        %7749 = sbr.rel (%p7747) target = $region120
      $region119: #{bottleneck_csp_pallas.1} parent=5 // pred_region
        %s7750 = ssub.s32 %s29, 2
        // Predicated region
        $region121: #{bottleneck_csp_pallas.1} parent=119 // pred_check
          %p7751 = pneg %p525
        $region122: #{bottleneck_csp_pallas.1} parent=119 // pred_check_branch
          %7753 = sbr.rel (%p7751) target = $region124
        $region123: #{bottleneck_csp_pallas.1} parent=119 // pred_region
          %p7754 = scmp.lt.s32.totalorder %s40, 1
          %s7755 = scalar_select %p7754, %s40, 1
          %s7756 = smul.addr %s7755, 32
          %s7757 = smul.addr %s7756, 4
          %s7758 = scalar_lea.vmem %s20, %s7757
        $region124: #{bottleneck_csp_pallas.1} parent=119 // pred_fallthru
          _
      $region120: #{bottleneck_csp_pallas.1} parent=5 // pred_fallthru
        _
    $region6: #{bottleneck_csp_pallas.1} parent=1 // loop_footer
      %s33 = sadd.s32 1, %s29
    $region7: #{bottleneck_csp_pallas.1} parent=1 // loop_footer_branch
      %28 = sbr.rel target = $region3
    $region8: #{bottleneck_csp_pallas.1} parent=1 // loop_exit
      _
    %7759 = vsyncpa [#allocation5], 1
    %s7760 = scalar_lea.sflag [#allocation5], 1
    %7761 = vsyncpa %s7760, 1

</llo_original>
